<compile_context>
chip_gen: v6e
topology: v6e:2x2x1
jax: 0.10.0
libtpu: 0.0.40
codegen_flags: <defaults>
</compile_context>

<pallas_src>
import functools
import math

import jax
import jax.numpy as jnp
from jax.experimental import pallas as pl
from jax.experimental.pallas import tpu as pltpu

# Set both to jnp.float32 to recover (near) exact parity with the PyTorch module.
_MXU_DTYPE = jnp.bfloat16   # dtype fed to the MXU (accumulation is always f32)
_W_DTYPE = jnp.bfloat16     # HBM storage dtype of matmul weights (halves DMA/VMEM)


def _mm(a, b):
    return jnp.dot(a.astype(_MXU_DTYPE), b.astype(_MXU_DTYPE),
                   preferred_element_type=jnp.float32)


def _mm_t(a, b):
    """a @ b.T (contract dim 1 with dim 1); fine for the tiny per-variate scores."""
    return jax.lax.dot_general(a.astype(_MXU_DTYPE), b.astype(_MXU_DTYPE),
                               (((1,), (1,)), ((), ())),
                               preferred_element_type=jnp.float32)


def _layer_norm(v, g, b):
    m = jnp.mean(v, axis=-1, keepdims=True)
    var = jnp.mean((v - m) ** 2, axis=-1, keepdims=True)
    return (v - m) * jax.lax.rsqrt(var + 1e-5) * g + b


def _softmax(s):
    s = s - jnp.max(s, axis=-1, keepdims=True)
    p = jnp.exp(s)
    return p / jnp.sum(p, axis=-1, keepdims=True)   # exact division (parity concern)


# ------------------------------------------------------------------
# Fused embedding + encoder kernel (one pallas_call for the whole encoder)
# ------------------------------------------------------------------

def _timexer_encoder_kernel(
        patches_ref, xm_ref, ve_w_ref, pos_ref, glb_ref, ex_w_ref, ex_b_ref,
        wqkv_ref, bqkv_ref, wos_ref, bos_ref,
        wqc_ref, bqc_ref, wkvc_ref, bkvc_ref, woc_ref, boc_ref,
        n1g_ref, n1b_ref, n2g_ref, n2b_ref,
        c1w_ref, c1b_ref, c2w_ref, c2b_ref, n3g_ref, n3b_ref,
        fng_ref, fnb_ref,
        o_ref, cross_ref,
        *, n_heads, n_vars, patch_num, b_blk, activation):
    f32 = jnp.float32
    C = n_vars
    L = patch_num + 1
    D = o_ref.shape[-1]
    H = n_heads
    E = D // H
    scale = 1.0 / math.sqrt(E)
    l_idx = pl.program_id(1)
    is_last = l_idx == pl.num_programs(1) - 1

    # ---- once per batch block: endogenous + exogenous embeddings ----------
    @pl.when(l_idx == 0)
    def _embed():
        pos = pos_ref[...].astype(f32)                 # (C*pn, D) pre-tiled per variate
        glb = glb_ref[...].astype(f32)                 # (C, D) global tokens
        ex_b = ex_b_ref[...].astype(f32)
        for e in range(b_blk):
            # patch value embedding: ONE MXU matmul for all variates/patches
            proj = _mm(patches_ref[e], ve_w_ref[...]) + pos          # (C*pn, D)
            # DataEmbedding_inverted on the time marks
            cross_ref[e] = _mm(xm_ref[e], ex_w_ref[...]) + ex_b      # (n_mark, D)
            rows = []
            for c in range(C):
                rows.append(proj[c * patch_num:(c + 1) * patch_num, :])
                rows.append(glb[c:c + 1, :])           # global token = last token
            o_ref[e] = jnp.concatenate(rows, axis=0)   # residual stream, resident in VMEM

    # ---- encoder layer `l_idx` (weights streamed per layer, bf16) ----------
    wqkv = wqkv_ref[0]
    bqkv = bqkv_ref[0].astype(f32)
    wos = wos_ref[0]
    bos = bos_ref[0].astype(f32)
    wqc = wqc_ref[0]
    bqc = bqc_ref[0].astype(f32)
    wkvc = wkvc_ref[0]
    bkvc = bkvc_ref[0].astype(f32)
    woc = woc_ref[0]
    boc = boc_ref[0].astype(f32)
    n1g = n1g_ref[0].astype(f32)
    n1b = n1b_ref[0].astype(f32)
    n2g = n2g_ref[0].astype(f32)
    n2b = n2b_ref[0].astype(f32)
    n3g = n3g_ref[0].astype(f32)
    n3b = n3b_ref[0].astype(f32)
    c1w = c1w_ref[0]
    c1b = c1b_ref[0].astype(f32)
    c2w = c2w_ref[0]
    c2b = c2b_ref[0].astype(f32)

    for e in range(b_blk):
        x = o_ref[e].astype(f32)                       # (C*L, D) residual stream
        qkv = _mm(x, wqkv) + bqkv                      # (C*L, 3D)

        # per-variate self-attention (block-diagonal, WITHOUT the dense NTxNT mask)
        ctx_parts = []
        for c in range(C):
            r0 = c * L
            q = qkv[r0:r0 + L, 0:D]
            k = qkv[r0:r0 + L, D:2 * D]
            v = qkv[r0:r0 + L, 2 * D:3 * D]
            heads = []
            for h in range(H):
                hs = slice(h * E, (h + 1) * E)
                s = _mm_t(q[:, hs], k[:, hs]) * scale            # (L, L)
                heads.append(_mm(_softmax(s), v[:, hs]))         # (L, E)
            ctx_parts.append(jnp.concatenate(heads, axis=-1))    # (L, D)
        ctx = jnp.concatenate(ctx_parts, axis=0)                 # (C*L, D)
        x1 = _layer_norm(x + _mm(ctx, wos) + bos, n1g, n1b)      # single output projection

        # global token of every variate cross-attends to the exogenous embedding
        glb_ori = jnp.concatenate(
            [x1[c * L + patch_num:c * L + L, :] for c in range(C)], axis=0)   # (C, D)
        qg = _mm(glb_ori, wqc) + bqc                             # (C, D)
        kv = _mm(cross_ref[e].astype(f32), wkvc) + bkvc          # (n_mark, 2D)
        kx = kv[:, 0:D]
        vx = kv[:, D:2 * D]
        heads = []
        for h in range(H):
            hs = slice(h * E, (h + 1) * E)
            s = _mm_t(qg[:, hs], kx[:, hs]) * scale              # (C, n_mark)
            heads.append(_mm(_softmax(s), vx[:, hs]))            # (C, E)
        g_ctx = jnp.concatenate(heads, axis=-1)                  # (C, D)
        x_glb = _layer_norm(glb_ori + _mm(g_ctx, woc) + boc, n2g, n2b)

        # scatter the refreshed global tokens back (pure slicing, no selection matmuls)
        parts = []
        for c in range(C):
            parts.append(x1[c * L:c * L + patch_num, :])
            parts.append(x_glb[c:c + 1, :])
        x_cat = jnp.concatenate(parts, axis=0)                   # (C*L, D)

        # position-wise FFN (Conv1d kernel_size=1 == per-token matmul)
        y = _mm(x_cat, c1w) + c1b
        y = jnp.maximum(y, 0.0) if activation == "relu" else jax.nn.gelu(y)
        y = _mm(y, c2w) + c2b
        out = _layer_norm(x_cat + y, n3g, n3b)

        @pl.when(is_last)
        def _store_final():
            # final encoder LayerNorm folded into the last layer step
            o_ref[e] = _layer_norm(out, fng_ref[...].astype(f32),
                                   fnb_ref[...].astype(f32))

        @pl.when(jnp.logical_not(is_last))
        def _store():
            o_ref[e] = out


def timexer_encode(patches, xm, params, *, cfg, b_blk=1):
    B = patches.shape[0]
    C = cfg["enc_in"]
    D = cfg["d_model"]
    pn = cfg["seq_len"] // cfg["patch_len"]
    L = pn + 1
    Le = cfg["e_layers"]
    n_mark = xm.shape[1]
    assert B % b_blk == 0

    def shared(a):
        return pl.BlockSpec(a.shape, lambda b, l, _r=a.ndim: (0,) * _r)

    def per_batch(a):
        return pl.BlockSpec((b_blk,) + a.shape[1:],
                            lambda b, l, _r=a.ndim: (b,) + (0,) * (_r - 1))

    def per_layer(a):
        return pl.BlockSpec((1,) + a.shape[1:],
                            lambda b, l, _r=a.ndim: (l,) + (0,) * (_r - 1))

    lay = params["layers"]
    args = [patches, xm,
            params["en_ve_w"], params["pos_emb"], params["glb_token"],
            params["ex_w"], params["ex_b"],
            lay["wqkv"], lay["bqkv"], lay["wo_s"], lay["bo_s"],
            lay["wq_c"], lay["bq_c"], lay["wkv_c"], lay["bkv_c"],
            lay["wo_c"], lay["bo_c"],
            lay["n1_g"], lay["n1_b"], lay["n2_g"], lay["n2_b"],
            lay["c1_w"], lay["c1_b"], lay["c2_w"], lay["c2_b"],
            lay["n3_g"], lay["n3_b"],
            params["norm_g"], params["norm_b"]]
    specs = ([per_batch(patches), per_batch(xm)] +
             [shared(a) for a in args[2:7]] +
             [per_layer(a) for a in args[7:27]] +
             [shared(a) for a in args[27:29]])

    kern = functools.partial(
        _timexer_encoder_kernel,
        n_heads=cfg["n_heads"], n_vars=C, patch_num=pn, b_blk=b_blk,
        activation=cfg.get("activation", "relu"))

    return pl.pallas_call(
        kern,
        out_shape=jax.ShapeDtypeStruct((B, C * L, D), jnp.float32),
        grid=(B // b_blk, Le),
        in_specs=specs,
        out_specs=pl.BlockSpec((b_blk, C * L, D), lambda b, l: (b, 0, 0)),
        scratch_shapes=[pltpu.VMEM((b_blk, n_mark, D), jnp.float32)],
        compiler_params=pltpu.CompilerParams(
            dimension_semantics=("parallel", "arbitrary"),
            # explicit VMEM budget: fits v7x's 64 MiB as well as v5e/v6e
            vmem_limit_bytes=64 * 1024 * 1024),
    )(*args)


# ------------------------------------------------------------------
# FlattenHead kernel (one matmul, lane-dense padded output, fused RevIN denorm)
# ------------------------------------------------------------------

def _head_kernel(x_ref, w_ref, b_ref, mu_ref, sd_ref, o_ref):
    f32 = jnp.float32
    out = _mm(x_ref[0], w_ref[...]) + b_ref[...].astype(f32)   # (C, P_pad)
    o_ref[0] = out * sd_ref[0] + mu_ref[0]                     # RevIN de-norm


def timexer_head(feats, head_w, head_b, mu, sd):
    B, C, LD = feats.shape
    Pp = head_w.shape[-1]
    return pl.pallas_call(
        _head_kernel,
        out_shape=jax.ShapeDtypeStruct((B, C, Pp), jnp.float32),
        grid=(B,),
        in_specs=[pl.BlockSpec((1, C, LD), lambda b: (b, 0, 0)),
                  pl.BlockSpec(head_w.shape, lambda b: (0, 0)),
                  pl.BlockSpec(head_b.shape, lambda b: (0, 0)),
                  pl.BlockSpec((1, C, 1), lambda b: (b, 0, 0)),
                  pl.BlockSpec((1, C, 1), lambda b: (b, 0, 0))],
        out_specs=pl.BlockSpec((1, C, Pp), lambda b: (b, 0, 0)),
        compiler_params=pltpu.CompilerParams(dimension_semantics=("parallel",)),
    )(feats, head_w, head_b, mu, sd)


# ------------------------------------------------------------------
# Parameters (plain JAX, computed once)
# ------------------------------------------------------------------

def positional_embedding(d_model, max_len):
    position = jnp.arange(max_len, dtype=jnp.float32)[:, None]
    div_term = jnp.exp(jnp.arange(0, d_model, 2, dtype=jnp.float32)
                       * -(math.log(10000.0) / d_model))
    pe = jnp.zeros((max_len, d_model), jnp.float32)
    pe = pe.at[:, 0::2].set(jnp.sin(position * div_term))
    pe = pe.at[:, 1::2].set(jnp.cos(position * div_term))
    return pe


def _dense(key, fan_in, fan_out):
    kw, kb = jax.random.split(key)
    w = 0.02 * jax.random.normal(kw, (fan_in, fan_out), jnp.float32)
    b = 0.02 * jax.random.normal(kb, (1, fan_out), jnp.float32)
    return w, b


def init_params(key, cfg):
    D, d_ff = cfg["d_model"], cfg["d_ff"]
    patch_len, T = cfg["patch_len"], cfg["seq_len"]
    C = cfg["enc_in"]                                  # features == 'M'
    pn = T // patch_len
    L = pn + 1
    P = cfg["pred_len"]
    Le = cfg["e_layers"]
    P_pad = ((P + 127) // 128) * 128                   # lane-dense head output
    keys = jax.random.split(key, 6 + Le)

    params = {}
    # EnEmbedding
    params["en_ve_w"] = (0.02 * jax.random.normal(
        keys[0], (patch_len, D), jnp.float32)).astype(_W_DTYPE)
    params["glb_token"] = jax.random.normal(keys[1], (C, D), jnp.float32)
    params["pos_emb"] = jnp.tile(positional_embedding(D, max(pn, 1)), (C, 1))
    # DataEmbedding_inverted (Linear over seq_len)
    ex_w, ex_b = _dense(keys[2], T, D)
    params["ex_w"] = ex_w.astype(_W_DTYPE)
    params["ex_b"] = ex_b

    # Encoder layers: weights stacked on a leading layer axis (streamed per step)
    names = ("wqkv", "bqkv", "wo_s", "bo_s", "wq_c", "bq_c", "wkv_c", "bkv_c",
             "wo_c", "bo_c", "c1_w", "c1_b", "c2_w", "c2_b",
             "n1_g", "n1_b", "n2_g", "n2_b", "n3_g", "n3_b")
    stacked = {n: [] for n in names}
    for li in range(Le):
        lk = jax.random.split(keys[6 + li], 7)
        for nm, (fi, fo), kk in (("wqkv", (D, 3 * D), lk[0]),
                                 ("wo_s", (D, D), lk[1]),
                                 ("wq_c", (D, D), lk[2]),
                                 ("wkv_c", (D, 2 * D), lk[3]),
                                 ("wo_c", (D, D), lk[4]),
                                 ("c1_w", (D, d_ff), lk[5]),
                                 ("c2_w", (d_ff, D), lk[6])):
            w, b = _dense(kk, fi, fo)
            stacked[nm].append(w)
            stacked[nm.replace("w", "b", 1) if nm[0] == "w" else nm.replace("_w", "_b")].append(b)
        for n in ("n1", "n2", "n3"):
            stacked[n + "_g"].append(jnp.ones((1, D), jnp.float32))
            stacked[n + "_b"].append(jnp.zeros((1, D), jnp.float32))
    weight_names = {"wqkv", "wo_s", "wq_c", "wkv_c", "wo_c", "c1_w", "c2_w"}
    params["layers"] = {
        n: jnp.stack(v, axis=0).astype(_W_DTYPE if n in weight_names else jnp.float32)
        for n, v in stacked.items()}

    # Final encoder norm
    params["norm_g"] = jnp.ones((1, D), jnp.float32)
    params["norm_b"] = jnp.zeros((1, D), jnp.float32)
    # FlattenHead: PyTorch flattens (D, L) row-major (input index d*L + l).  Store
    # the weight permuted to token-major order (l*D + d) so the head kernel can
    # consume the free (B, C, L*D) view of the features with ONE matmul; pad the
    # output dim to a multiple of 128 for lane-dense stores.
    hw, hb = _dense(keys[3], D * L, P)
    hw_tok = hw.reshape(D, L, P).transpose(1, 0, 2).reshape(L * D, P)
    params["head_w"] = (jnp.zeros((L * D, P_pad), jnp.float32)
                        .at[:, :P].set(hw_tok).astype(_W_DTYPE))
    params["head_b"] = jnp.zeros((1, P_pad), jnp.float32).at[:, :P].set(hb)
    return params


# ------------------------------------------------------------------
# Full forward pass
# ------------------------------------------------------------------

def timexer_forward(params, x_enc, x_mark_enc, x_dec=None, x_mark_dec=None, *, cfg):
    B, T, C = x_enc.shape
    D = cfg["d_model"]
    P = cfg["pred_len"]
    p_len = cfg["patch_len"]
    pn = T // p_len
    L = pn + 1
    use_norm = cfg.get("use_norm", True)

    # RevIN statistics (mean over time, biased variance) -- matches the module
    if use_norm:
        means = jnp.mean(x_enc, axis=1, keepdims=True)              # (B, 1, C)
        xc = x_enc - means
        var = jnp.mean(xc * xc, axis=1, keepdims=True)
        stdev = jnp.sqrt(var + 1e-5)
        xn = xc / stdev
    else:
        means = jnp.zeros((B, 1, C), jnp.float32)
        stdev = jnp.ones((B, 1, C), jnp.float32)
        xn = x_enc

    # layout plumbing in XLA (cheap transposes / free reshapes)
    xt = jnp.transpose(xn, (0, 2, 1))                               # (B, C, T)
    patches = xt[:, :, :pn * p_len].reshape(B, C * pn, p_len)       # unfold -> one matmul
    xm = jnp.transpose(x_mark_enc, (0, 2, 1))                       # (B, n_mark, T)

    feats = timexer_encode(patches, xm, params, cfg=cfg,
                           b_blk=cfg.get("batch_block", 1))         # (B, C*L, D)
    feats_flat = feats.reshape(B, C, L * D)                         # free view (same bytes)

    mu = jnp.transpose(means, (0, 2, 1)).astype(jnp.float32)        # (B, C, 1)
    sd = jnp.transpose(stdev, (0, 2, 1)).astype(jnp.float32)
    out = timexer_head(feats_flat, params["head_w"], params["head_b"], mu, sd)

    dec = jnp.transpose(out[:, :, :P], (0, 2, 1))                   # (B, pred_len, C)
    return dec


# ------------------------------------------------------------------

if __name__ == "__main__":
    cfg = dict(seq_len=16, pred_len=8, patch_len=8, enc_in=4,
               d_model=32, n_heads=4, d_ff=64, e_layers=2,
               activation="relu", use_norm=True, batch_block=1)
    B, n_mark = 2, 4

    key = jax.random.PRNGKey(0)
    k1, k2, k3 = jax.random.split(key, 3)
    x_enc = jax.random.normal(k1, (B, cfg["seq_len"], cfg["enc_in"]), jnp.float32)
    x_mark_enc = jax.random.normal(k2, (B, cfg["seq_len"], n_mark), jnp.float32)
    x_dec = jnp.zeros((B, cfg["pred_len"], cfg["enc_in"]), jnp.float32)   # unused by model
    x_mark_dec = jnp.zeros((B, cfg["pred_len"], n_mark), jnp.float32)     # unused by model

    params = init_params(k3, cfg)

    fwd = jax.jit(functools.partial(timexer_forward, cfg=cfg))
    out = fwd(params, x_enc, x_mark_enc, x_dec, x_mark_dec)
    out = jax.block_until_ready(out)
    assert out.shape == (B, cfg["pred_len"], cfg["enc_in"]), out.shape
    assert bool(jnp.all(jnp.isfinite(out)))
    print("KERNEL_OK")
</pallas_src>

<mosaic_0001>
module attributes {stable_mosaic.version = 11 : i64} {
  func.func @_head_kernel(%arg0: i32, %arg1: memref<1x4x96xf32, #tpu.memory_space<vmem>>, %arg2: memref<96x128xbf16, #tpu.memory_space<vmem>>, %arg3: memref<1x128xf32, #tpu.memory_space<vmem>>, %arg4: memref<1x4x1xf32, #tpu.memory_space<vmem>>, %arg5: memref<1x4x1xf32, #tpu.memory_space<vmem>>, %arg6: memref<1x4x128xf32, #tpu.memory_space<vmem>>) attributes {dimension_semantics = [#tpu.dimension_semantics<parallel>], iteration_bounds = array<i64: 2>, scalar_prefetch = 0 : i64, scratch_operands = 0 : i64, tpu.core_type = #tpu.core_type<tc>, window_params = [{transform_indices = @transform_0, window_bounds = array<i64: 1, 4, 96>}, {pipeline_mode = #tpu.pipeline_mode<synchronous>, transform_indices = @transform_1, window_bounds = array<i64: 96, 128>}, {pipeline_mode = #tpu.pipeline_mode<synchronous>, transform_indices = @transform_2, window_bounds = array<i64: 1, 128>}, {transform_indices = @transform_3, window_bounds = array<i64: 1, 4, 1>}, {transform_indices = @transform_4, window_bounds = array<i64: 1, 4, 1>}, {transform_indices = @transform_5, window_bounds = array<i64: 1, 4, 128>}]} {
    %c0 = arith.constant 0 : index
    %c0_0 = arith.constant 0 : index
    %c0_1 = arith.constant 0 : index
    %0 = vector.load %arg1[%c0, %c0_0, %c0_1] : memref<1x4x96xf32, #tpu.memory_space<vmem>>, vector<1x4x96xf32>
    %1 = vector.shape_cast %0 : vector<1x4x96xf32> to vector<4x96xf32>
    %c0_2 = arith.constant 0 : index
    %c0_3 = arith.constant 0 : index
    %2 = vector.load %arg2[%c0_2, %c0_3] : memref<96x128xbf16, #tpu.memory_space<vmem>>, vector<96x128xbf16>
    %3 = arith.truncf %1 : vector<4x96xf32> to vector<4x96xbf16>
    %cst = arith.constant dense<0.000000e+00> : vector<4x128xf32>
    %4 = tpu.matmul %3, %2, %cst {dimension_numbers = #tpu.dot_dimension_numbers<[1], [0], [0], [1], [0, 0, 1, 1], [], []>} : vector<4x96xbf16>, vector<96x128xbf16>, vector<4x128xf32> -> vector<4x128xf32>
    %c0_4 = arith.constant 0 : index
    %c0_5 = arith.constant 0 : index
    %5 = vector.load %arg3[%c0_4, %c0_5] : memref<1x128xf32, #tpu.memory_space<vmem>>, vector<1x128xf32>
    %6 = vector.broadcast %5 : vector<1x128xf32> to vector<4x128xf32>
    %7 = arith.addf %4, %6 : vector<4x128xf32>
    %c0_6 = arith.constant 0 : index
    %c0_7 = arith.constant 0 : index
    %c0_8 = arith.constant 0 : index
    %8 = vector.load %arg5[%c0_6, %c0_7, %c0_8] : memref<1x4x1xf32, #tpu.memory_space<vmem>>, vector<1x4x1xf32>
    %9 = vector.shape_cast %8 : vector<1x4x1xf32> to vector<4x1xf32>
    %10 = vector.broadcast %9 : vector<4x1xf32> to vector<4x128xf32>
    %11 = arith.mulf %7, %10 : vector<4x128xf32>
    %c0_9 = arith.constant 0 : index
    %c0_10 = arith.constant 0 : index
    %c0_11 = arith.constant 0 : index
    %12 = vector.load %arg4[%c0_9, %c0_10, %c0_11] : memref<1x4x1xf32, #tpu.memory_space<vmem>>, vector<1x4x1xf32>
    %13 = vector.shape_cast %12 : vector<1x4x1xf32> to vector<4x1xf32>
    %14 = vector.broadcast %13 : vector<4x1xf32> to vector<4x128xf32>
    %15 = arith.addf %11, %14 : vector<4x128xf32>
    %c0_12 = arith.constant 0 : index
    %c0_13 = arith.constant 0 : index
    %c0_14 = arith.constant 0 : index
    %16 = vector.load %arg6[%c0_12, %c0_13, %c0_14] : memref<1x4x128xf32, #tpu.memory_space<vmem>>, vector<1x4x128xf32>
    %17 = vector.shape_cast %16 : vector<1x4x128xf32> to vector<4x128xf32>
    %18 = vector.shape_cast %15 : vector<4x128xf32> to vector<1x4x128xf32>
    tpu.vector_store %arg6[%c0_12, %c0_13, %c0_14], %18 {strides = array<i32>} : memref<1x4x128xf32, #tpu.memory_space<vmem>>, vector<1x4x128xf32>,
    return
  }
  func.func @transform_0(%arg0: i32) -> (i32, i32, i32) {
    %c0_i32 = arith.constant 0 : i32
    %c0_i32_0 = arith.constant 0 : i32
    %c0_i32_1 = arith.constant 0 : i32
    return %arg0, %c0_i32, %c0_i32_0 : i32, i32, i32
  }
  func.func @transform_1(%arg0: i32) -> (i32, i32) {
    %c0_i32 = arith.constant 0 : i32
    %c0_i32_0 = arith.constant 0 : i32
    %c0_i32_1 = arith.constant 0 : i32
    return %c0_i32, %c0_i32_0 : i32, i32
  }
  func.func @transform_2(%arg0: i32) -> (i32, i32) {
    %c0_i32 = arith.constant 0 : i32
    %c0_i32_0 = arith.constant 0 : i32
    %c0_i32_1 = arith.constant 0 : i32
    return %c0_i32, %c0_i32_0 : i32, i32
  }
  func.func @transform_3(%arg0: i32) -> (i32, i32, i32) {
    %c0_i32 = arith.constant 0 : i32
    %c0_i32_0 = arith.constant 0 : i32
    %c0_i32_1 = arith.constant 0 : i32
    return %arg0, %c0_i32, %c0_i32_0 : i32, i32, i32
  }
  func.func @transform_4(%arg0: i32) -> (i32, i32, i32) {
    %c0_i32 = arith.constant 0 : i32
    %c0_i32_0 = arith.constant 0 : i32
    %c0_i32_1 = arith.constant 0 : i32
    return %arg0, %c0_i32, %c0_i32_0 : i32, i32, i32
  }
  func.func @transform_5(%arg0: i32) -> (i32, i32, i32) {
    %c0_i32 = arith.constant 0 : i32
    %c0_i32_0 = arith.constant 0 : i32
    %c0_i32_1 = arith.constant 0 : i32
    return %arg0, %c0_i32, %c0_i32_0 : i32, i32, i32
  }
}

module attributes {stable_mosaic.version = 11 : i64} {
  func.func @_timexer_encoder_kernel(%arg0: i32, %arg1: i32, %arg2: memref<1x8x8xf32, #tpu.memory_space<vmem>>, %arg3: memref<1x4x16xf32, #tpu.memory_space<vmem>>, %arg4: memref<8x32xbf16, #tpu.memory_space<vmem>>, %arg5: memref<8x32xf32, #tpu.memory_space<vmem>>, %arg6: memref<4x32xf32, #tpu.memory_space<vmem>>, %arg7: memref<16x32xbf16, #tpu.memory_space<vmem>>, %arg8: memref<1x32xf32, #tpu.memory_space<vmem>>, %arg9: memref<1x32x96xbf16, #tpu.memory_space<vmem>>, %arg10: memref<1x1x96xf32, #tpu.memory_space<vmem>>, %arg11: memref<1x32x32xbf16, #tpu.memory_space<vmem>>, %arg12: memref<1x1x32xf32, #tpu.memory_space<vmem>>, %arg13: memref<1x32x32xbf16, #tpu.memory_space<vmem>>, %arg14: memref<1x1x32xf32, #tpu.memory_space<vmem>>, %arg15: memref<1x32x64xbf16, #tpu.memory_space<vmem>>, %arg16: memref<1x1x64xf32, #tpu.memory_space<vmem>>, %arg17: memref<1x32x32xbf16, #tpu.memory_space<vmem>>, %arg18: memref<1x1x32xf32, #tpu.memory_space<vmem>>, %arg19: memref<1x1x32xf32, #tpu.memory_space<vmem>>, %arg20: memref<1x1x32xf32, #tpu.memory_space<vmem>>, %arg21: memref<1x1x32xf32, #tpu.memory_space<vmem>>, %arg22: memref<1x1x32xf32, #tpu.memory_space<vmem>>, %arg23: memref<1x32x64xbf16, #tpu.memory_space<vmem>>, %arg24: memref<1x1x64xf32, #tpu.memory_space<vmem>>, %arg25: memref<1x64x32xbf16, #tpu.memory_space<vmem>>, %arg26: memref<1x1x32xf32, #tpu.memory_space<vmem>>, %arg27: memref<1x1x32xf32, #tpu.memory_space<vmem>>, %arg28: memref<1x1x32xf32, #tpu.memory_space<vmem>>, %arg29: memref<1x32xf32, #tpu.memory_space<vmem>>, %arg30: memref<1x32xf32, #tpu.memory_space<vmem>>, %arg31: memref<1x12x32xf32, #tpu.memory_space<vmem>>, %arg32: memref<1x4x32xf32, #tpu.memory_space<vmem>>) attributes {dimension_semantics = [#tpu.dimension_semantics<parallel>, #tpu.dimension_semantics<arbitrary>], iteration_bounds = array<i64: 2, 2>, scalar_prefetch = 0 : i64, scratch_operands = 1 : i64, tpu.core_type = #tpu.core_type<tc>, window_params = [{transform_indices = @transform_0, window_bounds = array<i64: 1, 8, 8>}, {transform_indices = @transform_1, window_bounds = array<i64: 1, 4, 16>}, {pipeline_mode = #tpu.pipeline_mode<synchronous>, transform_indices = @transform_2, window_bounds = array<i64: 8, 32>}, {pipeline_mode = #tpu.pipeline_mode<synchronous>, transform_indices = @transform_3, window_bounds = array<i64: 8, 32>}, {pipeline_mode = #tpu.pipeline_mode<synchronous>, transform_indices = @transform_4, window_bounds = array<i64: 4, 32>}, {pipeline_mode = #tpu.pipeline_mode<synchronous>, transform_indices = @transform_5, window_bounds = array<i64: 16, 32>}, {pipeline_mode = #tpu.pipeline_mode<synchronous>, transform_indices = @transform_6, window_bounds = array<i64: 1, 32>}, {transform_indices = @transform_7, window_bounds = array<i64: 1, 32, 96>}, {transform_indices = @transform_8, window_bounds = array<i64: 1, 1, 96>}, {transform_indices = @transform_9, window_bounds = array<i64: 1, 32, 32>}, {transform_indices = @transform_10, window_bounds = array<i64: 1, 1, 32>}, {transform_indices = @transform_11, window_bounds = array<i64: 1, 32, 32>}, {transform_indices = @transform_12, window_bounds = array<i64: 1, 1, 32>}, {transform_indices = @transform_13, window_bounds = array<i64: 1, 32, 64>}, {transform_indices = @transform_14, window_bounds = array<i64: 1, 1, 64>}, {transform_indices = @transform_15, window_bounds = array<i64: 1, 32, 32>}, {transform_indices = @transform_16, window_bounds = array<i64: 1, 1, 32>}, {transform_indices = @transform_17, window_bounds = array<i64: 1, 1, 32>}, {transform_indices = @transform_18, window_bounds = array<i64: 1, 1, 32>}, {transform_indices = @transform_19, window_bounds = array<i64: 1, 1, 32>}, {transform_indices = @transform_20, window_bounds = array<i64: 1, 1, 32>}, {transform_indices = @transform_21, window_bounds = array<i64: 1, 32, 64>}, {transform_indices = @transform_22, window_bounds = array<i64: 1, 1, 64>}, {transform_indices = @transform_23, window_bounds = array<i64: 1, 64, 32>}, {transform_indices = @transform_24, window_bounds = array<i64: 1, 1, 32>}, {transform_indices = @transform_25, window_bounds = array<i64: 1, 1, 32>}, {transform_indices = @transform_26, window_bounds = array<i64: 1, 1, 32>}, {pipeline_mode = #tpu.pipeline_mode<synchronous>, transform_indices = @transform_27, window_bounds = array<i64: 1, 32>}, {pipeline_mode = #tpu.pipeline_mode<synchronous>, transform_indices = @transform_28, window_bounds = array<i64: 1, 32>}, {transform_indices = @transform_29, window_bounds = array<i64: 1, 12, 32>}]} {
    %c1_i32 = arith.constant 1 : i32
    %0 = arith.cmpi eq, %arg1, %c1_i32 : i32
    %c0_i32 = arith.constant 0 : i32
    %1 = arith.cmpi eq, %arg1, %c0_i32 : i32
    %2 = arith.extui %1 : i1 to i32
    %c0_i32_0 = arith.constant 0 : i32
    %3 = arith.cmpi ne, %2, %c0_i32_0 : i32
    scf.if %3 {
      %c0_190 = arith.constant 0 : index
      %c0_191 = arith.constant 0 : index
      %586 = vector.load %arg5[%c0_190, %c0_191] : memref<8x32xf32, #tpu.memory_space<vmem>>, vector<8x32xf32>
      %c0_192 = arith.constant 0 : index
      %c0_193 = arith.constant 0 : index
      %587 = vector.load %arg6[%c0_192, %c0_193] : memref<4x32xf32, #tpu.memory_space<vmem>>, vector<4x32xf32>
      %c0_194 = arith.constant 0 : index
      %c0_195 = arith.constant 0 : index
      %588 = vector.load %arg8[%c0_194, %c0_195] : memref<1x32xf32, #tpu.memory_space<vmem>>, vector<1x32xf32>
      %c0_196 = arith.constant 0 : index
      %c0_197 = arith.constant 0 : index
      %c0_198 = arith.constant 0 : index
      %589 = vector.load %arg2[%c0_196, %c0_197, %c0_198] : memref<1x8x8xf32, #tpu.memory_space<vmem>>, vector<1x8x8xf32>
      %590 = vector.shape_cast %589 : vector<1x8x8xf32> to vector<8x8xf32>
      %c0_199 = arith.constant 0 : index
      %c0_200 = arith.constant 0 : index
      %591 = vector.load %arg4[%c0_199, %c0_200] : memref<8x32xbf16, #tpu.memory_space<vmem>>, vector<8x32xbf16>
      %592 = arith.truncf %590 : vector<8x8xf32> to vector<8x8xbf16>
      %cst_201 = arith.constant dense<0.000000e+00> : vector<8x32xf32>
      %593 = tpu.matmul %592, %591, %cst_201 {dimension_numbers = #tpu.dot_dimension_numbers<[1], [0], [0], [1], [0, 0, 1, 1], [], []>} : vector<8x8xbf16>, vector<8x32xbf16>, vector<8x32xf32> -> vector<8x32xf32>
      %594 = arith.addf %593, %586 : vector<8x32xf32>
      %c0_202 = arith.constant 0 : index
      %c0_203 = arith.constant 0 : index
      %c0_204 = arith.constant 0 : index
      %595 = vector.load %arg3[%c0_202, %c0_203, %c0_204] : memref<1x4x16xf32, #tpu.memory_space<vmem>>, vector<1x4x16xf32>
      %596 = vector.shape_cast %595 : vector<1x4x16xf32> to vector<4x16xf32>
      %c0_205 = arith.constant 0 : index
      %c0_206 = arith.constant 0 : index
      %597 = vector.load %arg7[%c0_205, %c0_206] : memref<16x32xbf16, #tpu.memory_space<vmem>>, vector<16x32xbf16>
      %598 = arith.truncf %596 : vector<4x16xf32> to vector<4x16xbf16>
      %cst_207 = arith.constant dense<0.000000e+00> : vector<4x32xf32>
      %599 = tpu.matmul %598, %597, %cst_207 {dimension_numbers = #tpu.dot_dimension_numbers<[1], [0], [0], [1], [0, 0, 1, 1], [], []>} : vector<4x16xbf16>, vector<16x32xbf16>, vector<4x32xf32> -> vector<4x32xf32>
      %600 = vector.broadcast %588 : vector<1x32xf32> to vector<4x32xf32>
      %601 = arith.addf %599, %600 : vector<4x32xf32>
      %c0_208 = arith.constant 0 : index
      %c0_209 = arith.constant 0 : index
      %c0_210 = arith.constant 0 : index
      %602 = vector.load %arg32[%c0_208, %c0_209, %c0_210] : memref<1x4x32xf32, #tpu.memory_space<vmem>>, vector<1x4x32xf32>
      %603 = vector.shape_cast %602 : vector<1x4x32xf32> to vector<4x32xf32>
      %604 = vector.shape_cast %601 : vector<4x32xf32> to vector<1x4x32xf32>
      tpu.vector_store %arg32[%c0_208, %c0_209, %c0_210], %604 {strides = array<i32>} : memref<1x4x32xf32, #tpu.memory_space<vmem>>, vector<1x4x32xf32>,
      %605 = vector.extract_strided_slice %594 {offsets = [0, 0], sizes = [2, 32], strides = [1, 1]} : vector<8x32xf32> to vector<2x32xf32>
      %606 = vector.extract_strided_slice %587 {offsets = [0, 0], sizes = [1, 32], strides = [1, 1]} : vector<4x32xf32> to vector<1x32xf32>
      %607 = vector.extract_strided_slice %594 {offsets = [2, 0], sizes = [2, 32], strides = [1, 1]} : vector<8x32xf32> to vector<2x32xf32>
      %608 = vector.extract_strided_slice %587 {offsets = [1, 0], sizes = [1, 32], strides = [1, 1]} : vector<4x32xf32> to vector<1x32xf32>
      %609 = vector.extract_strided_slice %594 {offsets = [4, 0], sizes = [2, 32], strides = [1, 1]} : vector<8x32xf32> to vector<2x32xf32>
      %610 = vector.extract_strided_slice %587 {offsets = [2, 0], sizes = [1, 32], strides = [1, 1]} : vector<4x32xf32> to vector<1x32xf32>
      %611 = vector.extract_strided_slice %594 {offsets = [6, 0], sizes = [2, 32], strides = [1, 1]} : vector<8x32xf32> to vector<2x32xf32>
      %612 = vector.extract_strided_slice %587 {offsets = [3, 0], sizes = [1, 32], strides = [1, 1]} : vector<4x32xf32> to vector<1x32xf32>
      %613 = tpu.concatenate %605, %606, %607, %608, %609, %610, %611, %612 in 0 : vector<2x32xf32>, vector<1x32xf32>, vector<2x32xf32>, vector<1x32xf32>, vector<2x32xf32>, vector<1x32xf32>, vector<2x32xf32>, vector<1x32xf32> -> vector<12x32xf32>
      %c0_211 = arith.constant 0 : index
      %c0_212 = arith.constant 0 : index
      %c0_213 = arith.constant 0 : index
      %614 = vector.load %arg31[%c0_211, %c0_212, %c0_213] : memref<1x12x32xf32, #tpu.memory_space<vmem>>, vector<1x12x32xf32>
      %615 = vector.shape_cast %614 : vector<1x12x32xf32> to vector<12x32xf32>
      %616 = vector.shape_cast %613 : vector<12x32xf32> to vector<1x12x32xf32>
      tpu.vector_store %arg31[%c0_211, %c0_212, %c0_213], %616 {strides = array<i32>} : memref<1x12x32xf32, #tpu.memory_space<vmem>>, vector<1x12x32xf32>,
    } else {
    }
    %c0 = arith.constant 0 : index
    %c0_1 = arith.constant 0 : index
    %c0_2 = arith.constant 0 : index
    %4 = vector.load %arg9[%c0, %c0_1, %c0_2] : memref<1x32x96xbf16, #tpu.memory_space<vmem>>, vector<1x32x96xbf16>
    %5 = vector.shape_cast %4 : vector<1x32x96xbf16> to vector<32x96xbf16>
    %c0_3 = arith.constant 0 : index
    %c0_4 = arith.constant 0 : index
    %c0_5 = arith.constant 0 : index
    %6 = vector.load %arg10[%c0_3, %c0_4, %c0_5] : memref<1x1x96xf32, #tpu.memory_space<vmem>>, vector<1x1x96xf32>
    %7 = vector.shape_cast %6 : vector<1x1x96xf32> to vector<1x96xf32>
    %c0_6 = arith.constant 0 : index
    %c0_7 = arith.constant 0 : index
    %c0_8 = arith.constant 0 : index
    %8 = vector.load %arg11[%c0_6, %c0_7, %c0_8] : memref<1x32x32xbf16, #tpu.memory_space<vmem>>, vector<1x32x32xbf16>
    %9 = vector.shape_cast %8 : vector<1x32x32xbf16> to vector<32x32xbf16>
    %c0_9 = arith.constant 0 : index
    %c0_10 = arith.constant 0 : index
    %c0_11 = arith.constant 0 : index
    %10 = vector.load %arg12[%c0_9, %c0_10, %c0_11] : memref<1x1x32xf32, #tpu.memory_space<vmem>>, vector<1x1x32xf32>
    %11 = vector.shape_cast %10 : vector<1x1x32xf32> to vector<1x32xf32>
    %c0_12 = arith.constant 0 : index
    %c0_13 = arith.constant 0 : index
    %c0_14 = arith.constant 0 : index
    %12 = vector.load %arg13[%c0_12, %c0_13, %c0_14] : memref<1x32x32xbf16, #tpu.memory_space<vmem>>, vector<1x32x32xbf16>
    %13 = vector.shape_cast %12 : vector<1x32x32xbf16> to vector<32x32xbf16>
    %c0_15 = arith.constant 0 : index
    %c0_16 = arith.constant 0 : index
    %c0_17 = arith.constant 0 : index
    %14 = vector.load %arg14[%c0_15, %c0_16, %c0_17] : memref<1x1x32xf32, #tpu.memory_space<vmem>>, vector<1x1x32xf32>
    %15 = vector.shape_cast %14 : vector<1x1x32xf32> to vector<1x32xf32>
    %c0_18 = arith.constant 0 : index
    %c0_19 = arith.constant 0 : index
    %c0_20 = arith.constant 0 : index
    %16 = vector.load %arg15[%c0_18, %c0_19, %c0_20] : memref<1x32x64xbf16, #tpu.memory_space<vmem>>, vector<1x32x64xbf16>
    %17 = vector.shape_cast %16 : vector<1x32x64xbf16> to vector<32x64xbf16>
    %c0_21 = arith.constant 0 : index
    %c0_22 = arith.constant 0 : index
    %c0_23 = arith.constant 0 : index
    %18 = vector.load %arg16[%c0_21, %c0_22, %c0_23] : memref<1x1x64xf32, #tpu.memory_space<vmem>>, vector<1x1x64xf32>
    %19 = vector.shape_cast %18 : vector<1x1x64xf32> to vector<1x64xf32>
    %c0_24 = arith.constant 0 : index
    %c0_25 = arith.constant 0 : index
    %c0_26 = arith.constant 0 : index
    %20 = vector.load %arg17[%c0_24, %c0_25, %c0_26] : memref<1x32x32xbf16, #tpu.memory_space<vmem>>, vector<1x32x32xbf16>
    %21 = vector.shape_cast %20 : vector<1x32x32xbf16> to vector<32x32xbf16>
    %c0_27 = arith.constant 0 : index
    %c0_28 = arith.constant 0 : index
    %c0_29 = arith.constant 0 : index
    %22 = vector.load %arg18[%c0_27, %c0_28, %c0_29] : memref<1x1x32xf32, #tpu.memory_space<vmem>>, vector<1x1x32xf32>
    %23 = vector.shape_cast %22 : vector<1x1x32xf32> to vector<1x32xf32>
    %c0_30 = arith.constant 0 : index
    %c0_31 = arith.constant 0 : index
    %c0_32 = arith.constant 0 : index
    %24 = vector.load %arg19[%c0_30, %c0_31, %c0_32] : memref<1x1x32xf32, #tpu.memory_space<vmem>>, vector<1x1x32xf32>
    %25 = vector.shape_cast %24 : vector<1x1x32xf32> to vector<1x32xf32>
    %c0_33 = arith.constant 0 : index
    %c0_34 = arith.constant 0 : index
    %c0_35 = arith.constant 0 : index
    %26 = vector.load %arg20[%c0_33, %c0_34, %c0_35] : memref<1x1x32xf32, #tpu.memory_space<vmem>>, vector<1x1x32xf32>
    %27 = vector.shape_cast %26 : vector<1x1x32xf32> to vector<1x32xf32>
    %c0_36 = arith.constant 0 : index
    %c0_37 = arith.constant 0 : index
    %c0_38 = arith.constant 0 : index
    %28 = vector.load %arg21[%c0_36, %c0_37, %c0_38] : memref<1x1x32xf32, #tpu.memory_space<vmem>>, vector<1x1x32xf32>
    %29 = vector.shape_cast %28 : vector<1x1x32xf32> to vector<1x32xf32>
    %c0_39 = arith.constant 0 : index
    %c0_40 = arith.constant 0 : index
    %c0_41 = arith.constant 0 : index
    %30 = vector.load %arg22[%c0_39, %c0_40, %c0_41] : memref<1x1x32xf32, #tpu.memory_space<vmem>>, vector<1x1x32xf32>
    %31 = vector.shape_cast %30 : vector<1x1x32xf32> to vector<1x32xf32>
    %c0_42 = arith.constant 0 : index
    %c0_43 = arith.constant 0 : index
    %c0_44 = arith.constant 0 : index
    %32 = vector.load %arg27[%c0_42, %c0_43, %c0_44] : memref<1x1x32xf32, #tpu.memory_space<vmem>>, vector<1x1x32xf32>
    %33 = vector.shape_cast %32 : vector<1x1x32xf32> to vector<1x32xf32>
    %c0_45 = arith.constant 0 : index
    %c0_46 = arith.constant 0 : index
    %c0_47 = arith.constant 0 : index
    %34 = vector.load %arg28[%c0_45, %c0_46, %c0_47] : memref<1x1x32xf32, #tpu.memory_space<vmem>>, vector<1x1x32xf32>
    %35 = vector.shape_cast %34 : vector<1x1x32xf32> to vector<1x32xf32>
    %c0_48 = arith.constant 0 : index
    %c0_49 = arith.constant 0 : index
    %c0_50 = arith.constant 0 : index
    %36 = vector.load %arg23[%c0_48, %c0_49, %c0_50] : memref<1x32x64xbf16, #tpu.memory_space<vmem>>, vector<1x32x64xbf16>
    %37 = vector.shape_cast %36 : vector<1x32x64xbf16> to vector<32x64xbf16>
    %c0_51 = arith.constant 0 : index
    %c0_52 = arith.constant 0 : index
    %c0_53 = arith.constant 0 : index
    %38 = vector.load %arg24[%c0_51, %c0_52, %c0_53] : memref<1x1x64xf32, #tpu.memory_space<vmem>>, vector<1x1x64xf32>
    %39 = vector.shape_cast %38 : vector<1x1x64xf32> to vector<1x64xf32>
    %c0_54 = arith.constant 0 : index
    %c0_55 = arith.constant 0 : index
    %c0_56 = arith.constant 0 : index
    %40 = vector.load %arg25[%c0_54, %c0_55, %c0_56] : memref<1x64x32xbf16, #tpu.memory_space<vmem>>, vector<1x64x32xbf16>
    %41 = vector.shape_cast %40 : vector<1x64x32xbf16> to vector<64x32xbf16>
    %c0_57 = arith.constant 0 : index
    %c0_58 = arith.constant 0 : index
    %c0_59 = arith.constant 0 : index
    %42 = vector.load %arg26[%c0_57, %c0_58, %c0_59] : memref<1x1x32xf32, #tpu.memory_space<vmem>>, vector<1x1x32xf32>
    %43 = vector.shape_cast %42 : vector<1x1x32xf32> to vector<1x32xf32>
    %c0_60 = arith.constant 0 : index
    %c0_61 = arith.constant 0 : index
    %c0_62 = arith.constant 0 : index
    %44 = vector.load %arg31[%c0_60, %c0_61, %c0_62] : memref<1x12x32xf32, #tpu.memory_space<vmem>>, vector<1x12x32xf32>
    %45 = vector.shape_cast %44 : vector<1x12x32xf32> to vector<12x32xf32>
    %46 = arith.truncf %45 : vector<12x32xf32> to vector<12x32xbf16>
    %cst = arith.constant dense<0.000000e+00> : vector<12x96xf32>
    %47 = tpu.matmul %46, %5, %cst {dimension_numbers = #tpu.dot_dimension_numbers<[1], [0], [0], [1], [0, 0, 1, 1], [], []>} : vector<12x32xbf16>, vector<32x96xbf16>, vector<12x96xf32> -> vector<12x96xf32>
    %48 = vector.broadcast %7 : vector<1x96xf32> to vector<12x96xf32>
    %49 = arith.addf %47, %48 : vector<12x96xf32>
    %50 = vector.extract_strided_slice %49 {offsets = [0, 0], sizes = [3, 32], strides = [1, 1]} : vector<12x96xf32> to vector<3x32xf32>
    %51 = vector.extract_strided_slice %49 {offsets = [0, 32], sizes = [3, 32], strides = [1, 1]} : vector<12x96xf32> to vector<3x32xf32>
    %52 = vector.extract_strided_slice %49 {offsets = [0, 64], sizes = [3, 32], strides = [1, 1]} : vector<12x96xf32> to vector<3x32xf32>
    %53 = vector.extract_strided_slice %50 {offsets = [0, 0], sizes = [3, 8], strides = [1, 1]} : vector<3x32xf32> to vector<3x8xf32>
    %54 = vector.extract_strided_slice %51 {offsets = [0, 0], sizes = [3, 8], strides = [1, 1]} : vector<3x32xf32> to vector<3x8xf32>
    %55 = arith.truncf %53 : vector<3x8xf32> to vector<3x8xbf16>
    %56 = arith.truncf %54 : vector<3x8xf32> to vector<3x8xbf16>
    %cst_63 = arith.constant dense<0.000000e+00> : vector<3x3xf32>
    %57 = tpu.matmul %55, %56, %cst_63 {dimension_numbers = #tpu.dot_dimension_numbers<[1], [1], [0], [0], [0, 0, 1, 0], [], []>} : vector<3x8xbf16>, vector<3x8xbf16>, vector<3x3xf32> -> vector<3x3xf32>
    %cst_64 = arith.constant 0.353553385 : f32
    %58 = vector.broadcast %cst_64 : f32 to vector<3x3xf32>
    %59 = arith.mulf %57, %58 : vector<3x3xf32>
    %cst_65 = arith.constant dense<0xFF800000> : vector<3xf32>
    %60 = vector.multi_reduction <maximumf>, %59, %cst_65 [1] : vector<3x3xf32> to vector<3xf32>
    %61 = vector.shape_cast %60 : vector<3xf32> to vector<3x1xf32>
    %62 = vector.broadcast %61 : vector<3x1xf32> to vector<3x3xf32>
    %63 = arith.subf %59, %62 : vector<3x3xf32>
    %64 = math.exp %63 : vector<3x3xf32>
    %cst_66 = arith.constant dense<0.000000e+00> : vector<3xf32>
    %65 = vector.multi_reduction <add>, %64, %cst_66 [1] : vector<3x3xf32> to vector<3xf32>
    %66 = vector.shape_cast %65 : vector<3xf32> to vector<3x1xf32>
    %67 = vector.broadcast %66 : vector<3x1xf32> to vector<3x3xf32>
    %68 = arith.divf %64, %67 : vector<3x3xf32>
    %69 = vector.extract_strided_slice %52 {offsets = [0, 0], sizes = [3, 8], strides = [1, 1]} : vector<3x32xf32> to vector<3x8xf32>
    %70 = arith.truncf %68 : vector<3x3xf32> to vector<3x3xbf16>
    %71 = arith.truncf %69 : vector<3x8xf32> to vector<3x8xbf16>
    %cst_67 = arith.constant dense<0.000000e+00> : vector<3x8xf32>
    %72 = tpu.matmul %70, %71, %cst_67 {dimension_numbers = #tpu.dot_dimension_numbers<[1], [0], [0], [1], [0, 0, 1, 1], [], []>} : vector<3x3xbf16>, vector<3x8xbf16>, vector<3x8xf32> -> vector<3x8xf32>
    %73 = vector.extract_strided_slice %50 {offsets = [0, 8], sizes = [3, 8], strides = [1, 1]} : vector<3x32xf32> to vector<3x8xf32>
    %74 = vector.extract_strided_slice %51 {offsets = [0, 8], sizes = [3, 8], strides = [1, 1]} : vector<3x32xf32> to vector<3x8xf32>
    %75 = arith.truncf %73 : vector<3x8xf32> to vector<3x8xbf16>
    %76 = arith.truncf %74 : vector<3x8xf32> to vector<3x8xbf16>
    %cst_68 = arith.constant dense<0.000000e+00> : vector<3x3xf32>
    %77 = tpu.matmul %75, %76, %cst_68 {dimension_numbers = #tpu.dot_dimension_numbers<[1], [1], [0], [0], [0, 0, 1, 0], [], []>} : vector<3x8xbf16>, vector<3x8xbf16>, vector<3x3xf32> -> vector<3x3xf32>
    %cst_69 = arith.constant 0.353553385 : f32
    %78 = vector.broadcast %cst_69 : f32 to vector<3x3xf32>
    %79 = arith.mulf %77, %78 : vector<3x3xf32>
    %cst_70 = arith.constant dense<0xFF800000> : vector<3xf32>
    %80 = vector.multi_reduction <maximumf>, %79, %cst_70 [1] : vector<3x3xf32> to vector<3xf32>
    %81 = vector.shape_cast %80 : vector<3xf32> to vector<3x1xf32>
    %82 = vector.broadcast %81 : vector<3x1xf32> to vector<3x3xf32>
    %83 = arith.subf %79, %82 : vector<3x3xf32>
    %84 = math.exp %83 : vector<3x3xf32>
    %cst_71 = arith.constant dense<0.000000e+00> : vector<3xf32>
    %85 = vector.multi_reduction <add>, %84, %cst_71 [1] : vector<3x3xf32> to vector<3xf32>
    %86 = vector.shape_cast %85 : vector<3xf32> to vector<3x1xf32>
    %87 = vector.broadcast %86 : vector<3x1xf32> to vector<3x3xf32>
    %88 = arith.divf %84, %87 : vector<3x3xf32>
    %89 = vector.extract_strided_slice %52 {offsets = [0, 8], sizes = [3, 8], strides = [1, 1]} : vector<3x32xf32> to vector<3x8xf32>
    %90 = arith.truncf %88 : vector<3x3xf32> to vector<3x3xbf16>
    %91 = arith.truncf %89 : vector<3x8xf32> to vector<3x8xbf16>
    %cst_72 = arith.constant dense<0.000000e+00> : vector<3x8xf32>
    %92 = tpu.matmul %90, %91, %cst_72 {dimension_numbers = #tpu.dot_dimension_numbers<[1], [0], [0], [1], [0, 0, 1, 1], [], []>} : vector<3x3xbf16>, vector<3x8xbf16>, vector<3x8xf32> -> vector<3x8xf32>
    %93 = vector.extract_strided_slice %50 {offsets = [0, 16], sizes = [3, 8], strides = [1, 1]} : vector<3x32xf32> to vector<3x8xf32>
    %94 = vector.extract_strided_slice %51 {offsets = [0, 16], sizes = [3, 8], strides = [1, 1]} : vector<3x32xf32> to vector<3x8xf32>
    %95 = arith.truncf %93 : vector<3x8xf32> to vector<3x8xbf16>
    %96 = arith.truncf %94 : vector<3x8xf32> to vector<3x8xbf16>
    %cst_73 = arith.constant dense<0.000000e+00> : vector<3x3xf32>
    %97 = tpu.matmul %95, %96, %cst_73 {dimension_numbers = #tpu.dot_dimension_numbers<[1], [1], [0], [0], [0, 0, 1, 0], [], []>} : vector<3x8xbf16>, vector<3x8xbf16>, vector<3x3xf32> -> vector<3x3xf32>
    %cst_74 = arith.constant 0.353553385 : f32
    %98 = vector.broadcast %cst_74 : f32 to vector<3x3xf32>
    %99 = arith.mulf %97, %98 : vector<3x3xf32>
    %cst_75 = arith.constant dense<0xFF800000> : vector<3xf32>
    %100 = vector.multi_reduction <maximumf>, %99, %cst_75 [1] : vector<3x3xf32> to vector<3xf32>
    %101 = vector.shape_cast %100 : vector<3xf32> to vector<3x1xf32>
    %102 = vector.broadcast %101 : vector<3x1xf32> to vector<3x3xf32>
    %103 = arith.subf %99, %102 : vector<3x3xf32>
    %104 = math.exp %103 : vector<3x3xf32>
    %cst_76 = arith.constant dense<0.000000e+00> : vector<3xf32>
    %105 = vector.multi_reduction <add>, %104, %cst_76 [1] : vector<3x3xf32> to vector<3xf32>
    %106 = vector.shape_cast %105 : vector<3xf32> to vector<3x1xf32>
    %107 = vector.broadcast %106 : vector<3x1xf32> to vector<3x3xf32>
    %108 = arith.divf %104, %107 : vector<3x3xf32>
    %109 = vector.extract_strided_slice %52 {offsets = [0, 16], sizes = [3, 8], strides = [1, 1]} : vector<3x32xf32> to vector<3x8xf32>
    %110 = arith.truncf %108 : vector<3x3xf32> to vector<3x3xbf16>
    %111 = arith.truncf %109 : vector<3x8xf32> to vector<3x8xbf16>
    %cst_77 = arith.constant dense<0.000000e+00> : vector<3x8xf32>
    %112 = tpu.matmul %110, %111, %cst_77 {dimension_numbers = #tpu.dot_dimension_numbers<[1], [0], [0], [1], [0, 0, 1, 1], [], []>} : vector<3x3xbf16>, vector<3x8xbf16>, vector<3x8xf32> -> vector<3x8xf32>
    %113 = vector.extract_strided_slice %50 {offsets = [0, 24], sizes = [3, 8], strides = [1, 1]} : vector<3x32xf32> to vector<3x8xf32>
    %114 = vector.extract_strided_slice %51 {offsets = [0, 24], sizes = [3, 8], strides = [1, 1]} : vector<3x32xf32> to vector<3x8xf32>
    %115 = arith.truncf %113 : vector<3x8xf32> to vector<3x8xbf16>
    %116 = arith.truncf %114 : vector<3x8xf32> to vector<3x8xbf16>
    %cst_78 = arith.constant dense<0.000000e+00> : vector<3x3xf32>
    %117 = tpu.matmul %115, %116, %cst_78 {dimension_numbers = #tpu.dot_dimension_numbers<[1], [1], [0], [0], [0, 0, 1, 0], [], []>} : vector<3x8xbf16>, vector<3x8xbf16>, vector<3x3xf32> -> vector<3x3xf32>
    %cst_79 = arith.constant 0.353553385 : f32
    %118 = vector.broadcast %cst_79 : f32 to vector<3x3xf32>
    %119 = arith.mulf %117, %118 : vector<3x3xf32>
    %cst_80 = arith.constant dense<0xFF800000> : vector<3xf32>
    %120 = vector.multi_reduction <maximumf>, %119, %cst_80 [1] : vector<3x3xf32> to vector<3xf32>
    %121 = vector.shape_cast %120 : vector<3xf32> to vector<3x1xf32>
    %122 = vector.broadcast %121 : vector<3x1xf32> to vector<3x3xf32>
    %123 = arith.subf %119, %122 : vector<3x3xf32>
    %124 = math.exp %123 : vector<3x3xf32>
    %cst_81 = arith.constant dense<0.000000e+00> : vector<3xf32>
    %125 = vector.multi_reduction <add>, %124, %cst_81 [1] : vector<3x3xf32> to vector<3xf32>
    %126 = vector.shape_cast %125 : vector<3xf32> to vector<3x1xf32>
    %127 = vector.broadcast %126 : vector<3x1xf32> to vector<3x3xf32>
    %128 = arith.divf %124, %127 : vector<3x3xf32>
    %129 = vector.extract_strided_slice %52 {offsets = [0, 24], sizes = [3, 8], strides = [1, 1]} : vector<3x32xf32> to vector<3x8xf32>
    %130 = arith.truncf %128 : vector<3x3xf32> to vector<3x3xbf16>
    %131 = arith.truncf %129 : vector<3x8xf32> to vector<3x8xbf16>
    %cst_82 = arith.constant dense<0.000000e+00> : vector<3x8xf32>
    %132 = tpu.matmul %130, %131, %cst_82 {dimension_numbers = #tpu.dot_dimension_numbers<[1], [0], [0], [1], [0, 0, 1, 1], [], []>} : vector<3x3xbf16>, vector<3x8xbf16>, vector<3x8xf32> -> vector<3x8xf32>
    %133 = tpu.concatenate %72, %92, %112, %132 in 1 : vector<3x8xf32>, vector<3x8xf32>, vector<3x8xf32>, vector<3x8xf32> -> vector<3x32xf32>
    %134 = vector.extract_strided_slice %49 {offsets = [3, 0], sizes = [3, 32], strides = [1, 1]} : vector<12x96xf32> to vector<3x32xf32>
    %135 = vector.extract_strided_slice %49 {offsets = [3, 32], sizes = [3, 32], strides = [1, 1]} : vector<12x96xf32> to vector<3x32xf32>
    %136 = vector.extract_strided_slice %49 {offsets = [3, 64], sizes = [3, 32], strides = [1, 1]} : vector<12x96xf32> to vector<3x32xf32>
    %137 = vector.extract_strided_slice %134 {offsets = [0, 0], sizes = [3, 8], strides = [1, 1]} : vector<3x32xf32> to vector<3x8xf32>
    %138 = vector.extract_strided_slice %135 {offsets = [0, 0], sizes = [3, 8], strides = [1, 1]} : vector<3x32xf32> to vector<3x8xf32>
    %139 = arith.truncf %137 : vector<3x8xf32> to vector<3x8xbf16>
    %140 = arith.truncf %138 : vector<3x8xf32> to vector<3x8xbf16>
    %cst_83 = arith.constant dense<0.000000e+00> : vector<3x3xf32>
    %141 = tpu.matmul %139, %140, %cst_83 {dimension_numbers = #tpu.dot_dimension_numbers<[1], [1], [0], [0], [0, 0, 1, 0], [], []>} : vector<3x8xbf16>, vector<3x8xbf16>, vector<3x3xf32> -> vector<3x3xf32>
    %cst_84 = arith.constant 0.353553385 : f32
    %142 = vector.broadcast %cst_84 : f32 to vector<3x3xf32>
    %143 = arith.mulf %141, %142 : vector<3x3xf32>
    %cst_85 = arith.constant dense<0xFF800000> : vector<3xf32>
    %144 = vector.multi_reduction <maximumf>, %143, %cst_85 [1] : vector<3x3xf32> to vector<3xf32>
    %145 = vector.shape_cast %144 : vector<3xf32> to vector<3x1xf32>
    %146 = vector.broadcast %145 : vector<3x1xf32> to vector<3x3xf32>
    %147 = arith.subf %143, %146 : vector<3x3xf32>
    %148 = math.exp %147 : vector<3x3xf32>
    %cst_86 = arith.constant dense<0.000000e+00> : vector<3xf32>
    %149 = vector.multi_reduction <add>, %148, %cst_86 [1] : vector<3x3xf32> to vector<3xf32>
    %150 = vector.shape_cast %149 : vector<3xf32> to vector<3x1xf32>
    %151 = vector.broadcast %150 : vector<3x1xf32> to vector<3x3xf32>
    %152 = arith.divf %148, %151 : vector<3x3xf32>
    %153 = vector.extract_strided_slice %136 {offsets = [0, 0], sizes = [3, 8], strides = [1, 1]} : vector<3x32xf32> to vector<3x8xf32>
    %154 = arith.truncf %152 : vector<3x3xf32> to vector<3x3xbf16>
    %155 = arith.truncf %153 : vector<3x8xf32> to vector<3x8xbf16>
    %cst_87 = arith.constant dense<0.000000e+00> : vector<3x8xf32>
    %156 = tpu.matmul %154, %155, %cst_87 {dimension_numbers = #tpu.dot_dimension_numbers<[1], [0], [0], [1], [0, 0, 1, 1], [], []>} : vector<3x3xbf16>, vector<3x8xbf16>, vector<3x8xf32> -> vector<3x8xf32>
    %157 = vector.extract_strided_slice %134 {offsets = [0, 8], sizes = [3, 8], strides = [1, 1]} : vector<3x32xf32> to vector<3x8xf32>
    %158 = vector.extract_strided_slice %135 {offsets = [0, 8], sizes = [3, 8], strides = [1, 1]} : vector<3x32xf32> to vector<3x8xf32>
    %159 = arith.truncf %157 : vector<3x8xf32> to vector<3x8xbf16>
    %160 = arith.truncf %158 : vector<3x8xf32> to vector<3x8xbf16>
    %cst_88 = arith.constant dense<0.000000e+00> : vector<3x3xf32>
    %161 = tpu.matmul %159, %160, %cst_88 {dimension_numbers = #tpu.dot_dimension_numbers<[1], [1], [0], [0], [0, 0, 1, 0], [], []>} : vector<3x8xbf16>, vector<3x8xbf16>, vector<3x3xf32> -> vector<3x3xf32>
    %cst_89 = arith.constant 0.353553385 : f32
    %162 = vector.broadcast %cst_89 : f32 to vector<3x3xf32>
    %163 = arith.mulf %161, %162 : vector<3x3xf32>
    %cst_90 = arith.constant dense<0xFF800000> : vector<3xf32>
    %164 = vector.multi_reduction <maximumf>, %163, %cst_90 [1] : vector<3x3xf32> to vector<3xf32>
    %165 = vector.shape_cast %164 : vector<3xf32> to vector<3x1xf32>
    %166 = vector.broadcast %165 : vector<3x1xf32> to vector<3x3xf32>
    %167 = arith.subf %163, %166 : vector<3x3xf32>
    %168 = math.exp %167 : vector<3x3xf32>
    %cst_91 = arith.constant dense<0.000000e+00> : vector<3xf32>
    %169 = vector.multi_reduction <add>, %168, %cst_91 [1] : vector<3x3xf32> to vector<3xf32>
    %170 = vector.shape_cast %169 : vector<3xf32> to vector<3x1xf32>
    %171 = vector.broadcast %170 : vector<3x1xf32> to vector<3x3xf32>
    %172 = arith.divf %168, %171 : vector<3x3xf32>
    %173 = vector.extract_strided_slice %136 {offsets = [0, 8], sizes = [3, 8], strides = [1, 1]} : vector<3x32xf32> to vector<3x8xf32>
    %174 = arith.truncf %172 : vector<3x3xf32> to vector<3x3xbf16>
    %175 = arith.truncf %173 : vector<3x8xf32> to vector<3x8xbf16>
    %cst_92 = arith.constant dense<0.000000e+00> : vector<3x8xf32>
    %176 = tpu.matmul %174, %175, %cst_92 {dimension_numbers = #tpu.dot_dimension_numbers<[1], [0], [0], [1], [0, 0, 1, 1], [], []>} : vector<3x3xbf16>, vector<3x8xbf16>, vector<3x8xf32> -> vector<3x8xf32>
    %177 = vector.extract_strided_slice %134 {offsets = [0, 16], sizes = [3, 8], strides = [1, 1]} : vector<3x32xf32> to vector<3x8xf32>
    %178 = vector.extract_strided_slice %135 {offsets = [0, 16], sizes = [3, 8], strides = [1, 1]} : vector<3x32xf32> to vector<3x8xf32>
    %179 = arith.truncf %177 : vector<3x8xf32> to vector<3x8xbf16>
    %180 = arith.truncf %178 : vector<3x8xf32> to vector<3x8xbf16>
    %cst_93 = arith.constant dense<0.000000e+00> : vector<3x3xf32>
    %181 = tpu.matmul %179, %180, %cst_93 {dimension_numbers = #tpu.dot_dimension_numbers<[1], [1], [0], [0], [0, 0, 1, 0], [], []>} : vector<3x8xbf16>, vector<3x8xbf16>, vector<3x3xf32> -> vector<3x3xf32>
    %cst_94 = arith.constant 0.353553385 : f32
    %182 = vector.broadcast %cst_94 : f32 to vector<3x3xf32>
    %183 = arith.mulf %181, %182 : vector<3x3xf32>
    %cst_95 = arith.constant dense<0xFF800000> : vector<3xf32>
    %184 = vector.multi_reduction <maximumf>, %183, %cst_95 [1] : vector<3x3xf32> to vector<3xf32>
    %185 = vector.shape_cast %184 : vector<3xf32> to vector<3x1xf32>
    %186 = vector.broadcast %185 : vector<3x1xf32> to vector<3x3xf32>
    %187 = arith.subf %183, %186 : vector<3x3xf32>
    %188 = math.exp %187 : vector<3x3xf32>
    %cst_96 = arith.constant dense<0.000000e+00> : vector<3xf32>
    %189 = vector.multi_reduction <add>, %188, %cst_96 [1] : vector<3x3xf32> to vector<3xf32>
    %190 = vector.shape_cast %189 : vector<3xf32> to vector<3x1xf32>
    %191 = vector.broadcast %190 : vector<3x1xf32> to vector<3x3xf32>
    %192 = arith.divf %188, %191 : vector<3x3xf32>
    %193 = vector.extract_strided_slice %136 {offsets = [0, 16], sizes = [3, 8], strides = [1, 1]} : vector<3x32xf32> to vector<3x8xf32>
    %194 = arith.truncf %192 : vector<3x3xf32> to vector<3x3xbf16>
    %195 = arith.truncf %193 : vector<3x8xf32> to vector<3x8xbf16>
    %cst_97 = arith.constant dense<0.000000e+00> : vector<3x8xf32>
    %196 = tpu.matmul %194, %195, %cst_97 {dimension_numbers = #tpu.dot_dimension_numbers<[1], [0], [0], [1], [0, 0, 1, 1], [], []>} : vector<3x3xbf16>, vector<3x8xbf16>, vector<3x8xf32> -> vector<3x8xf32>
    %197 = vector.extract_strided_slice %134 {offsets = [0, 24], sizes = [3, 8], strides = [1, 1]} : vector<3x32xf32> to vector<3x8xf32>
    %198 = vector.extract_strided_slice %135 {offsets = [0, 24], sizes = [3, 8], strides = [1, 1]} : vector<3x32xf32> to vector<3x8xf32>
    %199 = arith.truncf %197 : vector<3x8xf32> to vector<3x8xbf16>
    %200 = arith.truncf %198 : vector<3x8xf32> to vector<3x8xbf16>
    %cst_98 = arith.constant dense<0.000000e+00> : vector<3x3xf32>
    %201 = tpu.matmul %199, %200, %cst_98 {dimension_numbers = #tpu.dot_dimension_numbers<[1], [1], [0], [0], [0, 0, 1, 0], [], []>} : vector<3x8xbf16>, vector<3x8xbf16>, vector<3x3xf32> -> vector<3x3xf32>
    %cst_99 = arith.constant 0.353553385 : f32
    %202 = vector.broadcast %cst_99 : f32 to vector<3x3xf32>
    %203 = arith.mulf %201, %202 : vector<3x3xf32>
    %cst_100 = arith.constant dense<0xFF800000> : vector<3xf32>
    %204 = vector.multi_reduction <maximumf>, %203, %cst_100 [1] : vector<3x3xf32> to vector<3xf32>
    %205 = vector.shape_cast %204 : vector<3xf32> to vector<3x1xf32>
    %206 = vector.broadcast %205 : vector<3x1xf32> to vector<3x3xf32>
    %207 = arith.subf %203, %206 : vector<3x3xf32>
    %208 = math.exp %207 : vector<3x3xf32>
    %cst_101 = arith.constant dense<0.000000e+00> : vector<3xf32>
    %209 = vector.multi_reduction <add>, %208, %cst_101 [1] : vector<3x3xf32> to vector<3xf32>
    %210 = vector.shape_cast %209 : vector<3xf32> to vector<3x1xf32>
    %211 = vector.broadcast %210 : vector<3x1xf32> to vector<3x3xf32>
    %212 = arith.divf %208, %211 : vector<3x3xf32>
    %213 = vector.extract_strided_slice %136 {offsets = [0, 24], sizes = [3, 8], strides = [1, 1]} : vector<3x32xf32> to vector<3x8xf32>
    %214 = arith.truncf %212 : vector<3x3xf32> to vector<3x3xbf16>
    %215 = arith.truncf %213 : vector<3x8xf32> to vector<3x8xbf16>
    %cst_102 = arith.constant dense<0.000000e+00> : vector<3x8xf32>
    %216 = tpu.matmul %214, %215, %cst_102 {dimension_numbers = #tpu.dot_dimension_numbers<[1], [0], [0], [1], [0, 0, 1, 1], [], []>} : vector<3x3xbf16>, vector<3x8xbf16>, vector<3x8xf32> -> vector<3x8xf32>
    %217 = tpu.concatenate %156, %176, %196, %216 in 1 : vector<3x8xf32>, vector<3x8xf32>, vector<3x8xf32>, vector<3x8xf32> -> vector<3x32xf32>
    %218 = vector.extract_strided_slice %49 {offsets = [6, 0], sizes = [3, 32], strides = [1, 1]} : vector<12x96xf32> to vector<3x32xf32>
    %219 = vector.extract_strided_slice %49 {offsets = [6, 32], sizes = [3, 32], strides = [1, 1]} : vector<12x96xf32> to vector<3x32xf32>
    %220 = vector.extract_strided_slice %49 {offsets = [6, 64], sizes = [3, 32], strides = [1, 1]} : vector<12x96xf32> to vector<3x32xf32>
    %221 = vector.extract_strided_slice %218 {offsets = [0, 0], sizes = [3, 8], strides = [1, 1]} : vector<3x32xf32> to vector<3x8xf32>
    %222 = vector.extract_strided_slice %219 {offsets = [0, 0], sizes = [3, 8], strides = [1, 1]} : vector<3x32xf32> to vector<3x8xf32>
    %223 = arith.truncf %221 : vector<3x8xf32> to vector<3x8xbf16>
    %224 = arith.truncf %222 : vector<3x8xf32> to vector<3x8xbf16>
    %cst_103 = arith.constant dense<0.000000e+00> : vector<3x3xf32>
    %225 = tpu.matmul %223, %224, %cst_103 {dimension_numbers = #tpu.dot_dimension_numbers<[1], [1], [0], [0], [0, 0, 1, 0], [], []>} : vector<3x8xbf16>, vector<3x8xbf16>, vector<3x3xf32> -> vector<3x3xf32>
    %cst_104 = arith.constant 0.353553385 : f32
    %226 = vector.broadcast %cst_104 : f32 to vector<3x3xf32>
    %227 = arith.mulf %225, %226 : vector<3x3xf32>
    %cst_105 = arith.constant dense<0xFF800000> : vector<3xf32>
    %228 = vector.multi_reduction <maximumf>, %227, %cst_105 [1] : vector<3x3xf32> to vector<3xf32>
    %229 = vector.shape_cast %228 : vector<3xf32> to vector<3x1xf32>
    %230 = vector.broadcast %229 : vector<3x1xf32> to vector<3x3xf32>
    %231 = arith.subf %227, %230 : vector<3x3xf32>
    %232 = math.exp %231 : vector<3x3xf32>
    %cst_106 = arith.constant dense<0.000000e+00> : vector<3xf32>
    %233 = vector.multi_reduction <add>, %232, %cst_106 [1] : vector<3x3xf32> to vector<3xf32>
    %234 = vector.shape_cast %233 : vector<3xf32> to vector<3x1xf32>
    %235 = vector.broadcast %234 : vector<3x1xf32> to vector<3x3xf32>
    %236 = arith.divf %232, %235 : vector<3x3xf32>
    %237 = vector.extract_strided_slice %220 {offsets = [0, 0], sizes = [3, 8], strides = [1, 1]} : vector<3x32xf32> to vector<3x8xf32>
    %238 = arith.truncf %236 : vector<3x3xf32> to vector<3x3xbf16>
    %239 = arith.truncf %237 : vector<3x8xf32> to vector<3x8xbf16>
    %cst_107 = arith.constant dense<0.000000e+00> : vector<3x8xf32>
    %240 = tpu.matmul %238, %239, %cst_107 {dimension_numbers = #tpu.dot_dimension_numbers<[1], [0], [0], [1], [0, 0, 1, 1], [], []>} : vector<3x3xbf16>, vector<3x8xbf16>, vector<3x8xf32> -> vector<3x8xf32>
    %241 = vector.extract_strided_slice %218 {offsets = [0, 8], sizes = [3, 8], strides = [1, 1]} : vector<3x32xf32> to vector<3x8xf32>
    %242 = vector.extract_strided_slice %219 {offsets = [0, 8], sizes = [3, 8], strides = [1, 1]} : vector<3x32xf32> to vector<3x8xf32>
    %243 = arith.truncf %241 : vector<3x8xf32> to vector<3x8xbf16>
    %244 = arith.truncf %242 : vector<3x8xf32> to vector<3x8xbf16>
    %cst_108 = arith.constant dense<0.000000e+00> : vector<3x3xf32>
    %245 = tpu.matmul %243, %244, %cst_108 {dimension_numbers = #tpu.dot_dimension_numbers<[1], [1], [0], [0], [0, 0, 1, 0], [], []>} : vector<3x8xbf16>, vector<3x8xbf16>, vector<3x3xf32> -> vector<3x3xf32>
    %cst_109 = arith.constant 0.353553385 : f32
    %246 = vector.broadcast %cst_109 : f32 to vector<3x3xf32>
    %247 = arith.mulf %245, %246 : vector<3x3xf32>
    %cst_110 = arith.constant dense<0xFF800000> : vector<3xf32>
    %248 = vector.multi_reduction <maximumf>, %247, %cst_110 [1] : vector<3x3xf32> to vector<3xf32>
    %249 = vector.shape_cast %248 : vector<3xf32> to vector<3x1xf32>
    %250 = vector.broadcast %249 : vector<3x1xf32> to vector<3x3xf32>
    %251 = arith.subf %247, %250 : vector<3x3xf32>
    %252 = math.exp %251 : vector<3x3xf32>
    %cst_111 = arith.constant dense<0.000000e+00> : vector<3xf32>
    %253 = vector.multi_reduction <add>, %252, %cst_111 [1] : vector<3x3xf32> to vector<3xf32>
    %254 = vector.shape_cast %253 : vector<3xf32> to vector<3x1xf32>
    %255 = vector.broadcast %254 : vector<3x1xf32> to vector<3x3xf32>
    %256 = arith.divf %252, %255 : vector<3x3xf32>
    %257 = vector.extract_strided_slice %220 {offsets = [0, 8], sizes = [3, 8], strides = [1, 1]} : vector<3x32xf32> to vector<3x8xf32>
    %258 = arith.truncf %256 : vector<3x3xf32> to vector<3x3xbf16>
    %259 = arith.truncf %257 : vector<3x8xf32> to vector<3x8xbf16>
    %cst_112 = arith.constant dense<0.000000e+00> : vector<3x8xf32>
    %260 = tpu.matmul %258, %259, %cst_112 {dimension_numbers = #tpu.dot_dimension_numbers<[1], [0], [0], [1], [0, 0, 1, 1], [], []>} : vector<3x3xbf16>, vector<3x8xbf16>, vector<3x8xf32> -> vector<3x8xf32>
    %261 = vector.extract_strided_slice %218 {offsets = [0, 16], sizes = [3, 8], strides = [1, 1]} : vector<3x32xf32> to vector<3x8xf32>
    %262 = vector.extract_strided_slice %219 {offsets = [0, 16], sizes = [3, 8], strides = [1, 1]} : vector<3x32xf32> to vector<3x8xf32>
    %263 = arith.truncf %261 : vector<3x8xf32> to vector<3x8xbf16>
    %264 = arith.truncf %262 : vector<3x8xf32> to vector<3x8xbf16>
    %cst_113 = arith.constant dense<0.000000e+00> : vector<3x3xf32>
    %265 = tpu.matmul %263, %264, %cst_113 {dimension_numbers = #tpu.dot_dimension_numbers<[1], [1], [0], [0], [0, 0, 1, 0], [], []>} : vector<3x8xbf16>, vector<3x8xbf16>, vector<3x3xf32> -> vector<3x3xf32>
    %cst_114 = arith.constant 0.353553385 : f32
    %266 = vector.broadcast %cst_114 : f32 to vector<3x3xf32>
    %267 = arith.mulf %265, %266 : vector<3x3xf32>
    %cst_115 = arith.constant dense<0xFF800000> : vector<3xf32>
    %268 = vector.multi_reduction <maximumf>, %267, %cst_115 [1] : vector<3x3xf32> to vector<3xf32>
    %269 = vector.shape_cast %268 : vector<3xf32> to vector<3x1xf32>
    %270 = vector.broadcast %269 : vector<3x1xf32> to vector<3x3xf32>
    %271 = arith.subf %267, %270 : vector<3x3xf32>
    %272 = math.exp %271 : vector<3x3xf32>
    %cst_116 = arith.constant dense<0.000000e+00> : vector<3xf32>
    %273 = vector.multi_reduction <add>, %272, %cst_116 [1] : vector<3x3xf32> to vector<3xf32>
    %274 = vector.shape_cast %273 : vector<3xf32> to vector<3x1xf32>
    %275 = vector.broadcast %274 : vector<3x1xf32> to vector<3x3xf32>
    %276 = arith.divf %272, %275 : vector<3x3xf32>
    %277 = vector.extract_strided_slice %220 {offsets = [0, 16], sizes = [3, 8], strides = [1, 1]} : vector<3x32xf32> to vector<3x8xf32>
    %278 = arith.truncf %276 : vector<3x3xf32> to vector<3x3xbf16>
    %279 = arith.truncf %277 : vector<3x8xf32> to vector<3x8xbf16>
    %cst_117 = arith.constant dense<0.000000e+00> : vector<3x8xf32>
    %280 = tpu.matmul %278, %279, %cst_117 {dimension_numbers = #tpu.dot_dimension_numbers<[1], [0], [0], [1], [0, 0, 1, 1], [], []>} : vector<3x3xbf16>, vector<3x8xbf16>, vector<3x8xf32> -> vector<3x8xf32>
    %281 = vector.extract_strided_slice %218 {offsets = [0, 24], sizes = [3, 8], strides = [1, 1]} : vector<3x32xf32> to vector<3x8xf32>
    %282 = vector.extract_strided_slice %219 {offsets = [0, 24], sizes = [3, 8], strides = [1, 1]} : vector<3x32xf32> to vector<3x8xf32>
    %283 = arith.truncf %281 : vector<3x8xf32> to vector<3x8xbf16>
    %284 = arith.truncf %282 : vector<3x8xf32> to vector<3x8xbf16>
    %cst_118 = arith.constant dense<0.000000e+00> : vector<3x3xf32>
    %285 = tpu.matmul %283, %284, %cst_118 {dimension_numbers = #tpu.dot_dimension_numbers<[1], [1], [0], [0], [0, 0, 1, 0], [], []>} : vector<3x8xbf16>, vector<3x8xbf16>, vector<3x3xf32> -> vector<3x3xf32>
    %cst_119 = arith.constant 0.353553385 : f32
    %286 = vector.broadcast %cst_119 : f32 to vector<3x3xf32>
    %287 = arith.mulf %285, %286 : vector<3x3xf32>
    %cst_120 = arith.constant dense<0xFF800000> : vector<3xf32>
    %288 = vector.multi_reduction <maximumf>, %287, %cst_120 [1] : vector<3x3xf32> to vector<3xf32>
    %289 = vector.shape_cast %288 : vector<3xf32> to vector<3x1xf32>
    %290 = vector.broadcast %289 : vector<3x1xf32> to vector<3x3xf32>
    %291 = arith.subf %287, %290 : vector<3x3xf32>
    %292 = math.exp %291 : vector<3x3xf32>
    %cst_121 = arith.constant dense<0.000000e+00> : vector<3xf32>
    %293 = vector.multi_reduction <add>, %292, %cst_121 [1] : vector<3x3xf32> to vector<3xf32>
    %294 = vector.shape_cast %293 : vector<3xf32> to vector<3x1xf32>
    %295 = vector.broadcast %294 : vector<3x1xf32> to vector<3x3xf32>
    %296 = arith.divf %292, %295 : vector<3x3xf32>
    %297 = vector.extract_strided_slice %220 {offsets = [0, 24], sizes = [3, 8], strides = [1, 1]} : vector<3x32xf32> to vector<3x8xf32>
    %298 = arith.truncf %296 : vector<3x3xf32> to vector<3x3xbf16>
    %299 = arith.truncf %297 : vector<3x8xf32> to vector<3x8xbf16>
    %cst_122 = arith.constant dense<0.000000e+00> : vector<3x8xf32>
    %300 = tpu.matmul %298, %299, %cst_122 {dimension_numbers = #tpu.dot_dimension_numbers<[1], [0], [0], [1], [0, 0, 1, 1], [], []>} : vector<3x3xbf16>, vector<3x8xbf16>, vector<3x8xf32> -> vector<3x8xf32>
    %301 = tpu.concatenate %240, %260, %280, %300 in 1 : vector<3x8xf32>, vector<3x8xf32>, vector<3x8xf32>, vector<3x8xf32> -> vector<3x32xf32>
    %302 = vector.extract_strided_slice %49 {offsets = [9, 0], sizes = [3, 32], strides = [1, 1]} : vector<12x96xf32> to vector<3x32xf32>
    %303 = vector.extract_strided_slice %49 {offsets = [9, 32], sizes = [3, 32], strides = [1, 1]} : vector<12x96xf32> to vector<3x32xf32>
    %304 = vector.extract_strided_slice %49 {offsets = [9, 64], sizes = [3, 32], strides = [1, 1]} : vector<12x96xf32> to vector<3x32xf32>
    %305 = vector.extract_strided_slice %302 {offsets = [0, 0], sizes = [3, 8], strides = [1, 1]} : vector<3x32xf32> to vector<3x8xf32>
    %306 = vector.extract_strided_slice %303 {offsets = [0, 0], sizes = [3, 8], strides = [1, 1]} : vector<3x32xf32> to vector<3x8xf32>
    %307 = arith.truncf %305 : vector<3x8xf32> to vector<3x8xbf16>
    %308 = arith.truncf %306 : vector<3x8xf32> to vector<3x8xbf16>
    %cst_123 = arith.constant dense<0.000000e+00> : vector<3x3xf32>
    %309 = tpu.matmul %307, %308, %cst_123 {dimension_numbers = #tpu.dot_dimension_numbers<[1], [1], [0], [0], [0, 0, 1, 0], [], []>} : vector<3x8xbf16>, vector<3x8xbf16>, vector<3x3xf32> -> vector<3x3xf32>
    %cst_124 = arith.constant 0.353553385 : f32
    %310 = vector.broadcast %cst_124 : f32 to vector<3x3xf32>
    %311 = arith.mulf %309, %310 : vector<3x3xf32>
    %cst_125 = arith.constant dense<0xFF800000> : vector<3xf32>
    %312 = vector.multi_reduction <maximumf>, %311, %cst_125 [1] : vector<3x3xf32> to vector<3xf32>
    %313 = vector.shape_cast %312 : vector<3xf32> to vector<3x1xf32>
    %314 = vector.broadcast %313 : vector<3x1xf32> to vector<3x3xf32>
    %315 = arith.subf %311, %314 : vector<3x3xf32>
    %316 = math.exp %315 : vector<3x3xf32>
    %cst_126 = arith.constant dense<0.000000e+00> : vector<3xf32>
    %317 = vector.multi_reduction <add>, %316, %cst_126 [1] : vector<3x3xf32> to vector<3xf32>
    %318 = vector.shape_cast %317 : vector<3xf32> to vector<3x1xf32>
    %319 = vector.broadcast %318 : vector<3x1xf32> to vector<3x3xf32>
    %320 = arith.divf %316, %319 : vector<3x3xf32>
    %321 = vector.extract_strided_slice %304 {offsets = [0, 0], sizes = [3, 8], strides = [1, 1]} : vector<3x32xf32> to vector<3x8xf32>
    %322 = arith.truncf %320 : vector<3x3xf32> to vector<3x3xbf16>
    %323 = arith.truncf %321 : vector<3x8xf32> to vector<3x8xbf16>
    %cst_127 = arith.constant dense<0.000000e+00> : vector<3x8xf32>
    %324 = tpu.matmul %322, %323, %cst_127 {dimension_numbers = #tpu.dot_dimension_numbers<[1], [0], [0], [1], [0, 0, 1, 1], [], []>} : vector<3x3xbf16>, vector<3x8xbf16>, vector<3x8xf32> -> vector<3x8xf32>
    %325 = vector.extract_strided_slice %302 {offsets = [0, 8], sizes = [3, 8], strides = [1, 1]} : vector<3x32xf32> to vector<3x8xf32>
    %326 = vector.extract_strided_slice %303 {offsets = [0, 8], sizes = [3, 8], strides = [1, 1]} : vector<3x32xf32> to vector<3x8xf32>
    %327 = arith.truncf %325 : vector<3x8xf32> to vector<3x8xbf16>
    %328 = arith.truncf %326 : vector<3x8xf32> to vector<3x8xbf16>
    %cst_128 = arith.constant dense<0.000000e+00> : vector<3x3xf32>
    %329 = tpu.matmul %327, %328, %cst_128 {dimension_numbers = #tpu.dot_dimension_numbers<[1], [1], [0], [0], [0, 0, 1, 0], [], []>} : vector<3x8xbf16>, vector<3x8xbf16>, vector<3x3xf32> -> vector<3x3xf32>
    %cst_129 = arith.constant 0.353553385 : f32
    %330 = vector.broadcast %cst_129 : f32 to vector<3x3xf32>
    %331 = arith.mulf %329, %330 : vector<3x3xf32>
    %cst_130 = arith.constant dense<0xFF800000> : vector<3xf32>
    %332 = vector.multi_reduction <maximumf>, %331, %cst_130 [1] : vector<3x3xf32> to vector<3xf32>
    %333 = vector.shape_cast %332 : vector<3xf32> to vector<3x1xf32>
    %334 = vector.broadcast %333 : vector<3x1xf32> to vector<3x3xf32>
    %335 = arith.subf %331, %334 : vector<3x3xf32>
    %336 = math.exp %335 : vector<3x3xf32>
    %cst_131 = arith.constant dense<0.000000e+00> : vector<3xf32>
    %337 = vector.multi_reduction <add>, %336, %cst_131 [1] : vector<3x3xf32> to vector<3xf32>
    %338 = vector.shape_cast %337 : vector<3xf32> to vector<3x1xf32>
    %339 = vector.broadcast %338 : vector<3x1xf32> to vector<3x3xf32>
    %340 = arith.divf %336, %339 : vector<3x3xf32>
    %341 = vector.extract_strided_slice %304 {offsets = [0, 8], sizes = [3, 8], strides = [1, 1]} : vector<3x32xf32> to vector<3x8xf32>
    %342 = arith.truncf %340 : vector<3x3xf32> to vector<3x3xbf16>
    %343 = arith.truncf %341 : vector<3x8xf32> to vector<3x8xbf16>
    %cst_132 = arith.constant dense<0.000000e+00> : vector<3x8xf32>
    %344 = tpu.matmul %342, %343, %cst_132 {dimension_numbers = #tpu.dot_dimension_numbers<[1], [0], [0], [1], [0, 0, 1, 1], [], []>} : vector<3x3xbf16>, vector<3x8xbf16>, vector<3x8xf32> -> vector<3x8xf32>
    %345 = vector.extract_strided_slice %302 {offsets = [0, 16], sizes = [3, 8], strides = [1, 1]} : vector<3x32xf32> to vector<3x8xf32>
    %346 = vector.extract_strided_slice %303 {offsets = [0, 16], sizes = [3, 8], strides = [1, 1]} : vector<3x32xf32> to vector<3x8xf32>
    %347 = arith.truncf %345 : vector<3x8xf32> to vector<3x8xbf16>
    %348 = arith.truncf %346 : vector<3x8xf32> to vector<3x8xbf16>
    %cst_133 = arith.constant dense<0.000000e+00> : vector<3x3xf32>
    %349 = tpu.matmul %347, %348, %cst_133 {dimension_numbers = #tpu.dot_dimension_numbers<[1], [1], [0], [0], [0, 0, 1, 0], [], []>} : vector<3x8xbf16>, vector<3x8xbf16>, vector<3x3xf32> -> vector<3x3xf32>
    %cst_134 = arith.constant 0.353553385 : f32
    %350 = vector.broadcast %cst_134 : f32 to vector<3x3xf32>
    %351 = arith.mulf %349, %350 : vector<3x3xf32>
    %cst_135 = arith.constant dense<0xFF800000> : vector<3xf32>
    %352 = vector.multi_reduction <maximumf>, %351, %cst_135 [1] : vector<3x3xf32> to vector<3xf32>
    %353 = vector.shape_cast %352 : vector<3xf32> to vector<3x1xf32>
    %354 = vector.broadcast %353 : vector<3x1xf32> to vector<3x3xf32>
    %355 = arith.subf %351, %354 : vector<3x3xf32>
    %356 = math.exp %355 : vector<3x3xf32>
    %cst_136 = arith.constant dense<0.000000e+00> : vector<3xf32>
    %357 = vector.multi_reduction <add>, %356, %cst_136 [1] : vector<3x3xf32> to vector<3xf32>
    %358 = vector.shape_cast %357 : vector<3xf32> to vector<3x1xf32>
    %359 = vector.broadcast %358 : vector<3x1xf32> to vector<3x3xf32>
    %360 = arith.divf %356, %359 : vector<3x3xf32>
    %361 = vector.extract_strided_slice %304 {offsets = [0, 16], sizes = [3, 8], strides = [1, 1]} : vector<3x32xf32> to vector<3x8xf32>
    %362 = arith.truncf %360 : vector<3x3xf32> to vector<3x3xbf16>
    %363 = arith.truncf %361 : vector<3x8xf32> to vector<3x8xbf16>
    %cst_137 = arith.constant dense<0.000000e+00> : vector<3x8xf32>
    %364 = tpu.matmul %362, %363, %cst_137 {dimension_numbers = #tpu.dot_dimension_numbers<[1], [0], [0], [1], [0, 0, 1, 1], [], []>} : vector<3x3xbf16>, vector<3x8xbf16>, vector<3x8xf32> -> vector<3x8xf32>
    %365 = vector.extract_strided_slice %302 {offsets = [0, 24], sizes = [3, 8], strides = [1, 1]} : vector<3x32xf32> to vector<3x8xf32>
    %366 = vector.extract_strided_slice %303 {offsets = [0, 24], sizes = [3, 8], strides = [1, 1]} : vector<3x32xf32> to vector<3x8xf32>
    %367 = arith.truncf %365 : vector<3x8xf32> to vector<3x8xbf16>
    %368 = arith.truncf %366 : vector<3x8xf32> to vector<3x8xbf16>
    %cst_138 = arith.constant dense<0.000000e+00> : vector<3x3xf32>
    %369 = tpu.matmul %367, %368, %cst_138 {dimension_numbers = #tpu.dot_dimension_numbers<[1], [1], [0], [0], [0, 0, 1, 0], [], []>} : vector<3x8xbf16>, vector<3x8xbf16>, vector<3x3xf32> -> vector<3x3xf32>
    %cst_139 = arith.constant 0.353553385 : f32
    %370 = vector.broadcast %cst_139 : f32 to vector<3x3xf32>
    %371 = arith.mulf %369, %370 : vector<3x3xf32>
    %cst_140 = arith.constant dense<0xFF800000> : vector<3xf32>
    %372 = vector.multi_reduction <maximumf>, %371, %cst_140 [1] : vector<3x3xf32> to vector<3xf32>
    %373 = vector.shape_cast %372 : vector<3xf32> to vector<3x1xf32>
    %374 = vector.broadcast %373 : vector<3x1xf32> to vector<3x3xf32>
    %375 = arith.subf %371, %374 : vector<3x3xf32>
    %376 = math.exp %375 : vector<3x3xf32>
    %cst_141 = arith.constant dense<0.000000e+00> : vector<3xf32>
    %377 = vector.multi_reduction <add>, %376, %cst_141 [1] : vector<3x3xf32> to vector<3xf32>
    %378 = vector.shape_cast %377 : vector<3xf32> to vector<3x1xf32>
    %379 = vector.broadcast %378 : vector<3x1xf32> to vector<3x3xf32>
    %380 = arith.divf %376, %379 : vector<3x3xf32>
    %381 = vector.extract_strided_slice %304 {offsets = [0, 24], sizes = [3, 8], strides = [1, 1]} : vector<3x32xf32> to vector<3x8xf32>
    %382 = arith.truncf %380 : vector<3x3xf32> to vector<3x3xbf16>
    %383 = arith.truncf %381 : vector<3x8xf32> to vector<3x8xbf16>
    %cst_142 = arith.constant dense<0.000000e+00> : vector<3x8xf32>
    %384 = tpu.matmul %382, %383, %cst_142 {dimension_numbers = #tpu.dot_dimension_numbers<[1], [0], [0], [1], [0, 0, 1, 1], [], []>} : vector<3x3xbf16>, vector<3x8xbf16>, vector<3x8xf32> -> vector<3x8xf32>
    %385 = tpu.concatenate %324, %344, %364, %384 in 1 : vector<3x8xf32>, vector<3x8xf32>, vector<3x8xf32>, vector<3x8xf32> -> vector<3x32xf32>
    %386 = tpu.concatenate %133, %217, %301, %385 in 0 : vector<3x32xf32>, vector<3x32xf32>, vector<3x32xf32>, vector<3x32xf32> -> vector<12x32xf32>
    %387 = arith.truncf %386 : vector<12x32xf32> to vector<12x32xbf16>
    %cst_143 = arith.constant dense<0.000000e+00> : vector<12x32xf32>
    %388 = tpu.matmul %387, %9, %cst_143 {dimension_numbers = #tpu.dot_dimension_numbers<[1], [0], [0], [1], [0, 0, 1, 1], [], []>} : vector<12x32xbf16>, vector<32x32xbf16>, vector<12x32xf32> -> vector<12x32xf32>
    %389 = arith.addf %45, %388 : vector<12x32xf32>
    %390 = vector.broadcast %11 : vector<1x32xf32> to vector<12x32xf32>
    %391 = arith.addf %389, %390 : vector<12x32xf32>
    %cst_144 = arith.constant dense<0.000000e+00> : vector<12xf32>
    %392 = vector.multi_reduction <add>, %391, %cst_144 [1] : vector<12x32xf32> to vector<12xf32>
    %393 = vector.shape_cast %392 : vector<12xf32> to vector<12x1xf32>
    %cst_145 = arith.constant 3.200000e+01 : f32
    %394 = vector.broadcast %cst_145 : f32 to vector<12x1xf32>
    %395 = arith.divf %393, %394 : vector<12x1xf32>
    %396 = vector.broadcast %395 : vector<12x1xf32> to vector<12x32xf32>
    %397 = arith.subf %391, %396 : vector<12x32xf32>
    %398 = arith.mulf %397, %397 : vector<12x32xf32>
    %cst_146 = arith.constant dense<0.000000e+00> : vector<12xf32>
    %399 = vector.multi_reduction <add>, %398, %cst_146 [1] : vector<12x32xf32> to vector<12xf32>
    %400 = vector.shape_cast %399 : vector<12xf32> to vector<12x1xf32>
    %cst_147 = arith.constant 3.200000e+01 : f32
    %401 = vector.broadcast %cst_147 : f32 to vector<12x1xf32>
    %402 = arith.divf %400, %401 : vector<12x1xf32>
    %403 = vector.broadcast %395 : vector<12x1xf32> to vector<12x32xf32>
    %404 = arith.subf %391, %403 : vector<12x32xf32>
    %cst_148 = arith.constant 9.99999974E-6 : f32
    %405 = vector.broadcast %cst_148 : f32 to vector<12x1xf32>
    %406 = arith.addf %402, %405 : vector<12x1xf32>
    %407 = math.rsqrt %406 : vector<12x1xf32>
    %408 = vector.broadcast %407 : vector<12x1xf32> to vector<12x32xf32>
    %409 = arith.mulf %404, %408 : vector<12x32xf32>
    %410 = vector.broadcast %25 : vector<1x32xf32> to vector<12x32xf32>
    %411 = arith.mulf %409, %410 : vector<12x32xf32>
    %412 = vector.broadcast %27 : vector<1x32xf32> to vector<12x32xf32>
    %413 = arith.addf %411, %412 : vector<12x32xf32>
    %414 = vector.extract_strided_slice %413 {offsets = [2, 0], sizes = [1, 32], strides = [1, 1]} : vector<12x32xf32> to vector<1x32xf32>
    %415 = vector.extract_strided_slice %413 {offsets = [5, 0], sizes = [1, 32], strides = [1, 1]} : vector<12x32xf32> to vector<1x32xf32>
    %416 = vector.extract_strided_slice %413 {offsets = [8, 0], sizes = [1, 32], strides = [1, 1]} : vector<12x32xf32> to vector<1x32xf32>
    %417 = vector.extract_strided_slice %413 {offsets = [11, 0], sizes = [1, 32], strides = [1, 1]} : vector<12x32xf32> to vector<1x32xf32>
    %418 = tpu.concatenate %414, %415, %416, %417 in 0 : vector<1x32xf32>, vector<1x32xf32>, vector<1x32xf32>, vector<1x32xf32> -> vector<4x32xf32>
    %419 = arith.truncf %418 : vector<4x32xf32> to vector<4x32xbf16>
    %cst_149 = arith.constant dense<0.000000e+00> : vector<4x32xf32>
    %420 = tpu.matmul %419, %13, %cst_149 {dimension_numbers = #tpu.dot_dimension_numbers<[1], [0], [0], [1], [0, 0, 1, 1], [], []>} : vector<4x32xbf16>, vector<32x32xbf16>, vector<4x32xf32> -> vector<4x32xf32>
    %421 = vector.broadcast %15 : vector<1x32xf32> to vector<4x32xf32>
    %422 = arith.addf %420, %421 : vector<4x32xf32>
    %c0_150 = arith.constant 0 : index
    %c0_151 = arith.constant 0 : index
    %c0_152 = arith.constant 0 : index
    %423 = vector.load %arg32[%c0_150, %c0_151, %c0_152] : memref<1x4x32xf32, #tpu.memory_space<vmem>>, vector<1x4x32xf32>
    %424 = vector.shape_cast %423 : vector<1x4x32xf32> to vector<4x32xf32>
    %425 = arith.truncf %424 : vector<4x32xf32> to vector<4x32xbf16>
    %cst_153 = arith.constant dense<0.000000e+00> : vector<4x64xf32>
    %426 = tpu.matmul %425, %17, %cst_153 {dimension_numbers = #tpu.dot_dimension_numbers<[1], [0], [0], [1], [0, 0, 1, 1], [], []>} : vector<4x32xbf16>, vector<32x64xbf16>, vector<4x64xf32> -> vector<4x64xf32>
    %427 = vector.broadcast %19 : vector<1x64xf32> to vector<4x64xf32>
    %428 = arith.addf %426, %427 : vector<4x64xf32>
    %429 = vector.extract_strided_slice %428 {offsets = [0, 0], sizes = [4, 32], strides = [1, 1]} : vector<4x64xf32> to vector<4x32xf32>
    %430 = vector.extract_strided_slice %428 {offsets = [0, 32], sizes = [4, 32], strides = [1, 1]} : vector<4x64xf32> to vector<4x32xf32>
    %431 = vector.extract_strided_slice %422 {offsets = [0, 0], sizes = [4, 8], strides = [1, 1]} : vector<4x32xf32> to vector<4x8xf32>
    %432 = vector.extract_strided_slice %429 {offsets = [0, 0], sizes = [4, 8], strides = [1, 1]} : vector<4x32xf32> to vector<4x8xf32>
    %433 = arith.truncf %431 : vector<4x8xf32> to vector<4x8xbf16>
    %434 = arith.truncf %432 : vector<4x8xf32> to vector<4x8xbf16>
    %cst_154 = arith.constant dense<0.000000e+00> : vector<4x4xf32>
    %435 = tpu.matmul %433, %434, %cst_154 {dimension_numbers = #tpu.dot_dimension_numbers<[1], [1], [0], [0], [0, 0, 1, 0], [], []>} : vector<4x8xbf16>, vector<4x8xbf16>, vector<4x4xf32> -> vector<4x4xf32>
    %cst_155 = arith.constant 0.353553385 : f32
    %436 = vector.broadcast %cst_155 : f32 to vector<4x4xf32>
    %437 = arith.mulf %435, %436 : vector<4x4xf32>
    %cst_156 = arith.constant dense<0xFF800000> : vector<4xf32>
    %438 = vector.multi_reduction <maximumf>, %437, %cst_156 [1] : vector<4x4xf32> to vector<4xf32>
    %439 = vector.shape_cast %438 : vector<4xf32> to vector<4x1xf32>
    %440 = vector.broadcast %439 : vector<4x1xf32> to vector<4x4xf32>
    %441 = arith.subf %437, %440 : vector<4x4xf32>
    %442 = math.exp %441 : vector<4x4xf32>
    %cst_157 = arith.constant dense<0.000000e+00> : vector<4xf32>
    %443 = vector.multi_reduction <add>, %442, %cst_157 [1] : vector<4x4xf32> to vector<4xf32>
    %444 = vector.shape_cast %443 : vector<4xf32> to vector<4x1xf32>
    %445 = vector.broadcast %444 : vector<4x1xf32> to vector<4x4xf32>
    %446 = arith.divf %442, %445 : vector<4x4xf32>
    %447 = vector.extract_strided_slice %430 {offsets = [0, 0], sizes = [4, 8], strides = [1, 1]} : vector<4x32xf32> to vector<4x8xf32>
    %448 = arith.truncf %446 : vector<4x4xf32> to vector<4x4xbf16>
    %449 = arith.truncf %447 : vector<4x8xf32> to vector<4x8xbf16>
    %cst_158 = arith.constant dense<0.000000e+00> : vector<4x8xf32>
    %450 = tpu.matmul %448, %449, %cst_158 {dimension_numbers = #tpu.dot_dimension_numbers<[1], [0], [0], [1], [0, 0, 1, 1], [], []>} : vector<4x4xbf16>, vector<4x8xbf16>, vector<4x8xf32> -> vector<4x8xf32>
    %451 = vector.extract_strided_slice %422 {offsets = [0, 8], sizes = [4, 8], strides = [1, 1]} : vector<4x32xf32> to vector<4x8xf32>
    %452 = vector.extract_strided_slice %429 {offsets = [0, 8], sizes = [4, 8], strides = [1, 1]} : vector<4x32xf32> to vector<4x8xf32>
    %453 = arith.truncf %451 : vector<4x8xf32> to vector<4x8xbf16>
    %454 = arith.truncf %452 : vector<4x8xf32> to vector<4x8xbf16>
    %cst_159 = arith.constant dense<0.000000e+00> : vector<4x4xf32>
    %455 = tpu.matmul %453, %454, %cst_159 {dimension_numbers = #tpu.dot_dimension_numbers<[1], [1], [0], [0], [0, 0, 1, 0], [], []>} : vector<4x8xbf16>, vector<4x8xbf16>, vector<4x4xf32> -> vector<4x4xf32>
    %cst_160 = arith.constant 0.353553385 : f32
    %456 = vector.broadcast %cst_160 : f32 to vector<4x4xf32>
    %457 = arith.mulf %455, %456 : vector<4x4xf32>
    %cst_161 = arith.constant dense<0xFF800000> : vector<4xf32>
    %458 = vector.multi_reduction <maximumf>, %457, %cst_161 [1] : vector<4x4xf32> to vector<4xf32>
    %459 = vector.shape_cast %458 : vector<4xf32> to vector<4x1xf32>
    %460 = vector.broadcast %459 : vector<4x1xf32> to vector<4x4xf32>
    %461 = arith.subf %457, %460 : vector<4x4xf32>
    %462 = math.exp %461 : vector<4x4xf32>
    %cst_162 = arith.constant dense<0.000000e+00> : vector<4xf32>
    %463 = vector.multi_reduction <add>, %462, %cst_162 [1] : vector<4x4xf32> to vector<4xf32>
    %464 = vector.shape_cast %463 : vector<4xf32> to vector<4x1xf32>
    %465 = vector.broadcast %464 : vector<4x1xf32> to vector<4x4xf32>
    %466 = arith.divf %462, %465 : vector<4x4xf32>
    %467 = vector.extract_strided_slice %430 {offsets = [0, 8], sizes = [4, 8], strides = [1, 1]} : vector<4x32xf32> to vector<4x8xf32>
    %468 = arith.truncf %466 : vector<4x4xf32> to vector<4x4xbf16>
    %469 = arith.truncf %467 : vector<4x8xf32> to vector<4x8xbf16>
    %cst_163 = arith.constant dense<0.000000e+00> : vector<4x8xf32>
    %470 = tpu.matmul %468, %469, %cst_163 {dimension_numbers = #tpu.dot_dimension_numbers<[1], [0], [0], [1], [0, 0, 1, 1], [], []>} : vector<4x4xbf16>, vector<4x8xbf16>, vector<4x8xf32> -> vector<4x8xf32>
    %471 = vector.extract_strided_slice %422 {offsets = [0, 16], sizes = [4, 8], strides = [1, 1]} : vector<4x32xf32> to vector<4x8xf32>
    %472 = vector.extract_strided_slice %429 {offsets = [0, 16], sizes = [4, 8], strides = [1, 1]} : vector<4x32xf32> to vector<4x8xf32>
    %473 = arith.truncf %471 : vector<4x8xf32> to vector<4x8xbf16>
    %474 = arith.truncf %472 : vector<4x8xf32> to vector<4x8xbf16>
    %cst_164 = arith.constant dense<0.000000e+00> : vector<4x4xf32>
    %475 = tpu.matmul %473, %474, %cst_164 {dimension_numbers = #tpu.dot_dimension_numbers<[1], [1], [0], [0], [0, 0, 1, 0], [], []>} : vector<4x8xbf16>, vector<4x8xbf16>, vector<4x4xf32> -> vector<4x4xf32>
    %cst_165 = arith.constant 0.353553385 : f32
    %476 = vector.broadcast %cst_165 : f32 to vector<4x4xf32>
    %477 = arith.mulf %475, %476 : vector<4x4xf32>
    %cst_166 = arith.constant dense<0xFF800000> : vector<4xf32>
    %478 = vector.multi_reduction <maximumf>, %477, %cst_166 [1] : vector<4x4xf32> to vector<4xf32>
    %479 = vector.shape_cast %478 : vector<4xf32> to vector<4x1xf32>
    %480 = vector.broadcast %479 : vector<4x1xf32> to vector<4x4xf32>
    %481 = arith.subf %477, %480 : vector<4x4xf32>
    %482 = math.exp %481 : vector<4x4xf32>
    %cst_167 = arith.constant dense<0.000000e+00> : vector<4xf32>
    %483 = vector.multi_reduction <add>, %482, %cst_167 [1] : vector<4x4xf32> to vector<4xf32>
    %484 = vector.shape_cast %483 : vector<4xf32> to vector<4x1xf32>
    %485 = vector.broadcast %484 : vector<4x1xf32> to vector<4x4xf32>
    %486 = arith.divf %482, %485 : vector<4x4xf32>
    %487 = vector.extract_strided_slice %430 {offsets = [0, 16], sizes = [4, 8], strides = [1, 1]} : vector<4x32xf32> to vector<4x8xf32>
    %488 = arith.truncf %486 : vector<4x4xf32> to vector<4x4xbf16>
    %489 = arith.truncf %487 : vector<4x8xf32> to vector<4x8xbf16>
    %cst_168 = arith.constant dense<0.000000e+00> : vector<4x8xf32>
    %490 = tpu.matmul %488, %489, %cst_168 {dimension_numbers = #tpu.dot_dimension_numbers<[1], [0], [0], [1], [0, 0, 1, 1], [], []>} : vector<4x4xbf16>, vector<4x8xbf16>, vector<4x8xf32> -> vector<4x8xf32>
    %491 = vector.extract_strided_slice %422 {offsets = [0, 24], sizes = [4, 8], strides = [1, 1]} : vector<4x32xf32> to vector<4x8xf32>
    %492 = vector.extract_strided_slice %429 {offsets = [0, 24], sizes = [4, 8], strides = [1, 1]} : vector<4x32xf32> to vector<4x8xf32>
    %493 = arith.truncf %491 : vector<4x8xf32> to vector<4x8xbf16>
    %494 = arith.truncf %492 : vector<4x8xf32> to vector<4x8xbf16>
    %cst_169 = arith.constant dense<0.000000e+00> : vector<4x4xf32>
    %495 = tpu.matmul %493, %494, %cst_169 {dimension_numbers = #tpu.dot_dimension_numbers<[1], [1], [0], [0], [0, 0, 1, 0], [], []>} : vector<4x8xbf16>, vector<4x8xbf16>, vector<4x4xf32> -> vector<4x4xf32>
    %cst_170 = arith.constant 0.353553385 : f32
    %496 = vector.broadcast %cst_170 : f32 to vector<4x4xf32>
    %497 = arith.mulf %495, %496 : vector<4x4xf32>
    %cst_171 = arith.constant dense<0xFF800000> : vector<4xf32>
    %498 = vector.multi_reduction <maximumf>, %497, %cst_171 [1] : vector<4x4xf32> to vector<4xf32>
    %499 = vector.shape_cast %498 : vector<4xf32> to vector<4x1xf32>
    %500 = vector.broadcast %499 : vector<4x1xf32> to vector<4x4xf32>
    %501 = arith.subf %497, %500 : vector<4x4xf32>
    %502 = math.exp %501 : vector<4x4xf32>
    %cst_172 = arith.constant dense<0.000000e+00> : vector<4xf32>
    %503 = vector.multi_reduction <add>, %502, %cst_172 [1] : vector<4x4xf32> to vector<4xf32>
    %504 = vector.shape_cast %503 : vector<4xf32> to vector<4x1xf32>
    %505 = vector.broadcast %504 : vector<4x1xf32> to vector<4x4xf32>
    %506 = arith.divf %502, %505 : vector<4x4xf32>
    %507 = vector.extract_strided_slice %430 {offsets = [0, 24], sizes = [4, 8], strides = [1, 1]} : vector<4x32xf32> to vector<4x8xf32>
    %508 = arith.truncf %506 : vector<4x4xf32> to vector<4x4xbf16>
    %509 = arith.truncf %507 : vector<4x8xf32> to vector<4x8xbf16>
    %cst_173 = arith.constant dense<0.000000e+00> : vector<4x8xf32>
    %510 = tpu.matmul %508, %509, %cst_173 {dimension_numbers = #tpu.dot_dimension_numbers<[1], [0], [0], [1], [0, 0, 1, 1], [], []>} : vector<4x4xbf16>, vector<4x8xbf16>, vector<4x8xf32> -> vector<4x8xf32>
    %511 = tpu.concatenate %450, %470, %490, %510 in 1 : vector<4x8xf32>, vector<4x8xf32>, vector<4x8xf32>, vector<4x8xf32> -> vector<4x32xf32>
    %512 = arith.truncf %511 : vector<4x32xf32> to vector<4x32xbf16>
    %cst_174 = arith.constant dense<0.000000e+00> : vector<4x32xf32>
    %513 = tpu.matmul %512, %21, %cst_174 {dimension_numbers = #tpu.dot_dimension_numbers<[1], [0], [0], [1], [0, 0, 1, 1], [], []>} : vector<4x32xbf16>, vector<32x32xbf16>, vector<4x32xf32> -> vector<4x32xf32>
    %514 = arith.addf %418, %513 : vector<4x32xf32>
    %515 = vector.broadcast %23 : vector<1x32xf32> to vector<4x32xf32>
    %516 = arith.addf %514, %515 : vector<4x32xf32>
    %cst_175 = arith.constant dense<0.000000e+00> : vector<4xf32>
    %517 = vector.multi_reduction <add>, %516, %cst_175 [1] : vector<4x32xf32> to vector<4xf32>
    %518 = vector.shape_cast %517 : vector<4xf32> to vector<4x1xf32>
    %cst_176 = arith.constant 3.200000e+01 : f32
    %519 = vector.broadcast %cst_176 : f32 to vector<4x1xf32>
    %520 = arith.divf %518, %519 : vector<4x1xf32>
    %521 = vector.broadcast %520 : vector<4x1xf32> to vector<4x32xf32>
    %522 = arith.subf %516, %521 : vector<4x32xf32>
    %523 = arith.mulf %522, %522 : vector<4x32xf32>
    %cst_177 = arith.constant dense<0.000000e+00> : vector<4xf32>
    %524 = vector.multi_reduction <add>, %523, %cst_177 [1] : vector<4x32xf32> to vector<4xf32>
    %525 = vector.shape_cast %524 : vector<4xf32> to vector<4x1xf32>
    %cst_178 = arith.constant 3.200000e+01 : f32
    %526 = vector.broadcast %cst_178 : f32 to vector<4x1xf32>
    %527 = arith.divf %525, %526 : vector<4x1xf32>
    %528 = vector.broadcast %520 : vector<4x1xf32> to vector<4x32xf32>
    %529 = arith.subf %516, %528 : vector<4x32xf32>
    %cst_179 = arith.constant 9.99999974E-6 : f32
    %530 = vector.broadcast %cst_179 : f32 to vector<4x1xf32>
    %531 = arith.addf %527, %530 : vector<4x1xf32>
    %532 = math.rsqrt %531 : vector<4x1xf32>
    %533 = vector.broadcast %532 : vector<4x1xf32> to vector<4x32xf32>
    %534 = arith.mulf %529, %533 : vector<4x32xf32>
    %535 = vector.broadcast %29 : vector<1x32xf32> to vector<4x32xf32>
    %536 = arith.mulf %534, %535 : vector<4x32xf32>
    %537 = vector.broadcast %31 : vector<1x32xf32> to vector<4x32xf32>
    %538 = arith.addf %536, %537 : vector<4x32xf32>
    %539 = vector.extract_strided_slice %413 {offsets = [0, 0], sizes = [2, 32], strides = [1, 1]} : vector<12x32xf32> to vector<2x32xf32>
    %540 = vector.extract_strided_slice %538 {offsets = [0, 0], sizes = [1, 32], strides = [1, 1]} : vector<4x32xf32> to vector<1x32xf32>
    %541 = vector.extract_strided_slice %413 {offsets = [3, 0], sizes = [2, 32], strides = [1, 1]} : vector<12x32xf32> to vector<2x32xf32>
    %542 = vector.extract_strided_slice %538 {offsets = [1, 0], sizes = [1, 32], strides = [1, 1]} : vector<4x32xf32> to vector<1x32xf32>
    %543 = vector.extract_strided_slice %413 {offsets = [6, 0], sizes = [2, 32], strides = [1, 1]} : vector<12x32xf32> to vector<2x32xf32>
    %544 = vector.extract_strided_slice %538 {offsets = [2, 0], sizes = [1, 32], strides = [1, 1]} : vector<4x32xf32> to vector<1x32xf32>
    %545 = vector.extract_strided_slice %413 {offsets = [9, 0], sizes = [2, 32], strides = [1, 1]} : vector<12x32xf32> to vector<2x32xf32>
    %546 = vector.extract_strided_slice %538 {offsets = [3, 0], sizes = [1, 32], strides = [1, 1]} : vector<4x32xf32> to vector<1x32xf32>
    %547 = tpu.concatenate %539, %540, %541, %542, %543, %544, %545, %546 in 0 : vector<2x32xf32>, vector<1x32xf32>, vector<2x32xf32>, vector<1x32xf32>, vector<2x32xf32>, vector<1x32xf32>, vector<2x32xf32>, vector<1x32xf32> -> vector<12x32xf32>
    %548 = arith.truncf %547 : vector<12x32xf32> to vector<12x32xbf16>
    %cst_180 = arith.constant dense<0.000000e+00> : vector<12x64xf32>
    %549 = tpu.matmul %548, %37, %cst_180 {dimension_numbers = #tpu.dot_dimension_numbers<[1], [0], [0], [1], [0, 0, 1, 1], [], []>} : vector<12x32xbf16>, vector<32x64xbf16>, vector<12x64xf32> -> vector<12x64xf32>
    %550 = vector.broadcast %39 : vector<1x64xf32> to vector<12x64xf32>
    %551 = arith.addf %549, %550 : vector<12x64xf32>
    %cst_181 = arith.constant 0.000000e+00 : f32
    %552 = vector.broadcast %cst_181 : f32 to vector<12x64xf32>
    %553 = arith.maximumf %551, %552 : vector<12x64xf32>
    %554 = arith.truncf %553 : vector<12x64xf32> to vector<12x64xbf16>
    %cst_182 = arith.constant dense<0.000000e+00> : vector<12x32xf32>
    %555 = tpu.matmul %554, %41, %cst_182 {dimension_numbers = #tpu.dot_dimension_numbers<[1], [0], [0], [1], [0, 0, 1, 1], [], []>} : vector<12x64xbf16>, vector<64x32xbf16>, vector<12x32xf32> -> vector<12x32xf32>
    %556 = vector.broadcast %43 : vector<1x32xf32> to vector<12x32xf32>
    %557 = arith.addf %555, %556 : vector<12x32xf32>
    %558 = arith.addf %547, %557 : vector<12x32xf32>
    %cst_183 = arith.constant dense<0.000000e+00> : vector<12xf32>
    %559 = vector.multi_reduction <add>, %558, %cst_183 [1] : vector<12x32xf32> to vector<12xf32>
    %560 = vector.shape_cast %559 : vector<12xf32> to vector<12x1xf32>
    %cst_184 = arith.constant 3.200000e+01 : f32
    %561 = vector.broadcast %cst_184 : f32 to vector<12x1xf32>
    %562 = arith.divf %560, %561 : vector<12x1xf32>
    %563 = vector.broadcast %562 : vector<12x1xf32> to vector<12x32xf32>
    %564 = arith.subf %558, %563 : vector<12x32xf32>
    %565 = arith.mulf %564, %564 : vector<12x32xf32>
    %cst_185 = arith.constant dense<0.000000e+00> : vector<12xf32>
    %566 = vector.multi_reduction <add>, %565, %cst_185 [1] : vector<12x32xf32> to vector<12xf32>
    %567 = vector.shape_cast %566 : vector<12xf32> to vector<12x1xf32>
    %cst_186 = arith.constant 3.200000e+01 : f32
    %568 = vector.broadcast %cst_186 : f32 to vector<12x1xf32>
    %569 = arith.divf %567, %568 : vector<12x1xf32>
    %570 = vector.broadcast %562 : vector<12x1xf32> to vector<12x32xf32>
    %571 = arith.subf %558, %570 : vector<12x32xf32>
    %cst_187 = arith.constant 9.99999974E-6 : f32
    %572 = vector.broadcast %cst_187 : f32 to vector<12x1xf32>
    %573 = arith.addf %569, %572 : vector<12x1xf32>
    %574 = math.rsqrt %573 : vector<12x1xf32>
    %575 = vector.broadcast %574 : vector<12x1xf32> to vector<12x32xf32>
    %576 = arith.mulf %571, %575 : vector<12x32xf32>
    %577 = vector.broadcast %33 : vector<1x32xf32> to vector<12x32xf32>
    %578 = arith.mulf %576, %577 : vector<12x32xf32>
    %579 = vector.broadcast %35 : vector<1x32xf32> to vector<12x32xf32>
    %580 = arith.addf %578, %579 : vector<12x32xf32>
    %581 = arith.extui %0 : i1 to i32
    %c0_i32_188 = arith.constant 0 : i32
    %582 = arith.cmpi ne, %581, %c0_i32_188 : i32
    scf.if %582 {
      %c0_190 = arith.constant 0 : index
      %c0_191 = arith.constant 0 : index
      %586 = vector.load %arg29[%c0_190, %c0_191] : memref<1x32xf32, #tpu.memory_space<vmem>>, vector<1x32xf32>
      %c0_192 = arith.constant 0 : index
      %c0_193 = arith.constant 0 : index
      %587 = vector.load %arg30[%c0_192, %c0_193] : memref<1x32xf32, #tpu.memory_space<vmem>>, vector<1x32xf32>
      %cst_194 = arith.constant dense<0.000000e+00> : vector<12xf32>
      %588 = vector.multi_reduction <add>, %580, %cst_194 [1] : vector<12x32xf32> to vector<12xf32>
      %589 = vector.shape_cast %588 : vector<12xf32> to vector<12x1xf32>
      %cst_195 = arith.constant 3.200000e+01 : f32
      %590 = vector.broadcast %cst_195 : f32 to vector<12x1xf32>
      %591 = arith.divf %589, %590 : vector<12x1xf32>
      %592 = vector.broadcast %591 : vector<12x1xf32> to vector<12x32xf32>
      %593 = arith.subf %580, %592 : vector<12x32xf32>
      %594 = arith.mulf %593, %593 : vector<12x32xf32>
      %cst_196 = arith.constant dense<0.000000e+00> : vector<12xf32>
      %595 = vector.multi_reduction <add>, %594, %cst_196 [1] : vector<12x32xf32> to vector<12xf32>
      %596 = vector.shape_cast %595 : vector<12xf32> to vector<12x1xf32>
      %cst_197 = arith.constant 3.200000e+01 : f32
      %597 = vector.broadcast %cst_197 : f32 to vector<12x1xf32>
      %598 = arith.divf %596, %597 : vector<12x1xf32>
      %599 = vector.broadcast %591 : vector<12x1xf32> to vector<12x32xf32>
      %600 = arith.subf %580, %599 : vector<12x32xf32>
      %cst_198 = arith.constant 9.99999974E-6 : f32
      %601 = vector.broadcast %cst_198 : f32 to vector<12x1xf32>
      %602 = arith.addf %598, %601 : vector<12x1xf32>
      %603 = math.rsqrt %602 : vector<12x1xf32>
      %604 = vector.broadcast %603 : vector<12x1xf32> to vector<12x32xf32>
      %605 = arith.mulf %600, %604 : vector<12x32xf32>
      %606 = vector.broadcast %586 : vector<1x32xf32> to vector<12x32xf32>
      %607 = arith.mulf %605, %606 : vector<12x32xf32>
      %608 = vector.broadcast %587 : vector<1x32xf32> to vector<12x32xf32>
      %609 = arith.addf %607, %608 : vector<12x32xf32>
      %c0_199 = arith.constant 0 : index
      %c0_200 = arith.constant 0 : index
      %c0_201 = arith.constant 0 : index
      %610 = vector.load %arg31[%c0_199, %c0_200, %c0_201] : memref<1x12x32xf32, #tpu.memory_space<vmem>>, vector<1x12x32xf32>
      %611 = vector.shape_cast %610 : vector<1x12x32xf32> to vector<12x32xf32>
      %612 = vector.shape_cast %609 : vector<12x32xf32> to vector<1x12x32xf32>
      tpu.vector_store %arg31[%c0_199, %c0_200, %c0_201], %612 {strides = array<i32>} : memref<1x12x32xf32, #tpu.memory_space<vmem>>, vector<1x12x32xf32>,
    } else {
    }
    %true = arith.constant true
    %583 = arith.xori %0, %true : i1
    %584 = arith.extui %583 : i1 to i32
    %c0_i32_189 = arith.constant 0 : i32
    %585 = arith.cmpi ne, %584, %c0_i32_189 : i32
    scf.if %585 {
      %c0_190 = arith.constant 0 : index
      %c0_191 = arith.constant 0 : index
      %c0_192 = arith.constant 0 : index
      %586 = vector.load %arg31[%c0_190, %c0_191, %c0_192] : memref<1x12x32xf32, #tpu.memory_space<vmem>>, vector<1x12x32xf32>
      %587 = vector.shape_cast %586 : vector<1x12x32xf32> to vector<12x32xf32>
      %588 = vector.shape_cast %580 : vector<12x32xf32> to vector<1x12x32xf32>
      tpu.vector_store %arg31[%c0_190, %c0_191, %c0_192], %588 {strides = array<i32>} : memref<1x12x32xf32, #tpu.memory_space<vmem>>, vector<1x12x32xf32>,
    } else {
    }
    return
  }
  func.func @transform_0(%arg0: i32, %arg1: i32) -> (i32, i32, i32) {
    %c0_i32 = arith.constant 0 : i32
    %c0_i32_0 = arith.constant 0 : i32
    %c0_i32_1 = arith.constant 0 : i32
    return %arg0, %c0_i32, %c0_i32_0 : i32, i32, i32
  }
  func.func @transform_1(%arg0: i32, %arg1: i32) -> (i32, i32, i32) {
    %c0_i32 = arith.constant 0 : i32
    %c0_i32_0 = arith.constant 0 : i32
    %c0_i32_1 = arith.constant 0 : i32
    return %arg0, %c0_i32, %c0_i32_0 : i32, i32, i32
  }
  func.func @transform_2(%arg0: i32, %arg1: i32) -> (i32, i32) {
    %c0_i32 = arith.constant 0 : i32
    %c0_i32_0 = arith.constant 0 : i32
    %c0_i32_1 = arith.constant 0 : i32
    return %c0_i32, %c0_i32_0 : i32, i32
  }
  func.func @transform_3(%arg0: i32, %arg1: i32) -> (i32, i32) {
    %c0_i32 = arith.constant 0 : i32
    %c0_i32_0 = arith.constant 0 : i32
    %c0_i32_1 = arith.constant 0 : i32
    return %c0_i32, %c0_i32_0 : i32, i32
  }
  func.func @transform_4(%arg0: i32, %arg1: i32) -> (i32, i32) {
    %c0_i32 = arith.constant 0 : i32
    %c0_i32_0 = arith.constant 0 : i32
    %c0_i32_1 = arith.constant 0 : i32
    return %c0_i32, %c0_i32_0 : i32, i32
  }
  func.func @transform_5(%arg0: i32, %arg1: i32) -> (i32, i32) {
    %c0_i32 = arith.constant 0 : i32
    %c0_i32_0 = arith.constant 0 : i32
    %c0_i32_1 = arith.constant 0 : i32
    return %c0_i32, %c0_i32_0 : i32, i32
  }
  func.func @transform_6(%arg0: i32, %arg1: i32) -> (i32, i32) {
    %c0_i32 = arith.constant 0 : i32
    %c0_i32_0 = arith.constant 0 : i32
    %c0_i32_1 = arith.constant 0 : i32
    return %c0_i32, %c0_i32_0 : i32, i32
  }
  func.func @transform_7(%arg0: i32, %arg1: i32) -> (i32, i32, i32) {
    %c0_i32 = arith.constant 0 : i32
    %c0_i32_0 = arith.constant 0 : i32
    %c0_i32_1 = arith.constant 0 : i32
    return %arg1, %c0_i32, %c0_i32_0 : i32, i32, i32
  }
  func.func @transform_8(%arg0: i32, %arg1: i32) -> (i32, i32, i32) {
    %c0_i32 = arith.constant 0 : i32
    %c0_i32_0 = arith.constant 0 : i32
    %c0_i32_1 = arith.constant 0 : i32
    return %arg1, %c0_i32, %c0_i32_0 : i32, i32, i32
  }
  func.func @transform_9(%arg0: i32, %arg1: i32) -> (i32, i32, i32) {
    %c0_i32 = arith.constant 0 : i32
    %c0_i32_0 = arith.constant 0 : i32
    %c0_i32_1 = arith.constant 0 : i32
    return %arg1, %c0_i32, %c0_i32_0 : i32, i32, i32
  }
  func.func @transform_10(%arg0: i32, %arg1: i32) -> (i32, i32, i32) {
    %c0_i32 = arith.constant 0 : i32
    %c0_i32_0 = arith.constant 0 : i32
    %c0_i32_1 = arith.constant 0 : i32
    return %arg1, %c0_i32, %c0_i32_0 : i32, i32, i32
  }
  func.func @transform_11(%arg0: i32, %arg1: i32) -> (i32, i32, i32) {
    %c0_i32 = arith.constant 0 : i32
    %c0_i32_0 = arith.constant 0 : i32
    %c0_i32_1 = arith.constant 0 : i32
    return %arg1, %c0_i32, %c0_i32_0 : i32, i32, i32
  }
  func.func @transform_12(%arg0: i32, %arg1: i32) -> (i32, i32, i32) {
    %c0_i32 = arith.constant 0 : i32
    %c0_i32_0 = arith.constant 0 : i32
    %c0_i32_1 = arith.constant 0 : i32
    return %arg1, %c0_i32, %c0_i32_0 : i32, i32, i32
  }
  func.func @transform_13(%arg0: i32, %arg1: i32) -> (i32, i32, i32) {
    %c0_i32 = arith.constant 0 : i32
    %c0_i32_0 = arith.constant 0 : i32
    %c0_i32_1 = arith.constant 0 : i32
    return %arg1, %c0_i32, %c0_i32_0 : i32, i32, i32
  }
  func.func @transform_14(%arg0: i32, %arg1: i32) -> (i32, i32, i32) {
    %c0_i32 = arith.constant 0 : i32
    %c0_i32_0 = arith.constant 0 : i32
    %c0_i32_1 = arith.constant 0 : i32
    return %arg1, %c0_i32, %c0_i32_0 : i32, i32, i32
  }
  func.func @transform_15(%arg0: i32, %arg1: i32) -> (i32, i32, i32) {
    %c0_i32 = arith.constant 0 : i32
    %c0_i32_0 = arith.constant 0 : i32
    %c0_i32_1 = arith.constant 0 : i32
    return %arg1, %c0_i32, %c0_i32_0 : i32, i32, i32
  }
  func.func @transform_16(%arg0: i32, %arg1: i32) -> (i32, i32, i32) {
    %c0_i32 = arith.constant 0 : i32
    %c0_i32_0 = arith.constant 0 : i32
    %c0_i32_1 = arith.constant 0 : i32
    return %arg1, %c0_i32, %c0_i32_0 : i32, i32, i32
  }
  func.func @transform_17(%arg0: i32, %arg1: i32) -> (i32, i32, i32) {
    %c0_i32 = arith.constant 0 : i32
    %c0_i32_0 = arith.constant 0 : i32
    %c0_i32_1 = arith.constant 0 : i32
    return %arg1, %c0_i32, %c0_i32_0 : i32, i32, i32
  }
  func.func @transform_18(%arg0: i32, %arg1: i32) -> (i32, i32, i32) {
    %c0_i32 = arith.constant 0 : i32
    %c0_i32_0 = arith.constant 0 : i32
    %c0_i32_1 = arith.constant 0 : i32
    return %arg1, %c0_i32, %c0_i32_0 : i32, i32, i32
  }
  func.func @transform_19(%arg0: i32, %arg1: i32) -> (i32, i32, i32) {
    %c0_i32 = arith.constant 0 : i32
    %c0_i32_0 = arith.constant 0 : i32
    %c0_i32_1 = arith.constant 0 : i32
    return %arg1, %c0_i32, %c0_i32_0 : i32, i32, i32
  }
  func.func @transform_20(%arg0: i32, %arg1: i32) -> (i32, i32, i32) {
    %c0_i32 = arith.constant 0 : i32
    %c0_i32_0 = arith.constant 0 : i32
    %c0_i32_1 = arith.constant 0 : i32
    return %arg1, %c0_i32, %c0_i32_0 : i32, i32, i32
  }
  func.func @transform_21(%arg0: i32, %arg1: i32) -> (i32, i32, i32) {
    %c0_i32 = arith.constant 0 : i32
    %c0_i32_0 = arith.constant 0 : i32
    %c0_i32_1 = arith.constant 0 : i32
    return %arg1, %c0_i32, %c0_i32_0 : i32, i32, i32
  }
  func.func @transform_22(%arg0: i32, %arg1: i32) -> (i32, i32, i32) {
    %c0_i32 = arith.constant 0 : i32
    %c0_i32_0 = arith.constant 0 : i32
    %c0_i32_1 = arith.constant 0 : i32
    return %arg1, %c0_i32, %c0_i32_0 : i32, i32, i32
  }
  func.func @transform_23(%arg0: i32, %arg1: i32) -> (i32, i32, i32) {
    %c0_i32 = arith.constant 0 : i32
    %c0_i32_0 = arith.constant 0 : i32
    %c0_i32_1 = arith.constant 0 : i32
    return %arg1, %c0_i32, %c0_i32_0 : i32, i32, i32
  }
  func.func @transform_24(%arg0: i32, %arg1: i32) -> (i32, i32, i32) {
    %c0_i32 = arith.constant 0 : i32
    %c0_i32_0 = arith.constant 0 : i32
    %c0_i32_1 = arith.constant 0 : i32
    return %arg1, %c0_i32, %c0_i32_0 : i32, i32, i32
  }
  func.func @transform_25(%arg0: i32, %arg1: i32) -> (i32, i32, i32) {
    %c0_i32 = arith.constant 0 : i32
    %c0_i32_0 = arith.constant 0 : i32
    %c0_i32_1 = arith.constant 0 : i32
    return %arg1, %c0_i32, %c0_i32_0 : i32, i32, i32
  }
  func.func @transform_26(%arg0: i32, %arg1: i32) -> (i32, i32, i32) {
    %c0_i32 = arith.constant 0 : i32
    %c0_i32_0 = arith.constant 0 : i32
    %c0_i32_1 = arith.constant 0 : i32
    return %arg1, %c0_i32, %c0_i32_0 : i32, i32, i32
  }
  func.func @transform_27(%arg0: i32, %arg1: i32) -> (i32, i32) {
    %c0_i32 = arith.constant 0 : i32
    %c0_i32_0 = arith.constant 0 : i32
    %c0_i32_1 = arith.constant 0 : i32
    return %c0_i32, %c0_i32_0 : i32, i32
  }
  func.func @transform_28(%arg0: i32, %arg1: i32) -> (i32, i32) {
    %c0_i32 = arith.constant 0 : i32
    %c0_i32_0 = arith.constant 0 : i32
    %c0_i32_1 = arith.constant 0 : i32
    return %c0_i32, %c0_i32_0 : i32, i32
  }
  func.func @transform_29(%arg0: i32, %arg1: i32) -> (i32, i32, i32) {
    %c0_i32 = arith.constant 0 : i32
    %c0_i32_0 = arith.constant 0 : i32
    %c0_i32_1 = arith.constant 0 : i32
    return %arg0, %c0_i32, %c0_i32_0 : i32, i32, i32
  }
}

</mosaic_0001>

<llo_original>
// kernel: timexer_forward.3
$region0: #{timexer_forward.3}
  #allocation0 [shape = 'u32[]', space=smem, size = 0x4, offset = 0x4, fixed_abs, tag = 'smem constant byte address 0x4 - core index']
  #allocation1 [shape = 'u32[144,128]{1,0:T(1,128)}', space=vmem, size = 0x12000, scoped, tag = 'internal scratch']
  %s0 = inlined_call_operand.vmem [shape: f32[2,4,96], index: 0, kind: input, shape index: {}]
  %s1 = inlined_call_operand.vmem [shape: bf16[96,128], index: 1, kind: input, shape index: {}]
  %s2 = inlined_call_operand.vmem [shape: f32[1,128], index: 2, kind: input, shape index: {}]
  %s3 = inlined_call_operand.vmem [shape: f32[2,4,1], index: 3, kind: input, shape index: {}]
  %s4 = inlined_call_operand.vmem [shape: f32[2,4,1], index: 4, kind: input, shape index: {}]
  %s5 = inlined_call_operand.vmem [shape: f32[2,4,128], index: 5, kind: output, shape index: {}]
  %s6 = sld [smem:[#allocation0]]
  $region53: #{timexer_forward.3} parent=0
    _
  %s8 = ssub.s32 1, %s6
  %s9 = scalar_select 0, %s8, %s6
  loop: start=0, step=1, limit=4
  $region2: #{timexer_forward.3} parent=0 // loop_pre_header
    _
  $region3: #{timexer_forward.3} parent=0 // loop_header
    %s11 = sphi 0, %s15
    %p12 = scmp.ge.s32.totalorder %s11, 4
    %s21 = sphi 0, %s23
    %s24 = sphi 0, %s21
    %s25 = sphi 0, %s24
    %s41 = sphi 0, %s25
    %s45 = sphi 0, %s45
    %s47 = sphi 0, %s45
    %s48 = sphi 0, %s47
    %s62 = sphi 0, %s48
    %s66 = sphi 0, %s66
    %s68 = sphi 0, %s66
    %s69 = sphi 0, %s68
    %s83 = sphi 0, %s69
    %s89 = sphi 0, %s91
    %s92 = sphi 0, %s89
    %s93 = sphi 0, %s92
    %s109 = sphi 0, %s93
    %s115 = sphi 0, %s117
    %s118 = sphi 0, %s115
    %s119 = sphi 0, %s118
    %s135 = sphi 0, %s119
    %s141 = sphi 0, %s143
    %s144 = sphi 0, %s141
    %s145 = sphi 0, %s144
    %s161 = sphi 0, %s145
  $region4: #{timexer_forward.3} parent=0 // loop_header_branch
    %14 = sbr.rel (%p12) target = $region8
  $region5: #{timexer_forward.3} parent=0 // loop_body
    %s16 = ssub.s32 %s11, 1
    %s17 = ssub.s32 %s11, 2
    %s18 = sadd.s32 %s11, 1
    %s19 = ssub.s32 %s11, %s18
    %p20 = scmp.eq.s32.totalorder %s19, 0
    %s22 = sadd.s32 %s21, 1
    %s23 = scalar_select %p20, %s21, %s22
    %p26 = pneg %p20
    %p27 = scmp.eq.s32.totalorder %s11, 1
    %p28 = por %p26, %p27
    %p29 = scmp.ne.s32.totalorder %s21, %s24
    %p30 = scmp.eq.s32.totalorder %s11, 0
    %p31 = por %p29, %p30
    %p32 = scmp.ne.s32.totalorder %s21, %s24
    %p33 = scmp.eq.s32.totalorder %s16, 1
    %p34 = por %p32, %p33
    %p35 = scmp.ne.s32.totalorder %s24, %s25
    %p36 = scmp.eq.s32.totalorder %s16, 0
    %p37 = por %p35, %p36
    %p38 = scmp.ne.s32.totalorder %s24, %s25
    %p39 = scmp.eq.s32.totalorder %s17, 1
    %p40 = por %p38, %p39
    %p42 = scmp.ne.s32.totalorder %s25, %s41
    %p43 = scmp.eq.s32.totalorder %s17, 0
    %p44 = por %p42, %p43
    %s46 = sadd.s32 %s45, 1
    %p49 = scmp.eq.s32.totalorder %s11, 1
    %p50 = scmp.ne.s32.totalorder %s45, %s47
    %p51 = scmp.eq.s32.totalorder %s11, 0
    %p52 = por %p50, %p51
    %p53 = scmp.ne.s32.totalorder %s45, %s47
    %p54 = scmp.eq.s32.totalorder %s16, 1
    %p55 = por %p53, %p54
    %p56 = scmp.ne.s32.totalorder %s47, %s48
    %p57 = scmp.eq.s32.totalorder %s16, 0
    %p58 = por %p56, %p57
    %p59 = scmp.ne.s32.totalorder %s47, %s48
    %p60 = scmp.eq.s32.totalorder %s17, 1
    %p61 = por %p59, %p60
    %p63 = scmp.ne.s32.totalorder %s48, %s62
    %p64 = scmp.eq.s32.totalorder %s17, 0
    %p65 = por %p63, %p64
    %s67 = sadd.s32 %s66, 1
    %p70 = scmp.eq.s32.totalorder %s11, 1
    %p71 = scmp.ne.s32.totalorder %s66, %s68
    %p72 = scmp.eq.s32.totalorder %s11, 0
    %p73 = por %p71, %p72
    %p74 = scmp.ne.s32.totalorder %s66, %s68
    %p75 = scmp.eq.s32.totalorder %s16, 1
    %p76 = por %p74, %p75
    %p77 = scmp.ne.s32.totalorder %s68, %s69
    %p78 = scmp.eq.s32.totalorder %s16, 0
    %p79 = por %p77, %p78
    %p80 = scmp.ne.s32.totalorder %s68, %s69
    %p81 = scmp.eq.s32.totalorder %s17, 1
    %p82 = por %p80, %p81
    %p84 = scmp.ne.s32.totalorder %s69, %s83
    %p85 = scmp.eq.s32.totalorder %s17, 0
    %p86 = por %p84, %p85
    %s87 = ssub.s32 %s11, %s18
    %p88 = scmp.eq.s32.totalorder %s87, 0
    %s90 = sadd.s32 %s89, 1
    %s91 = scalar_select %p88, %s89, %s90
    %p94 = pneg %p88
    %p95 = scmp.eq.s32.totalorder %s11, 1
    %p96 = por %p94, %p95
    %p97 = scmp.ne.s32.totalorder %s89, %s92
    %p98 = scmp.eq.s32.totalorder %s11, 0
    %p99 = por %p97, %p98
    %p100 = scmp.ne.s32.totalorder %s89, %s92
    %p101 = scmp.eq.s32.totalorder %s16, 1
    %p102 = por %p100, %p101
    %p103 = scmp.ne.s32.totalorder %s92, %s93
    %p104 = scmp.eq.s32.totalorder %s16, 0
    %p105 = por %p103, %p104
    %p106 = scmp.ne.s32.totalorder %s92, %s93
    %p107 = scmp.eq.s32.totalorder %s17, 1
    %p108 = por %p106, %p107
    %p110 = scmp.ne.s32.totalorder %s93, %s109
    %p111 = scmp.eq.s32.totalorder %s17, 0
    %p112 = por %p110, %p111
    %s113 = ssub.s32 %s11, %s18
    %p114 = scmp.eq.s32.totalorder %s113, 0
    %s116 = sadd.s32 %s115, 1
    %s117 = scalar_select %p114, %s115, %s116
    %p120 = pneg %p114
    %p121 = scmp.eq.s32.totalorder %s11, 1
    %p122 = por %p120, %p121
    %p123 = scmp.ne.s32.totalorder %s115, %s118
    %p124 = scmp.eq.s32.totalorder %s11, 0
    %p125 = por %p123, %p124
    %p126 = scmp.ne.s32.totalorder %s115, %s118
    %p127 = scmp.eq.s32.totalorder %s16, 1
    %p128 = por %p126, %p127
    %p129 = scmp.ne.s32.totalorder %s118, %s119
    %p130 = scmp.eq.s32.totalorder %s16, 0
    %p131 = por %p129, %p130
    %p132 = scmp.ne.s32.totalorder %s118, %s119
    %p133 = scmp.eq.s32.totalorder %s17, 1
    %p134 = por %p132, %p133
    %p136 = scmp.ne.s32.totalorder %s119, %s135
    %p137 = scmp.eq.s32.totalorder %s17, 0
    %p138 = por %p136, %p137
    %s139 = ssub.s32 %s11, %s18
    %p140 = scmp.eq.s32.totalorder %s139, 0
    %s142 = sadd.s32 %s141, 1
    %s143 = scalar_select %p140, %s141, %s142
    %p146 = pneg %p140
    %p147 = scmp.eq.s32.totalorder %s11, 1
    %p148 = por %p146, %p147
    %p149 = scmp.ne.s32.totalorder %s141, %s144
    %p150 = scmp.eq.s32.totalorder %s11, 0
    %p151 = por %p149, %p150
    %p152 = scmp.ne.s32.totalorder %s141, %s144
    %p153 = scmp.eq.s32.totalorder %s16, 1
    %p154 = por %p152, %p153
    %p155 = scmp.ne.s32.totalorder %s144, %s145
    %p156 = scmp.eq.s32.totalorder %s16, 0
    %p157 = por %p155, %p156
    %p158 = scmp.ne.s32.totalorder %s144, %s145
    %p159 = scmp.eq.s32.totalorder %s17, 1
    %p160 = por %p158, %p159
    %p162 = scmp.ne.s32.totalorder %s145, %s161
    %p163 = scmp.eq.s32.totalorder %s17, 0
    %p164 = por %p162, %p163
    %p165 = scmp.le.s32.totalorder 1, %s11
    %p166 = scmp.lt.s32.totalorder %s11, 3
    %p167 = pnand %p165, %p166
    %p168 = pneg %p167
    // Predicated region
    $region9: #{timexer_forward.3} parent=5 // pred_check
      _
    $region10: #{timexer_forward.3} parent=5 // pred_check_branch
      %170 = sbr.rel (%p167) target = $region12
    $region11: #{timexer_forward.3} parent=5 // pred_region
      %s171 = ssub.s32 %s11, 1
      // Predicated region
      $region13: #{timexer_forward.3} parent=11 // pred_check
        %p172 = pneg %p58
      $region14: #{timexer_forward.3} parent=11 // pred_check_branch
        %174 = sbr.rel (%p172) target = $region16
      $region15: #{timexer_forward.3} parent=11 // pred_region
        _
      $region16: #{timexer_forward.3} parent=11 // pred_fallthru
        _
      // Predicated region
      $region17: #{timexer_forward.3} parent=11 // pred_check
        %p175 = pneg %p79
      $region18: #{timexer_forward.3} parent=11 // pred_check_branch
        %177 = sbr.rel (%p175) target = $region20
      $region19: #{timexer_forward.3} parent=11 // pred_region
        _
      $region20: #{timexer_forward.3} parent=11 // pred_fallthru
        _
    $region12: #{timexer_forward.3} parent=5 // pred_fallthru
      _
    %p178 = scmp.lt.s32.totalorder %s11, 2
    // Predicated region
    $region21: #{timexer_forward.3} parent=5 // pred_check
      %p179 = pneg %p178
    $region22: #{timexer_forward.3} parent=5 // pred_check_branch
      %181 = sbr.rel (%p179) target = $region24
    $region23: #{timexer_forward.3} parent=5 // pred_region
      // Predicated region
      $region25: #{timexer_forward.3} parent=23 // pred_check
        %p182 = pneg %p31
      $region26: #{timexer_forward.3} parent=23 // pred_check_branch
        %184 = sbr.rel (%p182) target = $region28
      $region27: #{timexer_forward.3} parent=23 // pred_region
        %p185 = scmp.lt.s32.totalorder %s11, 1
        %s186 = scalar_select %p185, %s11, 1
        %s187 = smul.addr %s186, 4
        %s188 = scalar_lea.vmem %s0, %s187
      $region28: #{timexer_forward.3} parent=23 // pred_fallthru
        _
      // Predicated region
      $region29: #{timexer_forward.3} parent=23 // pred_check
        %p189 = pneg %p99
      $region30: #{timexer_forward.3} parent=23 // pred_check_branch
        %191 = sbr.rel (%p189) target = $region32
      $region31: #{timexer_forward.3} parent=23 // pred_region
        %p192 = scmp.lt.s32.totalorder %s11, 1
        %s193 = scalar_select %p192, %s11, 1
        %s194 = smul.addr %s193, 4
        %s195 = scalar_lea.vmem %s3, %s194
      $region32: #{timexer_forward.3} parent=23 // pred_fallthru
        _
      // Predicated region
      $region33: #{timexer_forward.3} parent=23 // pred_check
        %p196 = pneg %p125
      $region34: #{timexer_forward.3} parent=23 // pred_check_branch
        %198 = sbr.rel (%p196) target = $region36
      $region35: #{timexer_forward.3} parent=23 // pred_region
        %p199 = scmp.lt.s32.totalorder %s11, 1
        %s200 = scalar_select %p199, %s11, 1
        %s201 = smul.addr %s200, 4
        %s202 = scalar_lea.vmem %s4, %s201
      $region36: #{timexer_forward.3} parent=23 // pred_fallthru
        _
    $region24: #{timexer_forward.3} parent=5 // pred_fallthru
      _
    %p203 = scmp.le.s32.totalorder 1, %s11
    %p204 = scmp.lt.s32.totalorder %s11, 3
    %p205 = pnand %p203, %p204
    %p206 = pneg %p205
    // Predicated region
    $region37: #{timexer_forward.3} parent=5 // pred_check
      _
    $region38: #{timexer_forward.3} parent=5 // pred_check_branch
      %208 = sbr.rel (%p205) target = $region40
    $region39: #{timexer_forward.3} parent=5 // pred_region
      %s209 = ssub.s32 %s11, 1
      %p210 = scmp.lt.s32.totalorder %s16, 1
      %s211 = scalar_select %p210, %s16, 1
      %s212 = smul.addr %s211, 4
      %s213 = scalar_lea.vmem %s0, %s212
      %p214 = pneg %p37
      %p215 = pneg %p34
      %p216 = pneg %p58
      %p217 = pneg %p55
      %p218 = pneg %p79
      %p219 = pneg %p76
      %p220 = scmp.lt.s32.totalorder %s16, 1
      %s221 = scalar_select %p220, %s16, 1
      %s222 = smul.addr %s221, 4
      %s223 = scalar_lea.vmem %s3, %s222
      %p224 = pneg %p105
      %p225 = pneg %p102
      %p226 = scmp.lt.s32.totalorder %s16, 1
      %s227 = scalar_select %p226, %s16, 1
      %s228 = smul.addr %s227, 4
      %s229 = scalar_lea.vmem %s4, %s228
      %p230 = pneg %p131
      %p231 = pneg %p128
      %p232 = pneg %p157
      %p233 = pneg %p154
      %p234 = scmp.lt.s32.totalorder %s16, 1
      %s235 = scalar_select %p234, %s16, 1
      %s236 = smul.addr %s235, 4
      %s237 = scalar_lea.vmem %s5, %s236
      %p238 = scmp.lt.s32.totalorder %s16, 1
      %s239 = scalar_select %p238, %s16, 1
      %s240 = smul.addr %s239, 4
      %s241 = scalar_lea.vmem %s0, %s240
      %p242 = scmp.lt.s32.totalorder %s16, 1
      %s243 = scalar_select %p242, %s16, 1
      %s244 = smul.addr %s243, 4
      %s245 = scalar_lea.vmem %s3, %s244
      %p246 = scmp.lt.s32.totalorder %s16, 1
      %s247 = scalar_select %p246, %s16, 1
      %s248 = smul.addr %s247, 4
      %s249 = scalar_lea.vmem %s4, %s248
      %p250 = scmp.lt.s32.totalorder %s16, 1
      %s251 = scalar_select %p250, %s16, 1
      %s252 = smul.addr %s251, 4
      %s253 = scalar_lea.vmem %s5, %s252
      %v255 = vld [vmem:[%s241] sm:$0xf]
      %v256 = vld [vmem:[%s1] sm:$0xf]
      %v257 = vld [vmem:[%s1 + $0x4] sm:$0xf]
      %v258 = vld [vmem:[%s1 + $0x8] sm:$0xf]
      %v259 = vld [vmem:[%s1 + $0xc] sm:$0xf]
      %v260 = vld [vmem:[%s1 + $0x10] sm:$0xf]
      %v261 = vld [vmem:[%s1 + $0x14] sm:$0xf]
      %v262 = vld [vmem:[%s1 + $0x18] sm:$0xf]
      %v263 = vld [vmem:[%s1 + $0x1c] sm:$0xf]
      %v264 = vld [vmem:[%s1 + $0x20] sm:$0xf]
      %v265 = vld [vmem:[%s1 + $0x24] sm:$0xf]
      %v266 = vld [vmem:[%s1 + $0x28] sm:$0xf]
      %v267 = vld [vmem:[%s1 + $0x2c] sm:$0xf]
      %v268 = vpack.c.bf16 %v255, %v255
      %v269 = vld [vmem:[%s2] sm:$0x1]
      %v271 = vlaneseq
      %v272 = vshrl.u32 %v271, 7
      %v273 = vsub.s32 0, %v272
      %v274 = vrot.slane %v269, %v273
      %v288 = vunpack.c.l.b16 %v256
      %v289 = vunpack.c.l.b16 %v257
      %v290 = vunpack.c.l.b16 %v258
      %v291 = vunpack.c.l.b16 %v259
      %v292 = vunpack.c.l.b16 %v260
      %v293 = vunpack.c.l.b16 %v261
      %v294 = vunpack.c.l.b16 %v262
      %v295 = vunpack.c.l.b16 %v263
      %v296 = vunpack.c.l.b16 %v264
      %v297 = vunpack.c.l.b16 %v265
      %v298 = vunpack.c.l.b16 %v266
      %v299 = vunpack.c.l.b16 %v267
      %v300 = vpack.c.b16 %v289, %v288
      %v301 = vpack.c.b16 %v291, %v290
      %v302 = vpack.c.b16 %v293, %v292
      %v303 = vpack.c.b16 %v295, %v294
      %v304 = vpack.c.b16 %v297, %v296
      %v305 = vpack.c.b16 %v299, %v298
      %vm312 = vcmask 785408
      %v314 = vsel %vm312, %v268, 0
      %316 = vmatprep.subr.bf16.mxu0 0
      %317 = vmatpush1.bf16.msra.mxu0 0
      %318 = vmatprep.subr.bf16.mxu0 0
      %319 = vmatpush1.bf16.msra.mxu0 0
      %320 = vmatprep.subr.bf16.mxu0 0
      %321 = vmatpush1.bf16.msra.mxu0 %v305
      %322 = vmatprep.subr.bf16.mxu0 0
      %323 = vmatpush1.bf16.msra.mxu0 %v304
      %324 = vmatprep.subr.bf16.mxu0 0
      %325 = vmatpush1.bf16.msra.mxu0 %v303
      %326 = vmatprep.subr.bf16.mxu0 0
      %327 = vmatpush1.bf16.msra.mxu0 %v302
      %328 = vmatprep.subr.bf16.mxu0 0
      %329 = vmatpush1.bf16.msra.mxu0 %v301
      %330 = vmatprep.subr.bf16.mxu0 0
      %331 = vmatpush1.bf16.msra.mxu0 %v300
      %332 = vmatprep.subr.bf16.mxu0 0
      %333 = vmatpush2.bf16.msra.mxu0 0
      %334 = vmatprep.subr.bf16.mxu0 0
      %335 = vmatpush2.bf16.msra.mxu0 0
      %336 = vmatprep.subr.bf16.mxu0 0
      %337 = vmatpush2.bf16.msra.mxu0 0
      %338 = vmatprep.subr.bf16.mxu0 0
      %339 = vmatpush2.bf16.msra.mxu0 0
      %340 = vmatprep.subr.bf16.mxu0 0
      %341 = vmatpush2.bf16.msra.mxu0 0
      %342 = vmatprep.subr.bf16.mxu0 0
      %343 = vmatpush2.bf16.msra.mxu0 0
      %344 = vmatprep.subr.bf16.mxu0 0
      %345 = vmatpush2.bf16.msra.mxu0 0
      %346 = vmatprep.subr.bf16.mxu0 0
      %347 = vmatpush2.bf16.msra.mxu0 0
      %348 = vmatprep.mubr.bf16.mxu0 0
      %349 = vmatmul.mubr.bf16.gmra.mxu0 %v314
      %v350 = vpop.f32.mrf.mxu0
      %v351 = vadd.f32 %v274, %v350
      %v352 = vpop.f32.mrf.mxu0
      %v353 = vpop.f32.mrf.mxu0
      %v354 = vpop.f32.mrf.mxu0
      %355 = vdwg.mxu0
      %v356 = vld [vmem:[%s249] sm:$0xf]
      %358 = vset.pattern.permute.xlu0 0
      %359 = vperm.xlu0 %358, %v356
      %v360 = vpop.permute.xlu0 %359
      %v362 = vmul.f32 %v351, %v360
      %v363 = vld [vmem:[%s245] sm:$0xf]
      %365 = vset.pattern.permute.xlu0 0
      %366 = vperm.xlu0 %365, %v363
      %v367 = vpop.permute.xlu0 %366
      %v369 = vadd.f32 %v362, %v367
      %370 = vst [vmem:[%s253] sm:$0xf] %v369
      %p371 = scmp.lt.s32.totalorder %s16, 1
      %s372 = scalar_select %p371, %s16, 1
      %s373 = smul.addr %s372, 4
      %s374 = scalar_lea.vmem %s5, %s373
      // Predicated region
      $region41: #{timexer_forward.3} parent=39 // pred_check
        %p375 = pneg %p154
      $region42: #{timexer_forward.3} parent=39 // pred_check_branch
        %377 = sbr.rel (%p375) target = $region44
      $region43: #{timexer_forward.3} parent=39 // pred_region
        _
      $region44: #{timexer_forward.3} parent=39 // pred_fallthru
        _
    $region40: #{timexer_forward.3} parent=5 // pred_fallthru
      _
    %p378 = scmp.le.s32.totalorder 2, %s11
    // Predicated region
    $region45: #{timexer_forward.3} parent=5 // pred_check
      %p379 = pneg %p378
    $region46: #{timexer_forward.3} parent=5 // pred_check_branch
      %381 = sbr.rel (%p379) target = $region48
    $region47: #{timexer_forward.3} parent=5 // pred_region
      %s382 = ssub.s32 %s11, 2
      // Predicated region
      $region49: #{timexer_forward.3} parent=47 // pred_check
        %p383 = pneg %p160
      $region50: #{timexer_forward.3} parent=47 // pred_check_branch
        %385 = sbr.rel (%p383) target = $region52
      $region51: #{timexer_forward.3} parent=47 // pred_region
        %p386 = scmp.lt.s32.totalorder %s17, 1
        %s387 = scalar_select %p386, %s17, 1
        %s388 = smul.addr %s387, 4
        %s389 = scalar_lea.vmem %s5, %s388
      $region52: #{timexer_forward.3} parent=47 // pred_fallthru
        _
    $region48: #{timexer_forward.3} parent=5 // pred_fallthru
      _
  $region6: #{timexer_forward.3} parent=0 // loop_footer
    %s15 = sadd.s32 1, %s11
  $region7: #{timexer_forward.3} parent=0 // loop_footer_branch
    %10 = sbr.rel target = $region3
  $region8: #{timexer_forward.3} parent=0 // loop_exit
    _

// kernel: timexer_forward.2
$region0: #{timexer_forward.2}
  #allocation0 [shape = 'u32[]', space=smem, size = 0x4, offset = 0x4, fixed_abs, tag = 'smem constant byte address 0x4 - core index']
  #allocation1 [shape = 'u32[144,128]{1,0:T(1,128)}', space=vmem, size = 0x12000, scoped, tag = 'internal scratch']
  #allocation2 [shape = 'f32[1,4,32]{2,1,0:T(4,128)}', space=vmem, size = 0x800, scoped, tag = 'scratch operand']
  %s0 = inlined_call_operand.smem [shape: u32[30], index: -1, kind: input, shape index: {}]
  %s1 = sld [smem:[%s0]]
  %s2 = scalar_lea.smem %s0, 1
  %s3 = sld [smem:[%s2]]
  %s4 = scalar_lea.smem %s0, 2
  %s5 = sld [smem:[%s4]]
  %s6 = scalar_lea.smem %s0, 3
  %s7 = sld [smem:[%s6]]
  %s8 = scalar_lea.smem %s0, 4
  %s9 = sld [smem:[%s8]]
  %s10 = scalar_lea.smem %s0, 5
  %s11 = sld [smem:[%s10]]
  %s12 = scalar_lea.smem %s0, 6
  %s13 = sld [smem:[%s12]]
  %s14 = scalar_lea.smem %s0, 7
  %s15 = sld [smem:[%s14]]
  %s16 = scalar_lea.smem %s0, 8
  %s17 = sld [smem:[%s16]]
  %s18 = scalar_lea.smem %s0, 9
  %s19 = sld [smem:[%s18]]
  %s20 = scalar_lea.smem %s0, 10
  %s21 = sld [smem:[%s20]]
  %s22 = scalar_lea.smem %s0, 11
  %s23 = sld [smem:[%s22]]
  %s24 = scalar_lea.smem %s0, 12
  %s25 = sld [smem:[%s24]]
  %s26 = scalar_lea.smem %s0, 13
  %s27 = sld [smem:[%s26]]
  %s28 = scalar_lea.smem %s0, 14
  %s29 = sld [smem:[%s28]]
  %s30 = scalar_lea.smem %s0, 15
  %s31 = sld [smem:[%s30]]
  %s32 = scalar_lea.smem %s0, 16
  %s33 = sld [smem:[%s32]]
  %s34 = scalar_lea.smem %s0, 17
  %s35 = sld [smem:[%s34]]
  %s36 = scalar_lea.smem %s0, 18
  %s37 = sld [smem:[%s36]]
  %s38 = scalar_lea.smem %s0, 19
  %s39 = sld [smem:[%s38]]
  %s40 = scalar_lea.smem %s0, 20
  %s41 = sld [smem:[%s40]]
  %s42 = scalar_lea.smem %s0, 21
  %s43 = sld [smem:[%s42]]
  %s44 = scalar_lea.smem %s0, 22
  %s45 = sld [smem:[%s44]]
  %s46 = scalar_lea.smem %s0, 23
  %s47 = sld [smem:[%s46]]
  %s48 = scalar_lea.smem %s0, 24
  %s49 = sld [smem:[%s48]]
  %s50 = scalar_lea.smem %s0, 25
  %s51 = sld [smem:[%s50]]
  %s52 = scalar_lea.smem %s0, 26
  %s53 = sld [smem:[%s52]]
  %s54 = scalar_lea.smem %s0, 27
  %s55 = sld [smem:[%s54]]
  %s56 = scalar_lea.smem %s0, 28
  %s57 = sld [smem:[%s56]]
  %s58 = scalar_lea.smem %s0, 29
  %s59 = sld [smem:[%s58]]
  %s60 = sld [smem:[#allocation0]]
  $region233: #{timexer_forward.2} parent=0
    _
  %s62 = ssub.s32 1, %s60
  %s63 = scalar_select 0, %s62, %s60
  $region1: #{timexer_forward.2} parent=0
    #allocation3 [shape = 'u8[2048]{0}', space=vmem, size = 0x800, scoped, tag = 'input window, operand 4, single buffered']
    #allocation4 [shape = 's32[2]{0}', space=sflag, size = 0x8, scoped, tag = 'scoped memory for timexer_forward.2']
    #allocation5 [shape = 'u8[4096]{0}', space=vmem, size = 0x1000, scoped, tag = 'input window, operand 5, single buffered']
    #allocation6 [shape = 's32[1]{0}', space=sflag, size = 0x4, scoped, tag = 'scoped memory for timexer_forward.2']
    #allocation7 [shape = 'u8[1024]{0}', space=vmem, size = 0x400, scoped, tag = 'input window, operand 8']
    #allocation8 [shape = 'u8[1024]{0}', space=vmem, size = 0x400, scoped, tag = 'input window, operand 10']
    #allocation9 [shape = 'u8[1024]{0}', space=vmem, size = 0x400, scoped, tag = 'input window, operand 12']
    #allocation10 [shape = 'u8[1024]{0}', space=vmem, size = 0x400, scoped, tag = 'input window, operand 14']
    #allocation11 [shape = 'u8[1024]{0}', space=vmem, size = 0x400, scoped, tag = 'input window, operand 16']
    #allocation12 [shape = 'u8[1024]{0}', space=vmem, size = 0x400, scoped, tag = 'input window, operand 17']
    #allocation13 [shape = 'u8[1024]{0}', space=vmem, size = 0x400, scoped, tag = 'input window, operand 18']
    #allocation14 [shape = 'u8[1024]{0}', space=vmem, size = 0x400, scoped, tag = 'input window, operand 19']
    #allocation15 [shape = 'u8[1024]{0}', space=vmem, size = 0x400, scoped, tag = 'input window, operand 20']
    #allocation16 [shape = 'u8[16384]{0}', space=vmem, size = 0x4000, scoped, tag = 'input window, operand 21']
    #allocation17 [shape = 'u8[1024]{0}', space=vmem, size = 0x400, scoped, tag = 'input window, operand 22']
    #allocation18 [shape = 'u8[1024]{0}', space=vmem, size = 0x400, scoped, tag = 'input window, operand 24']
    #allocation19 [shape = 'u8[1024]{0}', space=vmem, size = 0x400, scoped, tag = 'input window, operand 25']
    #allocation20 [shape = 'u8[1024]{0}', space=vmem, size = 0x400, scoped, tag = 'input window, operand 26']
    #allocation21 [shape = 'u8[512]{0}', space=vmem, size = 0x400, scoped, tag = 'input window, operand 27, single buffered']
    #allocation22 [shape = 'u8[512]{0}', space=vmem, size = 0x400, scoped, tag = 'input window, operand 28, single buffered']
    #allocation23 [shape = 's32[1]{0}', space=sflag, size = 0x4, scoped, tag = 'scoped memory for timexer_forward.2']
    %64 = vsyncpa [#allocation4], 0
    %65 = vsyncpa [#allocation6], 0
    %66 = vsyncpa [#allocation23], 0
    loop: start=0, step=1, limit=6
    $region2: #{timexer_forward.2} parent=1 // loop_pre_header
      _
    $region3: #{timexer_forward.2} parent=1 // loop_header
      %s68 = sphi 0, %s72
      %p69 = scmp.ge.s32.totalorder %s68, 6
      %s75 = sphi 0, %s87
      %s76 = sphi 0, %s83
      %s77 = sphi 0, %s75
      %s78 = sphi 0, %s76
      %s79 = sphi 0, %s77
      %s80 = sphi 0, %s78
      %s90 = sphi 0, %s92
      %s93 = sphi 0, %s90
      %s94 = sphi 0, %s93
      %s110 = sphi 0, %s94
      %s116 = sphi 0, %s118
      %s119 = sphi 0, %s116
      %s120 = sphi 0, %s119
      %s136 = sphi 0, %s120
      %s140 = sphi 0, %s140
      %s142 = sphi 0, %s140
      %s143 = sphi 0, %s142
      %s157 = sphi 0, %s143
      %s161 = sphi 0, %s161
      %s163 = sphi 0, %s161
      %s164 = sphi 0, %s163
      %s178 = sphi 0, %s164
      %s182 = sphi 0, %s182
      %s184 = sphi 0, %s182
      %s185 = sphi 0, %s184
      %s199 = sphi 0, %s185
      %s203 = sphi 0, %s203
      %s205 = sphi 0, %s203
      %s206 = sphi 0, %s205
      %s220 = sphi 0, %s206
      %s224 = sphi 0, %s224
      %s226 = sphi 0, %s224
      %s227 = sphi 0, %s226
      %s241 = sphi 0, %s227
      %s247 = sphi 0, %s249
      %s250 = sphi 0, %s247
      %s251 = sphi 0, %s250
      %s267 = sphi 0, %s251
      %s273 = sphi 0, %s275
      %s276 = sphi 0, %s273
      %s277 = sphi 0, %s276
      %s293 = sphi 0, %s277
      %s299 = sphi 0, %s301
      %s302 = sphi 0, %s299
      %s303 = sphi 0, %s302
      %s319 = sphi 0, %s303
      %s325 = sphi 0, %s327
      %s328 = sphi 0, %s325
      %s329 = sphi 0, %s328
      %s345 = sphi 0, %s329
      %s351 = sphi 0, %s353
      %s354 = sphi 0, %s351
      %s355 = sphi 0, %s354
      %s371 = sphi 0, %s355
      %s377 = sphi 0, %s379
      %s380 = sphi 0, %s377
      %s381 = sphi 0, %s380
      %s397 = sphi 0, %s381
      %s403 = sphi 0, %s405
      %s406 = sphi 0, %s403
      %s407 = sphi 0, %s406
      %s423 = sphi 0, %s407
      %s429 = sphi 0, %s431
      %s432 = sphi 0, %s429
      %s433 = sphi 0, %s432
      %s449 = sphi 0, %s433
      %s455 = sphi 0, %s457
      %s458 = sphi 0, %s455
      %s459 = sphi 0, %s458
      %s475 = sphi 0, %s459
      %s481 = sphi 0, %s483
      %s484 = sphi 0, %s481
      %s485 = sphi 0, %s484
      %s501 = sphi 0, %s485
      %s507 = sphi 0, %s509
      %s510 = sphi 0, %s507
      %s511 = sphi 0, %s510
      %s527 = sphi 0, %s511
      %s533 = sphi 0, %s535
      %s536 = sphi 0, %s533
      %s537 = sphi 0, %s536
      %s553 = sphi 0, %s537
      %s559 = sphi 0, %s561
      %s562 = sphi 0, %s559
      %s563 = sphi 0, %s562
      %s579 = sphi 0, %s563
      %s585 = sphi 0, %s587
      %s588 = sphi 0, %s585
      %s589 = sphi 0, %s588
      %s605 = sphi 0, %s589
      %s611 = sphi 0, %s613
      %s614 = sphi 0, %s611
      %s615 = sphi 0, %s614
      %s631 = sphi 0, %s615
      %s637 = sphi 0, %s639
      %s640 = sphi 0, %s637
      %s641 = sphi 0, %s640
      %s657 = sphi 0, %s641
      %s663 = sphi 0, %s665
      %s666 = sphi 0, %s663
      %s667 = sphi 0, %s666
      %s683 = sphi 0, %s667
      %s689 = sphi 0, %s691
      %s692 = sphi 0, %s689
      %s693 = sphi 0, %s692
      %s709 = sphi 0, %s693
      %s715 = sphi 0, %s717
      %s718 = sphi 0, %s715
      %s719 = sphi 0, %s718
      %s735 = sphi 0, %s719
      %s741 = sphi 0, %s743
      %s744 = sphi 0, %s741
      %s745 = sphi 0, %s744
      %s761 = sphi 0, %s745
      %s765 = sphi 0, %s765
      %s767 = sphi 0, %s765
      %s768 = sphi 0, %s767
      %s782 = sphi 0, %s768
      %s786 = sphi 0, %s786
      %s788 = sphi 0, %s786
      %s789 = sphi 0, %s788
      %s803 = sphi 0, %s789
      %s809 = sphi 0, %s811
      %s812 = sphi 0, %s809
      %s813 = sphi 0, %s812
      %s829 = sphi 0, %s813
    $region4: #{timexer_forward.2} parent=1 // loop_header_branch
      %71 = sbr.rel (%p69) target = $region8
    $region5: #{timexer_forward.2} parent=1 // loop_body
      %s73 = ssub.s32 %s68, 1
      %s74 = ssub.s32 %s68, 2
      %s81 = sadd.s32 1, %s76
      %p82 = scmp.ge.s32.totalorder %s81, 2
      %s83 = scalar_select %p82, 0, %s81
      %s84 = sadd.s32 1, %s75
      %s85 = scalar_select %p82, %s84, %s75
      %p86 = scmp.ge.s32.totalorder %s85, 2
      %s87 = scalar_select %p86, 0, %s85
      %s88 = ssub.s32 %s75, %s87
      %p89 = scmp.eq.s32.totalorder %s88, 0
      %s91 = sadd.s32 %s90, 1
      %s92 = scalar_select %p89, %s90, %s91
      %p95 = pneg %p89
      %p96 = scmp.eq.s32.totalorder %s68, 3
      %p97 = por %p95, %p96
      %p98 = scmp.ne.s32.totalorder %s90, %s93
      %p99 = scmp.eq.s32.totalorder %s68, 0
      %p100 = por %p98, %p99
      %p101 = scmp.ne.s32.totalorder %s90, %s93
      %p102 = scmp.eq.s32.totalorder %s73, 3
      %p103 = por %p101, %p102
      %p104 = scmp.ne.s32.totalorder %s93, %s94
      %p105 = scmp.eq.s32.totalorder %s73, 0
      %p106 = por %p104, %p105
      %p107 = scmp.ne.s32.totalorder %s93, %s94
      %p108 = scmp.eq.s32.totalorder %s74, 3
      %p109 = por %p107, %p108
      %p111 = scmp.ne.s32.totalorder %s94, %s110
      %p112 = scmp.eq.s32.totalorder %s74, 0
      %p113 = por %p111, %p112
      %s114 = ssub.s32 %s75, %s87
      %p115 = scmp.eq.s32.totalorder %s114, 0
      %s117 = sadd.s32 %s116, 1
      %s118 = scalar_select %p115, %s116, %s117
      %p121 = pneg %p115
      %p122 = scmp.eq.s32.totalorder %s68, 3
      %p123 = por %p121, %p122
      %p124 = scmp.ne.s32.totalorder %s116, %s119
      %p125 = scmp.eq.s32.totalorder %s68, 0
      %p126 = por %p124, %p125
      %p127 = scmp.ne.s32.totalorder %s116, %s119
      %p128 = scmp.eq.s32.totalorder %s73, 3
      %p129 = por %p127, %p128
      %p130 = scmp.ne.s32.totalorder %s119, %s120
      %p131 = scmp.eq.s32.totalorder %s73, 0
      %p132 = por %p130, %p131
      %p133 = scmp.ne.s32.totalorder %s119, %s120
      %p134 = scmp.eq.s32.totalorder %s74, 3
      %p135 = por %p133, %p134
      %p137 = scmp.ne.s32.totalorder %s120, %s136
      %p138 = scmp.eq.s32.totalorder %s74, 0
      %p139 = por %p137, %p138
      %s141 = sadd.s32 %s140, 1
      %p144 = scmp.eq.s32.totalorder %s68, 3
      %p145 = scmp.ne.s32.totalorder %s140, %s142
      %p146 = scmp.eq.s32.totalorder %s68, 0
      %p147 = por %p145, %p146
      %p148 = scmp.ne.s32.totalorder %s140, %s142
      %p149 = scmp.eq.s32.totalorder %s73, 3
      %p150 = por %p148, %p149
      %p151 = scmp.ne.s32.totalorder %s142, %s143
      %p152 = scmp.eq.s32.totalorder %s73, 0
      %p153 = por %p151, %p152
      %p154 = scmp.ne.s32.totalorder %s142, %s143
      %p155 = scmp.eq.s32.totalorder %s74, 3
      %p156 = por %p154, %p155
      %p158 = scmp.ne.s32.totalorder %s143, %s157
      %p159 = scmp.eq.s32.totalorder %s74, 0
      %p160 = por %p158, %p159
      %s162 = sadd.s32 %s161, 1
      %p165 = scmp.eq.s32.totalorder %s68, 3
      %p166 = scmp.ne.s32.totalorder %s161, %s163
      %p167 = scmp.eq.s32.totalorder %s68, 0
      %p168 = por %p166, %p167
      %p169 = scmp.ne.s32.totalorder %s161, %s163
      %p170 = scmp.eq.s32.totalorder %s73, 3
      %p171 = por %p169, %p170
      %p172 = scmp.ne.s32.totalorder %s163, %s164
      %p173 = scmp.eq.s32.totalorder %s73, 0
      %p174 = por %p172, %p173
      %p175 = scmp.ne.s32.totalorder %s163, %s164
      %p176 = scmp.eq.s32.totalorder %s74, 3
      %p177 = por %p175, %p176
      %p179 = scmp.ne.s32.totalorder %s164, %s178
      %p180 = scmp.eq.s32.totalorder %s74, 0
      %p181 = por %p179, %p180
      %s183 = sadd.s32 %s182, 1
      %p186 = scmp.eq.s32.totalorder %s68, 3
      %p187 = scmp.ne.s32.totalorder %s182, %s184
      %p188 = scmp.eq.s32.totalorder %s68, 0
      %p189 = por %p187, %p188
      %p190 = scmp.ne.s32.totalorder %s182, %s184
      %p191 = scmp.eq.s32.totalorder %s73, 3
      %p192 = por %p190, %p191
      %p193 = scmp.ne.s32.totalorder %s184, %s185
      %p194 = scmp.eq.s32.totalorder %s73, 0
      %p195 = por %p193, %p194
      %p196 = scmp.ne.s32.totalorder %s184, %s185
      %p197 = scmp.eq.s32.totalorder %s74, 3
      %p198 = por %p196, %p197
      %p200 = scmp.ne.s32.totalorder %s185, %s199
      %p201 = scmp.eq.s32.totalorder %s74, 0
      %p202 = por %p200, %p201
      %s204 = sadd.s32 %s203, 1
      %p207 = scmp.eq.s32.totalorder %s68, 3
      %p208 = scmp.ne.s32.totalorder %s203, %s205
      %p209 = scmp.eq.s32.totalorder %s68, 0
      %p210 = por %p208, %p209
      %p211 = scmp.ne.s32.totalorder %s203, %s205
      %p212 = scmp.eq.s32.totalorder %s73, 3
      %p213 = por %p211, %p212
      %p214 = scmp.ne.s32.totalorder %s205, %s206
      %p215 = scmp.eq.s32.totalorder %s73, 0
      %p216 = por %p214, %p215
      %p217 = scmp.ne.s32.totalorder %s205, %s206
      %p218 = scmp.eq.s32.totalorder %s74, 3
      %p219 = por %p217, %p218
      %p221 = scmp.ne.s32.totalorder %s206, %s220
      %p222 = scmp.eq.s32.totalorder %s74, 0
      %p223 = por %p221, %p222
      %s225 = sadd.s32 %s224, 1
      %p228 = scmp.eq.s32.totalorder %s68, 3
      %p229 = scmp.ne.s32.totalorder %s224, %s226
      %p230 = scmp.eq.s32.totalorder %s68, 0
      %p231 = por %p229, %p230
      %p232 = scmp.ne.s32.totalorder %s224, %s226
      %p233 = scmp.eq.s32.totalorder %s73, 3
      %p234 = por %p232, %p233
      %p235 = scmp.ne.s32.totalorder %s226, %s227
      %p236 = scmp.eq.s32.totalorder %s73, 0
      %p237 = por %p235, %p236
      %p238 = scmp.ne.s32.totalorder %s226, %s227
      %p239 = scmp.eq.s32.totalorder %s74, 3
      %p240 = por %p238, %p239
      %p242 = scmp.ne.s32.totalorder %s227, %s241
      %p243 = scmp.eq.s32.totalorder %s74, 0
      %p244 = por %p242, %p243
      %s245 = ssub.s32 %s76, %s83
      %p246 = scmp.eq.s32.totalorder %s245, 0
      %s248 = sadd.s32 %s247, 1
      %s249 = scalar_select %p246, %s247, %s248
      %p252 = pneg %p246
      %p253 = scmp.eq.s32.totalorder %s68, 3
      %p254 = por %p252, %p253
      %p255 = scmp.ne.s32.totalorder %s247, %s250
      %p256 = scmp.eq.s32.totalorder %s68, 0
      %p257 = por %p255, %p256
      %p258 = scmp.ne.s32.totalorder %s247, %s250
      %p259 = scmp.eq.s32.totalorder %s73, 3
      %p260 = por %p258, %p259
      %p261 = scmp.ne.s32.totalorder %s250, %s251
      %p262 = scmp.eq.s32.totalorder %s73, 0
      %p263 = por %p261, %p262
      %p264 = scmp.ne.s32.totalorder %s250, %s251
      %p265 = scmp.eq.s32.totalorder %s74, 3
      %p266 = por %p264, %p265
      %p268 = scmp.ne.s32.totalorder %s251, %s267
      %p269 = scmp.eq.s32.totalorder %s74, 0
      %p270 = por %p268, %p269
      %s271 = ssub.s32 %s76, %s83
      %p272 = scmp.eq.s32.totalorder %s271, 0
      %s274 = sadd.s32 %s273, 1
      %s275 = scalar_select %p272, %s273, %s274
      %p278 = pneg %p272
      %p279 = scmp.eq.s32.totalorder %s68, 3
      %p280 = por %p278, %p279
      %p281 = scmp.ne.s32.totalorder %s273, %s276
      %p282 = scmp.eq.s32.totalorder %s68, 0
      %p283 = por %p281, %p282
      %p284 = scmp.ne.s32.totalorder %s273, %s276
      %p285 = scmp.eq.s32.totalorder %s73, 3
      %p286 = por %p284, %p285
      %p287 = scmp.ne.s32.totalorder %s276, %s277
      %p288 = scmp.eq.s32.totalorder %s73, 0
      %p289 = por %p287, %p288
      %p290 = scmp.ne.s32.totalorder %s276, %s277
      %p291 = scmp.eq.s32.totalorder %s74, 3
      %p292 = por %p290, %p291
      %p294 = scmp.ne.s32.totalorder %s277, %s293
      %p295 = scmp.eq.s32.totalorder %s74, 0
      %p296 = por %p294, %p295
      %s297 = ssub.s32 %s76, %s83
      %p298 = scmp.eq.s32.totalorder %s297, 0
      %s300 = sadd.s32 %s299, 1
      %s301 = scalar_select %p298, %s299, %s300
      %p304 = pneg %p298
      %p305 = scmp.eq.s32.totalorder %s68, 3
      %p306 = por %p304, %p305
      %p307 = scmp.ne.s32.totalorder %s299, %s302
      %p308 = scmp.eq.s32.totalorder %s68, 0
      %p309 = por %p307, %p308
      %p310 = scmp.ne.s32.totalorder %s299, %s302
      %p311 = scmp.eq.s32.totalorder %s73, 3
      %p312 = por %p310, %p311
      %p313 = scmp.ne.s32.totalorder %s302, %s303
      %p314 = scmp.eq.s32.totalorder %s73, 0
      %p315 = por %p313, %p314
      %p316 = scmp.ne.s32.totalorder %s302, %s303
      %p317 = scmp.eq.s32.totalorder %s74, 3
      %p318 = por %p316, %p317
      %p320 = scmp.ne.s32.totalorder %s303, %s319
      %p321 = scmp.eq.s32.totalorder %s74, 0
      %p322 = por %p320, %p321
      %s323 = ssub.s32 %s76, %s83
      %p324 = scmp.eq.s32.totalorder %s323, 0
      %s326 = sadd.s32 %s325, 1
      %s327 = scalar_select %p324, %s325, %s326
      %p330 = pneg %p324
      %p331 = scmp.eq.s32.totalorder %s68, 3
      %p332 = por %p330, %p331
      %p333 = scmp.ne.s32.totalorder %s325, %s328
      %p334 = scmp.eq.s32.totalorder %s68, 0
      %p335 = por %p333, %p334
      %p336 = scmp.ne.s32.totalorder %s325, %s328
      %p337 = scmp.eq.s32.totalorder %s73, 3
      %p338 = por %p336, %p337
      %p339 = scmp.ne.s32.totalorder %s328, %s329
      %p340 = scmp.eq.s32.totalorder %s73, 0
      %p341 = por %p339, %p340
      %p342 = scmp.ne.s32.totalorder %s328, %s329
      %p343 = scmp.eq.s32.totalorder %s74, 3
      %p344 = por %p342, %p343
      %p346 = scmp.ne.s32.totalorder %s329, %s345
      %p347 = scmp.eq.s32.totalorder %s74, 0
      %p348 = por %p346, %p347
      %s349 = ssub.s32 %s76, %s83
      %p350 = scmp.eq.s32.totalorder %s349, 0
      %s352 = sadd.s32 %s351, 1
      %s353 = scalar_select %p350, %s351, %s352
      %p356 = pneg %p350
      %p357 = scmp.eq.s32.totalorder %s68, 3
      %p358 = por %p356, %p357
      %p359 = scmp.ne.s32.totalorder %s351, %s354
      %p360 = scmp.eq.s32.totalorder %s68, 0
      %p361 = por %p359, %p360
      %p362 = scmp.ne.s32.totalorder %s351, %s354
      %p363 = scmp.eq.s32.totalorder %s73, 3
      %p364 = por %p362, %p363
      %p365 = scmp.ne.s32.totalorder %s354, %s355
      %p366 = scmp.eq.s32.totalorder %s73, 0
      %p367 = por %p365, %p366
      %p368 = scmp.ne.s32.totalorder %s354, %s355
      %p369 = scmp.eq.s32.totalorder %s74, 3
      %p370 = por %p368, %p369
      %p372 = scmp.ne.s32.totalorder %s355, %s371
      %p373 = scmp.eq.s32.totalorder %s74, 0
      %p374 = por %p372, %p373
      %s375 = ssub.s32 %s76, %s83
      %p376 = scmp.eq.s32.totalorder %s375, 0
      %s378 = sadd.s32 %s377, 1
      %s379 = scalar_select %p376, %s377, %s378
      %p382 = pneg %p376
      %p383 = scmp.eq.s32.totalorder %s68, 3
      %p384 = por %p382, %p383
      %p385 = scmp.ne.s32.totalorder %s377, %s380
      %p386 = scmp.eq.s32.totalorder %s68, 0
      %p387 = por %p385, %p386
      %p388 = scmp.ne.s32.totalorder %s377, %s380
      %p389 = scmp.eq.s32.totalorder %s73, 3
      %p390 = por %p388, %p389
      %p391 = scmp.ne.s32.totalorder %s380, %s381
      %p392 = scmp.eq.s32.totalorder %s73, 0
      %p393 = por %p391, %p392
      %p394 = scmp.ne.s32.totalorder %s380, %s381
      %p395 = scmp.eq.s32.totalorder %s74, 3
      %p396 = por %p394, %p395
      %p398 = scmp.ne.s32.totalorder %s381, %s397
      %p399 = scmp.eq.s32.totalorder %s74, 0
      %p400 = por %p398, %p399
      %s401 = ssub.s32 %s76, %s83
      %p402 = scmp.eq.s32.totalorder %s401, 0
      %s404 = sadd.s32 %s403, 1
      %s405 = scalar_select %p402, %s403, %s404
      %p408 = pneg %p402
      %p409 = scmp.eq.s32.totalorder %s68, 3
      %p410 = por %p408, %p409
      %p411 = scmp.ne.s32.totalorder %s403, %s406
      %p412 = scmp.eq.s32.totalorder %s68, 0
      %p413 = por %p411, %p412
      %p414 = scmp.ne.s32.totalorder %s403, %s406
      %p415 = scmp.eq.s32.totalorder %s73, 3
      %p416 = por %p414, %p415
      %p417 = scmp.ne.s32.totalorder %s406, %s407
      %p418 = scmp.eq.s32.totalorder %s73, 0
      %p419 = por %p417, %p418
      %p420 = scmp.ne.s32.totalorder %s406, %s407
      %p421 = scmp.eq.s32.totalorder %s74, 3
      %p422 = por %p420, %p421
      %p424 = scmp.ne.s32.totalorder %s407, %s423
      %p425 = scmp.eq.s32.totalorder %s74, 0
      %p426 = por %p424, %p425
      %s427 = ssub.s32 %s76, %s83
      %p428 = scmp.eq.s32.totalorder %s427, 0
      %s430 = sadd.s32 %s429, 1
      %s431 = scalar_select %p428, %s429, %s430
      %p434 = pneg %p428
      %p435 = scmp.eq.s32.totalorder %s68, 3
      %p436 = por %p434, %p435
      %p437 = scmp.ne.s32.totalorder %s429, %s432
      %p438 = scmp.eq.s32.totalorder %s68, 0
      %p439 = por %p437, %p438
      %p440 = scmp.ne.s32.totalorder %s429, %s432
      %p441 = scmp.eq.s32.totalorder %s73, 3
      %p442 = por %p440, %p441
      %p443 = scmp.ne.s32.totalorder %s432, %s433
      %p444 = scmp.eq.s32.totalorder %s73, 0
      %p445 = por %p443, %p444
      %p446 = scmp.ne.s32.totalorder %s432, %s433
      %p447 = scmp.eq.s32.totalorder %s74, 3
      %p448 = por %p446, %p447
      %p450 = scmp.ne.s32.totalorder %s433, %s449
      %p451 = scmp.eq.s32.totalorder %s74, 0
      %p452 = por %p450, %p451
      %s453 = ssub.s32 %s76, %s83
      %p454 = scmp.eq.s32.totalorder %s453, 0
      %s456 = sadd.s32 %s455, 1
      %s457 = scalar_select %p454, %s455, %s456
      %p460 = pneg %p454
      %p461 = scmp.eq.s32.totalorder %s68, 3
      %p462 = por %p460, %p461
      %p463 = scmp.ne.s32.totalorder %s455, %s458
      %p464 = scmp.eq.s32.totalorder %s68, 0
      %p465 = por %p463, %p464
      %p466 = scmp.ne.s32.totalorder %s455, %s458
      %p467 = scmp.eq.s32.totalorder %s73, 3
      %p468 = por %p466, %p467
      %p469 = scmp.ne.s32.totalorder %s458, %s459
      %p470 = scmp.eq.s32.totalorder %s73, 0
      %p471 = por %p469, %p470
      %p472 = scmp.ne.s32.totalorder %s458, %s459
      %p473 = scmp.eq.s32.totalorder %s74, 3
      %p474 = por %p472, %p473
      %p476 = scmp.ne.s32.totalorder %s459, %s475
      %p477 = scmp.eq.s32.totalorder %s74, 0
      %p478 = por %p476, %p477
      %s479 = ssub.s32 %s76, %s83
      %p480 = scmp.eq.s32.totalorder %s479, 0
      %s482 = sadd.s32 %s481, 1
      %s483 = scalar_select %p480, %s481, %s482
      %p486 = pneg %p480
      %p487 = scmp.eq.s32.totalorder %s68, 3
      %p488 = por %p486, %p487
      %p489 = scmp.ne.s32.totalorder %s481, %s484
      %p490 = scmp.eq.s32.totalorder %s68, 0
      %p491 = por %p489, %p490
      %p492 = scmp.ne.s32.totalorder %s481, %s484
      %p493 = scmp.eq.s32.totalorder %s73, 3
      %p494 = por %p492, %p493
      %p495 = scmp.ne.s32.totalorder %s484, %s485
      %p496 = scmp.eq.s32.totalorder %s73, 0
      %p497 = por %p495, %p496
      %p498 = scmp.ne.s32.totalorder %s484, %s485
      %p499 = scmp.eq.s32.totalorder %s74, 3
      %p500 = por %p498, %p499
      %p502 = scmp.ne.s32.totalorder %s485, %s501
      %p503 = scmp.eq.s32.totalorder %s74, 0
      %p504 = por %p502, %p503
      %s505 = ssub.s32 %s76, %s83
      %p506 = scmp.eq.s32.totalorder %s505, 0
      %s508 = sadd.s32 %s507, 1
      %s509 = scalar_select %p506, %s507, %s508
      %p512 = pneg %p506
      %p513 = scmp.eq.s32.totalorder %s68, 3
      %p514 = por %p512, %p513
      %p515 = scmp.ne.s32.totalorder %s507, %s510
      %p516 = scmp.eq.s32.totalorder %s68, 0
      %p517 = por %p515, %p516
      %p518 = scmp.ne.s32.totalorder %s507, %s510
      %p519 = scmp.eq.s32.totalorder %s73, 3
      %p520 = por %p518, %p519
      %p521 = scmp.ne.s32.totalorder %s510, %s511
      %p522 = scmp.eq.s32.totalorder %s73, 0
      %p523 = por %p521, %p522
      %p524 = scmp.ne.s32.totalorder %s510, %s511
      %p525 = scmp.eq.s32.totalorder %s74, 3
      %p526 = por %p524, %p525
      %p528 = scmp.ne.s32.totalorder %s511, %s527
      %p529 = scmp.eq.s32.totalorder %s74, 0
      %p530 = por %p528, %p529
      %s531 = ssub.s32 %s76, %s83
      %p532 = scmp.eq.s32.totalorder %s531, 0
      %s534 = sadd.s32 %s533, 1
      %s535 = scalar_select %p532, %s533, %s534
      %p538 = pneg %p532
      %p539 = scmp.eq.s32.totalorder %s68, 3
      %p540 = por %p538, %p539
      %p541 = scmp.ne.s32.totalorder %s533, %s536
      %p542 = scmp.eq.s32.totalorder %s68, 0
      %p543 = por %p541, %p542
      %p544 = scmp.ne.s32.totalorder %s533, %s536
      %p545 = scmp.eq.s32.totalorder %s73, 3
      %p546 = por %p544, %p545
      %p547 = scmp.ne.s32.totalorder %s536, %s537
      %p548 = scmp.eq.s32.totalorder %s73, 0
      %p549 = por %p547, %p548
      %p550 = scmp.ne.s32.totalorder %s536, %s537
      %p551 = scmp.eq.s32.totalorder %s74, 3
      %p552 = por %p550, %p551
      %p554 = scmp.ne.s32.totalorder %s537, %s553
      %p555 = scmp.eq.s32.totalorder %s74, 0
      %p556 = por %p554, %p555
      %s557 = ssub.s32 %s76, %s83
      %p558 = scmp.eq.s32.totalorder %s557, 0
      %s560 = sadd.s32 %s559, 1
      %s561 = scalar_select %p558, %s559, %s560
      %p564 = pneg %p558
      %p565 = scmp.eq.s32.totalorder %s68, 3
      %p566 = por %p564, %p565
      %p567 = scmp.ne.s32.totalorder %s559, %s562
      %p568 = scmp.eq.s32.totalorder %s68, 0
      %p569 = por %p567, %p568
      %p570 = scmp.ne.s32.totalorder %s559, %s562
      %p571 = scmp.eq.s32.totalorder %s73, 3
      %p572 = por %p570, %p571
      %p573 = scmp.ne.s32.totalorder %s562, %s563
      %p574 = scmp.eq.s32.totalorder %s73, 0
      %p575 = por %p573, %p574
      %p576 = scmp.ne.s32.totalorder %s562, %s563
      %p577 = scmp.eq.s32.totalorder %s74, 3
      %p578 = por %p576, %p577
      %p580 = scmp.ne.s32.totalorder %s563, %s579
      %p581 = scmp.eq.s32.totalorder %s74, 0
      %p582 = por %p580, %p581
      %s583 = ssub.s32 %s76, %s83
      %p584 = scmp.eq.s32.totalorder %s583, 0
      %s586 = sadd.s32 %s585, 1
      %s587 = scalar_select %p584, %s585, %s586
      %p590 = pneg %p584
      %p591 = scmp.eq.s32.totalorder %s68, 3
      %p592 = por %p590, %p591
      %p593 = scmp.ne.s32.totalorder %s585, %s588
      %p594 = scmp.eq.s32.totalorder %s68, 0
      %p595 = por %p593, %p594
      %p596 = scmp.ne.s32.totalorder %s585, %s588
      %p597 = scmp.eq.s32.totalorder %s73, 3
      %p598 = por %p596, %p597
      %p599 = scmp.ne.s32.totalorder %s588, %s589
      %p600 = scmp.eq.s32.totalorder %s73, 0
      %p601 = por %p599, %p600
      %p602 = scmp.ne.s32.totalorder %s588, %s589
      %p603 = scmp.eq.s32.totalorder %s74, 3
      %p604 = por %p602, %p603
      %p606 = scmp.ne.s32.totalorder %s589, %s605
      %p607 = scmp.eq.s32.totalorder %s74, 0
      %p608 = por %p606, %p607
      %s609 = ssub.s32 %s76, %s83
      %p610 = scmp.eq.s32.totalorder %s609, 0
      %s612 = sadd.s32 %s611, 1
      %s613 = scalar_select %p610, %s611, %s612
      %p616 = pneg %p610
      %p617 = scmp.eq.s32.totalorder %s68, 3
      %p618 = por %p616, %p617
      %p619 = scmp.ne.s32.totalorder %s611, %s614
      %p620 = scmp.eq.s32.totalorder %s68, 0
      %p621 = por %p619, %p620
      %p622 = scmp.ne.s32.totalorder %s611, %s614
      %p623 = scmp.eq.s32.totalorder %s73, 3
      %p624 = por %p622, %p623
      %p625 = scmp.ne.s32.totalorder %s614, %s615
      %p626 = scmp.eq.s32.totalorder %s73, 0
      %p627 = por %p625, %p626
      %p628 = scmp.ne.s32.totalorder %s614, %s615
      %p629 = scmp.eq.s32.totalorder %s74, 3
      %p630 = por %p628, %p629
      %p632 = scmp.ne.s32.totalorder %s615, %s631
      %p633 = scmp.eq.s32.totalorder %s74, 0
      %p634 = por %p632, %p633
      %s635 = ssub.s32 %s76, %s83
      %p636 = scmp.eq.s32.totalorder %s635, 0
      %s638 = sadd.s32 %s637, 1
      %s639 = scalar_select %p636, %s637, %s638
      %p642 = pneg %p636
      %p643 = scmp.eq.s32.totalorder %s68, 3
      %p644 = por %p642, %p643
      %p645 = scmp.ne.s32.totalorder %s637, %s640
      %p646 = scmp.eq.s32.totalorder %s68, 0
      %p647 = por %p645, %p646
      %p648 = scmp.ne.s32.totalorder %s637, %s640
      %p649 = scmp.eq.s32.totalorder %s73, 3
      %p650 = por %p648, %p649
      %p651 = scmp.ne.s32.totalorder %s640, %s641
      %p652 = scmp.eq.s32.totalorder %s73, 0
      %p653 = por %p651, %p652
      %p654 = scmp.ne.s32.totalorder %s640, %s641
      %p655 = scmp.eq.s32.totalorder %s74, 3
      %p656 = por %p654, %p655
      %p658 = scmp.ne.s32.totalorder %s641, %s657
      %p659 = scmp.eq.s32.totalorder %s74, 0
      %p660 = por %p658, %p659
      %s661 = ssub.s32 %s76, %s83
      %p662 = scmp.eq.s32.totalorder %s661, 0
      %s664 = sadd.s32 %s663, 1
      %s665 = scalar_select %p662, %s663, %s664
      %p668 = pneg %p662
      %p669 = scmp.eq.s32.totalorder %s68, 3
      %p670 = por %p668, %p669
      %p671 = scmp.ne.s32.totalorder %s663, %s666
      %p672 = scmp.eq.s32.totalorder %s68, 0
      %p673 = por %p671, %p672
      %p674 = scmp.ne.s32.totalorder %s663, %s666
      %p675 = scmp.eq.s32.totalorder %s73, 3
      %p676 = por %p674, %p675
      %p677 = scmp.ne.s32.totalorder %s666, %s667
      %p678 = scmp.eq.s32.totalorder %s73, 0
      %p679 = por %p677, %p678
      %p680 = scmp.ne.s32.totalorder %s666, %s667
      %p681 = scmp.eq.s32.totalorder %s74, 3
      %p682 = por %p680, %p681
      %p684 = scmp.ne.s32.totalorder %s667, %s683
      %p685 = scmp.eq.s32.totalorder %s74, 0
      %p686 = por %p684, %p685
      %s687 = ssub.s32 %s76, %s83
      %p688 = scmp.eq.s32.totalorder %s687, 0
      %s690 = sadd.s32 %s689, 1
      %s691 = scalar_select %p688, %s689, %s690
      %p694 = pneg %p688
      %p695 = scmp.eq.s32.totalorder %s68, 3
      %p696 = por %p694, %p695
      %p697 = scmp.ne.s32.totalorder %s689, %s692
      %p698 = scmp.eq.s32.totalorder %s68, 0
      %p699 = por %p697, %p698
      %p700 = scmp.ne.s32.totalorder %s689, %s692
      %p701 = scmp.eq.s32.totalorder %s73, 3
      %p702 = por %p700, %p701
      %p703 = scmp.ne.s32.totalorder %s692, %s693
      %p704 = scmp.eq.s32.totalorder %s73, 0
      %p705 = por %p703, %p704
      %p706 = scmp.ne.s32.totalorder %s692, %s693
      %p707 = scmp.eq.s32.totalorder %s74, 3
      %p708 = por %p706, %p707
      %p710 = scmp.ne.s32.totalorder %s693, %s709
      %p711 = scmp.eq.s32.totalorder %s74, 0
      %p712 = por %p710, %p711
      %s713 = ssub.s32 %s76, %s83
      %p714 = scmp.eq.s32.totalorder %s713, 0
      %s716 = sadd.s32 %s715, 1
      %s717 = scalar_select %p714, %s715, %s716
      %p720 = pneg %p714
      %p721 = scmp.eq.s32.totalorder %s68, 3
      %p722 = por %p720, %p721
      %p723 = scmp.ne.s32.totalorder %s715, %s718
      %p724 = scmp.eq.s32.totalorder %s68, 0
      %p725 = por %p723, %p724
      %p726 = scmp.ne.s32.totalorder %s715, %s718
      %p727 = scmp.eq.s32.totalorder %s73, 3
      %p728 = por %p726, %p727
      %p729 = scmp.ne.s32.totalorder %s718, %s719
      %p730 = scmp.eq.s32.totalorder %s73, 0
      %p731 = por %p729, %p730
      %p732 = scmp.ne.s32.totalorder %s718, %s719
      %p733 = scmp.eq.s32.totalorder %s74, 3
      %p734 = por %p732, %p733
      %p736 = scmp.ne.s32.totalorder %s719, %s735
      %p737 = scmp.eq.s32.totalorder %s74, 0
      %p738 = por %p736, %p737
      %s739 = ssub.s32 %s76, %s83
      %p740 = scmp.eq.s32.totalorder %s739, 0
      %s742 = sadd.s32 %s741, 1
      %s743 = scalar_select %p740, %s741, %s742
      %p746 = pneg %p740
      %p747 = scmp.eq.s32.totalorder %s68, 3
      %p748 = por %p746, %p747
      %p749 = scmp.ne.s32.totalorder %s741, %s744
      %p750 = scmp.eq.s32.totalorder %s68, 0
      %p751 = por %p749, %p750
      %p752 = scmp.ne.s32.totalorder %s741, %s744
      %p753 = scmp.eq.s32.totalorder %s73, 3
      %p754 = por %p752, %p753
      %p755 = scmp.ne.s32.totalorder %s744, %s745
      %p756 = scmp.eq.s32.totalorder %s73, 0
      %p757 = por %p755, %p756
      %p758 = scmp.ne.s32.totalorder %s744, %s745
      %p759 = scmp.eq.s32.totalorder %s74, 3
      %p760 = por %p758, %p759
      %p762 = scmp.ne.s32.totalorder %s745, %s761
      %p763 = scmp.eq.s32.totalorder %s74, 0
      %p764 = por %p762, %p763
      %s766 = sadd.s32 %s765, 1
      %p769 = scmp.eq.s32.totalorder %s68, 3
      %p770 = scmp.ne.s32.totalorder %s765, %s767
      %p771 = scmp.eq.s32.totalorder %s68, 0
      %p772 = por %p770, %p771
      %p773 = scmp.ne.s32.totalorder %s765, %s767
      %p774 = scmp.eq.s32.totalorder %s73, 3
      %p775 = por %p773, %p774
      %p776 = scmp.ne.s32.totalorder %s767, %s768
      %p777 = scmp.eq.s32.totalorder %s73, 0
      %p778 = por %p776, %p777
      %p779 = scmp.ne.s32.totalorder %s767, %s768
      %p780 = scmp.eq.s32.totalorder %s74, 3
      %p781 = por %p779, %p780
      %p783 = scmp.ne.s32.totalorder %s768, %s782
      %p784 = scmp.eq.s32.totalorder %s74, 0
      %p785 = por %p783, %p784
      %s787 = sadd.s32 %s786, 1
      %p790 = scmp.eq.s32.totalorder %s68, 3
      %p791 = scmp.ne.s32.totalorder %s786, %s788
      %p792 = scmp.eq.s32.totalorder %s68, 0
      %p793 = por %p791, %p792
      %p794 = scmp.ne.s32.totalorder %s786, %s788
      %p795 = scmp.eq.s32.totalorder %s73, 3
      %p796 = por %p794, %p795
      %p797 = scmp.ne.s32.totalorder %s788, %s789
      %p798 = scmp.eq.s32.totalorder %s73, 0
      %p799 = por %p797, %p798
      %p800 = scmp.ne.s32.totalorder %s788, %s789
      %p801 = scmp.eq.s32.totalorder %s74, 3
      %p802 = por %p800, %p801
      %p804 = scmp.ne.s32.totalorder %s789, %s803
      %p805 = scmp.eq.s32.totalorder %s74, 0
      %p806 = por %p804, %p805
      %s807 = ssub.s32 %s75, %s87
      %p808 = scmp.eq.s32.totalorder %s807, 0
      %s810 = sadd.s32 %s809, 1
      %s811 = scalar_select %p808, %s809, %s810
      %p814 = pneg %p808
      %p815 = scmp.eq.s32.totalorder %s68, 3
      %p816 = por %p814, %p815
      %p817 = scmp.ne.s32.totalorder %s809, %s812
      %p818 = scmp.eq.s32.totalorder %s68, 0
      %p819 = por %p817, %p818
      %p820 = scmp.ne.s32.totalorder %s809, %s812
      %p821 = scmp.eq.s32.totalorder %s73, 3
      %p822 = por %p820, %p821
      %p823 = scmp.ne.s32.totalorder %s812, %s813
      %p824 = scmp.eq.s32.totalorder %s73, 0
      %p825 = por %p823, %p824
      %p826 = scmp.ne.s32.totalorder %s812, %s813
      %p827 = scmp.eq.s32.totalorder %s74, 3
      %p828 = por %p826, %p827
      %p830 = scmp.ne.s32.totalorder %s813, %s829
      %p831 = scmp.eq.s32.totalorder %s74, 0
      %p832 = por %p830, %p831
      %p833 = scmp.le.s32.totalorder 1, %s68
      %p834 = scmp.lt.s32.totalorder %s68, 5
      %p835 = pnand %p833, %p834
      %p836 = pneg %p835
      // Predicated region
      $region9: #{timexer_forward.2} parent=5 // pred_check
        _
      $region10: #{timexer_forward.2} parent=5 // pred_check_branch
        %838 = sbr.rel (%p835) target = $region12
      $region11: #{timexer_forward.2} parent=5 // pred_region
        %s839 = ssub.s32 %s68, 1
        // Predicated region
        $region13: #{timexer_forward.2} parent=11 // pred_check
          %p840 = pneg %p153
        $region14: #{timexer_forward.2} parent=11 // pred_check_branch
          %842 = sbr.rel (%p840) target = $region16
        $region15: #{timexer_forward.2} parent=11 // pred_region
          _
        $region16: #{timexer_forward.2} parent=11 // pred_fallthru
          _
        // Predicated region
        $region17: #{timexer_forward.2} parent=11 // pred_check
          %p843 = pneg %p174
        $region18: #{timexer_forward.2} parent=11 // pred_check_branch
          %845 = sbr.rel (%p843) target = $region20
        $region19: #{timexer_forward.2} parent=11 // pred_region
          _
        $region20: #{timexer_forward.2} parent=11 // pred_fallthru
          _
        // Predicated region
        $region21: #{timexer_forward.2} parent=11 // pred_check
          %p846 = pneg %p195
        $region22: #{timexer_forward.2} parent=11 // pred_check_branch
          %848 = sbr.rel (%p846) target = $region24
        $region23: #{timexer_forward.2} parent=11 // pred_region
          %s850 = ssub.s32 64, 64
          %851 = vsyncadd [#allocation4], %s850
          %s853 = sshll.u32 [#allocation3], 4
          %s854 = int_to_ptr.vmem [resolvable:$true] %s853
          %856 = dma.hbm_to_vmem [thread:$0]  %s9, 64, %s854, [#allocation4]
        $region24: #{timexer_forward.2} parent=11 // pred_fallthru
          _
        // Predicated region
        $region25: #{timexer_forward.2} parent=11 // pred_check
          %p857 = pneg %p216
        $region26: #{timexer_forward.2} parent=11 // pred_check_branch
          %859 = sbr.rel (%p857) target = $region28
        $region27: #{timexer_forward.2} parent=11 // pred_region
          %s861 = ssub.s32 128, 128
          %862 = vsyncadd [#allocation6], %s861
          %s863 = sshll.u32 [#allocation5], 4
          %s864 = int_to_ptr.vmem [resolvable:$true] %s863
          %869 = dma.hbm_to_vmem [thread:$0]  %s11, 128, %s864, [#allocation6], 64, 64, 4
        $region28: #{timexer_forward.2} parent=11 // pred_fallthru
          _
        // Predicated region
        $region29: #{timexer_forward.2} parent=11 // pred_check
          %p870 = pneg %p237
        $region30: #{timexer_forward.2} parent=11 // pred_check_branch
          %872 = sbr.rel (%p870) target = $region32
        $region31: #{timexer_forward.2} parent=11 // pred_region
          _
        $region32: #{timexer_forward.2} parent=11 // pred_fallthru
          _
        // Predicated region
        $region33: #{timexer_forward.2} parent=11 // pred_check
          %p873 = pneg %p778
        $region34: #{timexer_forward.2} parent=11 // pred_check_branch
          %875 = sbr.rel (%p873) target = $region36
        $region35: #{timexer_forward.2} parent=11 // pred_region
          %s877 = ssub.s32 16, 16
          %878 = vsyncadd [#allocation6], %s877
          %s880 = sshll.u32 [#allocation21], 4
          %s881 = int_to_ptr.vmem [resolvable:$true] %s880
          %883 = dma.hbm_to_vmem [thread:$0]  %s55, 16, %s881, [#allocation6]
        $region36: #{timexer_forward.2} parent=11 // pred_fallthru
          _
        // Predicated region
        $region37: #{timexer_forward.2} parent=11 // pred_check
          %p884 = pneg %p799
        $region38: #{timexer_forward.2} parent=11 // pred_check_branch
          %886 = sbr.rel (%p884) target = $region40
        $region39: #{timexer_forward.2} parent=11 // pred_region
          %s888 = ssub.s32 16, 16
          %889 = vsyncadd [#allocation23], %s888
          %s891 = sshll.u32 [#allocation22], 4
          %s892 = int_to_ptr.vmem [resolvable:$true] %s891
          %894 = dma.hbm_to_vmem [thread:$0]  %s57, 16, %s892, [#allocation23]
        $region40: #{timexer_forward.2} parent=11 // pred_fallthru
          _
      $region12: #{timexer_forward.2} parent=5 // pred_fallthru
        _
      %p895 = scmp.lt.s32.totalorder %s68, 4
      // Predicated region
      $region41: #{timexer_forward.2} parent=5 // pred_check
        %p896 = pneg %p895
      $region42: #{timexer_forward.2} parent=5 // pred_check_branch
        %898 = sbr.rel (%p896) target = $region44
      $region43: #{timexer_forward.2} parent=5 // pred_region
        // Predicated region
        $region45: #{timexer_forward.2} parent=43 // pred_check
          %p899 = pneg %p100
        $region46: #{timexer_forward.2} parent=43 // pred_check_branch
          %901 = sbr.rel (%p899) target = $region48
        $region47: #{timexer_forward.2} parent=43 // pred_region
          %p902 = scmp.lt.s32.totalorder %s75, 1
          %s903 = scalar_select %p902, %s75, 1
          %s904 = smul.addr %s903, 8
          %s905 = scalar_lea.vmem %s1, %s904
        $region48: #{timexer_forward.2} parent=43 // pred_fallthru
          _
        // Predicated region
        $region49: #{timexer_forward.2} parent=43 // pred_check
          %p906 = pneg %p126
        $region50: #{timexer_forward.2} parent=43 // pred_check_branch
          %908 = sbr.rel (%p906) target = $region52
        $region51: #{timexer_forward.2} parent=43 // pred_region
          %p909 = scmp.lt.s32.totalorder %s75, 1
          %s910 = scalar_select %p909, %s75, 1
          %s911 = smul.addr %s910, 4
          %s912 = scalar_lea.vmem %s3, %s911
        $region52: #{timexer_forward.2} parent=43 // pred_fallthru
          _
        // Predicated region
        $region53: #{timexer_forward.2} parent=43 // pred_check
          %p913 = pneg %p257
        $region54: #{timexer_forward.2} parent=43 // pred_check_branch
          %915 = sbr.rel (%p913) target = $region56
        $region55: #{timexer_forward.2} parent=43 // pred_region
          %p916 = scmp.lt.s32.totalorder %s76, 1
          %s917 = scalar_select %p916, %s76, 1
          %s918 = smul.addr %s917, 4
          %s919 = smul.addr %s918, 4
          %s920 = scalar_lea.vmem %s15, %s919
        $region56: #{timexer_forward.2} parent=43 // pred_fallthru
          _
        // Predicated region
        $region57: #{timexer_forward.2} parent=43 // pred_check
          %p921 = pneg %p283
        $region58: #{timexer_forward.2} parent=43 // pred_check_branch
          %923 = sbr.rel (%p921) target = $region60
        $region59: #{timexer_forward.2} parent=43 // pred_region
          %s924 = sand.u32 %s68, 1
          %s925 = scalar_lea.sflag [#allocation4], %s924
          %s926 = sand.u32 %s273, 1
          %s927 = scalar_lea.vmem [#allocation7], %s926
          %s929 = ssub.s32 16, 16
          %930 = vsyncadd %s925, %s929
          %s931 = smul.addr %s76, 16
          %s932 = scalar_lea.hbm %s17, %s931
          %s934 = sshll.u32 %s927, 4
          %s935 = int_to_ptr.vmem [resolvable:$true] %s934
          %937 = dma.hbm_to_vmem [thread:$0]  %s932, 16, %s935, %s925
        $region60: #{timexer_forward.2} parent=43 // pred_fallthru
          _
        // Predicated region
        $region61: #{timexer_forward.2} parent=43 // pred_check
          %p938 = pneg %p309
        $region62: #{timexer_forward.2} parent=43 // pred_check_branch
          %940 = sbr.rel (%p938) target = $region64
        $region63: #{timexer_forward.2} parent=43 // pred_region
          %p941 = scmp.lt.s32.totalorder %s76, 1
          %s942 = scalar_select %p941, %s76, 1
          %s943 = smul.addr %s942, 4
          %s944 = smul.addr %s943, 4
          %s945 = scalar_lea.vmem %s19, %s944
        $region64: #{timexer_forward.2} parent=43 // pred_fallthru
          _
        // Predicated region
        $region65: #{timexer_forward.2} parent=43 // pred_check
          %p946 = pneg %p335
        $region66: #{timexer_forward.2} parent=43 // pred_check_branch
          %948 = sbr.rel (%p946) target = $region68
        $region67: #{timexer_forward.2} parent=43 // pred_region
          %s949 = sand.u32 %s68, 1
          %s950 = scalar_lea.sflag [#allocation4], %s949
          %s951 = sand.u32 %s325, 1
          %s952 = scalar_lea.vmem [#allocation8], %s951
          %s954 = ssub.s32 16, 16
          %955 = vsyncadd %s950, %s954
          %s956 = smul.addr %s76, 16
          %s957 = scalar_lea.hbm %s21, %s956
          %s959 = sshll.u32 %s952, 4
          %s960 = int_to_ptr.vmem [resolvable:$true] %s959
          %962 = dma.hbm_to_vmem [thread:$0]  %s957, 16, %s960, %s950
        $region68: #{timexer_forward.2} parent=43 // pred_fallthru
          _
        // Predicated region
        $region69: #{timexer_forward.2} parent=43 // pred_check
          %p963 = pneg %p361
        $region70: #{timexer_forward.2} parent=43 // pred_check_branch
          %965 = sbr.rel (%p963) target = $region72
        $region71: #{timexer_forward.2} parent=43 // pred_region
          %p966 = scmp.lt.s32.totalorder %s76, 1
          %s967 = scalar_select %p966, %s76, 1
          %s968 = smul.addr %s967, 4
          %s969 = smul.addr %s968, 4
          %s970 = scalar_lea.vmem %s23, %s969
        $region72: #{timexer_forward.2} parent=43 // pred_fallthru
          _
        // Predicated region
        $region73: #{timexer_forward.2} parent=43 // pred_check
          %p971 = pneg %p387
        $region74: #{timexer_forward.2} parent=43 // pred_check_branch
          %973 = sbr.rel (%p971) target = $region76
        $region75: #{timexer_forward.2} parent=43 // pred_region
          %s974 = sand.u32 %s68, 1
          %s975 = scalar_lea.sflag [#allocation4], %s974
          %s976 = sand.u32 %s377, 1
          %s977 = scalar_lea.vmem [#allocation9], %s976
          %s979 = ssub.s32 16, 16
          %980 = vsyncadd %s975, %s979
          %s981 = smul.addr %s76, 16
          %s982 = scalar_lea.hbm %s25, %s981
          %s984 = sshll.u32 %s977, 4
          %s985 = int_to_ptr.vmem [resolvable:$true] %s984
          %987 = dma.hbm_to_vmem [thread:$0]  %s982, 16, %s985, %s975
        $region76: #{timexer_forward.2} parent=43 // pred_fallthru
          _
        // Predicated region
        $region77: #{timexer_forward.2} parent=43 // pred_check
          %p988 = pneg %p413
        $region78: #{timexer_forward.2} parent=43 // pred_check_branch
          %990 = sbr.rel (%p988) target = $region80
        $region79: #{timexer_forward.2} parent=43 // pred_region
          %p991 = scmp.lt.s32.totalorder %s76, 1
          %s992 = scalar_select %p991, %s76, 1
          %s993 = smul.addr %s992, 4
          %s994 = smul.addr %s993, 4
          %s995 = scalar_lea.vmem %s27, %s994
        $region80: #{timexer_forward.2} parent=43 // pred_fallthru
          _
        // Predicated region
        $region81: #{timexer_forward.2} parent=43 // pred_check
          %p996 = pneg %p439
        $region82: #{timexer_forward.2} parent=43 // pred_check_branch
          %998 = sbr.rel (%p996) target = $region84
        $region83: #{timexer_forward.2} parent=43 // pred_region
          %s999 = sand.u32 %s68, 1
          %s1000 = scalar_lea.sflag [#allocation4], %s999
          %s1001 = sand.u32 %s429, 1
          %s1002 = scalar_lea.vmem [#allocation10], %s1001
          %s1004 = ssub.s32 16, 16
          %1005 = vsyncadd %s1000, %s1004
          %s1006 = smul.addr %s76, 16
          %s1007 = scalar_lea.hbm %s29, %s1006
          %s1009 = sshll.u32 %s1002, 4
          %s1010 = int_to_ptr.vmem [resolvable:$true] %s1009
          %1012 = dma.hbm_to_vmem [thread:$0]  %s1007, 16, %s1010, %s1000
        $region84: #{timexer_forward.2} parent=43 // pred_fallthru
          _
        // Predicated region
        $region85: #{timexer_forward.2} parent=43 // pred_check
          %p1013 = pneg %p465
        $region86: #{timexer_forward.2} parent=43 // pred_check_branch
          %1015 = sbr.rel (%p1013) target = $region88
        $region87: #{timexer_forward.2} parent=43 // pred_region
          %p1016 = scmp.lt.s32.totalorder %s76, 1
          %s1017 = scalar_select %p1016, %s76, 1
          %s1018 = smul.addr %s1017, 4
          %s1019 = smul.addr %s1018, 4
          %s1020 = scalar_lea.vmem %s31, %s1019
        $region88: #{timexer_forward.2} parent=43 // pred_fallthru
          _
        // Predicated region
        $region89: #{timexer_forward.2} parent=43 // pred_check
          %p1021 = pneg %p491
        $region90: #{timexer_forward.2} parent=43 // pred_check_branch
          %1023 = sbr.rel (%p1021) target = $region92
        $region91: #{timexer_forward.2} parent=43 // pred_region
          %s1024 = sand.u32 %s68, 1
          %s1025 = scalar_lea.sflag [#allocation4], %s1024
          %s1026 = sand.u32 %s481, 1
          %s1027 = scalar_lea.vmem [#allocation11], %s1026
          %s1029 = ssub.s32 16, 16
          %1030 = vsyncadd %s1025, %s1029
          %s1031 = smul.addr %s76, 16
          %s1032 = scalar_lea.hbm %s33, %s1031
          %s1034 = sshll.u32 %s1027, 4
          %s1035 = int_to_ptr.vmem [resolvable:$true] %s1034
          %1037 = dma.hbm_to_vmem [thread:$0]  %s1032, 16, %s1035, %s1025
        $region92: #{timexer_forward.2} parent=43 // pred_fallthru
          _
        // Predicated region
        $region93: #{timexer_forward.2} parent=43 // pred_check
          %p1038 = pneg %p517
        $region94: #{timexer_forward.2} parent=43 // pred_check_branch
          %1040 = sbr.rel (%p1038) target = $region96
        $region95: #{timexer_forward.2} parent=43 // pred_region
          %s1041 = sand.u32 %s68, 1
          %s1042 = scalar_lea.sflag [#allocation4], %s1041
          %s1043 = sand.u32 %s507, 1
          %s1044 = scalar_lea.vmem [#allocation12], %s1043
          %s1046 = ssub.s32 16, 16
          %1047 = vsyncadd %s1042, %s1046
          %s1048 = smul.addr %s76, 16
          %s1049 = scalar_lea.hbm %s35, %s1048
          %s1051 = sshll.u32 %s1044, 4
          %s1052 = int_to_ptr.vmem [resolvable:$true] %s1051
          %1054 = dma.hbm_to_vmem [thread:$0]  %s1049, 16, %s1052, %s1042
        $region96: #{timexer_forward.2} parent=43 // pred_fallthru
          _
        // Predicated region
        $region97: #{timexer_forward.2} parent=43 // pred_check
          %p1055 = pneg %p543
        $region98: #{timexer_forward.2} parent=43 // pred_check_branch
          %1057 = sbr.rel (%p1055) target = $region100
        $region99: #{timexer_forward.2} parent=43 // pred_region
          %s1058 = sand.u32 %s68, 1
          %s1059 = scalar_lea.sflag [#allocation4], %s1058
          %s1060 = sand.u32 %s533, 1
          %s1061 = scalar_lea.vmem [#allocation13], %s1060
          %s1063 = ssub.s32 16, 16
          %1064 = vsyncadd %s1059, %s1063
          %s1065 = smul.addr %s76, 16
          %s1066 = scalar_lea.hbm %s37, %s1065
          %s1068 = sshll.u32 %s1061, 4
          %s1069 = int_to_ptr.vmem [resolvable:$true] %s1068
          %1071 = dma.hbm_to_vmem [thread:$0]  %s1066, 16, %s1069, %s1059
        $region100: #{timexer_forward.2} parent=43 // pred_fallthru
          _
        // Predicated region
        $region101: #{timexer_forward.2} parent=43 // pred_check
          %p1072 = pneg %p569
        $region102: #{timexer_forward.2} parent=43 // pred_check_branch
          %1074 = sbr.rel (%p1072) target = $region104
        $region103: #{timexer_forward.2} parent=43 // pred_region
          %s1075 = sand.u32 %s68, 1
          %s1076 = scalar_lea.sflag [#allocation4], %s1075
          %s1077 = sand.u32 %s559, 1
          %s1078 = scalar_lea.vmem [#allocation14], %s1077
          %s1080 = ssub.s32 16, 16
          %1081 = vsyncadd %s1076, %s1080
          %s1082 = smul.addr %s76, 16
          %s1083 = scalar_lea.hbm %s39, %s1082
          %s1085 = sshll.u32 %s1078, 4
          %s1086 = int_to_ptr.vmem [resolvable:$true] %s1085
          %1088 = dma.hbm_to_vmem [thread:$0]  %s1083, 16, %s1086, %s1076
        $region104: #{timexer_forward.2} parent=43 // pred_fallthru
          _
        // Predicated region
        $region105: #{timexer_forward.2} parent=43 // pred_check
          %p1089 = pneg %p595
        $region106: #{timexer_forward.2} parent=43 // pred_check_branch
          %1091 = sbr.rel (%p1089) target = $region108
        $region107: #{timexer_forward.2} parent=43 // pred_region
          %s1092 = sand.u32 %s68, 1
          %s1093 = scalar_lea.sflag [#allocation4], %s1092
          %s1094 = sand.u32 %s585, 1
          %s1095 = scalar_lea.vmem [#allocation15], %s1094
          %s1097 = ssub.s32 16, 16
          %1098 = vsyncadd %s1093, %s1097
          %s1099 = smul.addr %s76, 16
          %s1100 = scalar_lea.hbm %s41, %s1099
          %s1102 = sshll.u32 %s1095, 4
          %s1103 = int_to_ptr.vmem [resolvable:$true] %s1102
          %1105 = dma.hbm_to_vmem [thread:$0]  %s1100, 16, %s1103, %s1093
        $region108: #{timexer_forward.2} parent=43 // pred_fallthru
          _
        // Predicated region
        $region109: #{timexer_forward.2} parent=43 // pred_check
          %p1106 = pneg %p621
        $region110: #{timexer_forward.2} parent=43 // pred_check_branch
          %1108 = sbr.rel (%p1106) target = $region112
        $region111: #{timexer_forward.2} parent=43 // pred_region
          %s1109 = sand.u32 %s68, 1
          %s1110 = scalar_lea.sflag [#allocation4], %s1109
          %s1111 = sand.u32 %s611, 1
          %s1112 = smul.addr %s1111, 16
          %s1113 = scalar_lea.vmem [#allocation16], %s1112
          %s1115 = ssub.s32 256, 256
          %1116 = vsyncadd %s1110, %s1115
          %s1117 = smul.addr %s76, 4
          %s1118 = smul.addr %s1117, 64
          %s1119 = scalar_lea.hbm %s43, %s1118
          %s1120 = sshll.u32 %s1113, 4
          %s1121 = int_to_ptr.vmem [resolvable:$true] %s1120
          %1126 = dma.hbm_to_vmem [thread:$0]  %s1119, 256, %s1121, %s1110, 64, 64, 4
        $region112: #{timexer_forward.2} parent=43 // pred_fallthru
          _
        // Predicated region
        $region113: #{timexer_forward.2} parent=43 // pred_check
          %p1127 = pneg %p647
        $region114: #{timexer_forward.2} parent=43 // pred_check_branch
          %1129 = sbr.rel (%p1127) target = $region116
        $region115: #{timexer_forward.2} parent=43 // pred_region
          %s1130 = sand.u32 %s68, 1
          %s1131 = scalar_lea.sflag [#allocation4], %s1130
          %s1132 = sand.u32 %s637, 1
          %s1133 = scalar_lea.vmem [#allocation17], %s1132
          %s1135 = ssub.s32 16, 16
          %1136 = vsyncadd %s1131, %s1135
          %s1137 = smul.addr %s76, 16
          %s1138 = scalar_lea.hbm %s45, %s1137
          %s1140 = sshll.u32 %s1133, 4
          %s1141 = int_to_ptr.vmem [resolvable:$true] %s1140
          %1143 = dma.hbm_to_vmem [thread:$0]  %s1138, 16, %s1141, %s1131
        $region116: #{timexer_forward.2} parent=43 // pred_fallthru
          _
        // Predicated region
        $region117: #{timexer_forward.2} parent=43 // pred_check
          %p1144 = pneg %p673
        $region118: #{timexer_forward.2} parent=43 // pred_check_branch
          %1146 = sbr.rel (%p1144) target = $region120
        $region119: #{timexer_forward.2} parent=43 // pred_region
          %p1147 = scmp.lt.s32.totalorder %s76, 1
          %s1148 = scalar_select %p1147, %s76, 1
          %s1149 = smul.addr %s1148, 8
          %s1150 = smul.addr %s1149, 4
          %s1151 = scalar_lea.vmem %s47, %s1150
        $region120: #{timexer_forward.2} parent=43 // pred_fallthru
          _
        // Predicated region
        $region121: #{timexer_forward.2} parent=43 // pred_check
          %p1152 = pneg %p699
        $region122: #{timexer_forward.2} parent=43 // pred_check_branch
          %1154 = sbr.rel (%p1152) target = $region124
        $region123: #{timexer_forward.2} parent=43 // pred_region
          %s1155 = sand.u32 %s68, 1
          %s1156 = scalar_lea.sflag [#allocation4], %s1155
          %s1157 = sand.u32 %s689, 1
          %s1158 = scalar_lea.vmem [#allocation18], %s1157
          %s1160 = ssub.s32 16, 16
          %1161 = vsyncadd %s1156, %s1160
          %s1162 = smul.addr %s76, 16
          %s1163 = scalar_lea.hbm %s49, %s1162
          %s1165 = sshll.u32 %s1158, 4
          %s1166 = int_to_ptr.vmem [resolvable:$true] %s1165
          %1168 = dma.hbm_to_vmem [thread:$0]  %s1163, 16, %s1166, %s1156
        $region124: #{timexer_forward.2} parent=43 // pred_fallthru
          _
        // Predicated region
        $region125: #{timexer_forward.2} parent=43 // pred_check
          %p1169 = pneg %p725
        $region126: #{timexer_forward.2} parent=43 // pred_check_branch
          %1171 = sbr.rel (%p1169) target = $region128
        $region127: #{timexer_forward.2} parent=43 // pred_region
          %s1172 = sand.u32 %s68, 1
          %s1173 = scalar_lea.sflag [#allocation4], %s1172
          %s1174 = sand.u32 %s715, 1
          %s1175 = scalar_lea.vmem [#allocation19], %s1174
          %s1177 = ssub.s32 16, 16
          %1178 = vsyncadd %s1173, %s1177
          %s1179 = smul.addr %s76, 16
          %s1180 = scalar_lea.hbm %s51, %s1179
          %s1182 = sshll.u32 %s1175, 4
          %s1183 = int_to_ptr.vmem [resolvable:$true] %s1182
          %1185 = dma.hbm_to_vmem [thread:$0]  %s1180, 16, %s1183, %s1173
        $region128: #{timexer_forward.2} parent=43 // pred_fallthru
          _
        // Predicated region
        $region129: #{timexer_forward.2} parent=43 // pred_check
          %p1186 = pneg %p751
        $region130: #{timexer_forward.2} parent=43 // pred_check_branch
          %1188 = sbr.rel (%p1186) target = $region132
        $region131: #{timexer_forward.2} parent=43 // pred_region
          %s1189 = sand.u32 %s68, 1
          %s1190 = scalar_lea.sflag [#allocation4], %s1189
          %s1191 = sand.u32 %s741, 1
          %s1192 = scalar_lea.vmem [#allocation20], %s1191
          %s1194 = ssub.s32 16, 16
          %1195 = vsyncadd %s1190, %s1194
          %s1196 = smul.addr %s76, 16
          %s1197 = scalar_lea.hbm %s53, %s1196
          %s1199 = sshll.u32 %s1192, 4
          %s1200 = int_to_ptr.vmem [resolvable:$true] %s1199
          %1202 = dma.hbm_to_vmem [thread:$0]  %s1197, 16, %s1200, %s1190
        $region132: #{timexer_forward.2} parent=43 // pred_fallthru
          _
      $region44: #{timexer_forward.2} parent=5 // pred_fallthru
        _
      %p1203 = scmp.le.s32.totalorder 1, %s68
      %p1204 = scmp.lt.s32.totalorder %s68, 5
      %p1205 = pnand %p1203, %p1204
      %p1206 = pneg %p1205
      // Predicated region
      $region133: #{timexer_forward.2} parent=5 // pred_check
        _
      $region134: #{timexer_forward.2} parent=5 // pred_check_branch
        %1208 = sbr.rel (%p1205) target = $region136
      $region135: #{timexer_forward.2} parent=5 // pred_region
        %s1209 = ssub.s32 %s68, 1
        // Predicated region
        $region137: #{timexer_forward.2} parent=135 // pred_check
          %p1210 = pneg %p195
        $region138: #{timexer_forward.2} parent=135 // pred_check_branch
          %1212 = sbr.rel (%p1210) target = $region140
        $region139: #{timexer_forward.2} parent=135 // pred_region
          %1213 = dma.done [#allocation4], 64
        $region140: #{timexer_forward.2} parent=135 // pred_fallthru
          _
        // Predicated region
        $region141: #{timexer_forward.2} parent=135 // pred_check
          %p1214 = pneg %p216
        $region142: #{timexer_forward.2} parent=135 // pred_check_branch
          %1216 = sbr.rel (%p1214) target = $region144
        $region143: #{timexer_forward.2} parent=135 // pred_region
          %1217 = dma.done [#allocation6], 128
        $region144: #{timexer_forward.2} parent=135 // pred_fallthru
          _
        %s1218 = sand.u32 %s73, 1
        %s1219 = scalar_lea.sflag [#allocation4], %s1218
        %s1220 = sand.u32 %s276, 1
        %s1221 = scalar_lea.vmem [#allocation7], %s1220
        // Predicated region
        $region145: #{timexer_forward.2} parent=135 // pred_check
          %p1222 = pneg %p289
        $region146: #{timexer_forward.2} parent=135 // pred_check_branch
          %1224 = sbr.rel (%p1222) target = $region148
        $region147: #{timexer_forward.2} parent=135 // pred_region
          %1225 = dma.done %s1219, 16
        $region148: #{timexer_forward.2} parent=135 // pred_fallthru
          _
        %s1226 = sand.u32 %s73, 1
        %s1227 = scalar_lea.sflag [#allocation4], %s1226
        %s1228 = sand.u32 %s328, 1
        %s1229 = scalar_lea.vmem [#allocation8], %s1228
        // Predicated region
        $region149: #{timexer_forward.2} parent=135 // pred_check
          %p1230 = pneg %p341
        $region150: #{timexer_forward.2} parent=135 // pred_check_branch
          %1232 = sbr.rel (%p1230) target = $region152
        $region151: #{timexer_forward.2} parent=135 // pred_region
          %1233 = dma.done %s1227, 16
        $region152: #{timexer_forward.2} parent=135 // pred_fallthru
          _
        %s1234 = sand.u32 %s73, 1
        %s1235 = scalar_lea.sflag [#allocation4], %s1234
        %s1236 = sand.u32 %s380, 1
        %s1237 = scalar_lea.vmem [#allocation9], %s1236
        // Predicated region
        $region153: #{timexer_forward.2} parent=135 // pred_check
          %p1238 = pneg %p393
        $region154: #{timexer_forward.2} parent=135 // pred_check_branch
          %1240 = sbr.rel (%p1238) target = $region156
        $region155: #{timexer_forward.2} parent=135 // pred_region
          %1241 = dma.done %s1235, 16
        $region156: #{timexer_forward.2} parent=135 // pred_fallthru
          _
        %s1242 = sand.u32 %s73, 1
        %s1243 = scalar_lea.sflag [#allocation4], %s1242
        %s1244 = sand.u32 %s432, 1
        %s1245 = scalar_lea.vmem [#allocation10], %s1244
        // Predicated region
        $region157: #{timexer_forward.2} parent=135 // pred_check
          %p1246 = pneg %p445
        $region158: #{timexer_forward.2} parent=135 // pred_check_branch
          %1248 = sbr.rel (%p1246) target = $region160
        $region159: #{timexer_forward.2} parent=135 // pred_region
          %1249 = dma.done %s1243, 16
        $region160: #{timexer_forward.2} parent=135 // pred_fallthru
          _
        %s1250 = sand.u32 %s73, 1
        %s1251 = scalar_lea.sflag [#allocation4], %s1250
        %s1252 = sand.u32 %s484, 1
        %s1253 = scalar_lea.vmem [#allocation11], %s1252
        // Predicated region
        $region161: #{timexer_forward.2} parent=135 // pred_check
          %p1254 = pneg %p497
        $region162: #{timexer_forward.2} parent=135 // pred_check_branch
          %1256 = sbr.rel (%p1254) target = $region164
        $region163: #{timexer_forward.2} parent=135 // pred_region
          %1257 = dma.done %s1251, 16
        $region164: #{timexer_forward.2} parent=135 // pred_fallthru
          _
        %s1258 = sand.u32 %s73, 1
        %s1259 = scalar_lea.sflag [#allocation4], %s1258
        %s1260 = sand.u32 %s510, 1
        %s1261 = scalar_lea.vmem [#allocation12], %s1260
        // Predicated region
        $region165: #{timexer_forward.2} parent=135 // pred_check
          %p1262 = pneg %p523
        $region166: #{timexer_forward.2} parent=135 // pred_check_branch
          %1264 = sbr.rel (%p1262) target = $region168
        $region167: #{timexer_forward.2} parent=135 // pred_region
          %1265 = dma.done %s1259, 16
        $region168: #{timexer_forward.2} parent=135 // pred_fallthru
          _
        %s1266 = sand.u32 %s73, 1
        %s1267 = scalar_lea.sflag [#allocation4], %s1266
        %s1268 = sand.u32 %s536, 1
        %s1269 = scalar_lea.vmem [#allocation13], %s1268
        // Predicated region
        $region169: #{timexer_forward.2} parent=135 // pred_check
          %p1270 = pneg %p549
        $region170: #{timexer_forward.2} parent=135 // pred_check_branch
          %1272 = sbr.rel (%p1270) target = $region172
        $region171: #{timexer_forward.2} parent=135 // pred_region
          %1273 = dma.done %s1267, 16
        $region172: #{timexer_forward.2} parent=135 // pred_fallthru
          _
        %s1274 = sand.u32 %s73, 1
        %s1275 = scalar_lea.sflag [#allocation4], %s1274
        %s1276 = sand.u32 %s562, 1
        %s1277 = scalar_lea.vmem [#allocation14], %s1276
        // Predicated region
        $region173: #{timexer_forward.2} parent=135 // pred_check
          %p1278 = pneg %p575
        $region174: #{timexer_forward.2} parent=135 // pred_check_branch
          %1280 = sbr.rel (%p1278) target = $region176
        $region175: #{timexer_forward.2} parent=135 // pred_region
          %1281 = dma.done %s1275, 16
        $region176: #{timexer_forward.2} parent=135 // pred_fallthru
          _
        %s1282 = sand.u32 %s73, 1
        %s1283 = scalar_lea.sflag [#allocation4], %s1282
        %s1284 = sand.u32 %s588, 1
        %s1285 = scalar_lea.vmem [#allocation15], %s1284
        // Predicated region
        $region177: #{timexer_forward.2} parent=135 // pred_check
          %p1286 = pneg %p601
        $region178: #{timexer_forward.2} parent=135 // pred_check_branch
          %1288 = sbr.rel (%p1286) target = $region180
        $region179: #{timexer_forward.2} parent=135 // pred_region
          %1289 = dma.done %s1283, 16
        $region180: #{timexer_forward.2} parent=135 // pred_fallthru
          _
        %s1290 = sand.u32 %s73, 1
        %s1291 = scalar_lea.sflag [#allocation4], %s1290
        %s1292 = sand.u32 %s614, 1
        %s1293 = smul.addr %s1292, 16
        %s1294 = scalar_lea.vmem [#allocation16], %s1293
        // Predicated region
        $region181: #{timexer_forward.2} parent=135 // pred_check
          %p1295 = pneg %p627
        $region182: #{timexer_forward.2} parent=135 // pred_check_branch
          %1297 = sbr.rel (%p1295) target = $region184
        $region183: #{timexer_forward.2} parent=135 // pred_region
          %1298 = dma.done %s1291, 256
        $region184: #{timexer_forward.2} parent=135 // pred_fallthru
          _
        %s1299 = sand.u32 %s73, 1
        %s1300 = scalar_lea.sflag [#allocation4], %s1299
        %s1301 = sand.u32 %s640, 1
        %s1302 = scalar_lea.vmem [#allocation17], %s1301
        // Predicated region
        $region185: #{timexer_forward.2} parent=135 // pred_check
          %p1303 = pneg %p653
        $region186: #{timexer_forward.2} parent=135 // pred_check_branch
          %1305 = sbr.rel (%p1303) target = $region188
        $region187: #{timexer_forward.2} parent=135 // pred_region
          %1306 = dma.done %s1300, 16
        $region188: #{timexer_forward.2} parent=135 // pred_fallthru
          _
        %s1307 = sand.u32 %s73, 1
        %s1308 = scalar_lea.sflag [#allocation4], %s1307
        %s1309 = sand.u32 %s692, 1
        %s1310 = scalar_lea.vmem [#allocation18], %s1309
        // Predicated region
        $region189: #{timexer_forward.2} parent=135 // pred_check
          %p1311 = pneg %p705
        $region190: #{timexer_forward.2} parent=135 // pred_check_branch
          %1313 = sbr.rel (%p1311) target = $region192
        $region191: #{timexer_forward.2} parent=135 // pred_region
          %1314 = dma.done %s1308, 16
        $region192: #{timexer_forward.2} parent=135 // pred_fallthru
          _
        %s1315 = sand.u32 %s73, 1
        %s1316 = scalar_lea.sflag [#allocation4], %s1315
        %s1317 = sand.u32 %s718, 1
        %s1318 = scalar_lea.vmem [#allocation19], %s1317
        // Predicated region
        $region193: #{timexer_forward.2} parent=135 // pred_check
          %p1319 = pneg %p731
        $region194: #{timexer_forward.2} parent=135 // pred_check_branch
          %1321 = sbr.rel (%p1319) target = $region196
        $region195: #{timexer_forward.2} parent=135 // pred_region
          %1322 = dma.done %s1316, 16
        $region196: #{timexer_forward.2} parent=135 // pred_fallthru
          _
        %s1323 = sand.u32 %s73, 1
        %s1324 = scalar_lea.sflag [#allocation4], %s1323
        %s1325 = sand.u32 %s744, 1
        %s1326 = scalar_lea.vmem [#allocation20], %s1325
        // Predicated region
        $region197: #{timexer_forward.2} parent=135 // pred_check
          %p1327 = pneg %p757
        $region198: #{timexer_forward.2} parent=135 // pred_check_branch
          %1329 = sbr.rel (%p1327) target = $region200
        $region199: #{timexer_forward.2} parent=135 // pred_region
          %1330 = dma.done %s1324, 16
        $region200: #{timexer_forward.2} parent=135 // pred_fallthru
          _
        // Predicated region
        $region201: #{timexer_forward.2} parent=135 // pred_check
          %p1331 = pneg %p778
        $region202: #{timexer_forward.2} parent=135 // pred_check_branch
          %1333 = sbr.rel (%p1331) target = $region204
        $region203: #{timexer_forward.2} parent=135 // pred_region
          %1334 = dma.done [#allocation6], 16
        $region204: #{timexer_forward.2} parent=135 // pred_fallthru
          _
        // Predicated region
        $region205: #{timexer_forward.2} parent=135 // pred_check
          %p1335 = pneg %p799
        $region206: #{timexer_forward.2} parent=135 // pred_check_branch
          %1337 = sbr.rel (%p1335) target = $region208
        $region207: #{timexer_forward.2} parent=135 // pred_region
          %1338 = dma.done [#allocation23], 16
        $region208: #{timexer_forward.2} parent=135 // pred_fallthru
          _
        %p1339 = scmp.lt.s32.totalorder %s77, 1
        %s1340 = scalar_select %p1339, %s77, 1
        %s1341 = smul.addr %s1340, 8
        %s1342 = scalar_lea.vmem %s1, %s1341
        %p1343 = pneg %p106
        %p1344 = pneg %p103
        %p1345 = scmp.lt.s32.totalorder %s77, 1
        %s1346 = scalar_select %p1345, %s77, 1
        %s1347 = smul.addr %s1346, 4
        %s1348 = scalar_lea.vmem %s3, %s1347
        %p1349 = pneg %p132
        %p1350 = pneg %p129
        %p1351 = pneg %p153
        %p1352 = pneg %p150
        %p1353 = pneg %p174
        %p1354 = pneg %p171
        %p1355 = pneg %p195
        %p1356 = pneg %p192
        %p1357 = pneg %p216
        %p1358 = pneg %p213
        %p1359 = pneg %p237
        %p1360 = pneg %p234
        %p1361 = scmp.lt.s32.totalorder %s78, 1
        %s1362 = scalar_select %p1361, %s78, 1
        %s1363 = smul.addr %s1362, 4
        %s1364 = smul.addr %s1363, 4
        %s1365 = scalar_lea.vmem %s15, %s1364
        %p1366 = pneg %p263
        %p1367 = pneg %p260
        %s1368 = sand.u32 %s73, 1
        %s1369 = scalar_lea.sflag [#allocation4], %s1368
        %s1370 = sand.u32 %s276, 1
        %s1371 = scalar_lea.vmem [#allocation7], %s1370
        %p1372 = pneg %p289
        %p1373 = pneg %p286
        %p1374 = scmp.lt.s32.totalorder %s78, 1
        %s1375 = scalar_select %p1374, %s78, 1
        %s1376 = smul.addr %s1375, 4
        %s1377 = smul.addr %s1376, 4
        %s1378 = scalar_lea.vmem %s19, %s1377
        %p1379 = pneg %p315
        %p1380 = pneg %p312
        %s1381 = sand.u32 %s73, 1
        %s1382 = scalar_lea.sflag [#allocation4], %s1381
        %s1383 = sand.u32 %s328, 1
        %s1384 = scalar_lea.vmem [#allocation8], %s1383
        %p1385 = pneg %p341
        %p1386 = pneg %p338
        %p1387 = scmp.lt.s32.totalorder %s78, 1
        %s1388 = scalar_select %p1387, %s78, 1
        %s1389 = smul.addr %s1388, 4
        %s1390 = smul.addr %s1389, 4
        %s1391 = scalar_lea.vmem %s23, %s1390
        %p1392 = pneg %p367
        %p1393 = pneg %p364
        %s1394 = sand.u32 %s73, 1
        %s1395 = scalar_lea.sflag [#allocation4], %s1394
        %s1396 = sand.u32 %s380, 1
        %s1397 = scalar_lea.vmem [#allocation9], %s1396
        %p1398 = pneg %p393
        %p1399 = pneg %p390
        %p1400 = scmp.lt.s32.totalorder %s78, 1
        %s1401 = scalar_select %p1400, %s78, 1
        %s1402 = smul.addr %s1401, 4
        %s1403 = smul.addr %s1402, 4
        %s1404 = scalar_lea.vmem %s27, %s1403
        %p1405 = pneg %p419
        %p1406 = pneg %p416
        %s1407 = sand.u32 %s73, 1
        %s1408 = scalar_lea.sflag [#allocation4], %s1407
        %s1409 = sand.u32 %s432, 1
        %s1410 = scalar_lea.vmem [#allocation10], %s1409
        %p1411 = pneg %p445
        %p1412 = pneg %p442
        %p1413 = scmp.lt.s32.totalorder %s78, 1
        %s1414 = scalar_select %p1413, %s78, 1
        %s1415 = smul.addr %s1414, 4
        %s1416 = smul.addr %s1415, 4
        %s1417 = scalar_lea.vmem %s31, %s1416
        %p1418 = pneg %p471
        %p1419 = pneg %p468
        %s1420 = sand.u32 %s73, 1
        %s1421 = scalar_lea.sflag [#allocation4], %s1420
        %s1422 = sand.u32 %s484, 1
        %s1423 = scalar_lea.vmem [#allocation11], %s1422
        %p1424 = pneg %p497
        %p1425 = pneg %p494
        %s1426 = sand.u32 %s73, 1
        %s1427 = scalar_lea.sflag [#allocation4], %s1426
        %s1428 = sand.u32 %s510, 1
        %s1429 = scalar_lea.vmem [#allocation12], %s1428
        %p1430 = pneg %p523
        %p1431 = pneg %p520
        %s1432 = sand.u32 %s73, 1
        %s1433 = scalar_lea.sflag [#allocation4], %s1432
        %s1434 = sand.u32 %s536, 1
        %s1435 = scalar_lea.vmem [#allocation13], %s1434
        %p1436 = pneg %p549
        %p1437 = pneg %p546
        %s1438 = sand.u32 %s73, 1
        %s1439 = scalar_lea.sflag [#allocation4], %s1438
        %s1440 = sand.u32 %s562, 1
        %s1441 = scalar_lea.vmem [#allocation14], %s1440
        %p1442 = pneg %p575
        %p1443 = pneg %p572
        %s1444 = sand.u32 %s73, 1
        %s1445 = scalar_lea.sflag [#allocation4], %s1444
        %s1446 = sand.u32 %s588, 1
        %s1447 = scalar_lea.vmem [#allocation15], %s1446
        %p1448 = pneg %p601
        %p1449 = pneg %p598
        %s1450 = sand.u32 %s73, 1
        %s1451 = scalar_lea.sflag [#allocation4], %s1450
        %s1452 = sand.u32 %s614, 1
        %s1453 = smul.addr %s1452, 16
        %s1454 = scalar_lea.vmem [#allocation16], %s1453
        %p1455 = pneg %p627
        %p1456 = pneg %p624
        %s1457 = sand.u32 %s73, 1
        %s1458 = scalar_lea.sflag [#allocation4], %s1457
        %s1459 = sand.u32 %s640, 1
        %s1460 = scalar_lea.vmem [#allocation17], %s1459
        %p1461 = pneg %p653
        %p1462 = pneg %p650
        %p1463 = scmp.lt.s32.totalorder %s78, 1
        %s1464 = scalar_select %p1463, %s78, 1
        %s1465 = smul.addr %s1464, 8
        %s1466 = smul.addr %s1465, 4
        %s1467 = scalar_lea.vmem %s47, %s1466
        %p1468 = pneg %p679
        %p1469 = pneg %p676
        %s1470 = sand.u32 %s73, 1
        %s1471 = scalar_lea.sflag [#allocation4], %s1470
        %s1472 = sand.u32 %s692, 1
        %s1473 = scalar_lea.vmem [#allocation18], %s1472
        %p1474 = pneg %p705
        %p1475 = pneg %p702
        %s1476 = sand.u32 %s73, 1
        %s1477 = scalar_lea.sflag [#allocation4], %s1476
        %s1478 = sand.u32 %s718, 1
        %s1479 = scalar_lea.vmem [#allocation19], %s1478
        %p1480 = pneg %p731
        %p1481 = pneg %p728
        %s1482 = sand.u32 %s73, 1
        %s1483 = scalar_lea.sflag [#allocation4], %s1482
        %s1484 = sand.u32 %s744, 1
        %s1485 = scalar_lea.vmem [#allocation20], %s1484
        %p1486 = pneg %p757
        %p1487 = pneg %p754
        %p1488 = pneg %p778
        %p1489 = pneg %p775
        %p1490 = pneg %p799
        %p1491 = pneg %p796
        %p1492 = pneg %p825
        %p1493 = pneg %p822
        %p1494 = scmp.lt.s32.totalorder %s77, 1
        %s1495 = scalar_select %p1494, %s77, 1
        %s1496 = smul.addr %s1495, 2
        %s1497 = smul.addr %s1496, 8
        %s1498 = scalar_lea.vmem %s59, %s1497
        %p1499 = scmp.lt.s32.totalorder %s77, 1
        %s1500 = scalar_select %p1499, %s77, 1
        %s1501 = smul.addr %s1500, 8
        %s1502 = scalar_lea.vmem %s1, %s1501
        %p1503 = scmp.lt.s32.totalorder %s77, 1
        %s1504 = scalar_select %p1503, %s77, 1
        %s1505 = smul.addr %s1504, 4
        %s1506 = scalar_lea.vmem %s3, %s1505
        %p1507 = scmp.lt.s32.totalorder %s78, 1
        %s1508 = scalar_select %p1507, %s78, 1
        %s1509 = smul.addr %s1508, 4
        %s1510 = smul.addr %s1509, 4
        %s1511 = scalar_lea.vmem %s15, %s1510
        %p1512 = scmp.lt.s32.totalorder %s78, 1
        %s1513 = scalar_select %p1512, %s78, 1
        %s1514 = smul.addr %s1513, 4
        %s1515 = smul.addr %s1514, 4
        %s1516 = scalar_lea.vmem %s19, %s1515
        %p1517 = scmp.lt.s32.totalorder %s78, 1
        %s1518 = scalar_select %p1517, %s78, 1
        %s1519 = smul.addr %s1518, 4
        %s1520 = smul.addr %s1519, 4
        %s1521 = scalar_lea.vmem %s23, %s1520
        %p1522 = scmp.lt.s32.totalorder %s78, 1
        %s1523 = scalar_select %p1522, %s78, 1
        %s1524 = smul.addr %s1523, 4
        %s1525 = smul.addr %s1524, 4
        %s1526 = scalar_lea.vmem %s27, %s1525
        %p1527 = scmp.lt.s32.totalorder %s78, 1
        %s1528 = scalar_select %p1527, %s78, 1
        %s1529 = smul.addr %s1528, 4
        %s1530 = smul.addr %s1529, 4
        %s1531 = scalar_lea.vmem %s31, %s1530
        %p1532 = scmp.lt.s32.totalorder %s78, 1
        %s1533 = scalar_select %p1532, %s78, 1
        %s1534 = smul.addr %s1533, 8
        %s1535 = smul.addr %s1534, 4
        %s1536 = scalar_lea.vmem %s47, %s1535
        %p1537 = scmp.lt.s32.totalorder %s77, 1
        %s1538 = scalar_select %p1537, %s77, 1
        %s1539 = smul.addr %s1538, 2
        %s1540 = smul.addr %s1539, 8
        %s1541 = scalar_lea.vmem %s59, %s1540
        %p1543 = scmp.eq.s32.totalorder %s78, 1
        %p1544 = scmp.eq.s32.totalorder %s78, 0
        // Predicated region
        $region209: #{timexer_forward.2} parent=135 // pred_check
          %p1545 = pneg %p1544
        $region210: #{timexer_forward.2} parent=135 // pred_check_branch
          %1547 = sbr.rel (%p1545) target = $region212
        $region211: #{timexer_forward.2} parent=135 // pred_region
          %v1548 = vld [vmem:[%s7] sm:$0xff]
          %v1549 = vld [vmem:[#allocation3] sm:$0xf]
          %v1550 = vld [vmem:[%s13] sm:$0x1]
          %v1551 = vld [vmem:[%s1502] sm:$0xff]
          %v1552 = vld [vmem:[%s5] sm:$0xf]
          %v1553 = vpack.c.bf16 %v1551, %v1551
          %vm1554 = vcmask 64512
          %v1556 = vsel %vm1554, %v1553, 0
          %vm1558 = vcmask 1043456
          %v1560 = vsel %vm1558, %v1552, 0
          %1562 = vmatprep.subr.bf16.mxu0 0
          %1563 = vmatpush1.bf16.msra.mxu0 0
          %1564 = vmatprep.subr.bf16.mxu0 0
          %1565 = vmatpush1.bf16.msra.mxu0 0
          %1566 = vmatprep.subr.bf16.mxu0 0
          %1567 = vmatpush1.bf16.msra.mxu0 0
          %1568 = vmatprep.subr.bf16.mxu0 0
          %1569 = vmatpush1.bf16.msra.mxu0 0
          %1570 = vmatprep.subr.bf16.mxu0 0
          %1571 = vmatpush1.bf16.msra.mxu0 0
          %1572 = vmatprep.subr.bf16.mxu0 0
          %1573 = vmatpush1.bf16.msra.mxu0 0
          %1574 = vmatprep.subr.bf16.mxu0 0
          %1575 = vmatpush1.bf16.msra.mxu0 0
          %1576 = vmatprep.subr.bf16.mxu0 0
          %1577 = vmatpush1.bf16.msra.mxu0 %v1560
          %1578 = vmatprep.subr.bf16.mxu0 0
          %1579 = vmatpush2.bf16.msra.mxu0 0
          %1580 = vmatprep.subr.bf16.mxu0 0
          %1581 = vmatpush2.bf16.msra.mxu0 0
          %1582 = vmatprep.subr.bf16.mxu0 0
          %1583 = vmatpush2.bf16.msra.mxu0 0
          %1584 = vmatprep.subr.bf16.mxu0 0
          %1585 = vmatpush2.bf16.msra.mxu0 0
          %1586 = vmatprep.subr.bf16.mxu0 0
          %1587 = vmatpush2.bf16.msra.mxu0 0
          %1588 = vmatprep.subr.bf16.mxu0 0
          %1589 = vmatpush2.bf16.msra.mxu0 0
          %1590 = vmatprep.subr.bf16.mxu0 0
          %1591 = vmatpush2.bf16.msra.mxu0 0
          %1592 = vmatprep.subr.bf16.mxu0 0
          %1593 = vmatpush2.bf16.msra.mxu0 0
          %1594 = vmatprep.mubr.bf16.mxu0 0
          %1595 = vmatmul.mubr.bf16.gmra.mxu0 %v1556
          %v1596 = vpop.f32.mrf.mxu0
          %v1597 = vadd.f32 %v1548, %v1596
          %v1598 = vpop.f32.mrf.mxu0
          %v1599 = vpop.f32.mrf.mxu0
          %v1600 = vpop.f32.mrf.mxu0
          %1601 = vdwg.mxu0
          %v1602 = vld [vmem:[%s1506] sm:$0xf]
          %v1603 = vld [vmem:[#allocation5] sm:$0xf]
          %v1604 = vld [vmem:[#allocation5 + $0x4] sm:$0xf]
          %v1605 = vpack.c.bf16 %v1602, %v1602
          %v1607 = vlaneseq
          %v1608 = vshrl.u32 %v1607, 7
          %v1609 = vsub.s32 0, %v1608
          %v1610 = vrot.slane %v1550, %v1609
          %v1614 = vunpack.c.l.b16 %v1603
          %v1615 = vunpack.c.l.b16 %v1604
          %v1616 = vpack.c.b16 %v1615, %v1614
          %vm1618 = vcmask 130048
          %v1620 = vsel %vm1618, %v1605, 0
          %1622 = vmatprep.subr.bf16.mxu0 0
          %1623 = vmatpush1.bf16.msra.mxu0 0
          %1624 = vmatprep.subr.bf16.mxu0 0
          %1625 = vmatpush1.bf16.msra.mxu0 0
          %1626 = vmatprep.subr.bf16.mxu0 0
          %1627 = vmatpush1.bf16.msra.mxu0 0
          %1628 = vmatprep.subr.bf16.mxu0 0
          %1629 = vmatpush1.bf16.msra.mxu0 0
          %1630 = vmatprep.subr.bf16.mxu0 0
          %1631 = vmatpush1.bf16.msra.mxu0 0
          %1632 = vmatprep.subr.bf16.mxu0 0
          %1633 = vmatpush1.bf16.msra.mxu0 0
          %1634 = vmatprep.subr.bf16.mxu0 0
          %1635 = vmatpush1.bf16.msra.mxu0 0
          %1636 = vmatprep.subr.bf16.mxu0 0
          %1637 = vmatpush1.bf16.msra.mxu0 %v1616
          %1638 = vmatprep.subr.bf16.mxu0 0
          %1639 = vmatpush2.bf16.msra.mxu0 0
          %1640 = vmatprep.subr.bf16.mxu0 0
          %1641 = vmatpush2.bf16.msra.mxu0 0
          %1642 = vmatprep.subr.bf16.mxu0 0
          %1643 = vmatpush2.bf16.msra.mxu0 0
          %1644 = vmatprep.subr.bf16.mxu0 0
          %1645 = vmatpush2.bf16.msra.mxu0 0
          %1646 = vmatprep.subr.bf16.mxu0 0
          %1647 = vmatpush2.bf16.msra.mxu0 0
          %1648 = vmatprep.subr.bf16.mxu0 0
          %1649 = vmatpush2.bf16.msra.mxu0 0
          %1650 = vmatprep.subr.bf16.mxu0 0
          %1651 = vmatpush2.bf16.msra.mxu0 0
          %1652 = vmatprep.subr.bf16.mxu0 0
          %1653 = vmatpush2.bf16.msra.mxu0 0
          %1654 = vmatprep.mubr.bf16.mxu0 0
          %1655 = vmatmul.mubr.bf16.gmra.mxu0 %v1620
          %v1656 = vpop.f32.mrf.mxu0
          %v1657 = vadd.f32 %v1610, %v1656
          %v1658 = vpop.f32.mrf.mxu0
          %v1659 = vpop.f32.mrf.mxu0
          %v1660 = vpop.f32.mrf.mxu0
          %1661 = vdwg.mxu0
          %vm1662 = vcmask 257024
          %1663 = vst.msk [vmem:[#allocation2] sm:$0xf] %vm1662, %v1657
          %v1665 = vrot.slane %v1549, 6
          %v1668 = vrot.slane %v1597, 7
          %v1670 = vrot.slane %v1549, 4
          %v1672 = vrot.slane %v1597, 6
          %v1674 = vrot.slane %v1549, 2
          %v1676 = vrot.slane %v1597, 5
          %vm1678 = vcmask 1041408
          %v1679 = vsel %vm1678, %v1597, %v1665
          %vm1680 = vcmask 1042432
          %v1681 = vsel %vm1680, %v1679, %v1668
          %vm1682 = vcmask 1044480
          %v1683 = vsel %vm1682, %v1681, %v1670
          %vm1684 = vcmask 1045504
          %v1685 = vsel %vm1684, %v1683, %v1672
          %vm1686 = vcmask 1040384
          %v1687 = vsel %vm1686, %v1674, %v1676
          %v1688 = vsel %vm1680, %v1687, %v1549
          %vm1689 = vcmask 261120
          %1690 = vst.msk [vmem:[%s1541] sm:$0xff] %vm1689, %v1685
          %1691 = vst.msk [vmem:[%s1541 + $0x8] sm:$0xf] %vm1662, %v1688
        $region212: #{timexer_forward.2} parent=135 // pred_fallthru
          _
        %v1692 = vld [vmem:[%s1511] sm:$0xf]
        %v1693 = vld [vmem:[%s1511 + $0x4] sm:$0xf]
        %v1694 = vld [vmem:[%s1511 + $0x8] sm:$0xf]
        %v1695 = vld [vmem:[%s1511 + $0xc] sm:$0xf]
        %v1696 = vld [vmem:[%s1221] sm:$0x1]
        %v1697 = vld [vmem:[%s1516] sm:$0xf]
        %v1698 = vld [vmem:[%s1516 + $0x4] sm:$0xf]
        %v1699 = vld [vmem:[%s1516 + $0x8] sm:$0xf]
        %v1700 = vld [vmem:[%s1516 + $0xc] sm:$0xf]
        %v1701 = vld [vmem:[%s1229] sm:$0x1]
        %v1702 = vld [vmem:[%s1521] sm:$0xf]
        %v1703 = vld [vmem:[%s1521 + $0x4] sm:$0xf]
        %v1704 = vld [vmem:[%s1521 + $0x8] sm:$0xf]
        %v1705 = vld [vmem:[%s1521 + $0xc] sm:$0xf]
        %v1706 = vld [vmem:[%s1237] sm:$0x1]
        %v1707 = vld [vmem:[%s1526] sm:$0xf]
        %v1708 = vld [vmem:[%s1526 + $0x4] sm:$0xf]
        %v1709 = vld [vmem:[%s1526 + $0x8] sm:$0xf]
        %v1710 = vld [vmem:[%s1526 + $0xc] sm:$0xf]
        %v1711 = vld [vmem:[%s1245] sm:$0x1]
        %v1712 = vld [vmem:[%s1531] sm:$0xf]
        %v1713 = vld [vmem:[%s1531 + $0x4] sm:$0xf]
        %v1714 = vld [vmem:[%s1531 + $0x8] sm:$0xf]
        %v1715 = vld [vmem:[%s1531 + $0xc] sm:$0xf]
        %v1716 = vld [vmem:[%s1253] sm:$0x1]
        %v1717 = vld [vmem:[%s1261] sm:$0x1]
        %v1718 = vld [vmem:[%s1269] sm:$0x1]
        %v1719 = vld [vmem:[%s1277] sm:$0x1]
        %v1720 = vld [vmem:[%s1285] sm:$0x1]
        %v1721 = vld [vmem:[%s1318] sm:$0x1]
        %v1722 = vld [vmem:[%s1326] sm:$0x1]
        %v1723 = vld [vmem:[%s1294] sm:$0xf]
        %v1724 = vld [vmem:[%s1294 + $0x4] sm:$0xf]
        %v1725 = vld [vmem:[%s1294 + $0x8] sm:$0xf]
        %v1726 = vld [vmem:[%s1294 + $0xc] sm:$0xf]
        %v1727 = vld [vmem:[%s1302] sm:$0x1]
        %v1728 = vld [vmem:[%s1536] sm:$0xf]
        %v1729 = vld [vmem:[%s1536 + $0x4] sm:$0xf]
        %v1730 = vld [vmem:[%s1536 + $0x8] sm:$0xf]
        %v1731 = vld [vmem:[%s1536 + $0xc] sm:$0xf]
        %v1732 = vld [vmem:[%s1536 + $0x10] sm:$0xf]
        %v1733 = vld [vmem:[%s1536 + $0x14] sm:$0xf]
        %v1734 = vld [vmem:[%s1536 + $0x18] sm:$0xf]
        %v1735 = vld [vmem:[%s1536 + $0x1c] sm:$0xf]
        %v1736 = vld [vmem:[%s1310] sm:$0x1]
        %v1737 = vld [vmem:[%s1541] sm:$0xff]
        %v1738 = vld [vmem:[%s1541 + $0x8] sm:$0xf]
        %v1739 = vpack.c.bf16 %v1738, %v1737
        %v1741 = vlaneseq
        %v1742 = vshrl.u32 %v1741, 7
        %v1743 = vsub.s32 0, %v1742
        %v1744 = vrot.slane %v1696, %v1743
        %v1750 = vunpack.c.l.b16 %v1692
        %v1751 = vunpack.c.l.b16 %v1693
        %v1752 = vunpack.c.l.b16 %v1694
        %v1753 = vunpack.c.l.b16 %v1695
        %v1754 = vpack.c.b16 %v1751, %v1750
        %v1755 = vpack.c.b16 %v1753, %v1752
        %vm1758 = vcmask 261120
        %v1760 = vsel %vm1758, %v1739, 0
        %1762 = vmatprep.subr.bf16.mxu0 0
        %1763 = vmatpush1.bf16.msra.mxu0 0
        %1764 = vmatprep.subr.bf16.mxu0 0
        %1765 = vmatpush1.bf16.msra.mxu0 0
        %1766 = vmatprep.subr.bf16.mxu0 0
        %1767 = vmatpush1.bf16.msra.mxu0 0
        %1768 = vmatprep.subr.bf16.mxu0 0
        %1769 = vmatpush1.bf16.msra.mxu0 0
        %1770 = vmatprep.subr.bf16.mxu0 0
        %1771 = vmatpush1.bf16.msra.mxu0 0
        %1772 = vmatprep.subr.bf16.mxu0 0
        %1773 = vmatpush1.bf16.msra.mxu0 0
        %1774 = vmatprep.subr.bf16.mxu0 0
        %1775 = vmatpush1.bf16.msra.mxu0 %v1755
        %1776 = vmatprep.subr.bf16.mxu0 0
        %1777 = vmatpush1.bf16.msra.mxu0 %v1754
        %1778 = vmatprep.subr.bf16.mxu0 0
        %1779 = vmatpush2.bf16.msra.mxu0 0
        %1780 = vmatprep.subr.bf16.mxu0 0
        %1781 = vmatpush2.bf16.msra.mxu0 0
        %1782 = vmatprep.subr.bf16.mxu0 0
        %1783 = vmatpush2.bf16.msra.mxu0 0
        %1784 = vmatprep.subr.bf16.mxu0 0
        %1785 = vmatpush2.bf16.msra.mxu0 0
        %1786 = vmatprep.subr.bf16.mxu0 0
        %1787 = vmatpush2.bf16.msra.mxu0 0
        %1788 = vmatprep.subr.bf16.mxu0 0
        %1789 = vmatpush2.bf16.msra.mxu0 0
        %1790 = vmatprep.subr.bf16.mxu0 0
        %1791 = vmatpush2.bf16.msra.mxu0 0
        %1792 = vmatprep.subr.bf16.mxu0 0
        %1793 = vmatpush2.bf16.msra.mxu0 0
        %1794 = vmatprep.mubr.bf16.mxu0 0
        %1795 = vmatmul.mubr.bf16.gmra.mxu0 %v1760
        %v1796 = vpop.f32.mrf.mxu0
        %v1797 = vadd.f32 %v1744, %v1796
        %v1798 = vpop.f32.mrf.mxu0
        %v1799 = vpop.f32.mrf.mxu0
        %v1800 = vadd.f32 %v1744, %v1799
        %v1801 = vpop.f32.mrf.mxu0
        %1802 = vdwg.mxu0
        %v1803 = vpack.c.bf16 %v1797, %v1797
        %1805 = vrot.lane.b32.xlu0 %v1803, 96
        %v1806 = vpop.permute.xlu0 %1805
        %vm1807 = vcmask 64512
        %v1809 = vsel %vm1807, %v1803, 0
        %v1812 = vsel %vm1807, %v1806, 0
        %1814 = vmatprep.subr.bf16.mxu0 0
        %1815 = vmatpush1.bf16.xpose.msra.mxu0 0
        %1816 = vmatprep.subr.bf16.mxu0 0
        %1817 = vmatpush1.bf16.xpose.msra.mxu0 0
        %1818 = vmatprep.subr.bf16.mxu0 0
        %1819 = vmatpush1.bf16.xpose.msra.mxu0 0
        %1820 = vmatprep.subr.bf16.mxu0 0
        %1821 = vmatpush1.bf16.xpose.msra.mxu0 0
        %1822 = vmatprep.subr.bf16.mxu0 0
        %1823 = vmatpush1.bf16.xpose.msra.mxu0 0
        %1824 = vmatprep.subr.bf16.mxu0 0
        %1825 = vmatpush1.bf16.xpose.msra.mxu0 0
        %1826 = vmatprep.subr.bf16.mxu0 0
        %1827 = vmatpush1.bf16.xpose.msra.mxu0 0
        %1828 = vmatprep.subr.bf16.mxu0 0
        %1829 = vmatpush1.bf16.xpose.msra.mxu0 %v1812
        %1830 = vmatprep.subr.bf16.mxu0 0
        %1831 = vmatpush2.bf16.xpose.msra.mxu0 0
        %1832 = vmatprep.subr.bf16.mxu0 0
        %1833 = vmatpush2.bf16.xpose.msra.mxu0 0
        %1834 = vmatprep.subr.bf16.mxu0 0
        %1835 = vmatpush2.bf16.xpose.msra.mxu0 0
        %1836 = vmatprep.subr.bf16.mxu0 0
        %1837 = vmatpush2.bf16.xpose.msra.mxu0 0
        %1838 = vmatprep.subr.bf16.mxu0 0
        %1839 = vmatpush2.bf16.xpose.msra.mxu0 0
        %1840 = vmatprep.subr.bf16.mxu0 0
        %1841 = vmatpush2.bf16.xpose.msra.mxu0 0
        %1842 = vmatprep.subr.bf16.mxu0 0
        %1843 = vmatpush2.bf16.xpose.msra.mxu0 0
        %1844 = vmatprep.subr.bf16.mxu0 0
        %1845 = vmatpush2.bf16.xpose.msra.mxu0 0
        %1846 = vmatprep.mubr.bf16.mxu0 0
        %1847 = vmatmul.mubr.bf16.gmra.mxu0 %v1809
        %v1848 = vpop.f32.mrf.mxu0
        %v1849 = vadd.f32 0.0, %v1848
        %v1850 = vpop.f32.mrf.mxu0
        %v1851 = vpop.f32.mrf.mxu0
        %v1852 = vpop.f32.mrf.mxu0
        %1853 = vdwg.mxu0
        %v1854 = vmul.f32 %v1849, 0.35355338
        %vm1855 = vcmask 18432
        %v1856 = vsel %vm1855, %v1854, -inf
        %1857 = vmax.xlane.f32.xlu0 %v1856
        %v1858 = vpop.xlane.xlu0 %1857
        %v1859 = vsub.f32 %v1854, %v1858
        %v1860 = vmul.f32 %v1859, 1.442695
        %v1861 = vpow.pop %v1860
        %v1862 = vsel %vm1855, %v1861, 0.0
        %1863 = vadd.xlane.f32.xlu0 %v1862
        %v1864 = vpop.xlane.xlu0 %1863
        %v1865 = vrcp.pop %v1864
        %v1866 = vmul.f32 %v1861, %v1865
        %v1867 = vpack.c.bf16 %v1866, %v1866
        %1868 = vrot.lane.b32.xlu0 %v1803, 64
        %v1869 = vpop.permute.xlu0 %1868
        %vm1870 = vcmask 23552
        %v1872 = vsel %vm1870, %v1867, 0
        %vm1874 = vcmask 1040384
        %vm1875 = vcmask 1041408
        %v1876 = vsel %vm1874, 4294967295, 65535
        %v1877 = vsel %vm1875, %v1876, 0
        %v1879 = vand.u32 %v1869, %v1877
        %1881 = vmatprep.subr.bf16.mxu0 0
        %1882 = vmatpush1.bf16.msra.mxu0 0
        %1883 = vmatprep.subr.bf16.mxu0 0
        %1884 = vmatpush1.bf16.msra.mxu0 0
        %1885 = vmatprep.subr.bf16.mxu0 0
        %1886 = vmatpush1.bf16.msra.mxu0 0
        %1887 = vmatprep.subr.bf16.mxu0 0
        %1888 = vmatpush1.bf16.msra.mxu0 0
        %1889 = vmatprep.subr.bf16.mxu0 0
        %1890 = vmatpush1.bf16.msra.mxu0 0
        %1891 = vmatprep.subr.bf16.mxu0 0
        %1892 = vmatpush1.bf16.msra.mxu0 0
        %1893 = vmatprep.subr.bf16.mxu0 0
        %1894 = vmatpush1.bf16.msra.mxu0 0
        %1895 = vmatprep.subr.bf16.mxu0 0
        %1896 = vmatpush1.bf16.msra.mxu0 %v1879
        %1897 = vmatprep.subr.bf16.mxu0 0
        %1898 = vmatpush2.bf16.msra.mxu0 0
        %1899 = vmatprep.subr.bf16.mxu0 0
        %1900 = vmatpush2.bf16.msra.mxu0 0
        %1901 = vmatprep.subr.bf16.mxu0 0
        %1902 = vmatpush2.bf16.msra.mxu0 0
        %1903 = vmatprep.subr.bf16.mxu0 0
        %1904 = vmatpush2.bf16.msra.mxu0 0
        %1905 = vmatprep.subr.bf16.mxu0 0
        %1906 = vmatpush2.bf16.msra.mxu0 0
        %1907 = vmatprep.subr.bf16.mxu0 0
        %1908 = vmatpush2.bf16.msra.mxu0 0
        %1909 = vmatprep.subr.bf16.mxu0 0
        %1910 = vmatpush2.bf16.msra.mxu0 0
        %1911 = vmatprep.subr.bf16.mxu0 0
        %1912 = vmatpush2.bf16.msra.mxu0 0
        %1913 = vmatprep.mubr.bf16.mxu0 0
        %1914 = vmatmul.mubr.bf16.gmra.mxu0 %v1872
        %v1915 = vpop.f32.mrf.mxu0
        %v1916 = vadd.f32 0.0, %v1915
        %v1917 = vpop.f32.mrf.mxu0
        %v1918 = vpop.f32.mrf.mxu0
        %v1919 = vpop.f32.mrf.mxu0
        %1920 = vdwg.mxu0
        %1921 = vrot.lane.b32.xlu0 %v1803, 120
        %v1922 = vpop.permute.xlu0 %1921
        %1923 = vrot.lane.b32.xlu0 %v1803, 88
        %v1924 = vpop.permute.xlu0 %1923
        %v1926 = vsel %vm1807, %v1922, 0
        %v1929 = vsel %vm1807, %v1924, 0
        %1931 = vmatprep.subr.bf16.mxu0 0
        %1932 = vmatpush1.bf16.xpose.msra.mxu0 0
        %1933 = vmatprep.subr.bf16.mxu0 0
        %1934 = vmatpush1.bf16.xpose.msra.mxu0 0
        %1935 = vmatprep.subr.bf16.mxu0 0
        %1936 = vmatpush1.bf16.xpose.msra.mxu0 0
        %1937 = vmatprep.subr.bf16.mxu0 0
        %1938 = vmatpush1.bf16.xpose.msra.mxu0 0
        %1939 = vmatprep.subr.bf16.mxu0 0
        %1940 = vmatpush1.bf16.xpose.msra.mxu0 0
        %1941 = vmatprep.subr.bf16.mxu0 0
        %1942 = vmatpush1.bf16.xpose.msra.mxu0 0
        %1943 = vmatprep.subr.bf16.mxu0 0
        %1944 = vmatpush1.bf16.xpose.msra.mxu0 0
        %1945 = vmatprep.subr.bf16.mxu0 0
        %1946 = vmatpush1.bf16.xpose.msra.mxu0 %v1929
        %1947 = vmatprep.subr.bf16.mxu0 0
        %1948 = vmatpush2.bf16.xpose.msra.mxu0 0
        %1949 = vmatprep.subr.bf16.mxu0 0
        %1950 = vmatpush2.bf16.xpose.msra.mxu0 0
        %1951 = vmatprep.subr.bf16.mxu0 0
        %1952 = vmatpush2.bf16.xpose.msra.mxu0 0
        %1953 = vmatprep.subr.bf16.mxu0 0
        %1954 = vmatpush2.bf16.xpose.msra.mxu0 0
        %1955 = vmatprep.subr.bf16.mxu0 0
        %1956 = vmatpush2.bf16.xpose.msra.mxu0 0
        %1957 = vmatprep.subr.bf16.mxu0 0
        %1958 = vmatpush2.bf16.xpose.msra.mxu0 0
        %1959 = vmatprep.subr.bf16.mxu0 0
        %1960 = vmatpush2.bf16.xpose.msra.mxu0 0
        %1961 = vmatprep.subr.bf16.mxu0 0
        %1962 = vmatpush2.bf16.xpose.msra.mxu0 0
        %1963 = vmatprep.mubr.bf16.mxu0 0
        %1964 = vmatmul.mubr.bf16.gmra.mxu0 %v1926
        %v1965 = vpop.f32.mrf.mxu0
        %v1966 = vadd.f32 0.0, %v1965
        %v1967 = vpop.f32.mrf.mxu0
        %v1968 = vpop.f32.mrf.mxu0
        %v1969 = vpop.f32.mrf.mxu0
        %1970 = vdwg.mxu0
        %v1971 = vmul.f32 %v1966, 0.35355338
        %v1972 = vsel %vm1855, %v1971, -inf
        %1973 = vmax.xlane.f32.xlu0 %v1972
        %v1974 = vpop.xlane.xlu0 %1973
        %v1975 = vsub.f32 %v1971, %v1974
        %v1976 = vmul.f32 %v1975, 1.442695
        %v1977 = vpow.pop %v1976
        %v1978 = vsel %vm1855, %v1977, 0.0
        %1979 = vadd.xlane.f32.xlu0 %v1978
        %v1980 = vpop.xlane.xlu0 %1979
        %v1981 = vrcp.pop %v1980
        %v1982 = vmul.f32 %v1977, %v1981
        %v1983 = vpack.c.bf16 %v1982, %v1982
        %1984 = vrot.lane.b32.xlu0 %v1803, 56
        %v1985 = vpop.permute.xlu0 %1984
        %v1987 = vsel %vm1870, %v1983, 0
        %v1990 = vand.u32 %v1985, %v1877
        %1992 = vmatprep.subr.bf16.mxu0 0
        %1993 = vmatpush1.bf16.msra.mxu0 0
        %1994 = vmatprep.subr.bf16.mxu0 0
        %1995 = vmatpush1.bf16.msra.mxu0 0
        %1996 = vmatprep.subr.bf16.mxu0 0
        %1997 = vmatpush1.bf16.msra.mxu0 0
        %1998 = vmatprep.subr.bf16.mxu0 0
        %1999 = vmatpush1.bf16.msra.mxu0 0
        %2000 = vmatprep.subr.bf16.mxu0 0
        %2001 = vmatpush1.bf16.msra.mxu0 0
        %2002 = vmatprep.subr.bf16.mxu0 0
        %2003 = vmatpush1.bf16.msra.mxu0 0
        %2004 = vmatprep.subr.bf16.mxu0 0
        %2005 = vmatpush1.bf16.msra.mxu0 0
        %2006 = vmatprep.subr.bf16.mxu0 0
        %2007 = vmatpush1.bf16.msra.mxu0 %v1990
        %2008 = vmatprep.subr.bf16.mxu0 0
        %2009 = vmatpush2.bf16.msra.mxu0 0
        %2010 = vmatprep.subr.bf16.mxu0 0
        %2011 = vmatpush2.bf16.msra.mxu0 0
        %2012 = vmatprep.subr.bf16.mxu0 0
        %2013 = vmatpush2.bf16.msra.mxu0 0
        %2014 = vmatprep.subr.bf16.mxu0 0
        %2015 = vmatpush2.bf16.msra.mxu0 0
        %2016 = vmatprep.subr.bf16.mxu0 0
        %2017 = vmatpush2.bf16.msra.mxu0 0
        %2018 = vmatprep.subr.bf16.mxu0 0
        %2019 = vmatpush2.bf16.msra.mxu0 0
        %2020 = vmatprep.subr.bf16.mxu0 0
        %2021 = vmatpush2.bf16.msra.mxu0 0
        %2022 = vmatprep.subr.bf16.mxu0 0
        %2023 = vmatpush2.bf16.msra.mxu0 0
        %2024 = vmatprep.mubr.bf16.mxu0 0
        %2025 = vmatmul.mubr.bf16.gmra.mxu0 %v1987
        %v2026 = vpop.f32.mrf.mxu0
        %v2027 = vadd.f32 0.0, %v2026
        %v2028 = vpop.f32.mrf.mxu0
        %v2029 = vpop.f32.mrf.mxu0
        %v2030 = vpop.f32.mrf.mxu0
        %2031 = vdwg.mxu0
        %2032 = vrot.lane.b32.xlu0 %v1803, 112
        %v2033 = vpop.permute.xlu0 %2032
        %2034 = vrot.lane.b32.xlu0 %v1803, 80
        %v2035 = vpop.permute.xlu0 %2034
        %v2037 = vsel %vm1807, %v2033, 0
        %v2040 = vsel %vm1807, %v2035, 0
        %2042 = vmatprep.subr.bf16.mxu0 0
        %2043 = vmatpush1.bf16.xpose.msra.mxu0 0
        %2044 = vmatprep.subr.bf16.mxu0 0
        %2045 = vmatpush1.bf16.xpose.msra.mxu0 0
        %2046 = vmatprep.subr.bf16.mxu0 0
        %2047 = vmatpush1.bf16.xpose.msra.mxu0 0
        %2048 = vmatprep.subr.bf16.mxu0 0
        %2049 = vmatpush1.bf16.xpose.msra.mxu0 0
        %2050 = vmatprep.subr.bf16.mxu0 0
        %2051 = vmatpush1.bf16.xpose.msra.mxu0 0
        %2052 = vmatprep.subr.bf16.mxu0 0
        %2053 = vmatpush1.bf16.xpose.msra.mxu0 0
        %2054 = vmatprep.subr.bf16.mxu0 0
        %2055 = vmatpush1.bf16.xpose.msra.mxu0 0
        %2056 = vmatprep.subr.bf16.mxu0 0
        %2057 = vmatpush1.bf16.xpose.msra.mxu0 %v2040
        %2058 = vmatprep.subr.bf16.mxu0 0
        %2059 = vmatpush2.bf16.xpose.msra.mxu0 0
        %2060 = vmatprep.subr.bf16.mxu0 0
        %2061 = vmatpush2.bf16.xpose.msra.mxu0 0
        %2062 = vmatprep.subr.bf16.mxu0 0
        %2063 = vmatpush2.bf16.xpose.msra.mxu0 0
        %2064 = vmatprep.subr.bf16.mxu0 0
        %2065 = vmatpush2.bf16.xpose.msra.mxu0 0
        %2066 = vmatprep.subr.bf16.mxu0 0
        %2067 = vmatpush2.bf16.xpose.msra.mxu0 0
        %2068 = vmatprep.subr.bf16.mxu0 0
        %2069 = vmatpush2.bf16.xpose.msra.mxu0 0
        %2070 = vmatprep.subr.bf16.mxu0 0
        %2071 = vmatpush2.bf16.xpose.msra.mxu0 0
        %2072 = vmatprep.subr.bf16.mxu0 0
        %2073 = vmatpush2.bf16.xpose.msra.mxu0 0
        %2074 = vmatprep.mubr.bf16.mxu0 0
        %2075 = vmatmul.mubr.bf16.gmra.mxu0 %v2037
        %v2076 = vpop.f32.mrf.mxu0
        %v2077 = vadd.f32 0.0, %v2076
        %v2078 = vpop.f32.mrf.mxu0
        %v2079 = vpop.f32.mrf.mxu0
        %v2080 = vpop.f32.mrf.mxu0
        %2081 = vdwg.mxu0
        %v2082 = vmul.f32 %v2077, 0.35355338
        %v2083 = vsel %vm1855, %v2082, -inf
        %2084 = vmax.xlane.f32.xlu0 %v2083
        %v2085 = vpop.xlane.xlu0 %2084
        %v2086 = vsub.f32 %v2082, %v2085
        %v2087 = vmul.f32 %v2086, 1.442695
        %v2088 = vpow.pop %v2087
        %v2089 = vsel %vm1855, %v2088, 0.0
        %2090 = vadd.xlane.f32.xlu0 %v2089
        %v2091 = vpop.xlane.xlu0 %2090
        %v2092 = vrcp.pop %v2091
        %v2093 = vmul.f32 %v2088, %v2092
        %v2094 = vpack.c.bf16 %v2093, %v2093
        %2095 = vrot.lane.b32.xlu0 %v1803, 48
        %v2096 = vpop.permute.xlu0 %2095
        %v2098 = vsel %vm1870, %v2094, 0
        %v2101 = vand.u32 %v2096, %v1877
        %2103 = vmatprep.subr.bf16.mxu0 0
        %2104 = vmatpush1.bf16.msra.mxu0 0
        %2105 = vmatprep.subr.bf16.mxu0 0
        %2106 = vmatpush1.bf16.msra.mxu0 0
        %2107 = vmatprep.subr.bf16.mxu0 0
        %2108 = vmatpush1.bf16.msra.mxu0 0
        %2109 = vmatprep.subr.bf16.mxu0 0
        %2110 = vmatpush1.bf16.msra.mxu0 0
        %2111 = vmatprep.subr.bf16.mxu0 0
        %2112 = vmatpush1.bf16.msra.mxu0 0
        %2113 = vmatprep.subr.bf16.mxu0 0
        %2114 = vmatpush1.bf16.msra.mxu0 0
        %2115 = vmatprep.subr.bf16.mxu0 0
        %2116 = vmatpush1.bf16.msra.mxu0 0
        %2117 = vmatprep.subr.bf16.mxu0 0
        %2118 = vmatpush1.bf16.msra.mxu0 %v2101
        %2119 = vmatprep.subr.bf16.mxu0 0
        %2120 = vmatpush2.bf16.msra.mxu0 0
        %2121 = vmatprep.subr.bf16.mxu0 0
        %2122 = vmatpush2.bf16.msra.mxu0 0
        %2123 = vmatprep.subr.bf16.mxu0 0
        %2124 = vmatpush2.bf16.msra.mxu0 0
        %2125 = vmatprep.subr.bf16.mxu0 0
        %2126 = vmatpush2.bf16.msra.mxu0 0
        %2127 = vmatprep.subr.bf16.mxu0 0
        %2128 = vmatpush2.bf16.msra.mxu0 0
        %2129 = vmatprep.subr.bf16.mxu0 0
        %2130 = vmatpush2.bf16.msra.mxu0 0
        %2131 = vmatprep.subr.bf16.mxu0 0
        %2132 = vmatpush2.bf16.msra.mxu0 0
        %2133 = vmatprep.subr.bf16.mxu0 0
        %2134 = vmatpush2.bf16.msra.mxu0 0
        %2135 = vmatprep.mubr.bf16.mxu0 0
        %2136 = vmatmul.mubr.bf16.gmra.mxu0 %v2098
        %v2137 = vpop.f32.mrf.mxu0
        %v2138 = vadd.f32 0.0, %v2137
        %v2139 = vpop.f32.mrf.mxu0
        %v2140 = vpop.f32.mrf.mxu0
        %v2141 = vpop.f32.mrf.mxu0
        %2142 = vdwg.mxu0
        %2143 = vrot.lane.b32.xlu0 %v1803, 104
        %v2144 = vpop.permute.xlu0 %2143
        %2145 = vrot.lane.b32.xlu0 %v1803, 72
        %v2146 = vpop.permute.xlu0 %2145
        %v2148 = vsel %vm1807, %v2144, 0
        %v2151 = vsel %vm1807, %v2146, 0
        %2153 = vmatprep.subr.bf16.mxu0 0
        %2154 = vmatpush1.bf16.xpose.msra.mxu0 0
        %2155 = vmatprep.subr.bf16.mxu0 0
        %2156 = vmatpush1.bf16.xpose.msra.mxu0 0
        %2157 = vmatprep.subr.bf16.mxu0 0
        %2158 = vmatpush1.bf16.xpose.msra.mxu0 0
        %2159 = vmatprep.subr.bf16.mxu0 0
        %2160 = vmatpush1.bf16.xpose.msra.mxu0 0
        %2161 = vmatprep.subr.bf16.mxu0 0
        %2162 = vmatpush1.bf16.xpose.msra.mxu0 0
        %2163 = vmatprep.subr.bf16.mxu0 0
        %2164 = vmatpush1.bf16.xpose.msra.mxu0 0
        %2165 = vmatprep.subr.bf16.mxu0 0
        %2166 = vmatpush1.bf16.xpose.msra.mxu0 0
        %2167 = vmatprep.subr.bf16.mxu0 0
        %2168 = vmatpush1.bf16.xpose.msra.mxu0 %v2151
        %2169 = vmatprep.subr.bf16.mxu0 0
        %2170 = vmatpush2.bf16.xpose.msra.mxu0 0
        %2171 = vmatprep.subr.bf16.mxu0 0
        %2172 = vmatpush2.bf16.xpose.msra.mxu0 0
        %2173 = vmatprep.subr.bf16.mxu0 0
        %2174 = vmatpush2.bf16.xpose.msra.mxu0 0
        %2175 = vmatprep.subr.bf16.mxu0 0
        %2176 = vmatpush2.bf16.xpose.msra.mxu0 0
        %2177 = vmatprep.subr.bf16.mxu0 0
        %2178 = vmatpush2.bf16.xpose.msra.mxu0 0
        %2179 = vmatprep.subr.bf16.mxu0 0
        %2180 = vmatpush2.bf16.xpose.msra.mxu0 0
        %2181 = vmatprep.subr.bf16.mxu0 0
        %2182 = vmatpush2.bf16.xpose.msra.mxu0 0
        %2183 = vmatprep.subr.bf16.mxu0 0
        %2184 = vmatpush2.bf16.xpose.msra.mxu0 0
        %2185 = vmatprep.mubr.bf16.mxu0 0
        %2186 = vmatmul.mubr.bf16.gmra.mxu0 %v2148
        %v2187 = vpop.f32.mrf.mxu0
        %v2188 = vadd.f32 0.0, %v2187
        %v2189 = vpop.f32.mrf.mxu0
        %v2190 = vpop.f32.mrf.mxu0
        %v2191 = vpop.f32.mrf.mxu0
        %2192 = vdwg.mxu0
        %v2193 = vmul.f32 %v2188, 0.35355338
        %v2194 = vsel %vm1855, %v2193, -inf
        %2195 = vmax.xlane.f32.xlu0 %v2194
        %v2196 = vpop.xlane.xlu0 %2195
        %v2197 = vsub.f32 %v2193, %v2196
        %v2198 = vmul.f32 %v2197, 1.442695
        %v2199 = vpow.pop %v2198
        %v2200 = vsel %vm1855, %v2199, 0.0
        %2201 = vadd.xlane.f32.xlu0 %v2200
        %v2202 = vpop.xlane.xlu0 %2201
        %v2203 = vrcp.pop %v2202
        %v2204 = vmul.f32 %v2199, %v2203
        %v2205 = vpack.c.bf16 %v2204, %v2204
        %2206 = vrot.lane.b32.xlu0 %v1803, 40
        %v2207 = vpop.permute.xlu0 %2206
        %v2209 = vsel %vm1870, %v2205, 0
        %v2212 = vand.u32 %v2207, %v1877
        %2214 = vmatprep.subr.bf16.mxu0 0
        %2215 = vmatpush1.bf16.msra.mxu0 0
        %2216 = vmatprep.subr.bf16.mxu0 0
        %2217 = vmatpush1.bf16.msra.mxu0 0
        %2218 = vmatprep.subr.bf16.mxu0 0
        %2219 = vmatpush1.bf16.msra.mxu0 0
        %2220 = vmatprep.subr.bf16.mxu0 0
        %2221 = vmatpush1.bf16.msra.mxu0 0
        %2222 = vmatprep.subr.bf16.mxu0 0
        %2223 = vmatpush1.bf16.msra.mxu0 0
        %2224 = vmatprep.subr.bf16.mxu0 0
        %2225 = vmatpush1.bf16.msra.mxu0 0
        %2226 = vmatprep.subr.bf16.mxu0 0
        %2227 = vmatpush1.bf16.msra.mxu0 0
        %2228 = vmatprep.subr.bf16.mxu0 0
        %2229 = vmatpush1.bf16.msra.mxu0 %v2212
        %2230 = vmatprep.subr.bf16.mxu0 0
        %2231 = vmatpush2.bf16.msra.mxu0 0
        %2232 = vmatprep.subr.bf16.mxu0 0
        %2233 = vmatpush2.bf16.msra.mxu0 0
        %2234 = vmatprep.subr.bf16.mxu0 0
        %2235 = vmatpush2.bf16.msra.mxu0 0
        %2236 = vmatprep.subr.bf16.mxu0 0
        %2237 = vmatpush2.bf16.msra.mxu0 0
        %2238 = vmatprep.subr.bf16.mxu0 0
        %2239 = vmatpush2.bf16.msra.mxu0 0
        %2240 = vmatprep.subr.bf16.mxu0 0
        %2241 = vmatpush2.bf16.msra.mxu0 0
        %2242 = vmatprep.subr.bf16.mxu0 0
        %2243 = vmatpush2.bf16.msra.mxu0 0
        %2244 = vmatprep.subr.bf16.mxu0 0
        %2245 = vmatpush2.bf16.msra.mxu0 0
        %2246 = vmatprep.mubr.bf16.mxu0 0
        %2247 = vmatmul.mubr.bf16.gmra.mxu0 %v2209
        %v2248 = vpop.f32.mrf.mxu0
        %v2249 = vadd.f32 0.0, %v2248
        %v2250 = vpop.f32.mrf.mxu0
        %v2251 = vpop.f32.mrf.mxu0
        %v2252 = vpop.f32.mrf.mxu0
        %2253 = vdwg.mxu0
        %2255 = vrot.lane.b32.xlu0 %v2027, 8
        %v2256 = vpop.permute.xlu0 %2255
        %2259 = vrot.lane.b32.xlu0 %v2138, 16
        %v2260 = vpop.permute.xlu0 %2259
        %2263 = vrot.lane.b32.xlu0 %v2249, 24
        %v2264 = vpop.permute.xlu0 %2263
        %v2266 = vsel %vm1807, %v1916, %v2256
        %vm2267 = vcmask 130048
        %v2268 = vsel %vm2267, %v2266, %v2260
        %vm2269 = vcmask 195584
        %v2270 = vsel %vm2269, %v2268, %v2264
        %v2271 = vshrl.u32 %v1803, 16
        %v2273 = vrot.slane %v2271, 1
        %v2274 = vshll.u32 %v1803, 16
        %v2276 = vrot.slane %v2274, 2
        %v2277 = vor.u32 %v2273, %v2276
        %2278 = vrot.lane.b32.xlu0 %v2277, 96
        %v2279 = vpop.permute.xlu0 %2278
        %v2281 = vsel %vm1807, %v2277, 0
        %v2284 = vsel %vm1807, %v2279, 0
        %2286 = vmatprep.subr.bf16.mxu0 0
        %2287 = vmatpush1.bf16.xpose.msra.mxu0 0
        %2288 = vmatprep.subr.bf16.mxu0 0
        %2289 = vmatpush1.bf16.xpose.msra.mxu0 0
        %2290 = vmatprep.subr.bf16.mxu0 0
        %2291 = vmatpush1.bf16.xpose.msra.mxu0 0
        %2292 = vmatprep.subr.bf16.mxu0 0
        %2293 = vmatpush1.bf16.xpose.msra.mxu0 0
        %2294 = vmatprep.subr.bf16.mxu0 0
        %2295 = vmatpush1.bf16.xpose.msra.mxu0 0
        %2296 = vmatprep.subr.bf16.mxu0 0
        %2297 = vmatpush1.bf16.xpose.msra.mxu0 0
        %2298 = vmatprep.subr.bf16.mxu0 0
        %2299 = vmatpush1.bf16.xpose.msra.mxu0 0
        %2300 = vmatprep.subr.bf16.mxu0 0
        %2301 = vmatpush1.bf16.xpose.msra.mxu0 %v2284
        %2302 = vmatprep.subr.bf16.mxu0 0
        %2303 = vmatpush2.bf16.xpose.msra.mxu0 0
        %2304 = vmatprep.subr.bf16.mxu0 0
        %2305 = vmatpush2.bf16.xpose.msra.mxu0 0
        %2306 = vmatprep.subr.bf16.mxu0 0
        %2307 = vmatpush2.bf16.xpose.msra.mxu0 0
        %2308 = vmatprep.subr.bf16.mxu0 0
        %2309 = vmatpush2.bf16.xpose.msra.mxu0 0
        %2310 = vmatprep.subr.bf16.mxu0 0
        %2311 = vmatpush2.bf16.xpose.msra.mxu0 0
        %2312 = vmatprep.subr.bf16.mxu0 0
        %2313 = vmatpush2.bf16.xpose.msra.mxu0 0
        %2314 = vmatprep.subr.bf16.mxu0 0
        %2315 = vmatpush2.bf16.xpose.msra.mxu0 0
        %2316 = vmatprep.subr.bf16.mxu0 0
        %2317 = vmatpush2.bf16.xpose.msra.mxu0 0
        %2318 = vmatprep.mubr.bf16.mxu0 0
        %2319 = vmatmul.mubr.bf16.gmra.mxu0 %v2281
        %v2320 = vpop.f32.mrf.mxu0
        %v2321 = vadd.f32 0.0, %v2320
        %v2322 = vpop.f32.mrf.mxu0
        %v2323 = vpop.f32.mrf.mxu0
        %v2324 = vpop.f32.mrf.mxu0
        %2325 = vdwg.mxu0
        %v2326 = vmul.f32 %v2321, 0.35355338
        %v2327 = vsel %vm1855, %v2326, -inf
        %2328 = vmax.xlane.f32.xlu0 %v2327
        %v2329 = vpop.xlane.xlu0 %2328
        %v2330 = vsub.f32 %v2326, %v2329
        %v2331 = vmul.f32 %v2330, 1.442695
        %v2332 = vpow.pop %v2331
        %v2333 = vsel %vm1855, %v2332, 0.0
        %2334 = vadd.xlane.f32.xlu0 %v2333
        %v2335 = vpop.xlane.xlu0 %2334
        %v2336 = vrcp.pop %v2335
        %v2337 = vmul.f32 %v2332, %v2336
        %v2338 = vpack.c.bf16 %v2337, %v2337
        %2339 = vrot.lane.b32.xlu0 %v2277, 64
        %v2340 = vpop.permute.xlu0 %2339
        %v2342 = vsel %vm1870, %v2338, 0
        %v2345 = vand.u32 %v2340, %v1877
        %2347 = vmatprep.subr.bf16.mxu0 0
        %2348 = vmatpush1.bf16.msra.mxu0 0
        %2349 = vmatprep.subr.bf16.mxu0 0
        %2350 = vmatpush1.bf16.msra.mxu0 0
        %2351 = vmatprep.subr.bf16.mxu0 0
        %2352 = vmatpush1.bf16.msra.mxu0 0
        %2353 = vmatprep.subr.bf16.mxu0 0
        %2354 = vmatpush1.bf16.msra.mxu0 0
        %2355 = vmatprep.subr.bf16.mxu0 0
        %2356 = vmatpush1.bf16.msra.mxu0 0
        %2357 = vmatprep.subr.bf16.mxu0 0
        %2358 = vmatpush1.bf16.msra.mxu0 0
        %2359 = vmatprep.subr.bf16.mxu0 0
        %2360 = vmatpush1.bf16.msra.mxu0 0
        %2361 = vmatprep.subr.bf16.mxu0 0
        %2362 = vmatpush1.bf16.msra.mxu0 %v2345
        %2363 = vmatprep.subr.bf16.mxu0 0
        %2364 = vmatpush2.bf16.msra.mxu0 0
        %2365 = vmatprep.subr.bf16.mxu0 0
        %2366 = vmatpush2.bf16.msra.mxu0 0
        %2367 = vmatprep.subr.bf16.mxu0 0
        %2368 = vmatpush2.bf16.msra.mxu0 0
        %2369 = vmatprep.subr.bf16.mxu0 0
        %2370 = vmatpush2.bf16.msra.mxu0 0
        %2371 = vmatprep.subr.bf16.mxu0 0
        %2372 = vmatpush2.bf16.msra.mxu0 0
        %2373 = vmatprep.subr.bf16.mxu0 0
        %2374 = vmatpush2.bf16.msra.mxu0 0
        %2375 = vmatprep.subr.bf16.mxu0 0
        %2376 = vmatpush2.bf16.msra.mxu0 0
        %2377 = vmatprep.subr.bf16.mxu0 0
        %2378 = vmatpush2.bf16.msra.mxu0 0
        %2379 = vmatprep.mubr.bf16.mxu0 0
        %2380 = vmatmul.mubr.bf16.gmra.mxu0 %v2342
        %v2381 = vpop.f32.mrf.mxu0
        %v2382 = vadd.f32 0.0, %v2381
        %v2383 = vpop.f32.mrf.mxu0
        %v2384 = vpop.f32.mrf.mxu0
        %v2385 = vpop.f32.mrf.mxu0
        %2386 = vdwg.mxu0
        %2387 = vrot.lane.b32.xlu0 %v2277, 120
        %v2388 = vpop.permute.xlu0 %2387
        %2389 = vrot.lane.b32.xlu0 %v2277, 88
        %v2390 = vpop.permute.xlu0 %2389
        %v2392 = vsel %vm1807, %v2388, 0
        %v2395 = vsel %vm1807, %v2390, 0
        %2397 = vmatprep.subr.bf16.mxu0 0
        %2398 = vmatpush1.bf16.xpose.msra.mxu0 0
        %2399 = vmatprep.subr.bf16.mxu0 0
        %2400 = vmatpush1.bf16.xpose.msra.mxu0 0
        %2401 = vmatprep.subr.bf16.mxu0 0
        %2402 = vmatpush1.bf16.xpose.msra.mxu0 0
        %2403 = vmatprep.subr.bf16.mxu0 0
        %2404 = vmatpush1.bf16.xpose.msra.mxu0 0
        %2405 = vmatprep.subr.bf16.mxu0 0
        %2406 = vmatpush1.bf16.xpose.msra.mxu0 0
        %2407 = vmatprep.subr.bf16.mxu0 0
        %2408 = vmatpush1.bf16.xpose.msra.mxu0 0
        %2409 = vmatprep.subr.bf16.mxu0 0
        %2410 = vmatpush1.bf16.xpose.msra.mxu0 0
        %2411 = vmatprep.subr.bf16.mxu0 0
        %2412 = vmatpush1.bf16.xpose.msra.mxu0 %v2395
        %2413 = vmatprep.subr.bf16.mxu0 0
        %2414 = vmatpush2.bf16.xpose.msra.mxu0 0
        %2415 = vmatprep.subr.bf16.mxu0 0
        %2416 = vmatpush2.bf16.xpose.msra.mxu0 0
        %2417 = vmatprep.subr.bf16.mxu0 0
        %2418 = vmatpush2.bf16.xpose.msra.mxu0 0
        %2419 = vmatprep.subr.bf16.mxu0 0
        %2420 = vmatpush2.bf16.xpose.msra.mxu0 0
        %2421 = vmatprep.subr.bf16.mxu0 0
        %2422 = vmatpush2.bf16.xpose.msra.mxu0 0
        %2423 = vmatprep.subr.bf16.mxu0 0
        %2424 = vmatpush2.bf16.xpose.msra.mxu0 0
        %2425 = vmatprep.subr.bf16.mxu0 0
        %2426 = vmatpush2.bf16.xpose.msra.mxu0 0
        %2427 = vmatprep.subr.bf16.mxu0 0
        %2428 = vmatpush2.bf16.xpose.msra.mxu0 0
        %2429 = vmatprep.mubr.bf16.mxu0 0
        %2430 = vmatmul.mubr.bf16.gmra.mxu0 %v2392
        %v2431 = vpop.f32.mrf.mxu0
        %v2432 = vadd.f32 0.0, %v2431
        %v2433 = vpop.f32.mrf.mxu0
        %v2434 = vpop.f32.mrf.mxu0
        %v2435 = vpop.f32.mrf.mxu0
        %2436 = vdwg.mxu0
        %v2437 = vmul.f32 %v2432, 0.35355338
        %v2438 = vsel %vm1855, %v2437, -inf
        %2439 = vmax.xlane.f32.xlu0 %v2438
        %v2440 = vpop.xlane.xlu0 %2439
        %v2441 = vsub.f32 %v2437, %v2440
        %v2442 = vmul.f32 %v2441, 1.442695
        %v2443 = vpow.pop %v2442
        %v2444 = vsel %vm1855, %v2443, 0.0
        %2445 = vadd.xlane.f32.xlu0 %v2444
        %v2446 = vpop.xlane.xlu0 %2445
        %v2447 = vrcp.pop %v2446
        %v2448 = vmul.f32 %v2443, %v2447
        %v2449 = vpack.c.bf16 %v2448, %v2448
        %2450 = vrot.lane.b32.xlu0 %v2277, 56
        %v2451 = vpop.permute.xlu0 %2450
        %v2453 = vsel %vm1870, %v2449, 0
        %v2456 = vand.u32 %v2451, %v1877
        %2458 = vmatprep.subr.bf16.mxu0 0
        %2459 = vmatpush1.bf16.msra.mxu0 0
        %2460 = vmatprep.subr.bf16.mxu0 0
        %2461 = vmatpush1.bf16.msra.mxu0 0
        %2462 = vmatprep.subr.bf16.mxu0 0
        %2463 = vmatpush1.bf16.msra.mxu0 0
        %2464 = vmatprep.subr.bf16.mxu0 0
        %2465 = vmatpush1.bf16.msra.mxu0 0
        %2466 = vmatprep.subr.bf16.mxu0 0
        %2467 = vmatpush1.bf16.msra.mxu0 0
        %2468 = vmatprep.subr.bf16.mxu0 0
        %2469 = vmatpush1.bf16.msra.mxu0 0
        %2470 = vmatprep.subr.bf16.mxu0 0
        %2471 = vmatpush1.bf16.msra.mxu0 0
        %2472 = vmatprep.subr.bf16.mxu0 0
        %2473 = vmatpush1.bf16.msra.mxu0 %v2456
        %2474 = vmatprep.subr.bf16.mxu0 0
        %2475 = vmatpush2.bf16.msra.mxu0 0
        %2476 = vmatprep.subr.bf16.mxu0 0
        %2477 = vmatpush2.bf16.msra.mxu0 0
        %2478 = vmatprep.subr.bf16.mxu0 0
        %2479 = vmatpush2.bf16.msra.mxu0 0
        %2480 = vmatprep.subr.bf16.mxu0 0
        %2481 = vmatpush2.bf16.msra.mxu0 0
        %2482 = vmatprep.subr.bf16.mxu0 0
        %2483 = vmatpush2.bf16.msra.mxu0 0
        %2484 = vmatprep.subr.bf16.mxu0 0
        %2485 = vmatpush2.bf16.msra.mxu0 0
        %2486 = vmatprep.subr.bf16.mxu0 0
        %2487 = vmatpush2.bf16.msra.mxu0 0
        %2488 = vmatprep.subr.bf16.mxu0 0
        %2489 = vmatpush2.bf16.msra.mxu0 0
        %2490 = vmatprep.mubr.bf16.mxu0 0
        %2491 = vmatmul.mubr.bf16.gmra.mxu0 %v2453
        %v2492 = vpop.f32.mrf.mxu0
        %v2493 = vadd.f32 0.0, %v2492
        %v2494 = vpop.f32.mrf.mxu0
        %v2495 = vpop.f32.mrf.mxu0
        %v2496 = vpop.f32.mrf.mxu0
        %2497 = vdwg.mxu0
        %2498 = vrot.lane.b32.xlu0 %v2277, 112
        %v2499 = vpop.permute.xlu0 %2498
        %2500 = vrot.lane.b32.xlu0 %v2277, 80
        %v2501 = vpop.permute.xlu0 %2500
        %v2503 = vsel %vm1807, %v2499, 0
        %v2506 = vsel %vm1807, %v2501, 0
        %2508 = vmatprep.subr.bf16.mxu0 0
        %2509 = vmatpush1.bf16.xpose.msra.mxu0 0
        %2510 = vmatprep.subr.bf16.mxu0 0
        %2511 = vmatpush1.bf16.xpose.msra.mxu0 0
        %2512 = vmatprep.subr.bf16.mxu0 0
        %2513 = vmatpush1.bf16.xpose.msra.mxu0 0
        %2514 = vmatprep.subr.bf16.mxu0 0
        %2515 = vmatpush1.bf16.xpose.msra.mxu0 0
        %2516 = vmatprep.subr.bf16.mxu0 0
        %2517 = vmatpush1.bf16.xpose.msra.mxu0 0
        %2518 = vmatprep.subr.bf16.mxu0 0
        %2519 = vmatpush1.bf16.xpose.msra.mxu0 0
        %2520 = vmatprep.subr.bf16.mxu0 0
        %2521 = vmatpush1.bf16.xpose.msra.mxu0 0
        %2522 = vmatprep.subr.bf16.mxu0 0
        %2523 = vmatpush1.bf16.xpose.msra.mxu0 %v2506
        %2524 = vmatprep.subr.bf16.mxu0 0
        %2525 = vmatpush2.bf16.xpose.msra.mxu0 0
        %2526 = vmatprep.subr.bf16.mxu0 0
        %2527 = vmatpush2.bf16.xpose.msra.mxu0 0
        %2528 = vmatprep.subr.bf16.mxu0 0
        %2529 = vmatpush2.bf16.xpose.msra.mxu0 0
        %2530 = vmatprep.subr.bf16.mxu0 0
        %2531 = vmatpush2.bf16.xpose.msra.mxu0 0
        %2532 = vmatprep.subr.bf16.mxu0 0
        %2533 = vmatpush2.bf16.xpose.msra.mxu0 0
        %2534 = vmatprep.subr.bf16.mxu0 0
        %2535 = vmatpush2.bf16.xpose.msra.mxu0 0
        %2536 = vmatprep.subr.bf16.mxu0 0
        %2537 = vmatpush2.bf16.xpose.msra.mxu0 0
        %2538 = vmatprep.subr.bf16.mxu0 0
        %2539 = vmatpush2.bf16.xpose.msra.mxu0 0
        %2540 = vmatprep.mubr.bf16.mxu0 0
        %2541 = vmatmul.mubr.bf16.gmra.mxu0 %v2503
        %v2542 = vpop.f32.mrf.mxu0
        %v2543 = vadd.f32 0.0, %v2542
        %v2544 = vpop.f32.mrf.mxu0
        %v2545 = vpop.f32.mrf.mxu0
        %v2546 = vpop.f32.mrf.mxu0
        %2547 = vdwg.mxu0
        %v2548 = vmul.f32 %v2543, 0.35355338
        %v2549 = vsel %vm1855, %v2548, -inf
        %2550 = vmax.xlane.f32.xlu0 %v2549
        %v2551 = vpop.xlane.xlu0 %2550
        %v2552 = vsub.f32 %v2548, %v2551
        %v2553 = vmul.f32 %v2552, 1.442695
        %v2554 = vpow.pop %v2553
        %v2555 = vsel %vm1855, %v2554, 0.0
        %2556 = vadd.xlane.f32.xlu0 %v2555
        %v2557 = vpop.xlane.xlu0 %2556
        %v2558 = vrcp.pop %v2557
        %v2559 = vmul.f32 %v2554, %v2558
        %v2560 = vpack.c.bf16 %v2559, %v2559
        %2561 = vrot.lane.b32.xlu0 %v2277, 48
        %v2562 = vpop.permute.xlu0 %2561
        %v2564 = vsel %vm1870, %v2560, 0
        %v2567 = vand.u32 %v2562, %v1877
        %2569 = vmatprep.subr.bf16.mxu0 0
        %2570 = vmatpush1.bf16.msra.mxu0 0
        %2571 = vmatprep.subr.bf16.mxu0 0
        %2572 = vmatpush1.bf16.msra.mxu0 0
        %2573 = vmatprep.subr.bf16.mxu0 0
        %2574 = vmatpush1.bf16.msra.mxu0 0
        %2575 = vmatprep.subr.bf16.mxu0 0
        %2576 = vmatpush1.bf16.msra.mxu0 0
        %2577 = vmatprep.subr.bf16.mxu0 0
        %2578 = vmatpush1.bf16.msra.mxu0 0
        %2579 = vmatprep.subr.bf16.mxu0 0
        %2580 = vmatpush1.bf16.msra.mxu0 0
        %2581 = vmatprep.subr.bf16.mxu0 0
        %2582 = vmatpush1.bf16.msra.mxu0 0
        %2583 = vmatprep.subr.bf16.mxu0 0
        %2584 = vmatpush1.bf16.msra.mxu0 %v2567
        %2585 = vmatprep.subr.bf16.mxu0 0
        %2586 = vmatpush2.bf16.msra.mxu0 0
        %2587 = vmatprep.subr.bf16.mxu0 0
        %2588 = vmatpush2.bf16.msra.mxu0 0
        %2589 = vmatprep.subr.bf16.mxu0 0
        %2590 = vmatpush2.bf16.msra.mxu0 0
        %2591 = vmatprep.subr.bf16.mxu0 0
        %2592 = vmatpush2.bf16.msra.mxu0 0
        %2593 = vmatprep.subr.bf16.mxu0 0
        %2594 = vmatpush2.bf16.msra.mxu0 0
        %2595 = vmatprep.subr.bf16.mxu0 0
        %2596 = vmatpush2.bf16.msra.mxu0 0
        %2597 = vmatprep.subr.bf16.mxu0 0
        %2598 = vmatpush2.bf16.msra.mxu0 0
        %2599 = vmatprep.subr.bf16.mxu0 0
        %2600 = vmatpush2.bf16.msra.mxu0 0
        %2601 = vmatprep.mubr.bf16.mxu0 0
        %2602 = vmatmul.mubr.bf16.gmra.mxu0 %v2564
        %v2603 = vpop.f32.mrf.mxu0
        %v2604 = vadd.f32 0.0, %v2603
        %v2605 = vpop.f32.mrf.mxu0
        %v2606 = vpop.f32.mrf.mxu0
        %v2607 = vpop.f32.mrf.mxu0
        %2608 = vdwg.mxu0
        %2609 = vrot.lane.b32.xlu0 %v2277, 104
        %v2610 = vpop.permute.xlu0 %2609
        %2611 = vrot.lane.b32.xlu0 %v2277, 72
        %v2612 = vpop.permute.xlu0 %2611
        %v2614 = vsel %vm1807, %v2610, 0
        %v2617 = vsel %vm1807, %v2612, 0
        %2619 = vmatprep.subr.bf16.mxu0 0
        %2620 = vmatpush1.bf16.xpose.msra.mxu0 0
        %2621 = vmatprep.subr.bf16.mxu0 0
        %2622 = vmatpush1.bf16.xpose.msra.mxu0 0
        %2623 = vmatprep.subr.bf16.mxu0 0
        %2624 = vmatpush1.bf16.xpose.msra.mxu0 0
        %2625 = vmatprep.subr.bf16.mxu0 0
        %2626 = vmatpush1.bf16.xpose.msra.mxu0 0
        %2627 = vmatprep.subr.bf16.mxu0 0
        %2628 = vmatpush1.bf16.xpose.msra.mxu0 0
        %2629 = vmatprep.subr.bf16.mxu0 0
        %2630 = vmatpush1.bf16.xpose.msra.mxu0 0
        %2631 = vmatprep.subr.bf16.mxu0 0
        %2632 = vmatpush1.bf16.xpose.msra.mxu0 0
        %2633 = vmatprep.subr.bf16.mxu0 0
        %2634 = vmatpush1.bf16.xpose.msra.mxu0 %v2617
        %2635 = vmatprep.subr.bf16.mxu0 0
        %2636 = vmatpush2.bf16.xpose.msra.mxu0 0
        %2637 = vmatprep.subr.bf16.mxu0 0
        %2638 = vmatpush2.bf16.xpose.msra.mxu0 0
        %2639 = vmatprep.subr.bf16.mxu0 0
        %2640 = vmatpush2.bf16.xpose.msra.mxu0 0
        %2641 = vmatprep.subr.bf16.mxu0 0
        %2642 = vmatpush2.bf16.xpose.msra.mxu0 0
        %2643 = vmatprep.subr.bf16.mxu0 0
        %2644 = vmatpush2.bf16.xpose.msra.mxu0 0
        %2645 = vmatprep.subr.bf16.mxu0 0
        %2646 = vmatpush2.bf16.xpose.msra.mxu0 0
        %2647 = vmatprep.subr.bf16.mxu0 0
        %2648 = vmatpush2.bf16.xpose.msra.mxu0 0
        %2649 = vmatprep.subr.bf16.mxu0 0
        %2650 = vmatpush2.bf16.xpose.msra.mxu0 0
        %2651 = vmatprep.mubr.bf16.mxu0 0
        %2652 = vmatmul.mubr.bf16.gmra.mxu0 %v2614
        %v2653 = vpop.f32.mrf.mxu0
        %v2654 = vadd.f32 0.0, %v2653
        %v2655 = vpop.f32.mrf.mxu0
        %v2656 = vpop.f32.mrf.mxu0
        %v2657 = vpop.f32.mrf.mxu0
        %2658 = vdwg.mxu0
        %v2659 = vmul.f32 %v2654, 0.35355338
        %v2660 = vsel %vm1855, %v2659, -inf
        %2661 = vmax.xlane.f32.xlu0 %v2660
        %v2662 = vpop.xlane.xlu0 %2661
        %v2663 = vsub.f32 %v2659, %v2662
        %v2664 = vmul.f32 %v2663, 1.442695
        %v2665 = vpow.pop %v2664
        %v2666 = vsel %vm1855, %v2665, 0.0
        %2667 = vadd.xlane.f32.xlu0 %v2666
        %v2668 = vpop.xlane.xlu0 %2667
        %v2669 = vrcp.pop %v2668
        %v2670 = vmul.f32 %v2665, %v2669
        %v2671 = vpack.c.bf16 %v2670, %v2670
        %2672 = vrot.lane.b32.xlu0 %v2277, 40
        %v2673 = vpop.permute.xlu0 %2672
        %v2675 = vsel %vm1870, %v2671, 0
        %v2678 = vand.u32 %v2673, %v1877
        %2680 = vmatprep.subr.bf16.mxu0 0
        %2681 = vmatpush1.bf16.msra.mxu0 0
        %2682 = vmatprep.subr.bf16.mxu0 0
        %2683 = vmatpush1.bf16.msra.mxu0 0
        %2684 = vmatprep.subr.bf16.mxu0 0
        %2685 = vmatpush1.bf16.msra.mxu0 0
        %2686 = vmatprep.subr.bf16.mxu0 0
        %2687 = vmatpush1.bf16.msra.mxu0 0
        %2688 = vmatprep.subr.bf16.mxu0 0
        %2689 = vmatpush1.bf16.msra.mxu0 0
        %2690 = vmatprep.subr.bf16.mxu0 0
        %2691 = vmatpush1.bf16.msra.mxu0 0
        %2692 = vmatprep.subr.bf16.mxu0 0
        %2693 = vmatpush1.bf16.msra.mxu0 0
        %2694 = vmatprep.subr.bf16.mxu0 0
        %2695 = vmatpush1.bf16.msra.mxu0 %v2678
        %2696 = vmatprep.subr.bf16.mxu0 0
        %2697 = vmatpush2.bf16.msra.mxu0 0
        %2698 = vmatprep.subr.bf16.mxu0 0
        %2699 = vmatpush2.bf16.msra.mxu0 0
        %2700 = vmatprep.subr.bf16.mxu0 0
        %2701 = vmatpush2.bf16.msra.mxu0 0
        %2702 = vmatprep.subr.bf16.mxu0 0
        %2703 = vmatpush2.bf16.msra.mxu0 0
        %2704 = vmatprep.subr.bf16.mxu0 0
        %2705 = vmatpush2.bf16.msra.mxu0 0
        %2706 = vmatprep.subr.bf16.mxu0 0
        %2707 = vmatpush2.bf16.msra.mxu0 0
        %2708 = vmatprep.subr.bf16.mxu0 0
        %2709 = vmatpush2.bf16.msra.mxu0 0
        %2710 = vmatprep.subr.bf16.mxu0 0
        %2711 = vmatpush2.bf16.msra.mxu0 0
        %2712 = vmatprep.mubr.bf16.mxu0 0
        %2713 = vmatmul.mubr.bf16.gmra.mxu0 %v2675
        %v2714 = vpop.f32.mrf.mxu0
        %v2715 = vadd.f32 0.0, %v2714
        %v2716 = vpop.f32.mrf.mxu0
        %v2717 = vpop.f32.mrf.mxu0
        %v2718 = vpop.f32.mrf.mxu0
        %2719 = vdwg.mxu0
        %2721 = vrot.lane.b32.xlu0 %v2493, 8
        %v2722 = vpop.permute.xlu0 %2721
        %2725 = vrot.lane.b32.xlu0 %v2604, 16
        %v2726 = vpop.permute.xlu0 %2725
        %2729 = vrot.lane.b32.xlu0 %v2715, 24
        %v2730 = vpop.permute.xlu0 %2729
        %v2732 = vsel %vm1807, %v2382, %v2722
        %v2733 = vsel %vm2267, %v2732, %v2726
        %v2734 = vsel %vm2269, %v2733, %v2730
        %v2735 = vpack.c.bf16 %v1800, %v1797
        %v2737 = vrot.slane %v2735, 3
        %2738 = vrot.lane.b32.xlu0 %v2737, 96
        %v2739 = vpop.permute.xlu0 %2738
        %v2741 = vsel %vm1807, %v2737, 0
        %v2744 = vsel %vm1807, %v2739, 0
        %2746 = vmatprep.subr.bf16.mxu0 0
        %2747 = vmatpush1.bf16.xpose.msra.mxu0 0
        %2748 = vmatprep.subr.bf16.mxu0 0
        %2749 = vmatpush1.bf16.xpose.msra.mxu0 0
        %2750 = vmatprep.subr.bf16.mxu0 0
        %2751 = vmatpush1.bf16.xpose.msra.mxu0 0
        %2752 = vmatprep.subr.bf16.mxu0 0
        %2753 = vmatpush1.bf16.xpose.msra.mxu0 0
        %2754 = vmatprep.subr.bf16.mxu0 0
        %2755 = vmatpush1.bf16.xpose.msra.mxu0 0
        %2756 = vmatprep.subr.bf16.mxu0 0
        %2757 = vmatpush1.bf16.xpose.msra.mxu0 0
        %2758 = vmatprep.subr.bf16.mxu0 0
        %2759 = vmatpush1.bf16.xpose.msra.mxu0 0
        %2760 = vmatprep.subr.bf16.mxu0 0
        %2761 = vmatpush1.bf16.xpose.msra.mxu0 %v2744
        %2762 = vmatprep.subr.bf16.mxu0 0
        %2763 = vmatpush2.bf16.xpose.msra.mxu0 0
        %2764 = vmatprep.subr.bf16.mxu0 0
        %2765 = vmatpush2.bf16.xpose.msra.mxu0 0
        %2766 = vmatprep.subr.bf16.mxu0 0
        %2767 = vmatpush2.bf16.xpose.msra.mxu0 0
        %2768 = vmatprep.subr.bf16.mxu0 0
        %2769 = vmatpush2.bf16.xpose.msra.mxu0 0
        %2770 = vmatprep.subr.bf16.mxu0 0
        %2771 = vmatpush2.bf16.xpose.msra.mxu0 0
        %2772 = vmatprep.subr.bf16.mxu0 0
        %2773 = vmatpush2.bf16.xpose.msra.mxu0 0
        %2774 = vmatprep.subr.bf16.mxu0 0
        %2775 = vmatpush2.bf16.xpose.msra.mxu0 0
        %2776 = vmatprep.subr.bf16.mxu0 0
        %2777 = vmatpush2.bf16.xpose.msra.mxu0 0
        %2778 = vmatprep.mubr.bf16.mxu0 0
        %2779 = vmatmul.mubr.bf16.gmra.mxu0 %v2741
        %v2780 = vpop.f32.mrf.mxu0
        %v2781 = vadd.f32 0.0, %v2780
        %v2782 = vpop.f32.mrf.mxu0
        %v2783 = vpop.f32.mrf.mxu0
        %v2784 = vpop.f32.mrf.mxu0
        %2785 = vdwg.mxu0
        %v2786 = vmul.f32 %v2781, 0.35355338
        %v2787 = vsel %vm1855, %v2786, -inf
        %2788 = vmax.xlane.f32.xlu0 %v2787
        %v2789 = vpop.xlane.xlu0 %2788
        %v2790 = vsub.f32 %v2786, %v2789
        %v2791 = vmul.f32 %v2790, 1.442695
        %v2792 = vpow.pop %v2791
        %v2793 = vsel %vm1855, %v2792, 0.0
        %2794 = vadd.xlane.f32.xlu0 %v2793
        %v2795 = vpop.xlane.xlu0 %2794
        %v2796 = vrcp.pop %v2795
        %v2797 = vmul.f32 %v2792, %v2796
        %v2798 = vpack.c.bf16 %v2797, %v2797
        %2799 = vrot.lane.b32.xlu0 %v2737, 64
        %v2800 = vpop.permute.xlu0 %2799
        %v2802 = vsel %vm1870, %v2798, 0
        %v2805 = vand.u32 %v2800, %v1877
        %2807 = vmatprep.subr.bf16.mxu0 0
        %2808 = vmatpush1.bf16.msra.mxu0 0
        %2809 = vmatprep.subr.bf16.mxu0 0
        %2810 = vmatpush1.bf16.msra.mxu0 0
        %2811 = vmatprep.subr.bf16.mxu0 0
        %2812 = vmatpush1.bf16.msra.mxu0 0
        %2813 = vmatprep.subr.bf16.mxu0 0
        %2814 = vmatpush1.bf16.msra.mxu0 0
        %2815 = vmatprep.subr.bf16.mxu0 0
        %2816 = vmatpush1.bf16.msra.mxu0 0
        %2817 = vmatprep.subr.bf16.mxu0 0
        %2818 = vmatpush1.bf16.msra.mxu0 0
        %2819 = vmatprep.subr.bf16.mxu0 0
        %2820 = vmatpush1.bf16.msra.mxu0 0
        %2821 = vmatprep.subr.bf16.mxu0 0
        %2822 = vmatpush1.bf16.msra.mxu0 %v2805
        %2823 = vmatprep.subr.bf16.mxu0 0
        %2824 = vmatpush2.bf16.msra.mxu0 0
        %2825 = vmatprep.subr.bf16.mxu0 0
        %2826 = vmatpush2.bf16.msra.mxu0 0
        %2827 = vmatprep.subr.bf16.mxu0 0
        %2828 = vmatpush2.bf16.msra.mxu0 0
        %2829 = vmatprep.subr.bf16.mxu0 0
        %2830 = vmatpush2.bf16.msra.mxu0 0
        %2831 = vmatprep.subr.bf16.mxu0 0
        %2832 = vmatpush2.bf16.msra.mxu0 0
        %2833 = vmatprep.subr.bf16.mxu0 0
        %2834 = vmatpush2.bf16.msra.mxu0 0
        %2835 = vmatprep.subr.bf16.mxu0 0
        %2836 = vmatpush2.bf16.msra.mxu0 0
        %2837 = vmatprep.subr.bf16.mxu0 0
        %2838 = vmatpush2.bf16.msra.mxu0 0
        %2839 = vmatprep.mubr.bf16.mxu0 0
        %2840 = vmatmul.mubr.bf16.gmra.mxu0 %v2802
        %v2841 = vpop.f32.mrf.mxu0
        %v2842 = vadd.f32 0.0, %v2841
        %v2843 = vpop.f32.mrf.mxu0
        %v2844 = vpop.f32.mrf.mxu0
        %v2845 = vpop.f32.mrf.mxu0
        %2846 = vdwg.mxu0
        %2847 = vrot.lane.b32.xlu0 %v2737, 120
        %v2848 = vpop.permute.xlu0 %2847
        %2849 = vrot.lane.b32.xlu0 %v2737, 88
        %v2850 = vpop.permute.xlu0 %2849
        %v2852 = vsel %vm1807, %v2848, 0
        %v2855 = vsel %vm1807, %v2850, 0
        %2857 = vmatprep.subr.bf16.mxu0 0
        %2858 = vmatpush1.bf16.xpose.msra.mxu0 0
        %2859 = vmatprep.subr.bf16.mxu0 0
        %2860 = vmatpush1.bf16.xpose.msra.mxu0 0
        %2861 = vmatprep.subr.bf16.mxu0 0
        %2862 = vmatpush1.bf16.xpose.msra.mxu0 0
        %2863 = vmatprep.subr.bf16.mxu0 0
        %2864 = vmatpush1.bf16.xpose.msra.mxu0 0
        %2865 = vmatprep.subr.bf16.mxu0 0
        %2866 = vmatpush1.bf16.xpose.msra.mxu0 0
        %2867 = vmatprep.subr.bf16.mxu0 0
        %2868 = vmatpush1.bf16.xpose.msra.mxu0 0
        %2869 = vmatprep.subr.bf16.mxu0 0
        %2870 = vmatpush1.bf16.xpose.msra.mxu0 0
        %2871 = vmatprep.subr.bf16.mxu0 0
        %2872 = vmatpush1.bf16.xpose.msra.mxu0 %v2855
        %2873 = vmatprep.subr.bf16.mxu0 0
        %2874 = vmatpush2.bf16.xpose.msra.mxu0 0
        %2875 = vmatprep.subr.bf16.mxu0 0
        %2876 = vmatpush2.bf16.xpose.msra.mxu0 0
        %2877 = vmatprep.subr.bf16.mxu0 0
        %2878 = vmatpush2.bf16.xpose.msra.mxu0 0
        %2879 = vmatprep.subr.bf16.mxu0 0
        %2880 = vmatpush2.bf16.xpose.msra.mxu0 0
        %2881 = vmatprep.subr.bf16.mxu0 0
        %2882 = vmatpush2.bf16.xpose.msra.mxu0 0
        %2883 = vmatprep.subr.bf16.mxu0 0
        %2884 = vmatpush2.bf16.xpose.msra.mxu0 0
        %2885 = vmatprep.subr.bf16.mxu0 0
        %2886 = vmatpush2.bf16.xpose.msra.mxu0 0
        %2887 = vmatprep.subr.bf16.mxu0 0
        %2888 = vmatpush2.bf16.xpose.msra.mxu0 0
        %2889 = vmatprep.mubr.bf16.mxu0 0
        %2890 = vmatmul.mubr.bf16.gmra.mxu0 %v2852
        %v2891 = vpop.f32.mrf.mxu0
        %v2892 = vadd.f32 0.0, %v2891
        %v2893 = vpop.f32.mrf.mxu0
        %v2894 = vpop.f32.mrf.mxu0
        %v2895 = vpop.f32.mrf.mxu0
        %2896 = vdwg.mxu0
        %v2897 = vmul.f32 %v2892, 0.35355338
        %v2898 = vsel %vm1855, %v2897, -inf
        %2899 = vmax.xlane.f32.xlu0 %v2898
        %v2900 = vpop.xlane.xlu0 %2899
        %v2901 = vsub.f32 %v2897, %v2900
        %v2902 = vmul.f32 %v2901, 1.442695
        %v2903 = vpow.pop %v2902
        %v2904 = vsel %vm1855, %v2903, 0.0
        %2905 = vadd.xlane.f32.xlu0 %v2904
        %v2906 = vpop.xlane.xlu0 %2905
        %v2907 = vrcp.pop %v2906
        %v2908 = vmul.f32 %v2903, %v2907
        %v2909 = vpack.c.bf16 %v2908, %v2908
        %2910 = vrot.lane.b32.xlu0 %v2737, 56
        %v2911 = vpop.permute.xlu0 %2910
        %v2913 = vsel %vm1870, %v2909, 0
        %v2916 = vand.u32 %v2911, %v1877
        %2918 = vmatprep.subr.bf16.mxu0 0
        %2919 = vmatpush1.bf16.msra.mxu0 0
        %2920 = vmatprep.subr.bf16.mxu0 0
        %2921 = vmatpush1.bf16.msra.mxu0 0
        %2922 = vmatprep.subr.bf16.mxu0 0
        %2923 = vmatpush1.bf16.msra.mxu0 0
        %2924 = vmatprep.subr.bf16.mxu0 0
        %2925 = vmatpush1.bf16.msra.mxu0 0
        %2926 = vmatprep.subr.bf16.mxu0 0
        %2927 = vmatpush1.bf16.msra.mxu0 0
        %2928 = vmatprep.subr.bf16.mxu0 0
        %2929 = vmatpush1.bf16.msra.mxu0 0
        %2930 = vmatprep.subr.bf16.mxu0 0
        %2931 = vmatpush1.bf16.msra.mxu0 0
        %2932 = vmatprep.subr.bf16.mxu0 0
        %2933 = vmatpush1.bf16.msra.mxu0 %v2916
        %2934 = vmatprep.subr.bf16.mxu0 0
        %2935 = vmatpush2.bf16.msra.mxu0 0
        %2936 = vmatprep.subr.bf16.mxu0 0
        %2937 = vmatpush2.bf16.msra.mxu0 0
        %2938 = vmatprep.subr.bf16.mxu0 0
        %2939 = vmatpush2.bf16.msra.mxu0 0
        %2940 = vmatprep.subr.bf16.mxu0 0
        %2941 = vmatpush2.bf16.msra.mxu0 0
        %2942 = vmatprep.subr.bf16.mxu0 0
        %2943 = vmatpush2.bf16.msra.mxu0 0
        %2944 = vmatprep.subr.bf16.mxu0 0
        %2945 = vmatpush2.bf16.msra.mxu0 0
        %2946 = vmatprep.subr.bf16.mxu0 0
        %2947 = vmatpush2.bf16.msra.mxu0 0
        %2948 = vmatprep.subr.bf16.mxu0 0
        %2949 = vmatpush2.bf16.msra.mxu0 0
        %2950 = vmatprep.mubr.bf16.mxu0 0
        %2951 = vmatmul.mubr.bf16.gmra.mxu0 %v2913
        %v2952 = vpop.f32.mrf.mxu0
        %v2953 = vadd.f32 0.0, %v2952
        %v2954 = vpop.f32.mrf.mxu0
        %v2955 = vpop.f32.mrf.mxu0
        %v2956 = vpop.f32.mrf.mxu0
        %2957 = vdwg.mxu0
        %2958 = vrot.lane.b32.xlu0 %v2737, 112
        %v2959 = vpop.permute.xlu0 %2958
        %2960 = vrot.lane.b32.xlu0 %v2737, 80
        %v2961 = vpop.permute.xlu0 %2960
        %v2963 = vsel %vm1807, %v2959, 0
        %v2966 = vsel %vm1807, %v2961, 0
        %2968 = vmatprep.subr.bf16.mxu0 0
        %2969 = vmatpush1.bf16.xpose.msra.mxu0 0
        %2970 = vmatprep.subr.bf16.mxu0 0
        %2971 = vmatpush1.bf16.xpose.msra.mxu0 0
        %2972 = vmatprep.subr.bf16.mxu0 0
        %2973 = vmatpush1.bf16.xpose.msra.mxu0 0
        %2974 = vmatprep.subr.bf16.mxu0 0
        %2975 = vmatpush1.bf16.xpose.msra.mxu0 0
        %2976 = vmatprep.subr.bf16.mxu0 0
        %2977 = vmatpush1.bf16.xpose.msra.mxu0 0
        %2978 = vmatprep.subr.bf16.mxu0 0
        %2979 = vmatpush1.bf16.xpose.msra.mxu0 0
        %2980 = vmatprep.subr.bf16.mxu0 0
        %2981 = vmatpush1.bf16.xpose.msra.mxu0 0
        %2982 = vmatprep.subr.bf16.mxu0 0
        %2983 = vmatpush1.bf16.xpose.msra.mxu0 %v2966
        %2984 = vmatprep.subr.bf16.mxu0 0
        %2985 = vmatpush2.bf16.xpose.msra.mxu0 0
        %2986 = vmatprep.subr.bf16.mxu0 0
        %2987 = vmatpush2.bf16.xpose.msra.mxu0 0
        %2988 = vmatprep.subr.bf16.mxu0 0
        %2989 = vmatpush2.bf16.xpose.msra.mxu0 0
        %2990 = vmatprep.subr.bf16.mxu0 0
        %2991 = vmatpush2.bf16.xpose.msra.mxu0 0
        %2992 = vmatprep.subr.bf16.mxu0 0
        %2993 = vmatpush2.bf16.xpose.msra.mxu0 0
        %2994 = vmatprep.subr.bf16.mxu0 0
        %2995 = vmatpush2.bf16.xpose.msra.mxu0 0
        %2996 = vmatprep.subr.bf16.mxu0 0
        %2997 = vmatpush2.bf16.xpose.msra.mxu0 0
        %2998 = vmatprep.subr.bf16.mxu0 0
        %2999 = vmatpush2.bf16.xpose.msra.mxu0 0
        %3000 = vmatprep.mubr.bf16.mxu0 0
        %3001 = vmatmul.mubr.bf16.gmra.mxu0 %v2963
        %v3002 = vpop.f32.mrf.mxu0
        %v3003 = vadd.f32 0.0, %v3002
        %v3004 = vpop.f32.mrf.mxu0
        %v3005 = vpop.f32.mrf.mxu0
        %v3006 = vpop.f32.mrf.mxu0
        %3007 = vdwg.mxu0
        %v3008 = vmul.f32 %v3003, 0.35355338
        %v3009 = vsel %vm1855, %v3008, -inf
        %3010 = vmax.xlane.f32.xlu0 %v3009
        %v3011 = vpop.xlane.xlu0 %3010
        %v3012 = vsub.f32 %v3008, %v3011
        %v3013 = vmul.f32 %v3012, 1.442695
        %v3014 = vpow.pop %v3013
        %v3015 = vsel %vm1855, %v3014, 0.0
        %3016 = vadd.xlane.f32.xlu0 %v3015
        %v3017 = vpop.xlane.xlu0 %3016
        %v3018 = vrcp.pop %v3017
        %v3019 = vmul.f32 %v3014, %v3018
        %v3020 = vpack.c.bf16 %v3019, %v3019
        %3021 = vrot.lane.b32.xlu0 %v2737, 48
        %v3022 = vpop.permute.xlu0 %3021
        %v3024 = vsel %vm1870, %v3020, 0
        %v3027 = vand.u32 %v3022, %v1877
        %3029 = vmatprep.subr.bf16.mxu0 0
        %3030 = vmatpush1.bf16.msra.mxu0 0
        %3031 = vmatprep.subr.bf16.mxu0 0
        %3032 = vmatpush1.bf16.msra.mxu0 0
        %3033 = vmatprep.subr.bf16.mxu0 0
        %3034 = vmatpush1.bf16.msra.mxu0 0
        %3035 = vmatprep.subr.bf16.mxu0 0
        %3036 = vmatpush1.bf16.msra.mxu0 0
        %3037 = vmatprep.subr.bf16.mxu0 0
        %3038 = vmatpush1.bf16.msra.mxu0 0
        %3039 = vmatprep.subr.bf16.mxu0 0
        %3040 = vmatpush1.bf16.msra.mxu0 0
        %3041 = vmatprep.subr.bf16.mxu0 0
        %3042 = vmatpush1.bf16.msra.mxu0 0
        %3043 = vmatprep.subr.bf16.mxu0 0
        %3044 = vmatpush1.bf16.msra.mxu0 %v3027
        %3045 = vmatprep.subr.bf16.mxu0 0
        %3046 = vmatpush2.bf16.msra.mxu0 0
        %3047 = vmatprep.subr.bf16.mxu0 0
        %3048 = vmatpush2.bf16.msra.mxu0 0
        %3049 = vmatprep.subr.bf16.mxu0 0
        %3050 = vmatpush2.bf16.msra.mxu0 0
        %3051 = vmatprep.subr.bf16.mxu0 0
        %3052 = vmatpush2.bf16.msra.mxu0 0
        %3053 = vmatprep.subr.bf16.mxu0 0
        %3054 = vmatpush2.bf16.msra.mxu0 0
        %3055 = vmatprep.subr.bf16.mxu0 0
        %3056 = vmatpush2.bf16.msra.mxu0 0
        %3057 = vmatprep.subr.bf16.mxu0 0
        %3058 = vmatpush2.bf16.msra.mxu0 0
        %3059 = vmatprep.subr.bf16.mxu0 0
        %3060 = vmatpush2.bf16.msra.mxu0 0
        %3061 = vmatprep.mubr.bf16.mxu0 0
        %3062 = vmatmul.mubr.bf16.gmra.mxu0 %v3024
        %v3063 = vpop.f32.mrf.mxu0
        %v3064 = vadd.f32 0.0, %v3063
        %v3065 = vpop.f32.mrf.mxu0
        %v3066 = vpop.f32.mrf.mxu0
        %v3067 = vpop.f32.mrf.mxu0
        %3068 = vdwg.mxu0
        %3069 = vrot.lane.b32.xlu0 %v2737, 104
        %v3070 = vpop.permute.xlu0 %3069
        %3071 = vrot.lane.b32.xlu0 %v2737, 72
        %v3072 = vpop.permute.xlu0 %3071
        %v3074 = vsel %vm1807, %v3070, 0
        %v3077 = vsel %vm1807, %v3072, 0
        %3079 = vmatprep.subr.bf16.mxu0 0
        %3080 = vmatpush1.bf16.xpose.msra.mxu0 0
        %3081 = vmatprep.subr.bf16.mxu0 0
        %3082 = vmatpush1.bf16.xpose.msra.mxu0 0
        %3083 = vmatprep.subr.bf16.mxu0 0
        %3084 = vmatpush1.bf16.xpose.msra.mxu0 0
        %3085 = vmatprep.subr.bf16.mxu0 0
        %3086 = vmatpush1.bf16.xpose.msra.mxu0 0
        %3087 = vmatprep.subr.bf16.mxu0 0
        %3088 = vmatpush1.bf16.xpose.msra.mxu0 0
        %3089 = vmatprep.subr.bf16.mxu0 0
        %3090 = vmatpush1.bf16.xpose.msra.mxu0 0
        %3091 = vmatprep.subr.bf16.mxu0 0
        %3092 = vmatpush1.bf16.xpose.msra.mxu0 0
        %3093 = vmatprep.subr.bf16.mxu0 0
        %3094 = vmatpush1.bf16.xpose.msra.mxu0 %v3077
        %3095 = vmatprep.subr.bf16.mxu0 0
        %3096 = vmatpush2.bf16.xpose.msra.mxu0 0
        %3097 = vmatprep.subr.bf16.mxu0 0
        %3098 = vmatpush2.bf16.xpose.msra.mxu0 0
        %3099 = vmatprep.subr.bf16.mxu0 0
        %3100 = vmatpush2.bf16.xpose.msra.mxu0 0
        %3101 = vmatprep.subr.bf16.mxu0 0
        %3102 = vmatpush2.bf16.xpose.msra.mxu0 0
        %3103 = vmatprep.subr.bf16.mxu0 0
        %3104 = vmatpush2.bf16.xpose.msra.mxu0 0
        %3105 = vmatprep.subr.bf16.mxu0 0
        %3106 = vmatpush2.bf16.xpose.msra.mxu0 0
        %3107 = vmatprep.subr.bf16.mxu0 0
        %3108 = vmatpush2.bf16.xpose.msra.mxu0 0
        %3109 = vmatprep.subr.bf16.mxu0 0
        %3110 = vmatpush2.bf16.xpose.msra.mxu0 0
        %3111 = vmatprep.mubr.bf16.mxu0 0
        %3112 = vmatmul.mubr.bf16.gmra.mxu0 %v3074
        %v3113 = vpop.f32.mrf.mxu0
        %v3114 = vadd.f32 0.0, %v3113
        %v3115 = vpop.f32.mrf.mxu0
        %v3116 = vpop.f32.mrf.mxu0
        %v3117 = vpop.f32.mrf.mxu0
        %3118 = vdwg.mxu0
        %v3119 = vmul.f32 %v3114, 0.35355338
        %v3120 = vsel %vm1855, %v3119, -inf
        %3121 = vmax.xlane.f32.xlu0 %v3120
        %v3122 = vpop.xlane.xlu0 %3121
        %v3123 = vsub.f32 %v3119, %v3122
        %v3124 = vmul.f32 %v3123, 1.442695
        %v3125 = vpow.pop %v3124
        %v3126 = vsel %vm1855, %v3125, 0.0
        %3127 = vadd.xlane.f32.xlu0 %v3126
        %v3128 = vpop.xlane.xlu0 %3127
        %v3129 = vrcp.pop %v3128
        %v3130 = vmul.f32 %v3125, %v3129
        %v3131 = vpack.c.bf16 %v3130, %v3130
        %3132 = vrot.lane.b32.xlu0 %v2737, 40
        %v3133 = vpop.permute.xlu0 %3132
        %v3135 = vsel %vm1870, %v3131, 0
        %v3138 = vand.u32 %v3133, %v1877
        %3140 = vmatprep.subr.bf16.mxu0 0
        %3141 = vmatpush1.bf16.msra.mxu0 0
        %3142 = vmatprep.subr.bf16.mxu0 0
        %3143 = vmatpush1.bf16.msra.mxu0 0
        %3144 = vmatprep.subr.bf16.mxu0 0
        %3145 = vmatpush1.bf16.msra.mxu0 0
        %3146 = vmatprep.subr.bf16.mxu0 0
        %3147 = vmatpush1.bf16.msra.mxu0 0
        %3148 = vmatprep.subr.bf16.mxu0 0
        %3149 = vmatpush1.bf16.msra.mxu0 0
        %3150 = vmatprep.subr.bf16.mxu0 0
        %3151 = vmatpush1.bf16.msra.mxu0 0
        %3152 = vmatprep.subr.bf16.mxu0 0
        %3153 = vmatpush1.bf16.msra.mxu0 0
        %3154 = vmatprep.subr.bf16.mxu0 0
        %3155 = vmatpush1.bf16.msra.mxu0 %v3138
        %3156 = vmatprep.subr.bf16.mxu0 0
        %3157 = vmatpush2.bf16.msra.mxu0 0
        %3158 = vmatprep.subr.bf16.mxu0 0
        %3159 = vmatpush2.bf16.msra.mxu0 0
        %3160 = vmatprep.subr.bf16.mxu0 0
        %3161 = vmatpush2.bf16.msra.mxu0 0
        %3162 = vmatprep.subr.bf16.mxu0 0
        %3163 = vmatpush2.bf16.msra.mxu0 0
        %3164 = vmatprep.subr.bf16.mxu0 0
        %3165 = vmatpush2.bf16.msra.mxu0 0
        %3166 = vmatprep.subr.bf16.mxu0 0
        %3167 = vmatpush2.bf16.msra.mxu0 0
        %3168 = vmatprep.subr.bf16.mxu0 0
        %3169 = vmatpush2.bf16.msra.mxu0 0
        %3170 = vmatprep.subr.bf16.mxu0 0
        %3171 = vmatpush2.bf16.msra.mxu0 0
        %3172 = vmatprep.mubr.bf16.mxu0 0
        %3173 = vmatmul.mubr.bf16.gmra.mxu0 %v3135
        %v3174 = vpop.f32.mrf.mxu0
        %v3175 = vadd.f32 0.0, %v3174
        %v3176 = vpop.f32.mrf.mxu0
        %v3177 = vpop.f32.mrf.mxu0
        %v3178 = vpop.f32.mrf.mxu0
        %3179 = vdwg.mxu0
        %3181 = vrot.lane.b32.xlu0 %v2953, 8
        %v3182 = vpop.permute.xlu0 %3181
        %3185 = vrot.lane.b32.xlu0 %v3064, 16
        %v3186 = vpop.permute.xlu0 %3185
        %3189 = vrot.lane.b32.xlu0 %v3175, 24
        %v3190 = vpop.permute.xlu0 %3189
        %v3192 = vsel %vm1807, %v2842, %v3182
        %v3193 = vsel %vm2267, %v3192, %v3186
        %v3194 = vsel %vm2269, %v3193, %v3190
        %v3195 = vpack.c.bf16 %v1800, %v1800
        %v3197 = vshrl.u32 %v3195, 16
        %v3199 = vshll.u32 %v3195, 16
        %v3201 = vrot.slane %v3199, 1
        %v3202 = vor.u32 %v3197, %v3201
        %3203 = vrot.lane.b32.xlu0 %v3202, 96
        %v3204 = vpop.permute.xlu0 %3203
        %v3206 = vsel %vm1807, %v3202, 0
        %v3209 = vsel %vm1807, %v3204, 0
        %3211 = vmatprep.subr.bf16.mxu0 0
        %3212 = vmatpush1.bf16.xpose.msra.mxu0 0
        %3213 = vmatprep.subr.bf16.mxu0 0
        %3214 = vmatpush1.bf16.xpose.msra.mxu0 0
        %3215 = vmatprep.subr.bf16.mxu0 0
        %3216 = vmatpush1.bf16.xpose.msra.mxu0 0
        %3217 = vmatprep.subr.bf16.mxu0 0
        %3218 = vmatpush1.bf16.xpose.msra.mxu0 0
        %3219 = vmatprep.subr.bf16.mxu0 0
        %3220 = vmatpush1.bf16.xpose.msra.mxu0 0
        %3221 = vmatprep.subr.bf16.mxu0 0
        %3222 = vmatpush1.bf16.xpose.msra.mxu0 0
        %3223 = vmatprep.subr.bf16.mxu0 0
        %3224 = vmatpush1.bf16.xpose.msra.mxu0 0
        %3225 = vmatprep.subr.bf16.mxu0 0
        %3226 = vmatpush1.bf16.xpose.msra.mxu0 %v3209
        %3227 = vmatprep.subr.bf16.mxu0 0
        %3228 = vmatpush2.bf16.xpose.msra.mxu0 0
        %3229 = vmatprep.subr.bf16.mxu0 0
        %3230 = vmatpush2.bf16.xpose.msra.mxu0 0
        %3231 = vmatprep.subr.bf16.mxu0 0
        %3232 = vmatpush2.bf16.xpose.msra.mxu0 0
        %3233 = vmatprep.subr.bf16.mxu0 0
        %3234 = vmatpush2.bf16.xpose.msra.mxu0 0
        %3235 = vmatprep.subr.bf16.mxu0 0
        %3236 = vmatpush2.bf16.xpose.msra.mxu0 0
        %3237 = vmatprep.subr.bf16.mxu0 0
        %3238 = vmatpush2.bf16.xpose.msra.mxu0 0
        %3239 = vmatprep.subr.bf16.mxu0 0
        %3240 = vmatpush2.bf16.xpose.msra.mxu0 0
        %3241 = vmatprep.subr.bf16.mxu0 0
        %3242 = vmatpush2.bf16.xpose.msra.mxu0 0
        %3243 = vmatprep.mubr.bf16.mxu0 0
        %3244 = vmatmul.mubr.bf16.gmra.mxu0 %v3206
        %v3245 = vpop.f32.mrf.mxu0
        %v3246 = vadd.f32 0.0, %v3245
        %v3247 = vpop.f32.mrf.mxu0
        %v3248 = vpop.f32.mrf.mxu0
        %v3249 = vpop.f32.mrf.mxu0
        %3250 = vdwg.mxu0
        %v3251 = vmul.f32 %v3246, 0.35355338
        %v3252 = vsel %vm1855, %v3251, -inf
        %3253 = vmax.xlane.f32.xlu0 %v3252
        %v3254 = vpop.xlane.xlu0 %3253
        %v3255 = vsub.f32 %v3251, %v3254
        %v3256 = vmul.f32 %v3255, 1.442695
        %v3257 = vpow.pop %v3256
        %v3258 = vsel %vm1855, %v3257, 0.0
        %3259 = vadd.xlane.f32.xlu0 %v3258
        %v3260 = vpop.xlane.xlu0 %3259
        %v3261 = vrcp.pop %v3260
        %v3262 = vmul.f32 %v3257, %v3261
        %v3263 = vpack.c.bf16 %v3262, %v3262
        %3264 = vrot.lane.b32.xlu0 %v3202, 64
        %v3265 = vpop.permute.xlu0 %3264
        %v3267 = vsel %vm1870, %v3263, 0
        %v3270 = vand.u32 %v3265, %v1877
        %3272 = vmatprep.subr.bf16.mxu0 0
        %3273 = vmatpush1.bf16.msra.mxu0 0
        %3274 = vmatprep.subr.bf16.mxu0 0
        %3275 = vmatpush1.bf16.msra.mxu0 0
        %3276 = vmatprep.subr.bf16.mxu0 0
        %3277 = vmatpush1.bf16.msra.mxu0 0
        %3278 = vmatprep.subr.bf16.mxu0 0
        %3279 = vmatpush1.bf16.msra.mxu0 0
        %3280 = vmatprep.subr.bf16.mxu0 0
        %3281 = vmatpush1.bf16.msra.mxu0 0
        %3282 = vmatprep.subr.bf16.mxu0 0
        %3283 = vmatpush1.bf16.msra.mxu0 0
        %3284 = vmatprep.subr.bf16.mxu0 0
        %3285 = vmatpush1.bf16.msra.mxu0 0
        %3286 = vmatprep.subr.bf16.mxu0 0
        %3287 = vmatpush1.bf16.msra.mxu0 %v3270
        %3288 = vmatprep.subr.bf16.mxu0 0
        %3289 = vmatpush2.bf16.msra.mxu0 0
        %3290 = vmatprep.subr.bf16.mxu0 0
        %3291 = vmatpush2.bf16.msra.mxu0 0
        %3292 = vmatprep.subr.bf16.mxu0 0
        %3293 = vmatpush2.bf16.msra.mxu0 0
        %3294 = vmatprep.subr.bf16.mxu0 0
        %3295 = vmatpush2.bf16.msra.mxu0 0
        %3296 = vmatprep.subr.bf16.mxu0 0
        %3297 = vmatpush2.bf16.msra.mxu0 0
        %3298 = vmatprep.subr.bf16.mxu0 0
        %3299 = vmatpush2.bf16.msra.mxu0 0
        %3300 = vmatprep.subr.bf16.mxu0 0
        %3301 = vmatpush2.bf16.msra.mxu0 0
        %3302 = vmatprep.subr.bf16.mxu0 0
        %3303 = vmatpush2.bf16.msra.mxu0 0
        %3304 = vmatprep.mubr.bf16.mxu0 0
        %3305 = vmatmul.mubr.bf16.gmra.mxu0 %v3267
        %v3306 = vpop.f32.mrf.mxu0
        %v3307 = vadd.f32 0.0, %v3306
        %v3308 = vpop.f32.mrf.mxu0
        %v3309 = vpop.f32.mrf.mxu0
        %v3310 = vpop.f32.mrf.mxu0
        %3311 = vdwg.mxu0
        %3312 = vrot.lane.b32.xlu0 %v3202, 120
        %v3313 = vpop.permute.xlu0 %3312
        %3314 = vrot.lane.b32.xlu0 %v3202, 88
        %v3315 = vpop.permute.xlu0 %3314
        %v3317 = vsel %vm1807, %v3313, 0
        %v3320 = vsel %vm1807, %v3315, 0
        %3322 = vmatprep.subr.bf16.mxu0 0
        %3323 = vmatpush1.bf16.xpose.msra.mxu0 0
        %3324 = vmatprep.subr.bf16.mxu0 0
        %3325 = vmatpush1.bf16.xpose.msra.mxu0 0
        %3326 = vmatprep.subr.bf16.mxu0 0
        %3327 = vmatpush1.bf16.xpose.msra.mxu0 0
        %3328 = vmatprep.subr.bf16.mxu0 0
        %3329 = vmatpush1.bf16.xpose.msra.mxu0 0
        %3330 = vmatprep.subr.bf16.mxu0 0
        %3331 = vmatpush1.bf16.xpose.msra.mxu0 0
        %3332 = vmatprep.subr.bf16.mxu0 0
        %3333 = vmatpush1.bf16.xpose.msra.mxu0 0
        %3334 = vmatprep.subr.bf16.mxu0 0
        %3335 = vmatpush1.bf16.xpose.msra.mxu0 0
        %3336 = vmatprep.subr.bf16.mxu0 0
        %3337 = vmatpush1.bf16.xpose.msra.mxu0 %v3320
        %3338 = vmatprep.subr.bf16.mxu0 0
        %3339 = vmatpush2.bf16.xpose.msra.mxu0 0
        %3340 = vmatprep.subr.bf16.mxu0 0
        %3341 = vmatpush2.bf16.xpose.msra.mxu0 0
        %3342 = vmatprep.subr.bf16.mxu0 0
        %3343 = vmatpush2.bf16.xpose.msra.mxu0 0
        %3344 = vmatprep.subr.bf16.mxu0 0
        %3345 = vmatpush2.bf16.xpose.msra.mxu0 0
        %3346 = vmatprep.subr.bf16.mxu0 0
        %3347 = vmatpush2.bf16.xpose.msra.mxu0 0
        %3348 = vmatprep.subr.bf16.mxu0 0
        %3349 = vmatpush2.bf16.xpose.msra.mxu0 0
        %3350 = vmatprep.subr.bf16.mxu0 0
        %3351 = vmatpush2.bf16.xpose.msra.mxu0 0
        %3352 = vmatprep.subr.bf16.mxu0 0
        %3353 = vmatpush2.bf16.xpose.msra.mxu0 0
        %3354 = vmatprep.mubr.bf16.mxu0 0
        %3355 = vmatmul.mubr.bf16.gmra.mxu0 %v3317
        %v3356 = vpop.f32.mrf.mxu0
        %v3357 = vadd.f32 0.0, %v3356
        %v3358 = vpop.f32.mrf.mxu0
        %v3359 = vpop.f32.mrf.mxu0
        %v3360 = vpop.f32.mrf.mxu0
        %3361 = vdwg.mxu0
        %v3362 = vmul.f32 %v3357, 0.35355338
        %v3363 = vsel %vm1855, %v3362, -inf
        %3364 = vmax.xlane.f32.xlu0 %v3363
        %v3365 = vpop.xlane.xlu0 %3364
        %v3366 = vsub.f32 %v3362, %v3365
        %v3367 = vmul.f32 %v3366, 1.442695
        %v3368 = vpow.pop %v3367
        %v3369 = vsel %vm1855, %v3368, 0.0
        %3370 = vadd.xlane.f32.xlu0 %v3369
        %v3371 = vpop.xlane.xlu0 %3370
        %v3372 = vrcp.pop %v3371
        %v3373 = vmul.f32 %v3368, %v3372
        %v3374 = vpack.c.bf16 %v3373, %v3373
        %3375 = vrot.lane.b32.xlu0 %v3202, 56
        %v3376 = vpop.permute.xlu0 %3375
        %v3378 = vsel %vm1870, %v3374, 0
        %v3381 = vand.u32 %v3376, %v1877
        %3383 = vmatprep.subr.bf16.mxu0 0
        %3384 = vmatpush1.bf16.msra.mxu0 0
        %3385 = vmatprep.subr.bf16.mxu0 0
        %3386 = vmatpush1.bf16.msra.mxu0 0
        %3387 = vmatprep.subr.bf16.mxu0 0
        %3388 = vmatpush1.bf16.msra.mxu0 0
        %3389 = vmatprep.subr.bf16.mxu0 0
        %3390 = vmatpush1.bf16.msra.mxu0 0
        %3391 = vmatprep.subr.bf16.mxu0 0
        %3392 = vmatpush1.bf16.msra.mxu0 0
        %3393 = vmatprep.subr.bf16.mxu0 0
        %3394 = vmatpush1.bf16.msra.mxu0 0
        %3395 = vmatprep.subr.bf16.mxu0 0
        %3396 = vmatpush1.bf16.msra.mxu0 0
        %3397 = vmatprep.subr.bf16.mxu0 0
        %3398 = vmatpush1.bf16.msra.mxu0 %v3381
        %3399 = vmatprep.subr.bf16.mxu0 0
        %3400 = vmatpush2.bf16.msra.mxu0 0
        %3401 = vmatprep.subr.bf16.mxu0 0
        %3402 = vmatpush2.bf16.msra.mxu0 0
        %3403 = vmatprep.subr.bf16.mxu0 0
        %3404 = vmatpush2.bf16.msra.mxu0 0
        %3405 = vmatprep.subr.bf16.mxu0 0
        %3406 = vmatpush2.bf16.msra.mxu0 0
        %3407 = vmatprep.subr.bf16.mxu0 0
        %3408 = vmatpush2.bf16.msra.mxu0 0
        %3409 = vmatprep.subr.bf16.mxu0 0
        %3410 = vmatpush2.bf16.msra.mxu0 0
        %3411 = vmatprep.subr.bf16.mxu0 0
        %3412 = vmatpush2.bf16.msra.mxu0 0
        %3413 = vmatprep.subr.bf16.mxu0 0
        %3414 = vmatpush2.bf16.msra.mxu0 0
        %3415 = vmatprep.mubr.bf16.mxu0 0
        %3416 = vmatmul.mubr.bf16.gmra.mxu0 %v3378
        %v3417 = vpop.f32.mrf.mxu0
        %v3418 = vadd.f32 0.0, %v3417
        %v3419 = vpop.f32.mrf.mxu0
        %v3420 = vpop.f32.mrf.mxu0
        %v3421 = vpop.f32.mrf.mxu0
        %3422 = vdwg.mxu0
        %3423 = vrot.lane.b32.xlu0 %v3202, 112
        %v3424 = vpop.permute.xlu0 %3423
        %3425 = vrot.lane.b32.xlu0 %v3202, 80
        %v3426 = vpop.permute.xlu0 %3425
        %v3428 = vsel %vm1807, %v3424, 0
        %v3431 = vsel %vm1807, %v3426, 0
        %3433 = vmatprep.subr.bf16.mxu0 0
        %3434 = vmatpush1.bf16.xpose.msra.mxu0 0
        %3435 = vmatprep.subr.bf16.mxu0 0
        %3436 = vmatpush1.bf16.xpose.msra.mxu0 0
        %3437 = vmatprep.subr.bf16.mxu0 0
        %3438 = vmatpush1.bf16.xpose.msra.mxu0 0
        %3439 = vmatprep.subr.bf16.mxu0 0
        %3440 = vmatpush1.bf16.xpose.msra.mxu0 0
        %3441 = vmatprep.subr.bf16.mxu0 0
        %3442 = vmatpush1.bf16.xpose.msra.mxu0 0
        %3443 = vmatprep.subr.bf16.mxu0 0
        %3444 = vmatpush1.bf16.xpose.msra.mxu0 0
        %3445 = vmatprep.subr.bf16.mxu0 0
        %3446 = vmatpush1.bf16.xpose.msra.mxu0 0
        %3447 = vmatprep.subr.bf16.mxu0 0
        %3448 = vmatpush1.bf16.xpose.msra.mxu0 %v3431
        %3449 = vmatprep.subr.bf16.mxu0 0
        %3450 = vmatpush2.bf16.xpose.msra.mxu0 0
        %3451 = vmatprep.subr.bf16.mxu0 0
        %3452 = vmatpush2.bf16.xpose.msra.mxu0 0
        %3453 = vmatprep.subr.bf16.mxu0 0
        %3454 = vmatpush2.bf16.xpose.msra.mxu0 0
        %3455 = vmatprep.subr.bf16.mxu0 0
        %3456 = vmatpush2.bf16.xpose.msra.mxu0 0
        %3457 = vmatprep.subr.bf16.mxu0 0
        %3458 = vmatpush2.bf16.xpose.msra.mxu0 0
        %3459 = vmatprep.subr.bf16.mxu0 0
        %3460 = vmatpush2.bf16.xpose.msra.mxu0 0
        %3461 = vmatprep.subr.bf16.mxu0 0
        %3462 = vmatpush2.bf16.xpose.msra.mxu0 0
        %3463 = vmatprep.subr.bf16.mxu0 0
        %3464 = vmatpush2.bf16.xpose.msra.mxu0 0
        %3465 = vmatprep.mubr.bf16.mxu0 0
        %3466 = vmatmul.mubr.bf16.gmra.mxu0 %v3428
        %v3467 = vpop.f32.mrf.mxu0
        %v3468 = vadd.f32 0.0, %v3467
        %v3469 = vpop.f32.mrf.mxu0
        %v3470 = vpop.f32.mrf.mxu0
        %v3471 = vpop.f32.mrf.mxu0
        %3472 = vdwg.mxu0
        %v3473 = vmul.f32 %v3468, 0.35355338
        %v3474 = vsel %vm1855, %v3473, -inf
        %3475 = vmax.xlane.f32.xlu0 %v3474
        %v3476 = vpop.xlane.xlu0 %3475
        %v3477 = vsub.f32 %v3473, %v3476
        %v3478 = vmul.f32 %v3477, 1.442695
        %v3479 = vpow.pop %v3478
        %v3480 = vsel %vm1855, %v3479, 0.0
        %3481 = vadd.xlane.f32.xlu0 %v3480
        %v3482 = vpop.xlane.xlu0 %3481
        %v3483 = vrcp.pop %v3482
        %v3484 = vmul.f32 %v3479, %v3483
        %v3485 = vpack.c.bf16 %v3484, %v3484
        %3486 = vrot.lane.b32.xlu0 %v3202, 48
        %v3487 = vpop.permute.xlu0 %3486
        %v3489 = vsel %vm1870, %v3485, 0
        %v3492 = vand.u32 %v3487, %v1877
        %3494 = vmatprep.subr.bf16.mxu0 0
        %3495 = vmatpush1.bf16.msra.mxu0 0
        %3496 = vmatprep.subr.bf16.mxu0 0
        %3497 = vmatpush1.bf16.msra.mxu0 0
        %3498 = vmatprep.subr.bf16.mxu0 0
        %3499 = vmatpush1.bf16.msra.mxu0 0
        %3500 = vmatprep.subr.bf16.mxu0 0
        %3501 = vmatpush1.bf16.msra.mxu0 0
        %3502 = vmatprep.subr.bf16.mxu0 0
        %3503 = vmatpush1.bf16.msra.mxu0 0
        %3504 = vmatprep.subr.bf16.mxu0 0
        %3505 = vmatpush1.bf16.msra.mxu0 0
        %3506 = vmatprep.subr.bf16.mxu0 0
        %3507 = vmatpush1.bf16.msra.mxu0 0
        %3508 = vmatprep.subr.bf16.mxu0 0
        %3509 = vmatpush1.bf16.msra.mxu0 %v3492
        %3510 = vmatprep.subr.bf16.mxu0 0
        %3511 = vmatpush2.bf16.msra.mxu0 0
        %3512 = vmatprep.subr.bf16.mxu0 0
        %3513 = vmatpush2.bf16.msra.mxu0 0
        %3514 = vmatprep.subr.bf16.mxu0 0
        %3515 = vmatpush2.bf16.msra.mxu0 0
        %3516 = vmatprep.subr.bf16.mxu0 0
        %3517 = vmatpush2.bf16.msra.mxu0 0
        %3518 = vmatprep.subr.bf16.mxu0 0
        %3519 = vmatpush2.bf16.msra.mxu0 0
        %3520 = vmatprep.subr.bf16.mxu0 0
        %3521 = vmatpush2.bf16.msra.mxu0 0
        %3522 = vmatprep.subr.bf16.mxu0 0
        %3523 = vmatpush2.bf16.msra.mxu0 0
        %3524 = vmatprep.subr.bf16.mxu0 0
        %3525 = vmatpush2.bf16.msra.mxu0 0
        %3526 = vmatprep.mubr.bf16.mxu0 0
        %3527 = vmatmul.mubr.bf16.gmra.mxu0 %v3489
        %v3528 = vpop.f32.mrf.mxu0
        %v3529 = vadd.f32 0.0, %v3528
        %v3530 = vpop.f32.mrf.mxu0
        %v3531 = vpop.f32.mrf.mxu0
        %v3532 = vpop.f32.mrf.mxu0
        %3533 = vdwg.mxu0
        %3534 = vrot.lane.b32.xlu0 %v3202, 104
        %v3535 = vpop.permute.xlu0 %3534
        %3536 = vrot.lane.b32.xlu0 %v3202, 72
        %v3537 = vpop.permute.xlu0 %3536
        %v3539 = vsel %vm1807, %v3535, 0
        %v3542 = vsel %vm1807, %v3537, 0
        %3544 = vmatprep.subr.bf16.mxu0 0
        %3545 = vmatpush1.bf16.xpose.msra.mxu0 0
        %3546 = vmatprep.subr.bf16.mxu0 0
        %3547 = vmatpush1.bf16.xpose.msra.mxu0 0
        %3548 = vmatprep.subr.bf16.mxu0 0
        %3549 = vmatpush1.bf16.xpose.msra.mxu0 0
        %3550 = vmatprep.subr.bf16.mxu0 0
        %3551 = vmatpush1.bf16.xpose.msra.mxu0 0
        %3552 = vmatprep.subr.bf16.mxu0 0
        %3553 = vmatpush1.bf16.xpose.msra.mxu0 0
        %3554 = vmatprep.subr.bf16.mxu0 0
        %3555 = vmatpush1.bf16.xpose.msra.mxu0 0
        %3556 = vmatprep.subr.bf16.mxu0 0
        %3557 = vmatpush1.bf16.xpose.msra.mxu0 0
        %3558 = vmatprep.subr.bf16.mxu0 0
        %3559 = vmatpush1.bf16.xpose.msra.mxu0 %v3542
        %3560 = vmatprep.subr.bf16.mxu0 0
        %3561 = vmatpush2.bf16.xpose.msra.mxu0 0
        %3562 = vmatprep.subr.bf16.mxu0 0
        %3563 = vmatpush2.bf16.xpose.msra.mxu0 0
        %3564 = vmatprep.subr.bf16.mxu0 0
        %3565 = vmatpush2.bf16.xpose.msra.mxu0 0
        %3566 = vmatprep.subr.bf16.mxu0 0
        %3567 = vmatpush2.bf16.xpose.msra.mxu0 0
        %3568 = vmatprep.subr.bf16.mxu0 0
        %3569 = vmatpush2.bf16.xpose.msra.mxu0 0
        %3570 = vmatprep.subr.bf16.mxu0 0
        %3571 = vmatpush2.bf16.xpose.msra.mxu0 0
        %3572 = vmatprep.subr.bf16.mxu0 0
        %3573 = vmatpush2.bf16.xpose.msra.mxu0 0
        %3574 = vmatprep.subr.bf16.mxu0 0
        %3575 = vmatpush2.bf16.xpose.msra.mxu0 0
        %3576 = vmatprep.mubr.bf16.mxu0 0
        %3577 = vmatmul.mubr.bf16.gmra.mxu0 %v3539
        %v3578 = vpop.f32.mrf.mxu0
        %v3579 = vadd.f32 0.0, %v3578
        %v3580 = vpop.f32.mrf.mxu0
        %v3581 = vpop.f32.mrf.mxu0
        %v3582 = vpop.f32.mrf.mxu0
        %3583 = vdwg.mxu0
        %v3584 = vmul.f32 %v3579, 0.35355338
        %v3585 = vsel %vm1855, %v3584, -inf
        %3586 = vmax.xlane.f32.xlu0 %v3585
        %v3587 = vpop.xlane.xlu0 %3586
        %v3588 = vsub.f32 %v3584, %v3587
        %v3589 = vmul.f32 %v3588, 1.442695
        %v3590 = vpow.pop %v3589
        %v3591 = vsel %vm1855, %v3590, 0.0
        %3592 = vadd.xlane.f32.xlu0 %v3591
        %v3593 = vpop.xlane.xlu0 %3592
        %v3594 = vrcp.pop %v3593
        %v3595 = vmul.f32 %v3590, %v3594
        %v3596 = vpack.c.bf16 %v3595, %v3595
        %3597 = vrot.lane.b32.xlu0 %v3202, 40
        %v3598 = vpop.permute.xlu0 %3597
        %v3600 = vsel %vm1870, %v3596, 0
        %v3603 = vand.u32 %v3598, %v1877
        %3605 = vmatprep.subr.bf16.mxu0 0
        %3606 = vmatpush1.bf16.msra.mxu0 0
        %3607 = vmatprep.subr.bf16.mxu0 0
        %3608 = vmatpush1.bf16.msra.mxu0 0
        %3609 = vmatprep.subr.bf16.mxu0 0
        %3610 = vmatpush1.bf16.msra.mxu0 0
        %3611 = vmatprep.subr.bf16.mxu0 0
        %3612 = vmatpush1.bf16.msra.mxu0 0
        %3613 = vmatprep.subr.bf16.mxu0 0
        %3614 = vmatpush1.bf16.msra.mxu0 0
        %3615 = vmatprep.subr.bf16.mxu0 0
        %3616 = vmatpush1.bf16.msra.mxu0 0
        %3617 = vmatprep.subr.bf16.mxu0 0
        %3618 = vmatpush1.bf16.msra.mxu0 0
        %3619 = vmatprep.subr.bf16.mxu0 0
        %3620 = vmatpush1.bf16.msra.mxu0 %v3603
        %3621 = vmatprep.subr.bf16.mxu0 0
        %3622 = vmatpush2.bf16.msra.mxu0 0
        %3623 = vmatprep.subr.bf16.mxu0 0
        %3624 = vmatpush2.bf16.msra.mxu0 0
        %3625 = vmatprep.subr.bf16.mxu0 0
        %3626 = vmatpush2.bf16.msra.mxu0 0
        %3627 = vmatprep.subr.bf16.mxu0 0
        %3628 = vmatpush2.bf16.msra.mxu0 0
        %3629 = vmatprep.subr.bf16.mxu0 0
        %3630 = vmatpush2.bf16.msra.mxu0 0
        %3631 = vmatprep.subr.bf16.mxu0 0
        %3632 = vmatpush2.bf16.msra.mxu0 0
        %3633 = vmatprep.subr.bf16.mxu0 0
        %3634 = vmatpush2.bf16.msra.mxu0 0
        %3635 = vmatprep.subr.bf16.mxu0 0
        %3636 = vmatpush2.bf16.msra.mxu0 0
        %3637 = vmatprep.mubr.bf16.mxu0 0
        %3638 = vmatmul.mubr.bf16.gmra.mxu0 %v3600
        %v3639 = vpop.f32.mrf.mxu0
        %v3640 = vadd.f32 0.0, %v3639
        %v3641 = vpop.f32.mrf.mxu0
        %v3642 = vpop.f32.mrf.mxu0
        %v3643 = vpop.f32.mrf.mxu0
        %3644 = vdwg.mxu0
        %3646 = vrot.lane.b32.xlu0 %v3418, 8
        %v3647 = vpop.permute.xlu0 %3646
        %3650 = vrot.lane.b32.xlu0 %v3529, 16
        %v3651 = vpop.permute.xlu0 %3650
        %3654 = vrot.lane.b32.xlu0 %v3640, 24
        %v3655 = vpop.permute.xlu0 %3654
        %v3657 = vsel %vm1807, %v3307, %v3647
        %v3658 = vsel %vm2267, %v3657, %v3651
        %v3659 = vsel %vm2269, %v3658, %v3655
        %v3661 = vrot.slane %v2734, 5
        %v3664 = vrot.slane %v3194, 2
        %v3667 = vrot.slane %v3659, 7
        %vm3669 = vcmask 1042432
        %v3670 = vsel %vm3669, %v2270, %v3661
        %vm3671 = vcmask 1045504
        %v3672 = vsel %vm3671, %v3670, %v3664
        %v3673 = vsel %vm1874, %v3664, %v3667
        %v3674 = vpack.c.bf16 %v3673, %v3672
        %v3679 = vunpack.c.l.b16 %v1697
        %v3680 = vunpack.c.l.b16 %v1698
        %v3681 = vunpack.c.l.b16 %v1699
        %v3682 = vunpack.c.l.b16 %v1700
        %v3683 = vpack.c.b16 %v3680, %v3679
        %v3684 = vpack.c.b16 %v3682, %v3681
        %v3688 = vsel %vm1758, %v3674, 0
        %3690 = vmatprep.subr.bf16.mxu0 0
        %3691 = vmatpush1.bf16.msra.mxu0 0
        %3692 = vmatprep.subr.bf16.mxu0 0
        %3693 = vmatpush1.bf16.msra.mxu0 0
        %3694 = vmatprep.subr.bf16.mxu0 0
        %3695 = vmatpush1.bf16.msra.mxu0 0
        %3696 = vmatprep.subr.bf16.mxu0 0
        %3697 = vmatpush1.bf16.msra.mxu0 0
        %3698 = vmatprep.subr.bf16.mxu0 0
        %3699 = vmatpush1.bf16.msra.mxu0 0
        %3700 = vmatprep.subr.bf16.mxu0 0
        %3701 = vmatpush1.bf16.msra.mxu0 0
        %3702 = vmatprep.subr.bf16.mxu0 0
        %3703 = vmatpush1.bf16.msra.mxu0 %v3684
        %3704 = vmatprep.subr.bf16.mxu0 0
        %3705 = vmatpush1.bf16.msra.mxu0 %v3683
        %3706 = vmatprep.subr.bf16.mxu0 0
        %3707 = vmatpush2.bf16.msra.mxu0 0
        %3708 = vmatprep.subr.bf16.mxu0 0
        %3709 = vmatpush2.bf16.msra.mxu0 0
        %3710 = vmatprep.subr.bf16.mxu0 0
        %3711 = vmatpush2.bf16.msra.mxu0 0
        %3712 = vmatprep.subr.bf16.mxu0 0
        %3713 = vmatpush2.bf16.msra.mxu0 0
        %3714 = vmatprep.subr.bf16.mxu0 0
        %3715 = vmatpush2.bf16.msra.mxu0 0
        %3716 = vmatprep.subr.bf16.mxu0 0
        %3717 = vmatpush2.bf16.msra.mxu0 0
        %3718 = vmatprep.subr.bf16.mxu0 0
        %3719 = vmatpush2.bf16.msra.mxu0 0
        %3720 = vmatprep.subr.bf16.mxu0 0
        %3721 = vmatpush2.bf16.msra.mxu0 0
        %3722 = vmatprep.mubr.bf16.mxu0 0
        %3723 = vmatmul.mubr.bf16.gmra.mxu0 %v3688
        %v3724 = vpop.f32.mrf.mxu0
        %v3725 = vadd.f32 0.0, %v3724
        %v3726 = vpop.f32.mrf.mxu0
        %v3727 = vpop.f32.mrf.mxu0
        %v3728 = vadd.f32 0.0, %v3727
        %v3729 = vpop.f32.mrf.mxu0
        %3730 = vdwg.mxu0
        %v3731 = vadd.f32 %v1737, %v3725
        %v3732 = vadd.f32 %v1738, %v3728
        %v3734 = vlaneseq
        %v3735 = vshrl.u32 %v3734, 7
        %v3736 = vsub.s32 0, %v3735
        %v3737 = vrot.slane %v1701, %v3736
        %v3739 = vadd.f32 %v3731, %v3737
        %v3740 = vadd.f32 %v3732, %v3737
        %v3741 = vsel %vm1758, %v3739, 0.0
        %3742 = vadd.xlane.f32.xlu0 %v3741
        %v3743 = vpop.xlane.xlu0 %3742
        %vm3744 = vcmask 257024
        %v3745 = vsel %vm3744, %v3740, 0.0
        %3746 = vadd.xlane.f32.xlu0 %v3745
        %v3747 = vpop.xlane.xlu0 %3746
        %v3748 = vrcp.pop 32.0
        %v3749 = vmul.f32 %v3743, %v3748
        %v3750 = vmul.f32 %v3747, %v3748
        %v3751 = vsub.f32 %v3739, %v3749
        %v3752 = vsub.f32 %v3740, %v3750
        %v3753 = vmul.f32 %v3751, %v3751
        %v3754 = vmul.f32 %v3752, %v3752
        %v3755 = vsel %vm1758, %v3753, 0.0
        %3756 = vadd.xlane.f32.xlu0 %v3755
        %v3757 = vpop.xlane.xlu0 %3756
        %v3758 = vsel %vm3744, %v3754, 0.0
        %3759 = vadd.xlane.f32.xlu0 %v3758
        %v3760 = vpop.xlane.xlu0 %3759
        %v3761 = vmul.f32 %v3757, %v3748
        %v3762 = vmul.f32 %v3760, %v3748
        %v3763 = vadd.f32 %v3761, 1e-05
        %v3764 = vadd.f32 %v3762, 1e-05
        %v3765 = vrsqrt.pop %v3763
        %v3766 = vrsqrt.pop %v3764
        %v3767 = vmul.f32 %v3751, %v3765
        %v3768 = vmul.f32 %v3752, %v3766
        %v3770 = vlaneseq
        %v3771 = vshrl.u32 %v3770, 7
        %v3772 = vsub.s32 0, %v3771
        %v3773 = vrot.slane %v1717, %v3772
        %v3775 = vmul.f32 %v3767, %v3773
        %v3776 = vmul.f32 %v3768, %v3773
        %v3778 = vlaneseq
        %v3779 = vshrl.u32 %v3778, 7
        %v3780 = vsub.s32 0, %v3779
        %v3781 = vrot.slane %v1718, %v3780
        %v3783 = vadd.f32 %v3775, %v3781
        %v3784 = vadd.f32 %v3776, %v3781
        %v3786 = vrot.slane %v3783, 2
        %v3788 = vrot.slane %v3783, 4
        %v3791 = vrot.slane %v3784, 6
        %v3793 = vsel %vm1874, %v3786, %v3788
        %v3794 = vsel %vm1875, %v3793, %v3791
        %v3795 = vsel %vm3669, %v3794, %v3784
        %v3796 = vpack.c.bf16 %v3795, %v3795
        %v3798 = vlaneseq
        %v3799 = vshrl.u32 %v3798, 7
        %v3800 = vsub.s32 0, %v3799
        %v3801 = vrot.slane %v1706, %v3800
        %v3807 = vunpack.c.l.b16 %v1702
        %v3808 = vunpack.c.l.b16 %v1703
        %v3809 = vunpack.c.l.b16 %v1704
        %v3810 = vunpack.c.l.b16 %v1705
        %v3811 = vpack.c.b16 %v3808, %v3807
        %v3812 = vpack.c.b16 %v3810, %v3809
        %v3816 = vsel %vm1758, %v3796, 0
        %3818 = vmatprep.subr.bf16.mxu0 0
        %3819 = vmatpush1.bf16.msra.mxu0 0
        %3820 = vmatprep.subr.bf16.mxu0 0
        %3821 = vmatpush1.bf16.msra.mxu0 0
        %3822 = vmatprep.subr.bf16.mxu0 0
        %3823 = vmatpush1.bf16.msra.mxu0 0
        %3824 = vmatprep.subr.bf16.mxu0 0
        %3825 = vmatpush1.bf16.msra.mxu0 0
        %3826 = vmatprep.subr.bf16.mxu0 0
        %3827 = vmatpush1.bf16.msra.mxu0 0
        %3828 = vmatprep.subr.bf16.mxu0 0
        %3829 = vmatpush1.bf16.msra.mxu0 0
        %3830 = vmatprep.subr.bf16.mxu0 0
        %3831 = vmatpush1.bf16.msra.mxu0 %v3812
        %3832 = vmatprep.subr.bf16.mxu0 0
        %3833 = vmatpush1.bf16.msra.mxu0 %v3811
        %3834 = vmatprep.subr.bf16.mxu0 0
        %3835 = vmatpush2.bf16.msra.mxu0 0
        %3836 = vmatprep.subr.bf16.mxu0 0
        %3837 = vmatpush2.bf16.msra.mxu0 0
        %3838 = vmatprep.subr.bf16.mxu0 0
        %3839 = vmatpush2.bf16.msra.mxu0 0
        %3840 = vmatprep.subr.bf16.mxu0 0
        %3841 = vmatpush2.bf16.msra.mxu0 0
        %3842 = vmatprep.subr.bf16.mxu0 0
        %3843 = vmatpush2.bf16.msra.mxu0 0
        %3844 = vmatprep.subr.bf16.mxu0 0
        %3845 = vmatpush2.bf16.msra.mxu0 0
        %3846 = vmatprep.subr.bf16.mxu0 0
        %3847 = vmatpush2.bf16.msra.mxu0 0
        %3848 = vmatprep.subr.bf16.mxu0 0
        %3849 = vmatpush2.bf16.msra.mxu0 0
        %3850 = vmatprep.mubr.bf16.mxu0 0
        %3851 = vmatmul.mubr.bf16.gmra.mxu0 %v3816
        %v3852 = vpop.f32.mrf.mxu0
        %v3853 = vadd.f32 %v3801, %v3852
        %v3854 = vpop.f32.mrf.mxu0
        %v3855 = vpop.f32.mrf.mxu0
        %v3856 = vpop.f32.mrf.mxu0
        %3857 = vdwg.mxu0
        %v3858 = vld [vmem:[#allocation2] sm:$0xf]
        %v3859 = vpack.c.bf16 %v3858, %v3858
        %v3861 = vlaneseq
        %v3862 = vshrl.u32 %v3861, 7
        %v3863 = vsub.s32 0, %v3862
        %v3864 = vrot.slane %v1711, %v3863
        %v3870 = vunpack.c.l.b16 %v1707
        %v3871 = vunpack.c.l.b16 %v1708
        %v3872 = vunpack.c.l.b16 %v1709
        %v3873 = vunpack.c.l.b16 %v1710
        %v3874 = vpack.c.b16 %v3871, %v3870
        %v3875 = vpack.c.b16 %v3873, %v3872
        %v3879 = vsel %vm1758, %v3859, 0
        %3881 = vmatprep.subr.bf16.mxu0 0
        %3882 = vmatpush1.bf16.msra.mxu0 0
        %3883 = vmatprep.subr.bf16.mxu0 0
        %3884 = vmatpush1.bf16.msra.mxu0 0
        %3885 = vmatprep.subr.bf16.mxu0 0
        %3886 = vmatpush1.bf16.msra.mxu0 0
        %3887 = vmatprep.subr.bf16.mxu0 0
        %3888 = vmatpush1.bf16.msra.mxu0 0
        %3889 = vmatprep.subr.bf16.mxu0 0
        %3890 = vmatpush1.bf16.msra.mxu0 0
        %3891 = vmatprep.subr.bf16.mxu0 0
        %3892 = vmatpush1.bf16.msra.mxu0 0
        %3893 = vmatprep.subr.bf16.mxu0 0
        %3894 = vmatpush1.bf16.msra.mxu0 %v3875
        %3895 = vmatprep.subr.bf16.mxu0 0
        %3896 = vmatpush1.bf16.msra.mxu0 %v3874
        %3897 = vmatprep.subr.bf16.mxu0 0
        %3898 = vmatpush2.bf16.msra.mxu0 0
        %3899 = vmatprep.subr.bf16.mxu0 0
        %3900 = vmatpush2.bf16.msra.mxu0 0
        %3901 = vmatprep.subr.bf16.mxu0 0
        %3902 = vmatpush2.bf16.msra.mxu0 0
        %3903 = vmatprep.subr.bf16.mxu0 0
        %3904 = vmatpush2.bf16.msra.mxu0 0
        %3905 = vmatprep.subr.bf16.mxu0 0
        %3906 = vmatpush2.bf16.msra.mxu0 0
        %3907 = vmatprep.subr.bf16.mxu0 0
        %3908 = vmatpush2.bf16.msra.mxu0 0
        %3909 = vmatprep.subr.bf16.mxu0 0
        %3910 = vmatpush2.bf16.msra.mxu0 0
        %3911 = vmatprep.subr.bf16.mxu0 0
        %3912 = vmatpush2.bf16.msra.mxu0 0
        %3913 = vmatprep.mubr.bf16.mxu0 0
        %3914 = vmatmul.mubr.bf16.gmra.mxu0 %v3879
        %v3915 = vpop.f32.mrf.mxu0
        %v3916 = vadd.f32 %v3864, %v3915
        %v3917 = vpop.f32.mrf.mxu0
        %v3918 = vpop.f32.mrf.mxu0
        %v3919 = vpop.f32.mrf.mxu0
        %3920 = vdwg.mxu0
        %v3921 = vpack.c.bf16 %v3853, %v3853
        %v3922 = vpack.c.bf16 %v3916, %v3916
        %v3924 = vsel %vm1807, %v3921, 0
        %v3927 = vsel %vm1807, %v3922, 0
        %3929 = vmatprep.subr.bf16.mxu0 0
        %3930 = vmatpush1.bf16.xpose.msra.mxu0 0
        %3931 = vmatprep.subr.bf16.mxu0 0
        %3932 = vmatpush1.bf16.xpose.msra.mxu0 0
        %3933 = vmatprep.subr.bf16.mxu0 0
        %3934 = vmatpush1.bf16.xpose.msra.mxu0 0
        %3935 = vmatprep.subr.bf16.mxu0 0
        %3936 = vmatpush1.bf16.xpose.msra.mxu0 0
        %3937 = vmatprep.subr.bf16.mxu0 0
        %3938 = vmatpush1.bf16.xpose.msra.mxu0 0
        %3939 = vmatprep.subr.bf16.mxu0 0
        %3940 = vmatpush1.bf16.xpose.msra.mxu0 0
        %3941 = vmatprep.subr.bf16.mxu0 0
        %3942 = vmatpush1.bf16.xpose.msra.mxu0 0
        %3943 = vmatprep.subr.bf16.mxu0 0
        %3944 = vmatpush1.bf16.xpose.msra.mxu0 %v3927
        %3945 = vmatprep.subr.bf16.mxu0 0
        %3946 = vmatpush2.bf16.xpose.msra.mxu0 0
        %3947 = vmatprep.subr.bf16.mxu0 0
        %3948 = vmatpush2.bf16.xpose.msra.mxu0 0
        %3949 = vmatprep.subr.bf16.mxu0 0
        %3950 = vmatpush2.bf16.xpose.msra.mxu0 0
        %3951 = vmatprep.subr.bf16.mxu0 0
        %3952 = vmatpush2.bf16.xpose.msra.mxu0 0
        %3953 = vmatprep.subr.bf16.mxu0 0
        %3954 = vmatpush2.bf16.xpose.msra.mxu0 0
        %3955 = vmatprep.subr.bf16.mxu0 0
        %3956 = vmatpush2.bf16.xpose.msra.mxu0 0
        %3957 = vmatprep.subr.bf16.mxu0 0
        %3958 = vmatpush2.bf16.xpose.msra.mxu0 0
        %3959 = vmatprep.subr.bf16.mxu0 0
        %3960 = vmatpush2.bf16.xpose.msra.mxu0 0
        %3961 = vmatprep.mubr.bf16.mxu0 0
        %3962 = vmatmul.mubr.bf16.gmra.mxu0 %v3924
        %v3963 = vpop.f32.mrf.mxu0
        %v3964 = vadd.f32 0.0, %v3963
        %v3965 = vpop.f32.mrf.mxu0
        %v3966 = vpop.f32.mrf.mxu0
        %v3967 = vpop.f32.mrf.mxu0
        %3968 = vdwg.mxu0
        %v3969 = vmul.f32 %v3964, 0.35355338
        %vm3970 = vcmask 27648
        %v3971 = vsel %vm3970, %v3969, -inf
        %3972 = vmax.xlane.f32.xlu0 %v3971
        %v3973 = vpop.xlane.xlu0 %3972
        %v3974 = vsub.f32 %v3969, %v3973
        %v3975 = vmul.f32 %v3974, 1.442695
        %v3976 = vpow.pop %v3975
        %v3977 = vsel %vm3970, %v3976, 0.0
        %3978 = vadd.xlane.f32.xlu0 %v3977
        %v3979 = vpop.xlane.xlu0 %3978
        %v3980 = vrcp.pop %v3979
        %v3981 = vmul.f32 %v3976, %v3980
        %v3982 = vpack.c.bf16 %v3981, %v3981
        %3984 = vrot.lane.b32.xlu0 %v3922, 96
        %v3985 = vpop.permute.xlu0 %3984
        %vm3986 = vcmask 31744
        %v3988 = vsel %vm3986, %v3982, 0
        %v3991 = vsel %vm1875, %v3985, 0
        %3993 = vmatprep.subr.bf16.mxu0 0
        %3994 = vmatpush1.bf16.msra.mxu0 0
        %3995 = vmatprep.subr.bf16.mxu0 0
        %3996 = vmatpush1.bf16.msra.mxu0 0
        %3997 = vmatprep.subr.bf16.mxu0 0
        %3998 = vmatpush1.bf16.msra.mxu0 0
        %3999 = vmatprep.subr.bf16.mxu0 0
        %4000 = vmatpush1.bf16.msra.mxu0 0
        %4001 = vmatprep.subr.bf16.mxu0 0
        %4002 = vmatpush1.bf16.msra.mxu0 0
        %4003 = vmatprep.subr.bf16.mxu0 0
        %4004 = vmatpush1.bf16.msra.mxu0 0
        %4005 = vmatprep.subr.bf16.mxu0 0
        %4006 = vmatpush1.bf16.msra.mxu0 0
        %4007 = vmatprep.subr.bf16.mxu0 0
        %4008 = vmatpush1.bf16.msra.mxu0 %v3991
        %4009 = vmatprep.subr.bf16.mxu0 0
        %4010 = vmatpush2.bf16.msra.mxu0 0
        %4011 = vmatprep.subr.bf16.mxu0 0
        %4012 = vmatpush2.bf16.msra.mxu0 0
        %4013 = vmatprep.subr.bf16.mxu0 0
        %4014 = vmatpush2.bf16.msra.mxu0 0
        %4015 = vmatprep.subr.bf16.mxu0 0
        %4016 = vmatpush2.bf16.msra.mxu0 0
        %4017 = vmatprep.subr.bf16.mxu0 0
        %4018 = vmatpush2.bf16.msra.mxu0 0
        %4019 = vmatprep.subr.bf16.mxu0 0
        %4020 = vmatpush2.bf16.msra.mxu0 0
        %4021 = vmatprep.subr.bf16.mxu0 0
        %4022 = vmatpush2.bf16.msra.mxu0 0
        %4023 = vmatprep.subr.bf16.mxu0 0
        %4024 = vmatpush2.bf16.msra.mxu0 0
        %4025 = vmatprep.mubr.bf16.mxu0 0
        %4026 = vmatmul.mubr.bf16.gmra.mxu0 %v3988
        %v4027 = vpop.f32.mrf.mxu0
        %v4028 = vadd.f32 0.0, %v4027
        %v4029 = vpop.f32.mrf.mxu0
        %v4030 = vpop.f32.mrf.mxu0
        %v4031 = vpop.f32.mrf.mxu0
        %4032 = vdwg.mxu0
        %4034 = vrot.lane.b32.xlu0 %v3921, 120
        %v4035 = vpop.permute.xlu0 %4034
        %4036 = vrot.lane.b32.xlu0 %v3922, 120
        %v4037 = vpop.permute.xlu0 %4036
        %v4039 = vsel %vm1807, %v4035, 0
        %v4042 = vsel %vm1807, %v4037, 0
        %4044 = vmatprep.subr.bf16.mxu0 0
        %4045 = vmatpush1.bf16.xpose.msra.mxu0 0
        %4046 = vmatprep.subr.bf16.mxu0 0
        %4047 = vmatpush1.bf16.xpose.msra.mxu0 0
        %4048 = vmatprep.subr.bf16.mxu0 0
        %4049 = vmatpush1.bf16.xpose.msra.mxu0 0
        %4050 = vmatprep.subr.bf16.mxu0 0
        %4051 = vmatpush1.bf16.xpose.msra.mxu0 0
        %4052 = vmatprep.subr.bf16.mxu0 0
        %4053 = vmatpush1.bf16.xpose.msra.mxu0 0
        %4054 = vmatprep.subr.bf16.mxu0 0
        %4055 = vmatpush1.bf16.xpose.msra.mxu0 0
        %4056 = vmatprep.subr.bf16.mxu0 0
        %4057 = vmatpush1.bf16.xpose.msra.mxu0 0
        %4058 = vmatprep.subr.bf16.mxu0 0
        %4059 = vmatpush1.bf16.xpose.msra.mxu0 %v4042
        %4060 = vmatprep.subr.bf16.mxu0 0
        %4061 = vmatpush2.bf16.xpose.msra.mxu0 0
        %4062 = vmatprep.subr.bf16.mxu0 0
        %4063 = vmatpush2.bf16.xpose.msra.mxu0 0
        %4064 = vmatprep.subr.bf16.mxu0 0
        %4065 = vmatpush2.bf16.xpose.msra.mxu0 0
        %4066 = vmatprep.subr.bf16.mxu0 0
        %4067 = vmatpush2.bf16.xpose.msra.mxu0 0
        %4068 = vmatprep.subr.bf16.mxu0 0
        %4069 = vmatpush2.bf16.xpose.msra.mxu0 0
        %4070 = vmatprep.subr.bf16.mxu0 0
        %4071 = vmatpush2.bf16.xpose.msra.mxu0 0
        %4072 = vmatprep.subr.bf16.mxu0 0
        %4073 = vmatpush2.bf16.xpose.msra.mxu0 0
        %4074 = vmatprep.subr.bf16.mxu0 0
        %4075 = vmatpush2.bf16.xpose.msra.mxu0 0
        %4076 = vmatprep.mubr.bf16.mxu0 0
        %4077 = vmatmul.mubr.bf16.gmra.mxu0 %v4039
        %v4078 = vpop.f32.mrf.mxu0
        %v4079 = vadd.f32 0.0, %v4078
        %v4080 = vpop.f32.mrf.mxu0
        %v4081 = vpop.f32.mrf.mxu0
        %v4082 = vpop.f32.mrf.mxu0
        %4083 = vdwg.mxu0
        %v4084 = vmul.f32 %v4079, 0.35355338
        %v4085 = vsel %vm3970, %v4084, -inf
        %4086 = vmax.xlane.f32.xlu0 %v4085
        %v4087 = vpop.xlane.xlu0 %4086
        %v4088 = vsub.f32 %v4084, %v4087
        %v4089 = vmul.f32 %v4088, 1.442695
        %v4090 = vpow.pop %v4089
        %v4091 = vsel %vm3970, %v4090, 0.0
        %4092 = vadd.xlane.f32.xlu0 %v4091
        %v4093 = vpop.xlane.xlu0 %4092
        %v4094 = vrcp.pop %v4093
        %v4095 = vmul.f32 %v4090, %v4094
        %v4096 = vpack.c.bf16 %v4095, %v4095
        %4097 = vrot.lane.b32.xlu0 %v3922, 88
        %v4098 = vpop.permute.xlu0 %4097
        %v4100 = vsel %vm3986, %v4096, 0
        %v4103 = vsel %vm1875, %v4098, 0
        %4105 = vmatprep.subr.bf16.mxu0 0
        %4106 = vmatpush1.bf16.msra.mxu0 0
        %4107 = vmatprep.subr.bf16.mxu0 0
        %4108 = vmatpush1.bf16.msra.mxu0 0
        %4109 = vmatprep.subr.bf16.mxu0 0
        %4110 = vmatpush1.bf16.msra.mxu0 0
        %4111 = vmatprep.subr.bf16.mxu0 0
        %4112 = vmatpush1.bf16.msra.mxu0 0
        %4113 = vmatprep.subr.bf16.mxu0 0
        %4114 = vmatpush1.bf16.msra.mxu0 0
        %4115 = vmatprep.subr.bf16.mxu0 0
        %4116 = vmatpush1.bf16.msra.mxu0 0
        %4117 = vmatprep.subr.bf16.mxu0 0
        %4118 = vmatpush1.bf16.msra.mxu0 0
        %4119 = vmatprep.subr.bf16.mxu0 0
        %4120 = vmatpush1.bf16.msra.mxu0 %v4103
        %4121 = vmatprep.subr.bf16.mxu0 0
        %4122 = vmatpush2.bf16.msra.mxu0 0
        %4123 = vmatprep.subr.bf16.mxu0 0
        %4124 = vmatpush2.bf16.msra.mxu0 0
        %4125 = vmatprep.subr.bf16.mxu0 0
        %4126 = vmatpush2.bf16.msra.mxu0 0
        %4127 = vmatprep.subr.bf16.mxu0 0
        %4128 = vmatpush2.bf16.msra.mxu0 0
        %4129 = vmatprep.subr.bf16.mxu0 0
        %4130 = vmatpush2.bf16.msra.mxu0 0
        %4131 = vmatprep.subr.bf16.mxu0 0
        %4132 = vmatpush2.bf16.msra.mxu0 0
        %4133 = vmatprep.subr.bf16.mxu0 0
        %4134 = vmatpush2.bf16.msra.mxu0 0
        %4135 = vmatprep.subr.bf16.mxu0 0
        %4136 = vmatpush2.bf16.msra.mxu0 0
        %4137 = vmatprep.mubr.bf16.mxu0 0
        %4138 = vmatmul.mubr.bf16.gmra.mxu0 %v4100
        %v4139 = vpop.f32.mrf.mxu0
        %v4140 = vadd.f32 0.0, %v4139
        %v4141 = vpop.f32.mrf.mxu0
        %v4142 = vpop.f32.mrf.mxu0
        %v4143 = vpop.f32.mrf.mxu0
        %4144 = vdwg.mxu0
        %4145 = vrot.lane.b32.xlu0 %v3921, 112
        %v4146 = vpop.permute.xlu0 %4145
        %4147 = vrot.lane.b32.xlu0 %v3922, 112
        %v4148 = vpop.permute.xlu0 %4147
        %v4150 = vsel %vm1807, %v4146, 0
        %v4153 = vsel %vm1807, %v4148, 0
        %4155 = vmatprep.subr.bf16.mxu0 0
        %4156 = vmatpush1.bf16.xpose.msra.mxu0 0
        %4157 = vmatprep.subr.bf16.mxu0 0
        %4158 = vmatpush1.bf16.xpose.msra.mxu0 0
        %4159 = vmatprep.subr.bf16.mxu0 0
        %4160 = vmatpush1.bf16.xpose.msra.mxu0 0
        %4161 = vmatprep.subr.bf16.mxu0 0
        %4162 = vmatpush1.bf16.xpose.msra.mxu0 0
        %4163 = vmatprep.subr.bf16.mxu0 0
        %4164 = vmatpush1.bf16.xpose.msra.mxu0 0
        %4165 = vmatprep.subr.bf16.mxu0 0
        %4166 = vmatpush1.bf16.xpose.msra.mxu0 0
        %4167 = vmatprep.subr.bf16.mxu0 0
        %4168 = vmatpush1.bf16.xpose.msra.mxu0 0
        %4169 = vmatprep.subr.bf16.mxu0 0
        %4170 = vmatpush1.bf16.xpose.msra.mxu0 %v4153
        %4171 = vmatprep.subr.bf16.mxu0 0
        %4172 = vmatpush2.bf16.xpose.msra.mxu0 0
        %4173 = vmatprep.subr.bf16.mxu0 0
        %4174 = vmatpush2.bf16.xpose.msra.mxu0 0
        %4175 = vmatprep.subr.bf16.mxu0 0
        %4176 = vmatpush2.bf16.xpose.msra.mxu0 0
        %4177 = vmatprep.subr.bf16.mxu0 0
        %4178 = vmatpush2.bf16.xpose.msra.mxu0 0
        %4179 = vmatprep.subr.bf16.mxu0 0
        %4180 = vmatpush2.bf16.xpose.msra.mxu0 0
        %4181 = vmatprep.subr.bf16.mxu0 0
        %4182 = vmatpush2.bf16.xpose.msra.mxu0 0
        %4183 = vmatprep.subr.bf16.mxu0 0
        %4184 = vmatpush2.bf16.xpose.msra.mxu0 0
        %4185 = vmatprep.subr.bf16.mxu0 0
        %4186 = vmatpush2.bf16.xpose.msra.mxu0 0
        %4187 = vmatprep.mubr.bf16.mxu0 0
        %4188 = vmatmul.mubr.bf16.gmra.mxu0 %v4150
        %v4189 = vpop.f32.mrf.mxu0
        %v4190 = vadd.f32 0.0, %v4189
        %v4191 = vpop.f32.mrf.mxu0
        %v4192 = vpop.f32.mrf.mxu0
        %v4193 = vpop.f32.mrf.mxu0
        %4194 = vdwg.mxu0
        %v4195 = vmul.f32 %v4190, 0.35355338
        %v4196 = vsel %vm3970, %v4195, -inf
        %4197 = vmax.xlane.f32.xlu0 %v4196
        %v4198 = vpop.xlane.xlu0 %4197
        %v4199 = vsub.f32 %v4195, %v4198
        %v4200 = vmul.f32 %v4199, 1.442695
        %v4201 = vpow.pop %v4200
        %v4202 = vsel %vm3970, %v4201, 0.0
        %4203 = vadd.xlane.f32.xlu0 %v4202
        %v4204 = vpop.xlane.xlu0 %4203
        %v4205 = vrcp.pop %v4204
        %v4206 = vmul.f32 %v4201, %v4205
        %v4207 = vpack.c.bf16 %v4206, %v4206
        %4208 = vrot.lane.b32.xlu0 %v3922, 80
        %v4209 = vpop.permute.xlu0 %4208
        %v4211 = vsel %vm3986, %v4207, 0
        %v4214 = vsel %vm1875, %v4209, 0
        %4216 = vmatprep.subr.bf16.mxu0 0
        %4217 = vmatpush1.bf16.msra.mxu0 0
        %4218 = vmatprep.subr.bf16.mxu0 0
        %4219 = vmatpush1.bf16.msra.mxu0 0
        %4220 = vmatprep.subr.bf16.mxu0 0
        %4221 = vmatpush1.bf16.msra.mxu0 0
        %4222 = vmatprep.subr.bf16.mxu0 0
        %4223 = vmatpush1.bf16.msra.mxu0 0
        %4224 = vmatprep.subr.bf16.mxu0 0
        %4225 = vmatpush1.bf16.msra.mxu0 0
        %4226 = vmatprep.subr.bf16.mxu0 0
        %4227 = vmatpush1.bf16.msra.mxu0 0
        %4228 = vmatprep.subr.bf16.mxu0 0
        %4229 = vmatpush1.bf16.msra.mxu0 0
        %4230 = vmatprep.subr.bf16.mxu0 0
        %4231 = vmatpush1.bf16.msra.mxu0 %v4214
        %4232 = vmatprep.subr.bf16.mxu0 0
        %4233 = vmatpush2.bf16.msra.mxu0 0
        %4234 = vmatprep.subr.bf16.mxu0 0
        %4235 = vmatpush2.bf16.msra.mxu0 0
        %4236 = vmatprep.subr.bf16.mxu0 0
        %4237 = vmatpush2.bf16.msra.mxu0 0
        %4238 = vmatprep.subr.bf16.mxu0 0
        %4239 = vmatpush2.bf16.msra.mxu0 0
        %4240 = vmatprep.subr.bf16.mxu0 0
        %4241 = vmatpush2.bf16.msra.mxu0 0
        %4242 = vmatprep.subr.bf16.mxu0 0
        %4243 = vmatpush2.bf16.msra.mxu0 0
        %4244 = vmatprep.subr.bf16.mxu0 0
        %4245 = vmatpush2.bf16.msra.mxu0 0
        %4246 = vmatprep.subr.bf16.mxu0 0
        %4247 = vmatpush2.bf16.msra.mxu0 0
        %4248 = vmatprep.mubr.bf16.mxu0 0
        %4249 = vmatmul.mubr.bf16.gmra.mxu0 %v4211
        %v4250 = vpop.f32.mrf.mxu0
        %v4251 = vadd.f32 0.0, %v4250
        %v4252 = vpop.f32.mrf.mxu0
        %v4253 = vpop.f32.mrf.mxu0
        %v4254 = vpop.f32.mrf.mxu0
        %4255 = vdwg.mxu0
        %4256 = vrot.lane.b32.xlu0 %v3921, 104
        %v4257 = vpop.permute.xlu0 %4256
        %4258 = vrot.lane.b32.xlu0 %v3922, 104
        %v4259 = vpop.permute.xlu0 %4258
        %v4261 = vsel %vm1807, %v4257, 0
        %v4264 = vsel %vm1807, %v4259, 0
        %4266 = vmatprep.subr.bf16.mxu0 0
        %4267 = vmatpush1.bf16.xpose.msra.mxu0 0
        %4268 = vmatprep.subr.bf16.mxu0 0
        %4269 = vmatpush1.bf16.xpose.msra.mxu0 0
        %4270 = vmatprep.subr.bf16.mxu0 0
        %4271 = vmatpush1.bf16.xpose.msra.mxu0 0
        %4272 = vmatprep.subr.bf16.mxu0 0
        %4273 = vmatpush1.bf16.xpose.msra.mxu0 0
        %4274 = vmatprep.subr.bf16.mxu0 0
        %4275 = vmatpush1.bf16.xpose.msra.mxu0 0
        %4276 = vmatprep.subr.bf16.mxu0 0
        %4277 = vmatpush1.bf16.xpose.msra.mxu0 0
        %4278 = vmatprep.subr.bf16.mxu0 0
        %4279 = vmatpush1.bf16.xpose.msra.mxu0 0
        %4280 = vmatprep.subr.bf16.mxu0 0
        %4281 = vmatpush1.bf16.xpose.msra.mxu0 %v4264
        %4282 = vmatprep.subr.bf16.mxu0 0
        %4283 = vmatpush2.bf16.xpose.msra.mxu0 0
        %4284 = vmatprep.subr.bf16.mxu0 0
        %4285 = vmatpush2.bf16.xpose.msra.mxu0 0
        %4286 = vmatprep.subr.bf16.mxu0 0
        %4287 = vmatpush2.bf16.xpose.msra.mxu0 0
        %4288 = vmatprep.subr.bf16.mxu0 0
        %4289 = vmatpush2.bf16.xpose.msra.mxu0 0
        %4290 = vmatprep.subr.bf16.mxu0 0
        %4291 = vmatpush2.bf16.xpose.msra.mxu0 0
        %4292 = vmatprep.subr.bf16.mxu0 0
        %4293 = vmatpush2.bf16.xpose.msra.mxu0 0
        %4294 = vmatprep.subr.bf16.mxu0 0
        %4295 = vmatpush2.bf16.xpose.msra.mxu0 0
        %4296 = vmatprep.subr.bf16.mxu0 0
        %4297 = vmatpush2.bf16.xpose.msra.mxu0 0
        %4298 = vmatprep.mubr.bf16.mxu0 0
        %4299 = vmatmul.mubr.bf16.gmra.mxu0 %v4261
        %v4300 = vpop.f32.mrf.mxu0
        %v4301 = vadd.f32 0.0, %v4300
        %v4302 = vpop.f32.mrf.mxu0
        %v4303 = vpop.f32.mrf.mxu0
        %v4304 = vpop.f32.mrf.mxu0
        %4305 = vdwg.mxu0
        %v4306 = vmul.f32 %v4301, 0.35355338
        %v4307 = vsel %vm3970, %v4306, -inf
        %4308 = vmax.xlane.f32.xlu0 %v4307
        %v4309 = vpop.xlane.xlu0 %4308
        %v4310 = vsub.f32 %v4306, %v4309
        %v4311 = vmul.f32 %v4310, 1.442695
        %v4312 = vpow.pop %v4311
        %v4313 = vsel %vm3970, %v4312, 0.0
        %4314 = vadd.xlane.f32.xlu0 %v4313
        %v4315 = vpop.xlane.xlu0 %4314
        %v4316 = vrcp.pop %v4315
        %v4317 = vmul.f32 %v4312, %v4316
        %v4318 = vpack.c.bf16 %v4317, %v4317
        %4319 = vrot.lane.b32.xlu0 %v3922, 72
        %v4320 = vpop.permute.xlu0 %4319
        %v4322 = vsel %vm3986, %v4318, 0
        %v4325 = vsel %vm1875, %v4320, 0
        %4327 = vmatprep.subr.bf16.mxu0 0
        %4328 = vmatpush1.bf16.msra.mxu0 0
        %4329 = vmatprep.subr.bf16.mxu0 0
        %4330 = vmatpush1.bf16.msra.mxu0 0
        %4331 = vmatprep.subr.bf16.mxu0 0
        %4332 = vmatpush1.bf16.msra.mxu0 0
        %4333 = vmatprep.subr.bf16.mxu0 0
        %4334 = vmatpush1.bf16.msra.mxu0 0
        %4335 = vmatprep.subr.bf16.mxu0 0
        %4336 = vmatpush1.bf16.msra.mxu0 0
        %4337 = vmatprep.subr.bf16.mxu0 0
        %4338 = vmatpush1.bf16.msra.mxu0 0
        %4339 = vmatprep.subr.bf16.mxu0 0
        %4340 = vmatpush1.bf16.msra.mxu0 0
        %4341 = vmatprep.subr.bf16.mxu0 0
        %4342 = vmatpush1.bf16.msra.mxu0 %v4325
        %4343 = vmatprep.subr.bf16.mxu0 0
        %4344 = vmatpush2.bf16.msra.mxu0 0
        %4345 = vmatprep.subr.bf16.mxu0 0
        %4346 = vmatpush2.bf16.msra.mxu0 0
        %4347 = vmatprep.subr.bf16.mxu0 0
        %4348 = vmatpush2.bf16.msra.mxu0 0
        %4349 = vmatprep.subr.bf16.mxu0 0
        %4350 = vmatpush2.bf16.msra.mxu0 0
        %4351 = vmatprep.subr.bf16.mxu0 0
        %4352 = vmatpush2.bf16.msra.mxu0 0
        %4353 = vmatprep.subr.bf16.mxu0 0
        %4354 = vmatpush2.bf16.msra.mxu0 0
        %4355 = vmatprep.subr.bf16.mxu0 0
        %4356 = vmatpush2.bf16.msra.mxu0 0
        %4357 = vmatprep.subr.bf16.mxu0 0
        %4358 = vmatpush2.bf16.msra.mxu0 0
        %4359 = vmatprep.mubr.bf16.mxu0 0
        %4360 = vmatmul.mubr.bf16.gmra.mxu0 %v4322
        %v4361 = vpop.f32.mrf.mxu0
        %v4362 = vadd.f32 0.0, %v4361
        %v4363 = vpop.f32.mrf.mxu0
        %v4364 = vpop.f32.mrf.mxu0
        %v4365 = vpop.f32.mrf.mxu0
        %4366 = vdwg.mxu0
        %4368 = vrot.lane.b32.xlu0 %v4140, 8
        %v4369 = vpop.permute.xlu0 %4368
        %4372 = vrot.lane.b32.xlu0 %v4251, 16
        %v4373 = vpop.permute.xlu0 %4372
        %4376 = vrot.lane.b32.xlu0 %v4362, 24
        %v4377 = vpop.permute.xlu0 %4376
        %v4379 = vsel %vm1807, %v4028, %v4369
        %v4380 = vsel %vm2267, %v4379, %v4373
        %v4381 = vsel %vm2269, %v4380, %v4377
        %v4382 = vpack.c.bf16 %v4381, %v4381
        %v4387 = vunpack.c.l.b16 %v1712
        %v4388 = vunpack.c.l.b16 %v1713
        %v4389 = vunpack.c.l.b16 %v1714
        %v4390 = vunpack.c.l.b16 %v1715
        %v4391 = vpack.c.b16 %v4388, %v4387
        %v4392 = vpack.c.b16 %v4390, %v4389
        %v4396 = vsel %vm1758, %v4382, 0
        %4398 = vmatprep.subr.bf16.mxu0 0
        %4399 = vmatpush1.bf16.msra.mxu0 0
        %4400 = vmatprep.subr.bf16.mxu0 0
        %4401 = vmatpush1.bf16.msra.mxu0 0
        %4402 = vmatprep.subr.bf16.mxu0 0
        %4403 = vmatpush1.bf16.msra.mxu0 0
        %4404 = vmatprep.subr.bf16.mxu0 0
        %4405 = vmatpush1.bf16.msra.mxu0 0
        %4406 = vmatprep.subr.bf16.mxu0 0
        %4407 = vmatpush1.bf16.msra.mxu0 0
        %4408 = vmatprep.subr.bf16.mxu0 0
        %4409 = vmatpush1.bf16.msra.mxu0 0
        %4410 = vmatprep.subr.bf16.mxu0 0
        %4411 = vmatpush1.bf16.msra.mxu0 %v4392
        %4412 = vmatprep.subr.bf16.mxu0 0
        %4413 = vmatpush1.bf16.msra.mxu0 %v4391
        %4414 = vmatprep.subr.bf16.mxu0 0
        %4415 = vmatpush2.bf16.msra.mxu0 0
        %4416 = vmatprep.subr.bf16.mxu0 0
        %4417 = vmatpush2.bf16.msra.mxu0 0
        %4418 = vmatprep.subr.bf16.mxu0 0
        %4419 = vmatpush2.bf16.msra.mxu0 0
        %4420 = vmatprep.subr.bf16.mxu0 0
        %4421 = vmatpush2.bf16.msra.mxu0 0
        %4422 = vmatprep.subr.bf16.mxu0 0
        %4423 = vmatpush2.bf16.msra.mxu0 0
        %4424 = vmatprep.subr.bf16.mxu0 0
        %4425 = vmatpush2.bf16.msra.mxu0 0
        %4426 = vmatprep.subr.bf16.mxu0 0
        %4427 = vmatpush2.bf16.msra.mxu0 0
        %4428 = vmatprep.subr.bf16.mxu0 0
        %4429 = vmatpush2.bf16.msra.mxu0 0
        %4430 = vmatprep.mubr.bf16.mxu0 0
        %4431 = vmatmul.mubr.bf16.gmra.mxu0 %v4396
        %v4432 = vpop.f32.mrf.mxu0
        %v4433 = vadd.f32 0.0, %v4432
        %v4434 = vpop.f32.mrf.mxu0
        %v4435 = vpop.f32.mrf.mxu0
        %v4436 = vpop.f32.mrf.mxu0
        %4437 = vdwg.mxu0
        %v4438 = vadd.f32 %v3795, %v4433
        %v4440 = vlaneseq
        %v4441 = vshrl.u32 %v4440, 7
        %v4442 = vsub.s32 0, %v4441
        %v4443 = vrot.slane %v1716, %v4442
        %v4445 = vadd.f32 %v4438, %v4443
        %v4446 = vsel %vm3744, %v4445, 0.0
        %4447 = vadd.xlane.f32.xlu0 %v4446
        %v4448 = vpop.xlane.xlu0 %4447
        %v4449 = vmul.f32 %v4448, %v3748
        %v4450 = vsub.f32 %v4445, %v4449
        %v4451 = vmul.f32 %v4450, %v4450
        %v4452 = vsel %vm3744, %v4451, 0.0
        %4453 = vadd.xlane.f32.xlu0 %v4452
        %v4454 = vpop.xlane.xlu0 %4453
        %v4455 = vmul.f32 %v4454, %v3748
        %v4456 = vadd.f32 %v4455, 1e-05
        %v4457 = vrsqrt.pop %v4456
        %v4458 = vmul.f32 %v4450, %v4457
        %v4460 = vlaneseq
        %v4461 = vshrl.u32 %v4460, 7
        %v4462 = vsub.s32 0, %v4461
        %v4463 = vrot.slane %v1719, %v4462
        %v4465 = vmul.f32 %v4458, %v4463
        %v4467 = vlaneseq
        %v4468 = vshrl.u32 %v4467, 7
        %v4469 = vsub.s32 0, %v4468
        %v4470 = vrot.slane %v1720, %v4469
        %v4472 = vadd.f32 %v4465, %v4470
        %v4474 = vrot.slane %v4472, 6
        %v4476 = vrot.slane %v4472, 4
        %v4478 = vrot.slane %v4472, 2
        %v4480 = vsel %vm1875, %v3783, %v4474
        %v4481 = vsel %vm3669, %v4480, %v3783
        %vm4482 = vcmask 1044480
        %v4483 = vsel %vm4482, %v4481, %v4476
        %v4484 = vsel %vm3671, %v4483, %v3783
        %v4485 = vsel %vm1874, %v4478, %v3784
        %v4486 = vsel %vm3669, %v4485, %v4472
        %v4487 = vpack.c.bf16 %v4486, %v4484
        %v4489 = vlaneseq
        %v4490 = vshrl.u32 %v4489, 7
        %v4491 = vsub.s32 0, %v4490
        %v4492 = vrot.slane %v1727, %v4491
        %v4498 = vunpack.c.l.b16 %v1723
        %v4499 = vunpack.c.l.b16 %v1724
        %v4500 = vunpack.c.l.b16 %v1725
        %v4501 = vunpack.c.l.b16 %v1726
        %v4502 = vpack.c.b16 %v4499, %v4498
        %v4503 = vpack.c.b16 %v4501, %v4500
        %v4507 = vsel %vm1758, %v4487, 0
        %4509 = vmatprep.subr.bf16.mxu0 0
        %4510 = vmatpush1.bf16.msra.mxu0 0
        %4511 = vmatprep.subr.bf16.mxu0 0
        %4512 = vmatpush1.bf16.msra.mxu0 0
        %4513 = vmatprep.subr.bf16.mxu0 0
        %4514 = vmatpush1.bf16.msra.mxu0 0
        %4515 = vmatprep.subr.bf16.mxu0 0
        %4516 = vmatpush1.bf16.msra.mxu0 0
        %4517 = vmatprep.subr.bf16.mxu0 0
        %4518 = vmatpush1.bf16.msra.mxu0 0
        %4519 = vmatprep.subr.bf16.mxu0 0
        %4520 = vmatpush1.bf16.msra.mxu0 0
        %4521 = vmatprep.subr.bf16.mxu0 0
        %4522 = vmatpush1.bf16.msra.mxu0 %v4503
        %4523 = vmatprep.subr.bf16.mxu0 0
        %4524 = vmatpush1.bf16.msra.mxu0 %v4502
        %4525 = vmatprep.subr.bf16.mxu0 0
        %4526 = vmatpush2.bf16.msra.mxu0 0
        %4527 = vmatprep.subr.bf16.mxu0 0
        %4528 = vmatpush2.bf16.msra.mxu0 0
        %4529 = vmatprep.subr.bf16.mxu0 0
        %4530 = vmatpush2.bf16.msra.mxu0 0
        %4531 = vmatprep.subr.bf16.mxu0 0
        %4532 = vmatpush2.bf16.msra.mxu0 0
        %4533 = vmatprep.subr.bf16.mxu0 0
        %4534 = vmatpush2.bf16.msra.mxu0 0
        %4535 = vmatprep.subr.bf16.mxu0 0
        %4536 = vmatpush2.bf16.msra.mxu0 0
        %4537 = vmatprep.subr.bf16.mxu0 0
        %4538 = vmatpush2.bf16.msra.mxu0 0
        %4539 = vmatprep.subr.bf16.mxu0 0
        %4540 = vmatpush2.bf16.msra.mxu0 0
        %4541 = vmatprep.mubr.bf16.mxu0 0
        %4542 = vmatmul.mubr.bf16.gmra.mxu0 %v4507
        %v4543 = vpop.f32.mrf.mxu0
        %v4544 = vadd.f32 %v4492, %v4543
        %v4545 = vpop.f32.mrf.mxu0
        %v4546 = vpop.f32.mrf.mxu0
        %v4547 = vadd.f32 %v4492, %v4546
        %v4548 = vpop.f32.mrf.mxu0
        %4549 = vdwg.mxu0
        %v4550 = vmax.f32 %v4544, 0.0
        %v4551 = vmax.f32 %v4547, 0.0
        %v4552 = vpack.c.bf16 %v4551, %v4550
        %v4554 = vlaneseq
        %v4555 = vshrl.u32 %v4554, 7
        %v4556 = vsub.s32 0, %v4555
        %v4557 = vrot.slane %v1736, %v4556
        %v4567 = vunpack.c.l.b16 %v1728
        %v4568 = vunpack.c.l.b16 %v1729
        %v4569 = vunpack.c.l.b16 %v1730
        %v4570 = vunpack.c.l.b16 %v1731
        %v4571 = vunpack.c.l.b16 %v1732
        %v4572 = vunpack.c.l.b16 %v1733
        %v4573 = vunpack.c.l.b16 %v1734
        %v4574 = vunpack.c.l.b16 %v1735
        %v4575 = vpack.c.b16 %v4568, %v4567
        %v4576 = vpack.c.b16 %v4570, %v4569
        %v4577 = vpack.c.b16 %v4572, %v4571
        %v4578 = vpack.c.b16 %v4574, %v4573
        %vm4583 = vcmask 523264
        %v4585 = vsel %vm4583, %v4552, 0
        %4587 = vmatprep.subr.bf16.mxu0 0
        %4588 = vmatpush1.bf16.msra.mxu0 0
        %4589 = vmatprep.subr.bf16.mxu0 0
        %4590 = vmatpush1.bf16.msra.mxu0 0
        %4591 = vmatprep.subr.bf16.mxu0 0
        %4592 = vmatpush1.bf16.msra.mxu0 0
        %4593 = vmatprep.subr.bf16.mxu0 0
        %4594 = vmatpush1.bf16.msra.mxu0 0
        %4595 = vmatprep.subr.bf16.mxu0 0
        %4596 = vmatpush1.bf16.msra.mxu0 %v4578
        %4597 = vmatprep.subr.bf16.mxu0 0
        %4598 = vmatpush1.bf16.msra.mxu0 %v4577
        %4599 = vmatprep.subr.bf16.mxu0 0
        %4600 = vmatpush1.bf16.msra.mxu0 %v4576
        %4601 = vmatprep.subr.bf16.mxu0 0
        %4602 = vmatpush1.bf16.msra.mxu0 %v4575
        %4603 = vmatprep.subr.bf16.mxu0 0
        %4604 = vmatpush2.bf16.msra.mxu0 0
        %4605 = vmatprep.subr.bf16.mxu0 0
        %4606 = vmatpush2.bf16.msra.mxu0 0
        %4607 = vmatprep.subr.bf16.mxu0 0
        %4608 = vmatpush2.bf16.msra.mxu0 0
        %4609 = vmatprep.subr.bf16.mxu0 0
        %4610 = vmatpush2.bf16.msra.mxu0 0
        %4611 = vmatprep.subr.bf16.mxu0 0
        %4612 = vmatpush2.bf16.msra.mxu0 0
        %4613 = vmatprep.subr.bf16.mxu0 0
        %4614 = vmatpush2.bf16.msra.mxu0 0
        %4615 = vmatprep.subr.bf16.mxu0 0
        %4616 = vmatpush2.bf16.msra.mxu0 0
        %4617 = vmatprep.subr.bf16.mxu0 0
        %4618 = vmatpush2.bf16.msra.mxu0 0
        %4619 = vmatprep.mubr.bf16.mxu0 0
        %4620 = vmatmul.mubr.bf16.gmra.mxu0 %v4585
        %v4621 = vpop.f32.mrf.mxu0
        %v4622 = vadd.f32 %v4557, %v4621
        %v4623 = vpop.f32.mrf.mxu0
        %v4624 = vpop.f32.mrf.mxu0
        %v4625 = vadd.f32 %v4557, %v4624
        %v4626 = vpop.f32.mrf.mxu0
        %4627 = vdwg.mxu0
        %v4628 = vadd.f32 %v4484, %v4622
        %v4629 = vadd.f32 %v4486, %v4625
        %v4630 = vsel %vm1758, %v4628, 0.0
        %4631 = vadd.xlane.f32.xlu0 %v4630
        %v4632 = vpop.xlane.xlu0 %4631
        %v4633 = vsel %vm3744, %v4629, 0.0
        %4634 = vadd.xlane.f32.xlu0 %v4633
        %v4635 = vpop.xlane.xlu0 %4634
        %v4636 = vmul.f32 %v4632, %v3748
        %v4637 = vmul.f32 %v4635, %v3748
        %v4638 = vsub.f32 %v4628, %v4636
        %v4639 = vsub.f32 %v4629, %v4637
        %v4640 = vmul.f32 %v4638, %v4638
        %v4641 = vmul.f32 %v4639, %v4639
        %v4642 = vsel %vm1758, %v4640, 0.0
        %4643 = vadd.xlane.f32.xlu0 %v4642
        %v4644 = vpop.xlane.xlu0 %4643
        %v4645 = vsel %vm3744, %v4641, 0.0
        %4646 = vadd.xlane.f32.xlu0 %v4645
        %v4647 = vpop.xlane.xlu0 %4646
        %v4648 = vmul.f32 %v4644, %v3748
        %v4649 = vmul.f32 %v4647, %v3748
        %v4650 = vadd.f32 %v4648, 1e-05
        %v4651 = vadd.f32 %v4649, 1e-05
        %v4652 = vrsqrt.pop %v4650
        %v4653 = vrsqrt.pop %v4651
        %v4654 = vmul.f32 %v4638, %v4652
        %v4655 = vmul.f32 %v4639, %v4653
        %v4657 = vlaneseq
        %v4658 = vshrl.u32 %v4657, 7
        %v4659 = vsub.s32 0, %v4658
        %v4660 = vrot.slane %v1721, %v4659
        %v4662 = vmul.f32 %v4654, %v4660
        %v4663 = vmul.f32 %v4655, %v4660
        %v4665 = vlaneseq
        %v4666 = vshrl.u32 %v4665, 7
        %v4667 = vsub.s32 0, %v4666
        %v4668 = vrot.slane %v1722, %v4667
        %v4670 = vadd.f32 %v4662, %v4668
        %v4671 = vadd.f32 %v4663, %v4668
        // Predicated region
        $region213: #{timexer_forward.2} parent=135 // pred_check
          %p4672 = pneg %p1543
        $region214: #{timexer_forward.2} parent=135 // pred_check_branch
          %4674 = sbr.rel (%p4672) target = $region216
        $region215: #{timexer_forward.2} parent=135 // pred_region
          %v4675 = vld [vmem:[#allocation21] sm:$0x1]
          %v4676 = vld [vmem:[#allocation22] sm:$0x1]
          %v4677 = vsel %vm1758, %v4670, 0.0
          %4678 = vadd.xlane.f32.xlu0 %v4677
          %v4679 = vpop.xlane.xlu0 %4678
          %v4680 = vsel %vm3744, %v4671, 0.0
          %4681 = vadd.xlane.f32.xlu0 %v4680
          %v4682 = vpop.xlane.xlu0 %4681
          %v4683 = vmul.f32 %v4679, %v3748
          %v4684 = vmul.f32 %v4682, %v3748
          %v4685 = vsub.f32 %v4670, %v4683
          %v4686 = vsub.f32 %v4671, %v4684
          %v4687 = vmul.f32 %v4685, %v4685
          %v4688 = vmul.f32 %v4686, %v4686
          %v4689 = vsel %vm1758, %v4687, 0.0
          %4690 = vadd.xlane.f32.xlu0 %v4689
          %v4691 = vpop.xlane.xlu0 %4690
          %v4692 = vsel %vm3744, %v4688, 0.0
          %4693 = vadd.xlane.f32.xlu0 %v4692
          %v4694 = vpop.xlane.xlu0 %4693
          %v4695 = vmul.f32 %v4691, %v3748
          %v4696 = vmul.f32 %v4694, %v3748
          %v4697 = vadd.f32 %v4695, 1e-05
          %v4698 = vadd.f32 %v4696, 1e-05
          %v4699 = vrsqrt.pop %v4697
          %v4700 = vrsqrt.pop %v4698
          %v4701 = vmul.f32 %v4685, %v4699
          %v4702 = vmul.f32 %v4686, %v4700
          %v4704 = vlaneseq
          %v4705 = vshrl.u32 %v4704, 7
          %v4706 = vsub.s32 0, %v4705
          %v4707 = vrot.slane %v4675, %v4706
          %v4709 = vmul.f32 %v4701, %v4707
          %v4710 = vmul.f32 %v4702, %v4707
          %v4712 = vlaneseq
          %v4713 = vshrl.u32 %v4712, 7
          %v4714 = vsub.s32 0, %v4713
          %v4715 = vrot.slane %v4676, %v4714
          %v4717 = vadd.f32 %v4709, %v4715
          %v4718 = vadd.f32 %v4710, %v4715
          %4719 = vst.msk [vmem:[%s1541] sm:$0xff] %vm1758, %v4717
          %4720 = vst.msk [vmem:[%s1541 + $0x8] sm:$0xf] %vm3744, %v4718
        $region216: #{timexer_forward.2} parent=135 // pred_fallthru
          _
        %p4721 = scmp.ne.s32.totalorder %s78, 1
        // Predicated region
        $region217: #{timexer_forward.2} parent=135 // pred_check
          %p4722 = pneg %p4721
        $region218: #{timexer_forward.2} parent=135 // pred_check_branch
          %4724 = sbr.rel (%p4722) target = $region220
        $region219: #{timexer_forward.2} parent=135 // pred_region
          %4725 = vst.msk [vmem:[%s1541] sm:$0xff] %vm1758, %v4670
          %4726 = vst.msk [vmem:[%s1541 + $0x8] sm:$0xf] %vm3744, %v4671
        $region220: #{timexer_forward.2} parent=135 // pred_fallthru
          _
        %p4727 = scmp.lt.s32.totalorder %s77, 1
        %s4728 = scalar_select %p4727, %s77, 1
        %s4729 = smul.addr %s4728, 2
        %s4730 = smul.addr %s4729, 8
        %s4731 = scalar_lea.vmem %s59, %s4730
        // Predicated region
        $region221: #{timexer_forward.2} parent=135 // pred_check
          %p4732 = pneg %p822
        $region222: #{timexer_forward.2} parent=135 // pred_check_branch
          %4734 = sbr.rel (%p4732) target = $region224
        $region223: #{timexer_forward.2} parent=135 // pred_region
          _
        $region224: #{timexer_forward.2} parent=135 // pred_fallthru
          _
      $region136: #{timexer_forward.2} parent=5 // pred_fallthru
        _
      %p4735 = scmp.le.s32.totalorder 2, %s68
      // Predicated region
      $region225: #{timexer_forward.2} parent=5 // pred_check
        %p4736 = pneg %p4735
      $region226: #{timexer_forward.2} parent=5 // pred_check_branch
        %4738 = sbr.rel (%p4736) target = $region228
      $region227: #{timexer_forward.2} parent=5 // pred_region
        %s4739 = ssub.s32 %s68, 2
        // Predicated region
        $region229: #{timexer_forward.2} parent=227 // pred_check
          %p4740 = pneg %p828
        $region230: #{timexer_forward.2} parent=227 // pred_check_branch
          %4742 = sbr.rel (%p4740) target = $region232
        $region231: #{timexer_forward.2} parent=227 // pred_region
          %p4743 = scmp.lt.s32.totalorder %s79, 1
          %s4744 = scalar_select %p4743, %s79, 1
          %s4745 = smul.addr %s4744, 2
          %s4746 = smul.addr %s4745, 8
          %s4747 = scalar_lea.vmem %s59, %s4746
        $region232: #{timexer_forward.2} parent=227 // pred_fallthru
          _
      $region228: #{timexer_forward.2} parent=5 // pred_fallthru
        _
    $region6: #{timexer_forward.2} parent=1 // loop_footer
      %s72 = sadd.s32 1, %s68
    $region7: #{timexer_forward.2} parent=1 // loop_footer_branch
      %67 = sbr.rel target = $region3
    $region8: #{timexer_forward.2} parent=1 // loop_exit
      _
    %4748 = vsyncpa [#allocation4], 1
    %s4749 = scalar_lea.sflag [#allocation4], 1
    %4750 = vsyncpa %s4749, 1
    %4751 = vsyncpa [#allocation6], 1
    %4752 = vsyncpa [#allocation23], 1

</llo_original>
